<compile_context>
chip_gen: v7x
topology: tpu7x:2x2x1
jax: 0.10.0
libtpu: 0.0.40
codegen_flags: <defaults>
</compile_context>

<pallas_src>
import jax
import jax.numpy as jnp
from jax.experimental import pallas as pl
from jax.experimental.pallas import tpu as pltpu

HIDDEN = 512          # hard-coded in the PyTorch module
N_SHARED_REST = 3     # 3 extra shared Linear(512,512)+ReLU layers
N_UNSHARED_HID = 3    # 3 hidden Linear(512,512)+ReLU layers per branch


def _make_kernel(num_domains, style_dim):
    """Build the single-invocation kernel (num_domains/style_dim are static)."""

    def kernel(z_ref, w0_ref, b0_ref, wsh_ref, bsh_ref,
               wu_ref, bu_ref, wl_ref, bl_ref, y_ref, o_ref):
        bf = jnp.bfloat16

        # ---- shared trunk: 4 x (Linear + ReLU), computed exactly once per call ----
        h = jnp.dot(z_ref[...].astype(bf), w0_ref[...],
                    preferred_element_type=jnp.float32)
        h = jnp.maximum(h + b0_ref[...], 0.0)
        for l in range(N_SHARED_REST):
            h = jnp.dot(h.astype(bf), wsh_ref[l],
                        preferred_element_type=jnp.float32)
            h = jnp.maximum(h + bsh_ref[l], 0.0)

        # ---- unshared branches (statically unrolled; num_domains is tiny) ----
        outs = []
        for d in range(num_domains):
            g = h
            for l in range(N_UNSHARED_HID):
                g = jnp.dot(g.astype(bf), wu_ref[d, l],
                            preferred_element_type=jnp.float32)
                g = jnp.maximum(g + bu_ref[d, l], 0.0)
            g = jnp.dot(g.astype(bf), wl_ref[d],
                        preferred_element_type=jnp.float32) + bl_ref[d]
            outs.append(g)                      # (B, style_dim), f32

        # ---- s = out * y ; concatenate domains -> (B, nd*style) lane-dense store ----
        s_cat = jnp.concatenate(outs, axis=-1)  # (B, nd*style_dim) == (8, 128)
        o_ref[...] = (s_cat * y_ref[...]).astype(o_ref.dtype)

    return kernel


def prepare_params(params):
    """One-time packing OUTSIDE the hot path: bf16 weight matrices (halves HBM bytes
    on a DMA-bound kernel) + biases reshaped for in-kernel broadcast (kept f32)."""
    nd = params["w_last"].shape[0]
    s_dim = params["w_last"].shape[-1]
    H = HIDDEN
    return {
        "w0": params["w0"].astype(jnp.bfloat16),
        "b0": params["b0"].reshape(1, H).astype(jnp.float32),
        "w_sh": params["w_sh"].astype(jnp.bfloat16),
        "b_sh": params["b_sh"].reshape(N_SHARED_REST, 1, H).astype(jnp.float32),
        "w_un": params["w_un"].astype(jnp.bfloat16),
        "b_un": params["b_un"].reshape(nd, N_UNSHARED_HID, 1, H).astype(jnp.float32),
        "w_last": params["w_last"].astype(jnp.bfloat16),
        "b_last": params["b_last"].reshape(nd, 1, s_dim).astype(jnp.float32),
    }


def noise2style_pallas(z, y, packed):
    """z: (B, noise_dim) f32; y: (B, num_domains) f32; packed: prepare_params output.
    Returns s: (B, num_domains, style_dim) f32."""
    B, d_in = z.shape
    nd, _, s_dim = packed["w_last"].shape
    H = HIDDEN

    # y repeated per style feature -> (B, nd*s_dim) so the epilogue multiply and the
    # single output store are full 128-lane dense (nd*s_dim == 128 here).
    y_wide = jnp.repeat(y.astype(jnp.float32), s_dim, axis=1)

    args = (z, packed["w0"], packed["b0"], packed["w_sh"], packed["b_sh"],
            packed["w_un"], packed["b_un"], packed["w_last"], packed["b_last"],
            y_wide)

    # Advisory cost estimate: tell XLA this custom call is DMA-bound and FLOP-cheap.
    flops = (2 * B * (d_in * H + N_SHARED_REST * H * H)
             + nd * 2 * B * (N_UNSHARED_HID * H * H + H * s_dim))
    bytes_accessed = (sum(int(a.size) * a.dtype.itemsize for a in args)
                      + B * nd * s_dim * 4)

    out = pl.pallas_call(
        _make_kernel(nd, s_dim),
        out_shape=jax.ShapeDtypeStruct((B, nd * s_dim), jnp.float32),
        compiler_params=pltpu.CompilerParams(
            # ~5 MiB actual footprint (single invocation, no pipeline double-buffer);
            # keep the claim small so surrounding XLA fusions keep their VMEM.
            vmem_limit_bytes=16 * 1024 * 1024,
        ),
        cost_estimate=pl.CostEstimate(
            flops=flops, transcendentals=0, bytes_accessed=bytes_accessed),
    )(*args)

    # (B, nd*style) -> (B, nd, style)  == torch.stack(branch outputs, dim=1) * y[...,None]
    return out.reshape(B, nd, s_dim)


# ----------------------------- references (pure JAX) ------------------------------

def noise2style_reference_f32(z, y, params):
    """Pure-JAX f32 reference of the PyTorch forward (dataset != CelebA_HQ, no SPLIT_STYLE)."""
    h = jax.nn.relu(z @ params["w0"] + params["b0"])
    for l in range(N_SHARED_REST):
        h = jax.nn.relu(h @ params["w_sh"][l] + params["b_sh"][l])
    outs = []
    nd = params["w_last"].shape[0]
    for d in range(nd):
        g = h
        for l in range(N_UNSHARED_HID):
            g = jax.nn.relu(g @ params["w_un"][d, l] + params["b_un"][d, l])
        g = g @ params["w_last"][d] + params["b_last"][d]
        outs.append(g)
    out = jnp.stack(outs, axis=1)               # (B, num_domains, style_dim)
    return out * y[..., None]                   # y.unsqueeze(-1).expand_as(out)


def noise2style_reference_bf16(z, y, params):
    """Reference with the same bf16-input / f32-accumulate matmul scheme as the kernel."""
    bf = jnp.bfloat16

    def mm(a, w):
        return jnp.dot(a.astype(bf), w.astype(bf), preferred_element_type=jnp.float32)

    h = jax.nn.relu(mm(z, params["w0"]) + params["b0"])
    for l in range(N_SHARED_REST):
        h = jax.nn.relu(mm(h, params["w_sh"][l]) + params["b_sh"][l])
    outs = []
    nd = params["w_last"].shape[0]
    for d in range(nd):
        g = h
        for l in range(N_UNSHARED_HID):
            g = jax.nn.relu(mm(g, params["w_un"][d, l]) + params["b_un"][d, l])
        g = mm(g, params["w_last"][d]) + params["b_last"][d]
        outs.append(g)
    out = jnp.stack(outs, axis=1)
    return out * y[..., None]


def init_params(key, noise_dim, num_domains, style_dim):
    """Deterministic synthetic weights (the module applies a custom weights_init; the
    forward semantics do not depend on the init scheme, so small gaussians suffice)."""
    ks = jax.random.split(key, 8)
    scale = 0.05
    return {
        "w0": scale * jax.random.normal(ks[0], (noise_dim, HIDDEN), jnp.float32),
        "b0": scale * jax.random.normal(ks[1], (HIDDEN,), jnp.float32),
        "w_sh": scale * jax.random.normal(ks[2], (N_SHARED_REST, HIDDEN, HIDDEN), jnp.float32),
        "b_sh": scale * jax.random.normal(ks[3], (N_SHARED_REST, HIDDEN), jnp.float32),
        "w_un": scale * jax.random.normal(ks[4], (num_domains, N_UNSHARED_HID, HIDDEN, HIDDEN), jnp.float32),
        "b_un": scale * jax.random.normal(ks[5], (num_domains, N_UNSHARED_HID, HIDDEN), jnp.float32),
        "w_last": scale * jax.random.normal(ks[6], (num_domains, HIDDEN, style_dim), jnp.float32),
        "b_last": scale * jax.random.normal(ks[7], (num_domains, style_dim), jnp.float32),
    }


if __name__ == "__main__":
    B, NOISE_DIM, NUM_DOMAINS, STYLE_DIM = 8, 16, 2, 64

    key = jax.random.PRNGKey(0)
    k_p, k_z, k_y = jax.random.split(key, 3)

    params = init_params(k_p, NOISE_DIM, NUM_DOMAINS, STYLE_DIM)
    z = jax.random.normal(k_z, (B, NOISE_DIM), jnp.float32)
    # y: per-sample domain indicator vector (as in StarGAN-style mapping nets)
    y = jax.random.bernoulli(k_y, 0.5, (B, NUM_DOMAINS)).astype(jnp.float32)

    # One-time weight packing (bf16 cast) OUTSIDE the jitted hot path.
    packed = prepare_params(params)

    fwd = jax.jit(noise2style_pallas)
    s = jax.block_until_ready(fwd(z, y, packed))

    assert s.shape == (B, NUM_DOMAINS, STYLE_DIM), s.shape

    # Tight check against a precision-matched (bf16 weight streaming) reference.
    s_ref_bf16 = noise2style_reference_bf16(z, y, params)
    assert jnp.allclose(s, s_ref_bf16, atol=1e-3, rtol=1e-3), \
        float(jnp.abs(s - s_ref_bf16).max())

    # Loose check against the full-f32 module semantics (expected bf16 precision delta).
    s_ref_f32 = noise2style_reference_f32(z, y, params)
    assert jnp.allclose(s, s_ref_f32, atol=3e-2, rtol=3e-2), \
        float(jnp.abs(s - s_ref_f32).max())

    # TODO(synk): CelebA_HQ path (s = out[y == 1]) needs a data-dependent boolean gather
    # (dynamic output shape) and has no clean static Pallas equivalent; not implemented.
    print("KERNEL_OK")
</pallas_src>

<mosaic_0001>
module attributes {stable_mosaic.version = 11 : i64} {
  func.func @kernel(%arg0: memref<8x16xf32, #tpu.memory_space<vmem>>, %arg1: memref<16x512xbf16, #tpu.memory_space<vmem>>, %arg2: memref<1x512xf32, #tpu.memory_space<vmem>>, %arg3: memref<3x512x512xbf16, #tpu.memory_space<vmem>>, %arg4: memref<3x1x512xf32, #tpu.memory_space<vmem>>, %arg5: memref<2x3x512x512xbf16, #tpu.memory_space<vmem>>, %arg6: memref<2x3x1x512xf32, #tpu.memory_space<vmem>>, %arg7: memref<2x512x64xbf16, #tpu.memory_space<vmem>>, %arg8: memref<2x1x64xf32, #tpu.memory_space<vmem>>, %arg9: memref<8x128xf32, #tpu.memory_space<vmem>>, %arg10: memref<8x128xf32, #tpu.memory_space<vmem>>) attributes {dimension_semantics = [], scalar_prefetch = 0 : i64, scratch_operands = 0 : i64, tpu.core_type = #tpu.core_type<tc>} {
    %c0 = arith.constant 0 : index
    %c0_0 = arith.constant 0 : index
    %0 = vector.load %arg0[%c0, %c0_0] : memref<8x16xf32, #tpu.memory_space<vmem>>, vector<8x16xf32>
    %1 = arith.truncf %0 : vector<8x16xf32> to vector<8x16xbf16>
    %c0_1 = arith.constant 0 : index
    %c0_2 = arith.constant 0 : index
    %2 = vector.load %arg1[%c0_1, %c0_2] : memref<16x512xbf16, #tpu.memory_space<vmem>>, vector<16x512xbf16>
    %cst = arith.constant dense<0.000000e+00> : vector<8x512xf32>
    %3 = tpu.matmul %1, %2, %cst {dimension_numbers = #tpu.dot_dimension_numbers<[1], [0], [0], [1], [0, 0, 1, 1], [], []>} : vector<8x16xbf16>, vector<16x512xbf16>, vector<8x512xf32> -> vector<8x512xf32>
    %c0_3 = arith.constant 0 : index
    %c0_4 = arith.constant 0 : index
    %4 = vector.load %arg2[%c0_3, %c0_4] : memref<1x512xf32, #tpu.memory_space<vmem>>, vector<1x512xf32>
    %5 = vector.broadcast %4 : vector<1x512xf32> to vector<8x512xf32>
    %6 = arith.addf %3, %5 : vector<8x512xf32>
    %cst_5 = arith.constant 0.000000e+00 : f32
    %7 = vector.broadcast %cst_5 : f32 to vector<8x512xf32>
    %8 = arith.maximumf %6, %7 : vector<8x512xf32>
    %9 = arith.truncf %8 : vector<8x512xf32> to vector<8x512xbf16>
    %c0_6 = arith.constant 0 : index
    %c0_7 = arith.constant 0 : index
    %c0_8 = arith.constant 0 : index
    %10 = vector.load %arg3[%c0_6, %c0_7, %c0_8] : memref<3x512x512xbf16, #tpu.memory_space<vmem>>, vector<1x512x512xbf16>
    %11 = vector.shape_cast %10 : vector<1x512x512xbf16> to vector<512x512xbf16>
    %cst_9 = arith.constant dense<0.000000e+00> : vector<8x512xf32>
    %12 = tpu.matmul %9, %11, %cst_9 {dimension_numbers = #tpu.dot_dimension_numbers<[1], [0], [0], [1], [0, 0, 1, 1], [], []>} : vector<8x512xbf16>, vector<512x512xbf16>, vector<8x512xf32> -> vector<8x512xf32>
    %c0_10 = arith.constant 0 : index
    %c0_11 = arith.constant 0 : index
    %c0_12 = arith.constant 0 : index
    %13 = vector.load %arg4[%c0_10, %c0_11, %c0_12] : memref<3x1x512xf32, #tpu.memory_space<vmem>>, vector<1x1x512xf32>
    %14 = vector.shape_cast %13 : vector<1x1x512xf32> to vector<1x512xf32>
    %15 = vector.broadcast %14 : vector<1x512xf32> to vector<8x512xf32>
    %16 = arith.addf %12, %15 : vector<8x512xf32>
    %cst_13 = arith.constant 0.000000e+00 : f32
    %17 = vector.broadcast %cst_13 : f32 to vector<8x512xf32>
    %18 = arith.maximumf %16, %17 : vector<8x512xf32>
    %19 = arith.truncf %18 : vector<8x512xf32> to vector<8x512xbf16>
    %c1 = arith.constant 1 : index
    %c0_14 = arith.constant 0 : index
    %c0_15 = arith.constant 0 : index
    %20 = vector.load %arg3[%c1, %c0_14, %c0_15] : memref<3x512x512xbf16, #tpu.memory_space<vmem>>, vector<1x512x512xbf16>
    %21 = vector.shape_cast %20 : vector<1x512x512xbf16> to vector<512x512xbf16>
    %cst_16 = arith.constant dense<0.000000e+00> : vector<8x512xf32>
    %22 = tpu.matmul %19, %21, %cst_16 {dimension_numbers = #tpu.dot_dimension_numbers<[1], [0], [0], [1], [0, 0, 1, 1], [], []>} : vector<8x512xbf16>, vector<512x512xbf16>, vector<8x512xf32> -> vector<8x512xf32>
    %c1_17 = arith.constant 1 : index
    %c0_18 = arith.constant 0 : index
    %c0_19 = arith.constant 0 : index
    %23 = vector.load %arg4[%c1_17, %c0_18, %c0_19] : memref<3x1x512xf32, #tpu.memory_space<vmem>>, vector<1x1x512xf32>
    %24 = vector.shape_cast %23 : vector<1x1x512xf32> to vector<1x512xf32>
    %25 = vector.broadcast %24 : vector<1x512xf32> to vector<8x512xf32>
    %26 = arith.addf %22, %25 : vector<8x512xf32>
    %cst_20 = arith.constant 0.000000e+00 : f32
    %27 = vector.broadcast %cst_20 : f32 to vector<8x512xf32>
    %28 = arith.maximumf %26, %27 : vector<8x512xf32>
    %29 = arith.truncf %28 : vector<8x512xf32> to vector<8x512xbf16>
    %c2 = arith.constant 2 : index
    %c0_21 = arith.constant 0 : index
    %c0_22 = arith.constant 0 : index
    %30 = vector.load %arg3[%c2, %c0_21, %c0_22] : memref<3x512x512xbf16, #tpu.memory_space<vmem>>, vector<1x512x512xbf16>
    %31 = vector.shape_cast %30 : vector<1x512x512xbf16> to vector<512x512xbf16>
    %cst_23 = arith.constant dense<0.000000e+00> : vector<8x512xf32>
    %32 = tpu.matmul %29, %31, %cst_23 {dimension_numbers = #tpu.dot_dimension_numbers<[1], [0], [0], [1], [0, 0, 1, 1], [], []>} : vector<8x512xbf16>, vector<512x512xbf16>, vector<8x512xf32> -> vector<8x512xf32>
    %c2_24 = arith.constant 2 : index
    %c0_25 = arith.constant 0 : index
    %c0_26 = arith.constant 0 : index
    %33 = vector.load %arg4[%c2_24, %c0_25, %c0_26] : memref<3x1x512xf32, #tpu.memory_space<vmem>>, vector<1x1x512xf32>
    %34 = vector.shape_cast %33 : vector<1x1x512xf32> to vector<1x512xf32>
    %35 = vector.broadcast %34 : vector<1x512xf32> to vector<8x512xf32>
    %36 = arith.addf %32, %35 : vector<8x512xf32>
    %cst_27 = arith.constant 0.000000e+00 : f32
    %37 = vector.broadcast %cst_27 : f32 to vector<8x512xf32>
    %38 = arith.maximumf %36, %37 : vector<8x512xf32>
    %39 = arith.truncf %38 : vector<8x512xf32> to vector<8x512xbf16>
    %c0_28 = arith.constant 0 : index
    %c0_29 = arith.constant 0 : index
    %c0_30 = arith.constant 0 : index
    %c0_31 = arith.constant 0 : index
    %40 = vector.load %arg5[%c0_28, %c0_29, %c0_30, %c0_31] : memref<2x3x512x512xbf16, #tpu.memory_space<vmem>>, vector<1x1x512x512xbf16>
    %41 = vector.shape_cast %40 : vector<1x1x512x512xbf16> to vector<512x512xbf16>
    %cst_32 = arith.constant dense<0.000000e+00> : vector<8x512xf32>
    %42 = tpu.matmul %39, %41, %cst_32 {dimension_numbers = #tpu.dot_dimension_numbers<[1], [0], [0], [1], [0, 0, 1, 1], [], []>} : vector<8x512xbf16>, vector<512x512xbf16>, vector<8x512xf32> -> vector<8x512xf32>
    %c0_33 = arith.constant 0 : index
    %c0_34 = arith.constant 0 : index
    %c0_35 = arith.constant 0 : index
    %c0_36 = arith.constant 0 : index
    %43 = vector.load %arg6[%c0_33, %c0_34, %c0_35, %c0_36] : memref<2x3x1x512xf32, #tpu.memory_space<vmem>>, vector<1x1x1x512xf32>
    %44 = vector.shape_cast %43 : vector<1x1x1x512xf32> to vector<1x512xf32>
    %45 = vector.broadcast %44 : vector<1x512xf32> to vector<8x512xf32>
    %46 = arith.addf %42, %45 : vector<8x512xf32>
    %cst_37 = arith.constant 0.000000e+00 : f32
    %47 = vector.broadcast %cst_37 : f32 to vector<8x512xf32>
    %48 = arith.maximumf %46, %47 : vector<8x512xf32>
    %49 = arith.truncf %48 : vector<8x512xf32> to vector<8x512xbf16>
    %c0_38 = arith.constant 0 : index
    %c1_39 = arith.constant 1 : index
    %c0_40 = arith.constant 0 : index
    %c0_41 = arith.constant 0 : index
    %50 = vector.load %arg5[%c0_38, %c1_39, %c0_40, %c0_41] : memref<2x3x512x512xbf16, #tpu.memory_space<vmem>>, vector<1x1x512x512xbf16>
    %51 = vector.shape_cast %50 : vector<1x1x512x512xbf16> to vector<512x512xbf16>
    %cst_42 = arith.constant dense<0.000000e+00> : vector<8x512xf32>
    %52 = tpu.matmul %49, %51, %cst_42 {dimension_numbers = #tpu.dot_dimension_numbers<[1], [0], [0], [1], [0, 0, 1, 1], [], []>} : vector<8x512xbf16>, vector<512x512xbf16>, vector<8x512xf32> -> vector<8x512xf32>
    %c0_43 = arith.constant 0 : index
    %c1_44 = arith.constant 1 : index
    %c0_45 = arith.constant 0 : index
    %c0_46 = arith.constant 0 : index
    %53 = vector.load %arg6[%c0_43, %c1_44, %c0_45, %c0_46] : memref<2x3x1x512xf32, #tpu.memory_space<vmem>>, vector<1x1x1x512xf32>
    %54 = vector.shape_cast %53 : vector<1x1x1x512xf32> to vector<1x512xf32>
    %55 = vector.broadcast %54 : vector<1x512xf32> to vector<8x512xf32>
    %56 = arith.addf %52, %55 : vector<8x512xf32>
    %cst_47 = arith.constant 0.000000e+00 : f32
    %57 = vector.broadcast %cst_47 : f32 to vector<8x512xf32>
    %58 = arith.maximumf %56, %57 : vector<8x512xf32>
    %59 = arith.truncf %58 : vector<8x512xf32> to vector<8x512xbf16>
    %c0_48 = arith.constant 0 : index
    %c2_49 = arith.constant 2 : index
    %c0_50 = arith.constant 0 : index
    %c0_51 = arith.constant 0 : index
    %60 = vector.load %arg5[%c0_48, %c2_49, %c0_50, %c0_51] : memref<2x3x512x512xbf16, #tpu.memory_space<vmem>>, vector<1x1x512x512xbf16>
    %61 = vector.shape_cast %60 : vector<1x1x512x512xbf16> to vector<512x512xbf16>
    %cst_52 = arith.constant dense<0.000000e+00> : vector<8x512xf32>
    %62 = tpu.matmul %59, %61, %cst_52 {dimension_numbers = #tpu.dot_dimension_numbers<[1], [0], [0], [1], [0, 0, 1, 1], [], []>} : vector<8x512xbf16>, vector<512x512xbf16>, vector<8x512xf32> -> vector<8x512xf32>
    %c0_53 = arith.constant 0 : index
    %c2_54 = arith.constant 2 : index
    %c0_55 = arith.constant 0 : index
    %c0_56 = arith.constant 0 : index
    %63 = vector.load %arg6[%c0_53, %c2_54, %c0_55, %c0_56] : memref<2x3x1x512xf32, #tpu.memory_space<vmem>>, vector<1x1x1x512xf32>
    %64 = vector.shape_cast %63 : vector<1x1x1x512xf32> to vector<1x512xf32>
    %65 = vector.broadcast %64 : vector<1x512xf32> to vector<8x512xf32>
    %66 = arith.addf %62, %65 : vector<8x512xf32>
    %cst_57 = arith.constant 0.000000e+00 : f32
    %67 = vector.broadcast %cst_57 : f32 to vector<8x512xf32>
    %68 = arith.maximumf %66, %67 : vector<8x512xf32>
    %69 = arith.truncf %68 : vector<8x512xf32> to vector<8x512xbf16>
    %c0_58 = arith.constant 0 : index
    %c0_59 = arith.constant 0 : index
    %c0_60 = arith.constant 0 : index
    %70 = vector.load %arg7[%c0_58, %c0_59, %c0_60] : memref<2x512x64xbf16, #tpu.memory_space<vmem>>, vector<1x512x64xbf16>
    %71 = vector.shape_cast %70 : vector<1x512x64xbf16> to vector<512x64xbf16>
    %cst_61 = arith.constant dense<0.000000e+00> : vector<8x64xf32>
    %72 = tpu.matmul %69, %71, %cst_61 {dimension_numbers = #tpu.dot_dimension_numbers<[1], [0], [0], [1], [0, 0, 1, 1], [], []>} : vector<8x512xbf16>, vector<512x64xbf16>, vector<8x64xf32> -> vector<8x64xf32>
    %c0_62 = arith.constant 0 : index
    %c0_63 = arith.constant 0 : index
    %c0_64 = arith.constant 0 : index
    %73 = vector.load %arg8[%c0_62, %c0_63, %c0_64] : memref<2x1x64xf32, #tpu.memory_space<vmem>>, vector<1x1x64xf32>
    %74 = vector.shape_cast %73 : vector<1x1x64xf32> to vector<1x64xf32>
    %75 = vector.broadcast %74 : vector<1x64xf32> to vector<8x64xf32>
    %76 = arith.addf %72, %75 : vector<8x64xf32>
    %77 = arith.truncf %38 : vector<8x512xf32> to vector<8x512xbf16>
    %c1_65 = arith.constant 1 : index
    %c0_66 = arith.constant 0 : index
    %c0_67 = arith.constant 0 : index
    %c0_68 = arith.constant 0 : index
    %78 = vector.load %arg5[%c1_65, %c0_66, %c0_67, %c0_68] : memref<2x3x512x512xbf16, #tpu.memory_space<vmem>>, vector<1x1x512x512xbf16>
    %79 = vector.shape_cast %78 : vector<1x1x512x512xbf16> to vector<512x512xbf16>
    %cst_69 = arith.constant dense<0.000000e+00> : vector<8x512xf32>
    %80 = tpu.matmul %77, %79, %cst_69 {dimension_numbers = #tpu.dot_dimension_numbers<[1], [0], [0], [1], [0, 0, 1, 1], [], []>} : vector<8x512xbf16>, vector<512x512xbf16>, vector<8x512xf32> -> vector<8x512xf32>
    %c1_70 = arith.constant 1 : index
    %c0_71 = arith.constant 0 : index
    %c0_72 = arith.constant 0 : index
    %c0_73 = arith.constant 0 : index
    %81 = vector.load %arg6[%c1_70, %c0_71, %c0_72, %c0_73] : memref<2x3x1x512xf32, #tpu.memory_space<vmem>>, vector<1x1x1x512xf32>
    %82 = vector.shape_cast %81 : vector<1x1x1x512xf32> to vector<1x512xf32>
    %83 = vector.broadcast %82 : vector<1x512xf32> to vector<8x512xf32>
    %84 = arith.addf %80, %83 : vector<8x512xf32>
    %cst_74 = arith.constant 0.000000e+00 : f32
    %85 = vector.broadcast %cst_74 : f32 to vector<8x512xf32>
    %86 = arith.maximumf %84, %85 : vector<8x512xf32>
    %87 = arith.truncf %86 : vector<8x512xf32> to vector<8x512xbf16>
    %c1_75 = arith.constant 1 : index
    %c1_76 = arith.constant 1 : index
    %c0_77 = arith.constant 0 : index
    %c0_78 = arith.constant 0 : index
    %88 = vector.load %arg5[%c1_75, %c1_76, %c0_77, %c0_78] : memref<2x3x512x512xbf16, #tpu.memory_space<vmem>>, vector<1x1x512x512xbf16>
    %89 = vector.shape_cast %88 : vector<1x1x512x512xbf16> to vector<512x512xbf16>
    %cst_79 = arith.constant dense<0.000000e+00> : vector<8x512xf32>
    %90 = tpu.matmul %87, %89, %cst_79 {dimension_numbers = #tpu.dot_dimension_numbers<[1], [0], [0], [1], [0, 0, 1, 1], [], []>} : vector<8x512xbf16>, vector<512x512xbf16>, vector<8x512xf32> -> vector<8x512xf32>
    %c1_80 = arith.constant 1 : index
    %c1_81 = arith.constant 1 : index
    %c0_82 = arith.constant 0 : index
    %c0_83 = arith.constant 0 : index
    %91 = vector.load %arg6[%c1_80, %c1_81, %c0_82, %c0_83] : memref<2x3x1x512xf32, #tpu.memory_space<vmem>>, vector<1x1x1x512xf32>
    %92 = vector.shape_cast %91 : vector<1x1x1x512xf32> to vector<1x512xf32>
    %93 = vector.broadcast %92 : vector<1x512xf32> to vector<8x512xf32>
    %94 = arith.addf %90, %93 : vector<8x512xf32>
    %cst_84 = arith.constant 0.000000e+00 : f32
    %95 = vector.broadcast %cst_84 : f32 to vector<8x512xf32>
    %96 = arith.maximumf %94, %95 : vector<8x512xf32>
    %97 = arith.truncf %96 : vector<8x512xf32> to vector<8x512xbf16>
    %c1_85 = arith.constant 1 : index
    %c2_86 = arith.constant 2 : index
    %c0_87 = arith.constant 0 : index
    %c0_88 = arith.constant 0 : index
    %98 = vector.load %arg5[%c1_85, %c2_86, %c0_87, %c0_88] : memref<2x3x512x512xbf16, #tpu.memory_space<vmem>>, vector<1x1x512x512xbf16>
    %99 = vector.shape_cast %98 : vector<1x1x512x512xbf16> to vector<512x512xbf16>
    %cst_89 = arith.constant dense<0.000000e+00> : vector<8x512xf32>
    %100 = tpu.matmul %97, %99, %cst_89 {dimension_numbers = #tpu.dot_dimension_numbers<[1], [0], [0], [1], [0, 0, 1, 1], [], []>} : vector<8x512xbf16>, vector<512x512xbf16>, vector<8x512xf32> -> vector<8x512xf32>
    %c1_90 = arith.constant 1 : index
    %c2_91 = arith.constant 2 : index
    %c0_92 = arith.constant 0 : index
    %c0_93 = arith.constant 0 : index
    %101 = vector.load %arg6[%c1_90, %c2_91, %c0_92, %c0_93] : memref<2x3x1x512xf32, #tpu.memory_space<vmem>>, vector<1x1x1x512xf32>
    %102 = vector.shape_cast %101 : vector<1x1x1x512xf32> to vector<1x512xf32>
    %103 = vector.broadcast %102 : vector<1x512xf32> to vector<8x512xf32>
    %104 = arith.addf %100, %103 : vector<8x512xf32>
    %cst_94 = arith.constant 0.000000e+00 : f32
    %105 = vector.broadcast %cst_94 : f32 to vector<8x512xf32>
    %106 = arith.maximumf %104, %105 : vector<8x512xf32>
    %107 = arith.truncf %106 : vector<8x512xf32> to vector<8x512xbf16>
    %c1_95 = arith.constant 1 : index
    %c0_96 = arith.constant 0 : index
    %c0_97 = arith.constant 0 : index
    %108 = vector.load %arg7[%c1_95, %c0_96, %c0_97] : memref<2x512x64xbf16, #tpu.memory_space<vmem>>, vector<1x512x64xbf16>
    %109 = vector.shape_cast %108 : vector<1x512x64xbf16> to vector<512x64xbf16>
    %cst_98 = arith.constant dense<0.000000e+00> : vector<8x64xf32>
    %110 = tpu.matmul %107, %109, %cst_98 {dimension_numbers = #tpu.dot_dimension_numbers<[1], [0], [0], [1], [0, 0, 1, 1], [], []>} : vector<8x512xbf16>, vector<512x64xbf16>, vector<8x64xf32> -> vector<8x64xf32>
    %c1_99 = arith.constant 1 : index
    %c0_100 = arith.constant 0 : index
    %c0_101 = arith.constant 0 : index
    %111 = vector.load %arg8[%c1_99, %c0_100, %c0_101] : memref<2x1x64xf32, #tpu.memory_space<vmem>>, vector<1x1x64xf32>
    %112 = vector.shape_cast %111 : vector<1x1x64xf32> to vector<1x64xf32>
    %113 = vector.broadcast %112 : vector<1x64xf32> to vector<8x64xf32>
    %114 = arith.addf %110, %113 : vector<8x64xf32>
    %115 = tpu.concatenate %76, %114 in 1 : vector<8x64xf32>, vector<8x64xf32> -> vector<8x128xf32>
    %c0_102 = arith.constant 0 : index
    %c0_103 = arith.constant 0 : index
    %116 = vector.load %arg9[%c0_102, %c0_103] : memref<8x128xf32, #tpu.memory_space<vmem>>, vector<8x128xf32>
    %117 = arith.mulf %115, %116 : vector<8x128xf32>
    %c0_104 = arith.constant 0 : index
    %c0_105 = arith.constant 0 : index
    %118 = vector.load %arg10[%c0_104, %c0_105] : memref<8x128xf32, #tpu.memory_space<vmem>>, vector<8x128xf32>
    tpu.vector_store %arg10[%c0_104, %c0_105], %117 {strides = array<i32>} : memref<8x128xf32, #tpu.memory_space<vmem>>, vector<8x128xf32>,
    return
  }
}

</mosaic_0001>

<llo_original>
// kernel: noise2style_pallas.1
$region0: #{noise2style_pallas.1}
  #allocation0 [shape = 'u32[]', space=smem, size = 0x4, offset = 0x4, fixed_abs, tag = 'smem constant byte address 0x4 - core index']
  #allocation1 [shape = 'u32[144,128]{1,0:T(1,128)}', space=vmem, size = 0x12000, scoped, tag = 'internal scratch']
  %s0 = inlined_call_operand.hbm [shape: f32[8,16], index: 0, kind: input, shape index: {}]
  %s1 = inlined_call_operand.hbm [shape: bf16[16,512], index: 1, kind: input, shape index: {}]
  %s2 = inlined_call_operand.hbm [shape: f32[1,512], index: 2, kind: input, shape index: {}]
  %s3 = inlined_call_operand.hbm [shape: bf16[3,512,512], index: 3, kind: input, shape index: {}]
  %s4 = inlined_call_operand.hbm [shape: f32[3,1,512], index: 4, kind: input, shape index: {}]
  %s5 = inlined_call_operand.hbm [shape: bf16[2,3,512,512], index: 5, kind: input, shape index: {}]
  %s6 = inlined_call_operand.hbm [shape: f32[2,3,1,512], index: 6, kind: input, shape index: {}]
  %s7 = inlined_call_operand.vmem [shape: bf16[2,512,64], index: 7, kind: input, shape index: {}]
  %s8 = inlined_call_operand.hbm [shape: f32[2,1,64], index: 8, kind: input, shape index: {}]
  %s9 = inlined_call_operand.vmem [shape: f32[8,128], index: 9, kind: input, shape index: {}]
  %s10 = inlined_call_operand.vmem [shape: f32[8,128], index: 10, kind: output, shape index: {}]
  %s11 = sld [smem:[#allocation0]]
  $region82: #{noise2style_pallas.1} parent=0
    _
  %s13 = ssub.s32 1, %s11
  %s14 = scalar_select 0, %s13, %s11
  $region1: #{noise2style_pallas.1} parent=0
    #allocation2 [shape = 'u8[4096]{0}', space=vmem, size = 0x1000, scoped, tag = 'input window, operand 0, single buffered']
    #allocation3 [shape = 's32[1]{0}', space=sflag, size = 0x4, scoped, tag = 'scoped memory for noise2style_pallas.1']
    #allocation4 [shape = 'u8[16384]{0}', space=vmem, size = 0x4000, scoped, tag = 'input window, operand 1, single buffered']
    #allocation5 [shape = 's32[1]{0}', space=sflag, size = 0x4, scoped, tag = 'scoped memory for noise2style_pallas.1']
    #allocation6 [shape = 'u8[2048]{0}', space=vmem, size = 0x800, scoped, tag = 'input window, operand 2, single buffered']
    #allocation7 [shape = 'u8[1572864]{0}', space=vmem, size = 0x180000, scoped, tag = 'input window, operand 3, single buffered']
    #allocation8 [shape = 's32[1]{0}', space=sflag, size = 0x4, scoped, tag = 'scoped memory for noise2style_pallas.1']
    #allocation9 [shape = 'u8[6144]{0}', space=vmem, size = 0x1800, scoped, tag = 'input window, operand 4, single buffered']
    #allocation10 [shape = 'u8[3145728]{0}', space=vmem, size = 0x300000, scoped, tag = 'input window, operand 5, single buffered']
    #allocation11 [shape = 's32[1]{0}', space=sflag, size = 0x4, scoped, tag = 'scoped memory for noise2style_pallas.1']
    #allocation12 [shape = 'u8[12288]{0}', space=vmem, size = 0x3000, scoped, tag = 'input window, operand 6, single buffered']
    #allocation13 [shape = 'u8[1024]{0}', space=vmem, size = 0x400, scoped, tag = 'input window, operand 8, single buffered']
    #allocation14 [shape = 's32[1]{0}', space=sflag, size = 0x4, scoped, tag = 'scoped memory for noise2style_pallas.1']
    %15 = vsyncpa [#allocation3], 0
    %16 = vsyncpa [#allocation5], 0
    %17 = vsyncpa [#allocation8], 0
    %18 = vsyncpa [#allocation11], 0
    %19 = vsyncpa [#allocation14], 0
    // Predicated region
    $region2: #{noise2style_pallas.1} parent=1 // pred_check
      _
    $region3: #{noise2style_pallas.1} parent=1 // pred_check_branch
      %21 = sbr.rel (0) target = $region5
    $region4: #{noise2style_pallas.1} parent=1 // pred_region
      %s23 = ssub.s32 128, 128
      %24 = vsyncadd [#allocation3], %s23
      %s26 = sshll.u32 [#allocation2], 4
      %s27 = int_to_ptr.vmem [resolvable:$true] %s26
      %29 = dma.hbm_to_vmem [thread:$0]  %s0, 128, %s27, [#allocation3]
    $region5: #{noise2style_pallas.1} parent=1 // pred_fallthru
      _
    // Predicated region
    $region6: #{noise2style_pallas.1} parent=1 // pred_check
      _
    $region7: #{noise2style_pallas.1} parent=1 // pred_check_branch
      %31 = sbr.rel (0) target = $region9
    $region8: #{noise2style_pallas.1} parent=1 // pred_region
      %s33 = ssub.s32 512, 512
      %34 = vsyncadd [#allocation5], %s33
      %s35 = sshll.u32 [#allocation4], 4
      %s36 = int_to_ptr.vmem [resolvable:$true] %s35
      %41 = dma.hbm_to_vmem [thread:$0]  %s1, 512, %s36, [#allocation5], 256, 256, 16
    $region9: #{noise2style_pallas.1} parent=1 // pred_fallthru
      _
    // Predicated region
    $region10: #{noise2style_pallas.1} parent=1 // pred_check
      _
    $region11: #{noise2style_pallas.1} parent=1 // pred_check_branch
      %43 = sbr.rel (0) target = $region13
    $region12: #{noise2style_pallas.1} parent=1 // pred_region
      %s45 = ssub.s32 64, 64
      %46 = vsyncadd [#allocation5], %s45
      %s48 = sshll.u32 [#allocation6], 4
      %s49 = int_to_ptr.vmem [resolvable:$true] %s48
      %51 = dma.hbm_to_vmem [thread:$0]  %s2, 64, %s49, [#allocation5]
    $region13: #{noise2style_pallas.1} parent=1 // pred_fallthru
      _
    // Predicated region
    $region14: #{noise2style_pallas.1} parent=1 // pred_check
      _
    $region15: #{noise2style_pallas.1} parent=1 // pred_check_branch
      %53 = sbr.rel (0) target = $region17
    $region16: #{noise2style_pallas.1} parent=1 // pred_region
      %s55 = ssub.s32 49152, 49152
      %56 = vsyncadd [#allocation8], %s55
      %s57 = sshll.u32 [#allocation7], 4
      %s58 = int_to_ptr.vmem [resolvable:$true] %s57
      %63 = dma.hbm_to_vmem [thread:$0]  %s3, 49152, %s58, [#allocation8], 256, 256, 16
    $region17: #{noise2style_pallas.1} parent=1 // pred_fallthru
      _
    // Predicated region
    $region18: #{noise2style_pallas.1} parent=1 // pred_check
      _
    $region19: #{noise2style_pallas.1} parent=1 // pred_check_branch
      %65 = sbr.rel (0) target = $region21
    $region20: #{noise2style_pallas.1} parent=1 // pred_region
      %s67 = ssub.s32 192, 192
      %68 = vsyncadd [#allocation8], %s67
      %s69 = sshll.u32 [#allocation9], 4
      %s70 = int_to_ptr.vmem [resolvable:$true] %s69
      %75 = dma.hbm_to_vmem [thread:$0]  %s4, 192, %s70, [#allocation8], 64, 64, 4
    $region21: #{noise2style_pallas.1} parent=1 // pred_fallthru
      _
    // Predicated region
    $region22: #{noise2style_pallas.1} parent=1 // pred_check
      _
    $region23: #{noise2style_pallas.1} parent=1 // pred_check_branch
      %77 = sbr.rel (0) target = $region25
    $region24: #{noise2style_pallas.1} parent=1 // pred_region
      %s79 = ssub.s32 98304, 98304
      %80 = vsyncadd [#allocation11], %s79
      %s81 = sshll.u32 [#allocation10], 4
      %s82 = int_to_ptr.vmem [resolvable:$true] %s81
      %87 = dma.hbm_to_vmem [thread:$0]  %s5, 98304, %s82, [#allocation11], 256, 256, 16
    $region25: #{noise2style_pallas.1} parent=1 // pred_fallthru
      _
    // Predicated region
    $region26: #{noise2style_pallas.1} parent=1 // pred_check
      _
    $region27: #{noise2style_pallas.1} parent=1 // pred_check_branch
      %89 = sbr.rel (0) target = $region29
    $region28: #{noise2style_pallas.1} parent=1 // pred_region
      %s91 = ssub.s32 384, 384
      %92 = vsyncadd [#allocation11], %s91
      %s93 = sshll.u32 [#allocation12], 4
      %s94 = int_to_ptr.vmem [resolvable:$true] %s93
      %99 = dma.hbm_to_vmem [thread:$0]  %s6, 384, %s94, [#allocation11], 64, 64, 4
    $region29: #{noise2style_pallas.1} parent=1 // pred_fallthru
      _
    // Predicated region
    $region30: #{noise2style_pallas.1} parent=1 // pred_check
      _
    $region31: #{noise2style_pallas.1} parent=1 // pred_check_branch
      %101 = sbr.rel (0) target = $region33
    $region32: #{noise2style_pallas.1} parent=1 // pred_region
      _
    $region33: #{noise2style_pallas.1} parent=1 // pred_fallthru
      _
    // Predicated region
    $region34: #{noise2style_pallas.1} parent=1 // pred_check
      _
    $region35: #{noise2style_pallas.1} parent=1 // pred_check_branch
      %103 = sbr.rel (0) target = $region37
    $region36: #{noise2style_pallas.1} parent=1 // pred_region
      %s105 = ssub.s32 32, 32
      %106 = vsyncadd [#allocation14], %s105
      %s107 = sshll.u32 [#allocation13], 4
      %s108 = int_to_ptr.vmem [resolvable:$true] %s107
      %113 = dma.hbm_to_vmem [thread:$0]  %s8, 32, %s108, [#allocation14], 16, 16, 1
    $region37: #{noise2style_pallas.1} parent=1 // pred_fallthru
      _
    // Predicated region
    $region38: #{noise2style_pallas.1} parent=1 // pred_check
      _
    $region39: #{noise2style_pallas.1} parent=1 // pred_check_branch
      %115 = sbr.rel (0) target = $region41
    $region40: #{noise2style_pallas.1} parent=1 // pred_region
      _
    $region41: #{noise2style_pallas.1} parent=1 // pred_fallthru
      _
    // Predicated region
    $region42: #{noise2style_pallas.1} parent=1 // pred_check
      _
    $region43: #{noise2style_pallas.1} parent=1 // pred_check_branch
      %117 = sbr.rel (0) target = $region45
    $region44: #{noise2style_pallas.1} parent=1 // pred_region
      %118 = dma.done [#allocation3], 128
    $region45: #{noise2style_pallas.1} parent=1 // pred_fallthru
      _
    // Predicated region
    $region46: #{noise2style_pallas.1} parent=1 // pred_check
      _
    $region47: #{noise2style_pallas.1} parent=1 // pred_check_branch
      %120 = sbr.rel (0) target = $region49
    $region48: #{noise2style_pallas.1} parent=1 // pred_region
      %121 = dma.done [#allocation5], 512
    $region49: #{noise2style_pallas.1} parent=1 // pred_fallthru
      _
    // Predicated region
    $region50: #{noise2style_pallas.1} parent=1 // pred_check
      _
    $region51: #{noise2style_pallas.1} parent=1 // pred_check_branch
      %123 = sbr.rel (0) target = $region53
    $region52: #{noise2style_pallas.1} parent=1 // pred_region
      %124 = dma.done [#allocation5], 64
    $region53: #{noise2style_pallas.1} parent=1 // pred_fallthru
      _
    // Predicated region
    $region54: #{noise2style_pallas.1} parent=1 // pred_check
      _
    $region55: #{noise2style_pallas.1} parent=1 // pred_check_branch
      %126 = sbr.rel (0) target = $region57
    $region56: #{noise2style_pallas.1} parent=1 // pred_region
      %127 = dma.done [#allocation8], 49152
    $region57: #{noise2style_pallas.1} parent=1 // pred_fallthru
      _
    // Predicated region
    $region58: #{noise2style_pallas.1} parent=1 // pred_check
      _
    $region59: #{noise2style_pallas.1} parent=1 // pred_check_branch
      %129 = sbr.rel (0) target = $region61
    $region60: #{noise2style_pallas.1} parent=1 // pred_region
      %130 = dma.done [#allocation8], 192
    $region61: #{noise2style_pallas.1} parent=1 // pred_fallthru
      _
    // Predicated region
    $region62: #{noise2style_pallas.1} parent=1 // pred_check
      _
    $region63: #{noise2style_pallas.1} parent=1 // pred_check_branch
      %132 = sbr.rel (0) target = $region65
    $region64: #{noise2style_pallas.1} parent=1 // pred_region
      %133 = dma.done [#allocation11], 98304
    $region65: #{noise2style_pallas.1} parent=1 // pred_fallthru
      _
    // Predicated region
    $region66: #{noise2style_pallas.1} parent=1 // pred_check
      _
    $region67: #{noise2style_pallas.1} parent=1 // pred_check_branch
      %135 = sbr.rel (0) target = $region69
    $region68: #{noise2style_pallas.1} parent=1 // pred_region
      %136 = dma.done [#allocation11], 384
    $region69: #{noise2style_pallas.1} parent=1 // pred_fallthru
      _
    // Predicated region
    $region70: #{noise2style_pallas.1} parent=1 // pred_check
      _
    $region71: #{noise2style_pallas.1} parent=1 // pred_check_branch
      %138 = sbr.rel (0) target = $region73
    $region72: #{noise2style_pallas.1} parent=1 // pred_region
      %139 = dma.done [#allocation14], 32
    $region73: #{noise2style_pallas.1} parent=1 // pred_fallthru
      _
    %v141 = vld [vmem:[#allocation2] sm:$0xff]
    %v142 = vpack.c.bf16 %v141, %v141
    %v143 = vld [vmem:[#allocation4] sm:$0xff]
    %v144 = vld [vmem:[#allocation4 + $0x8] sm:$0xff]
    %v145 = vld [vmem:[#allocation4 + $0x10] sm:$0xff]
    %v146 = vld [vmem:[#allocation4 + $0x18] sm:$0xff]
    %v147 = vld [vmem:[#allocation6] sm:$0xf]
    %v149 = vlaneseq
    %v150 = vshrl.u32 %v149, 7
    %v151 = vsub.s32 0, %v150
    %v152 = vrot.slane %v147, %v151
    %v153 = vlaneseq
    %v154 = vshrl.u32 %v153, 7
    %v155 = vsub.s32 1, %v154
    %v156 = vrot.slane %v147, %v155
    %v157 = vlaneseq
    %v158 = vshrl.u32 %v157, 7
    %v159 = vsub.s32 2, %v158
    %v160 = vrot.slane %v147, %v159
    %v161 = vlaneseq
    %v162 = vshrl.u32 %v161, 7
    %v163 = vsub.s32 3, %v162
    %v164 = vrot.slane %v147, %v163
    %v173 = vunpack.c.l.b16 %v143
    %v174 = vunpack.c.h.b16 %v143
    %v175 = vunpack.c.l.b16 %v144
    %v176 = vunpack.c.h.b16 %v144
    %v177 = vunpack.c.l.b16 %v145
    %v178 = vunpack.c.h.b16 %v145
    %v179 = vunpack.c.l.b16 %v146
    %v180 = vunpack.c.h.b16 %v146
    %v181 = vpack.c.b16 %v177, %v173
    %v182 = vpack.c.b16 %v178, %v174
    %v183 = vpack.c.b16 %v179, %v175
    %v184 = vpack.c.b16 %v180, %v176
    %vm189 = vcmask 130048
    %v191 = vsel %vm189, %v142, 0
    %193 = vmatprep.subr.bf16.mxu0 %v182
    %194 = vmatpush1.bf16.msra.mxu0 %v181
    %195 = vmatprep.subr.bf16.mxu0 0
    %196 = vmatpush1.bf16.msra.mxu0 0
    %197 = vmatprep.subr.bf16.mxu0 0
    %198 = vmatpush1.bf16.msra.mxu0 0
    %199 = vmatprep.subr.bf16.mxu0 0
    %200 = vmatpush1.bf16.msra.mxu0 0
    %201 = vmatprep.subr.bf16.mxu0 0
    %202 = vmatpush1.bf16.msra.mxu0 0
    %203 = vmatprep.subr.bf16.mxu0 0
    %204 = vmatpush1.bf16.msra.mxu0 0
    %205 = vmatprep.subr.bf16.mxu0 0
    %206 = vmatpush1.bf16.msra.mxu0 0
    %207 = vmatprep.subr.bf16.mxu0 0
    %208 = vmatpush1.bf16.msra.mxu0 0
    %209 = vmatprep.subr.bf16.mxu0 0
    %210 = vmatpush1.bf16.msra.mxu0 0
    %211 = vmatprep.subr.bf16.mxu0 0
    %212 = vmatpush1.bf16.msra.mxu0 0
    %213 = vmatprep.subr.bf16.mxu0 0
    %214 = vmatpush1.bf16.msra.mxu0 0
    %215 = vmatprep.subr.bf16.mxu0 0
    %216 = vmatpush1.bf16.msra.mxu0 0
    %217 = vmatprep.subr.bf16.mxu0 0
    %218 = vmatpush1.bf16.msra.mxu0 0
    %219 = vmatprep.subr.bf16.mxu0 0
    %220 = vmatpush1.bf16.msra.mxu0 0
    %221 = vmatprep.subr.bf16.mxu0 0
    %222 = vmatpush1.bf16.msra.mxu0 0
    %223 = vmatprep.subr.bf16.mxu0 0
    %224 = vmatpush1.bf16.msra.mxu0 0
    %225 = vmatprep.mubr.bf16.mxu0 0
    %226 = vmatmul.mubr.bf16.gmra.mrb[0].mxu0 %v191
    %v227 = vpop.f32.mrb[0].mxu0
    %v228 = vadd.f32 %v152, %v227
    %v229 = vpop.f32.mrb[0].mxu0
    %v230 = vadd.f32 %v156, %v229
    %v231 = vpop.f32.mrb[0].mxu0
    %v232 = vpop.f32.mrb[0].mxu0
    %233 = vdwg.mxu0
    %234 = vmatprep.subr.bf16.mxu0 %v184
    %235 = vmatpush1.bf16.msra.mxu0 %v183
    %236 = vmatprep.subr.bf16.mxu0 0
    %237 = vmatpush1.bf16.msra.mxu0 0
    %238 = vmatprep.subr.bf16.mxu0 0
    %239 = vmatpush1.bf16.msra.mxu0 0
    %240 = vmatprep.subr.bf16.mxu0 0
    %241 = vmatpush1.bf16.msra.mxu0 0
    %242 = vmatprep.subr.bf16.mxu0 0
    %243 = vmatpush1.bf16.msra.mxu0 0
    %244 = vmatprep.subr.bf16.mxu0 0
    %245 = vmatpush1.bf16.msra.mxu0 0
    %246 = vmatprep.subr.bf16.mxu0 0
    %247 = vmatpush1.bf16.msra.mxu0 0
    %248 = vmatprep.subr.bf16.mxu0 0
    %249 = vmatpush1.bf16.msra.mxu0 0
    %250 = vmatprep.subr.bf16.mxu0 0
    %251 = vmatpush1.bf16.msra.mxu0 0
    %252 = vmatprep.subr.bf16.mxu0 0
    %253 = vmatpush1.bf16.msra.mxu0 0
    %254 = vmatprep.subr.bf16.mxu0 0
    %255 = vmatpush1.bf16.msra.mxu0 0
    %256 = vmatprep.subr.bf16.mxu0 0
    %257 = vmatpush1.bf16.msra.mxu0 0
    %258 = vmatprep.subr.bf16.mxu0 0
    %259 = vmatpush1.bf16.msra.mxu0 0
    %260 = vmatprep.subr.bf16.mxu0 0
    %261 = vmatpush1.bf16.msra.mxu0 0
    %262 = vmatprep.subr.bf16.mxu0 0
    %263 = vmatpush1.bf16.msra.mxu0 0
    %264 = vmatprep.subr.bf16.mxu0 0
    %265 = vmatpush1.bf16.msra.mxu0 0
    %266 = vmatprep.mubr.bf16.mxu0 0
    %267 = vmatmul.mubr.bf16.gmra.mrb[0].mxu0 %v191
    %v268 = vpop.f32.mrb[0].mxu0
    %v269 = vadd.f32 %v160, %v268
    %v270 = vpop.f32.mrb[0].mxu0
    %v271 = vadd.f32 %v164, %v270
    %v272 = vpop.f32.mrb[0].mxu0
    %v273 = vpop.f32.mrb[0].mxu0
    %274 = vdwg.mxu0
    %v275 = vmax.f32 %v228, 0.0
    %v276 = vmax.f32 %v230, 0.0
    %v277 = vmax.f32 %v269, 0.0
    %v278 = vmax.f32 %v271, 0.0
    %v279 = vpack.c.bf16 %v275, %v275
    %v280 = vpack.c.bf16 %v276, %v276
    %v281 = vpack.c.bf16 %v277, %v277
    %v282 = vpack.c.bf16 %v278, %v278
    %v283 = vld [vmem:[#allocation7] sm:$0xff]
    %v284 = vld [vmem:[#allocation7 + $0x8] sm:$0xff]
    %v285 = vld [vmem:[#allocation7 + $0x10] sm:$0xff]
    %v286 = vld [vmem:[#allocation7 + $0x18] sm:$0xff]
    %v287 = vld [vmem:[#allocation7 + $0x20] sm:$0xff]
    %v288 = vld [vmem:[#allocation7 + $0x28] sm:$0xff]
    %v289 = vld [vmem:[#allocation7 + $0x30] sm:$0xff]
    %v290 = vld [vmem:[#allocation7 + $0x38] sm:$0xff]
    %v291 = vld [vmem:[#allocation7 + $0x40] sm:$0xff]
    %v292 = vld [vmem:[#allocation7 + $0x48] sm:$0xff]
    %v293 = vld [vmem:[#allocation7 + $0x50] sm:$0xff]
    %v294 = vld [vmem:[#allocation7 + $0x58] sm:$0xff]
    %v295 = vld [vmem:[#allocation7 + $0x60] sm:$0xff]
    %v296 = vld [vmem:[#allocation7 + $0x68] sm:$0xff]
    %v297 = vld [vmem:[#allocation7 + $0x70] sm:$0xff]
    %v298 = vld [vmem:[#allocation7 + $0x78] sm:$0xff]
    %v299 = vld [vmem:[#allocation7 + $0x80] sm:$0xff]
    %v300 = vld [vmem:[#allocation7 + $0x88] sm:$0xff]
    %v301 = vld [vmem:[#allocation7 + $0x90] sm:$0xff]
    %v302 = vld [vmem:[#allocation7 + $0x98] sm:$0xff]
    %v303 = vld [vmem:[#allocation7 + $0xa0] sm:$0xff]
    %v304 = vld [vmem:[#allocation7 + $0xa8] sm:$0xff]
    %v305 = vld [vmem:[#allocation7 + $0xb0] sm:$0xff]
    %v306 = vld [vmem:[#allocation7 + $0xb8] sm:$0xff]
    %v307 = vld [vmem:[#allocation7 + $0xc0] sm:$0xff]
    %v308 = vld [vmem:[#allocation7 + $0xc8] sm:$0xff]
    %v309 = vld [vmem:[#allocation7 + $0xd0] sm:$0xff]
    %v310 = vld [vmem:[#allocation7 + $0xd8] sm:$0xff]
    %v311 = vld [vmem:[#allocation7 + $0xe0] sm:$0xff]
    %v312 = vld [vmem:[#allocation7 + $0xe8] sm:$0xff]
    %v313 = vld [vmem:[#allocation7 + $0xf0] sm:$0xff]
    %v314 = vld [vmem:[#allocation7 + $0xf8] sm:$0xff]
    %v315 = vld [vmem:[#allocation7 + $0x100] sm:$0xff]
    %v316 = vld [vmem:[#allocation7 + $0x108] sm:$0xff]
    %v317 = vld [vmem:[#allocation7 + $0x110] sm:$0xff]
    %v318 = vld [vmem:[#allocation7 + $0x118] sm:$0xff]
    %v319 = vld [vmem:[#allocation7 + $0x120] sm:$0xff]
    %v320 = vld [vmem:[#allocation7 + $0x128] sm:$0xff]
    %v321 = vld [vmem:[#allocation7 + $0x130] sm:$0xff]
    %v322 = vld [vmem:[#allocation7 + $0x138] sm:$0xff]
    %v323 = vld [vmem:[#allocation7 + $0x140] sm:$0xff]
    %v324 = vld [vmem:[#allocation7 + $0x148] sm:$0xff]
    %v325 = vld [vmem:[#allocation7 + $0x150] sm:$0xff]
    %v326 = vld [vmem:[#allocation7 + $0x158] sm:$0xff]
    %v327 = vld [vmem:[#allocation7 + $0x160] sm:$0xff]
    %v328 = vld [vmem:[#allocation7 + $0x168] sm:$0xff]
    %v329 = vld [vmem:[#allocation7 + $0x170] sm:$0xff]
    %v330 = vld [vmem:[#allocation7 + $0x178] sm:$0xff]
    %v331 = vld [vmem:[#allocation7 + $0x180] sm:$0xff]
    %v332 = vld [vmem:[#allocation7 + $0x188] sm:$0xff]
    %v333 = vld [vmem:[#allocation7 + $0x190] sm:$0xff]
    %v334 = vld [vmem:[#allocation7 + $0x198] sm:$0xff]
    %v335 = vld [vmem:[#allocation7 + $0x1a0] sm:$0xff]
    %v336 = vld [vmem:[#allocation7 + $0x1a8] sm:$0xff]
    %v337 = vld [vmem:[#allocation7 + $0x1b0] sm:$0xff]
    %v338 = vld [vmem:[#allocation7 + $0x1b8] sm:$0xff]
    %v339 = vld [vmem:[#allocation7 + $0x1c0] sm:$0xff]
    %v340 = vld [vmem:[#allocation7 + $0x1c8] sm:$0xff]
    %v341 = vld [vmem:[#allocation7 + $0x1d0] sm:$0xff]
    %v342 = vld [vmem:[#allocation7 + $0x1d8] sm:$0xff]
    %v343 = vld [vmem:[#allocation7 + $0x1e0] sm:$0xff]
    %v344 = vld [vmem:[#allocation7 + $0x1e8] sm:$0xff]
    %v345 = vld [vmem:[#allocation7 + $0x1f0] sm:$0xff]
    %v346 = vld [vmem:[#allocation7 + $0x1f8] sm:$0xff]
    %v347 = vld [vmem:[#allocation7 + $0x200] sm:$0xff]
    %v348 = vld [vmem:[#allocation7 + $0x208] sm:$0xff]
    %v349 = vld [vmem:[#allocation7 + $0x210] sm:$0xff]
    %v350 = vld [vmem:[#allocation7 + $0x218] sm:$0xff]
    %v351 = vld [vmem:[#allocation7 + $0x220] sm:$0xff]
    %v352 = vld [vmem:[#allocation7 + $0x228] sm:$0xff]
    %v353 = vld [vmem:[#allocation7 + $0x230] sm:$0xff]
    %v354 = vld [vmem:[#allocation7 + $0x238] sm:$0xff]
    %v355 = vld [vmem:[#allocation7 + $0x240] sm:$0xff]
    %v356 = vld [vmem:[#allocation7 + $0x248] sm:$0xff]
    %v357 = vld [vmem:[#allocation7 + $0x250] sm:$0xff]
    %v358 = vld [vmem:[#allocation7 + $0x258] sm:$0xff]
    %v359 = vld [vmem:[#allocation7 + $0x260] sm:$0xff]
    %v360 = vld [vmem:[#allocation7 + $0x268] sm:$0xff]
    %v361 = vld [vmem:[#allocation7 + $0x270] sm:$0xff]
    %v362 = vld [vmem:[#allocation7 + $0x278] sm:$0xff]
    %v363 = vld [vmem:[#allocation7 + $0x280] sm:$0xff]
    %v364 = vld [vmem:[#allocation7 + $0x288] sm:$0xff]
    %v365 = vld [vmem:[#allocation7 + $0x290] sm:$0xff]
    %v366 = vld [vmem:[#allocation7 + $0x298] sm:$0xff]
    %v367 = vld [vmem:[#allocation7 + $0x2a0] sm:$0xff]
    %v368 = vld [vmem:[#allocation7 + $0x2a8] sm:$0xff]
    %v369 = vld [vmem:[#allocation7 + $0x2b0] sm:$0xff]
    %v370 = vld [vmem:[#allocation7 + $0x2b8] sm:$0xff]
    %v371 = vld [vmem:[#allocation7 + $0x2c0] sm:$0xff]
    %v372 = vld [vmem:[#allocation7 + $0x2c8] sm:$0xff]
    %v373 = vld [vmem:[#allocation7 + $0x2d0] sm:$0xff]
    %v374 = vld [vmem:[#allocation7 + $0x2d8] sm:$0xff]
    %v375 = vld [vmem:[#allocation7 + $0x2e0] sm:$0xff]
    %v376 = vld [vmem:[#allocation7 + $0x2e8] sm:$0xff]
    %v377 = vld [vmem:[#allocation7 + $0x2f0] sm:$0xff]
    %v378 = vld [vmem:[#allocation7 + $0x2f8] sm:$0xff]
    %v379 = vld [vmem:[#allocation7 + $0x300] sm:$0xff]
    %v380 = vld [vmem:[#allocation7 + $0x308] sm:$0xff]
    %v381 = vld [vmem:[#allocation7 + $0x310] sm:$0xff]
    %v382 = vld [vmem:[#allocation7 + $0x318] sm:$0xff]
    %v383 = vld [vmem:[#allocation7 + $0x320] sm:$0xff]
    %v384 = vld [vmem:[#allocation7 + $0x328] sm:$0xff]
    %v385 = vld [vmem:[#allocation7 + $0x330] sm:$0xff]
    %v386 = vld [vmem:[#allocation7 + $0x338] sm:$0xff]
    %v387 = vld [vmem:[#allocation7 + $0x340] sm:$0xff]
    %v388 = vld [vmem:[#allocation7 + $0x348] sm:$0xff]
    %v389 = vld [vmem:[#allocation7 + $0x350] sm:$0xff]
    %v390 = vld [vmem:[#allocation7 + $0x358] sm:$0xff]
    %v391 = vld [vmem:[#allocation7 + $0x360] sm:$0xff]
    %v392 = vld [vmem:[#allocation7 + $0x368] sm:$0xff]
    %v393 = vld [vmem:[#allocation7 + $0x370] sm:$0xff]
    %v394 = vld [vmem:[#allocation7 + $0x378] sm:$0xff]
    %v395 = vld [vmem:[#allocation7 + $0x380] sm:$0xff]
    %v396 = vld [vmem:[#allocation7 + $0x388] sm:$0xff]
    %v397 = vld [vmem:[#allocation7 + $0x390] sm:$0xff]
    %v398 = vld [vmem:[#allocation7 + $0x398] sm:$0xff]
    %v399 = vld [vmem:[#allocation7 + $0x3a0] sm:$0xff]
    %v400 = vld [vmem:[#allocation7 + $0x3a8] sm:$0xff]
    %v401 = vld [vmem:[#allocation7 + $0x3b0] sm:$0xff]
    %v402 = vld [vmem:[#allocation7 + $0x3b8] sm:$0xff]
    %v403 = vld [vmem:[#allocation7 + $0x3c0] sm:$0xff]
    %v404 = vld [vmem:[#allocation7 + $0x3c8] sm:$0xff]
    %v405 = vld [vmem:[#allocation7 + $0x3d0] sm:$0xff]
    %v406 = vld [vmem:[#allocation7 + $0x3d8] sm:$0xff]
    %v407 = vld [vmem:[#allocation7 + $0x3e0] sm:$0xff]
    %v408 = vld [vmem:[#allocation7 + $0x3e8] sm:$0xff]
    %v409 = vld [vmem:[#allocation7 + $0x3f0] sm:$0xff]
    %v410 = vld [vmem:[#allocation7 + $0x3f8] sm:$0xff]
    %v411 = vld [vmem:[#allocation9] sm:$0xf]
    %v413 = vlaneseq
    %v414 = vshrl.u32 %v413, 7
    %v415 = vsub.s32 0, %v414
    %v416 = vrot.slane %v411, %v415
    %v417 = vlaneseq
    %v418 = vshrl.u32 %v417, 7
    %v419 = vsub.s32 1, %v418
    %v420 = vrot.slane %v411, %v419
    %v421 = vlaneseq
    %v422 = vshrl.u32 %v421, 7
    %v423 = vsub.s32 2, %v422
    %v424 = vrot.slane %v411, %v423
    %v425 = vlaneseq
    %v426 = vshrl.u32 %v425, 7
    %v427 = vsub.s32 3, %v426
    %v428 = vrot.slane %v411, %v427
    %v561 = vunpack.c.l.b16 %v283
    %v562 = vunpack.c.h.b16 %v283
    %v563 = vunpack.c.l.b16 %v284
    %v564 = vunpack.c.h.b16 %v284
    %v565 = vunpack.c.l.b16 %v285
    %v566 = vunpack.c.h.b16 %v285
    %v567 = vunpack.c.l.b16 %v286
    %v568 = vunpack.c.h.b16 %v286
    %v569 = vunpack.c.l.b16 %v287
    %v570 = vunpack.c.h.b16 %v287
    %v571 = vunpack.c.l.b16 %v288
    %v572 = vunpack.c.h.b16 %v288
    %v573 = vunpack.c.l.b16 %v289
    %v574 = vunpack.c.h.b16 %v289
    %v575 = vunpack.c.l.b16 %v290
    %v576 = vunpack.c.h.b16 %v290
    %v577 = vunpack.c.l.b16 %v291
    %v578 = vunpack.c.h.b16 %v291
    %v579 = vunpack.c.l.b16 %v292
    %v580 = vunpack.c.h.b16 %v292
    %v581 = vunpack.c.l.b16 %v293
    %v582 = vunpack.c.h.b16 %v293
    %v583 = vunpack.c.l.b16 %v294
    %v584 = vunpack.c.h.b16 %v294
    %v585 = vunpack.c.l.b16 %v295
    %v586 = vunpack.c.h.b16 %v295
    %v587 = vunpack.c.l.b16 %v296
    %v588 = vunpack.c.h.b16 %v296
    %v589 = vunpack.c.l.b16 %v297
    %v590 = vunpack.c.h.b16 %v297
    %v591 = vunpack.c.l.b16 %v298
    %v592 = vunpack.c.h.b16 %v298
    %v593 = vunpack.c.l.b16 %v299
    %v594 = vunpack.c.h.b16 %v299
    %v595 = vunpack.c.l.b16 %v300
    %v596 = vunpack.c.h.b16 %v300
    %v597 = vunpack.c.l.b16 %v301
    %v598 = vunpack.c.h.b16 %v301
    %v599 = vunpack.c.l.b16 %v302
    %v600 = vunpack.c.h.b16 %v302
    %v601 = vunpack.c.l.b16 %v303
    %v602 = vunpack.c.h.b16 %v303
    %v603 = vunpack.c.l.b16 %v304
    %v604 = vunpack.c.h.b16 %v304
    %v605 = vunpack.c.l.b16 %v305
    %v606 = vunpack.c.h.b16 %v305
    %v607 = vunpack.c.l.b16 %v306
    %v608 = vunpack.c.h.b16 %v306
    %v609 = vunpack.c.l.b16 %v307
    %v610 = vunpack.c.h.b16 %v307
    %v611 = vunpack.c.l.b16 %v308
    %v612 = vunpack.c.h.b16 %v308
    %v613 = vunpack.c.l.b16 %v309
    %v614 = vunpack.c.h.b16 %v309
    %v615 = vunpack.c.l.b16 %v310
    %v616 = vunpack.c.h.b16 %v310
    %v617 = vunpack.c.l.b16 %v311
    %v618 = vunpack.c.h.b16 %v311
    %v619 = vunpack.c.l.b16 %v312
    %v620 = vunpack.c.h.b16 %v312
    %v621 = vunpack.c.l.b16 %v313
    %v622 = vunpack.c.h.b16 %v313
    %v623 = vunpack.c.l.b16 %v314
    %v624 = vunpack.c.h.b16 %v314
    %v625 = vunpack.c.l.b16 %v315
    %v626 = vunpack.c.h.b16 %v315
    %v627 = vunpack.c.l.b16 %v316
    %v628 = vunpack.c.h.b16 %v316
    %v629 = vunpack.c.l.b16 %v317
    %v630 = vunpack.c.h.b16 %v317
    %v631 = vunpack.c.l.b16 %v318
    %v632 = vunpack.c.h.b16 %v318
    %v633 = vunpack.c.l.b16 %v319
    %v634 = vunpack.c.h.b16 %v319
    %v635 = vunpack.c.l.b16 %v320
    %v636 = vunpack.c.h.b16 %v320
    %v637 = vunpack.c.l.b16 %v321
    %v638 = vunpack.c.h.b16 %v321
    %v639 = vunpack.c.l.b16 %v322
    %v640 = vunpack.c.h.b16 %v322
    %v641 = vunpack.c.l.b16 %v323
    %v642 = vunpack.c.h.b16 %v323
    %v643 = vunpack.c.l.b16 %v324
    %v644 = vunpack.c.h.b16 %v324
    %v645 = vunpack.c.l.b16 %v325
    %v646 = vunpack.c.h.b16 %v325
    %v647 = vunpack.c.l.b16 %v326
    %v648 = vunpack.c.h.b16 %v326
    %v649 = vunpack.c.l.b16 %v327
    %v650 = vunpack.c.h.b16 %v327
    %v651 = vunpack.c.l.b16 %v328
    %v652 = vunpack.c.h.b16 %v328
    %v653 = vunpack.c.l.b16 %v329
    %v654 = vunpack.c.h.b16 %v329
    %v655 = vunpack.c.l.b16 %v330
    %v656 = vunpack.c.h.b16 %v330
    %v657 = vunpack.c.l.b16 %v331
    %v658 = vunpack.c.h.b16 %v331
    %v659 = vunpack.c.l.b16 %v332
    %v660 = vunpack.c.h.b16 %v332
    %v661 = vunpack.c.l.b16 %v333
    %v662 = vunpack.c.h.b16 %v333
    %v663 = vunpack.c.l.b16 %v334
    %v664 = vunpack.c.h.b16 %v334
    %v665 = vunpack.c.l.b16 %v335
    %v666 = vunpack.c.h.b16 %v335
    %v667 = vunpack.c.l.b16 %v336
    %v668 = vunpack.c.h.b16 %v336
    %v669 = vunpack.c.l.b16 %v337
    %v670 = vunpack.c.h.b16 %v337
    %v671 = vunpack.c.l.b16 %v338
    %v672 = vunpack.c.h.b16 %v338
    %v673 = vunpack.c.l.b16 %v339
    %v674 = vunpack.c.h.b16 %v339
    %v675 = vunpack.c.l.b16 %v340
    %v676 = vunpack.c.h.b16 %v340
    %v677 = vunpack.c.l.b16 %v341
    %v678 = vunpack.c.h.b16 %v341
    %v679 = vunpack.c.l.b16 %v342
    %v680 = vunpack.c.h.b16 %v342
    %v681 = vunpack.c.l.b16 %v343
    %v682 = vunpack.c.h.b16 %v343
    %v683 = vunpack.c.l.b16 %v344
    %v684 = vunpack.c.h.b16 %v344
    %v685 = vunpack.c.l.b16 %v345
    %v686 = vunpack.c.h.b16 %v345
    %v687 = vunpack.c.l.b16 %v346
    %v688 = vunpack.c.h.b16 %v346
    %v689 = vunpack.c.l.b16 %v347
    %v690 = vunpack.c.h.b16 %v347
    %v691 = vunpack.c.l.b16 %v348
    %v692 = vunpack.c.h.b16 %v348
    %v693 = vunpack.c.l.b16 %v349
    %v694 = vunpack.c.h.b16 %v349
    %v695 = vunpack.c.l.b16 %v350
    %v696 = vunpack.c.h.b16 %v350
    %v697 = vunpack.c.l.b16 %v351
    %v698 = vunpack.c.h.b16 %v351
    %v699 = vunpack.c.l.b16 %v352
    %v700 = vunpack.c.h.b16 %v352
    %v701 = vunpack.c.l.b16 %v353
    %v702 = vunpack.c.h.b16 %v353
    %v703 = vunpack.c.l.b16 %v354
    %v704 = vunpack.c.h.b16 %v354
    %v705 = vunpack.c.l.b16 %v355
    %v706 = vunpack.c.h.b16 %v355
    %v707 = vunpack.c.l.b16 %v356
    %v708 = vunpack.c.h.b16 %v356
    %v709 = vunpack.c.l.b16 %v357
    %v710 = vunpack.c.h.b16 %v357
    %v711 = vunpack.c.l.b16 %v358
    %v712 = vunpack.c.h.b16 %v358
    %v713 = vunpack.c.l.b16 %v359
    %v714 = vunpack.c.h.b16 %v359
    %v715 = vunpack.c.l.b16 %v360
    %v716 = vunpack.c.h.b16 %v360
    %v717 = vunpack.c.l.b16 %v361
    %v718 = vunpack.c.h.b16 %v361
    %v719 = vunpack.c.l.b16 %v362
    %v720 = vunpack.c.h.b16 %v362
    %v721 = vunpack.c.l.b16 %v363
    %v722 = vunpack.c.h.b16 %v363
    %v723 = vunpack.c.l.b16 %v364
    %v724 = vunpack.c.h.b16 %v364
    %v725 = vunpack.c.l.b16 %v365
    %v726 = vunpack.c.h.b16 %v365
    %v727 = vunpack.c.l.b16 %v366
    %v728 = vunpack.c.h.b16 %v366
    %v729 = vunpack.c.l.b16 %v367
    %v730 = vunpack.c.h.b16 %v367
    %v731 = vunpack.c.l.b16 %v368
    %v732 = vunpack.c.h.b16 %v368
    %v733 = vunpack.c.l.b16 %v369
    %v734 = vunpack.c.h.b16 %v369
    %v735 = vunpack.c.l.b16 %v370
    %v736 = vunpack.c.h.b16 %v370
    %v737 = vunpack.c.l.b16 %v371
    %v738 = vunpack.c.h.b16 %v371
    %v739 = vunpack.c.l.b16 %v372
    %v740 = vunpack.c.h.b16 %v372
    %v741 = vunpack.c.l.b16 %v373
    %v742 = vunpack.c.h.b16 %v373
    %v743 = vunpack.c.l.b16 %v374
    %v744 = vunpack.c.h.b16 %v374
    %v745 = vunpack.c.l.b16 %v375
    %v746 = vunpack.c.h.b16 %v375
    %v747 = vunpack.c.l.b16 %v376
    %v748 = vunpack.c.h.b16 %v376
    %v749 = vunpack.c.l.b16 %v377
    %v750 = vunpack.c.h.b16 %v377
    %v751 = vunpack.c.l.b16 %v378
    %v752 = vunpack.c.h.b16 %v378
    %v753 = vunpack.c.l.b16 %v379
    %v754 = vunpack.c.h.b16 %v379
    %v755 = vunpack.c.l.b16 %v380
    %v756 = vunpack.c.h.b16 %v380
    %v757 = vunpack.c.l.b16 %v381
    %v758 = vunpack.c.h.b16 %v381
    %v759 = vunpack.c.l.b16 %v382
    %v760 = vunpack.c.h.b16 %v382
    %v761 = vunpack.c.l.b16 %v383
    %v762 = vunpack.c.h.b16 %v383
    %v763 = vunpack.c.l.b16 %v384
    %v764 = vunpack.c.h.b16 %v384
    %v765 = vunpack.c.l.b16 %v385
    %v766 = vunpack.c.h.b16 %v385
    %v767 = vunpack.c.l.b16 %v386
    %v768 = vunpack.c.h.b16 %v386
    %v769 = vunpack.c.l.b16 %v387
    %v770 = vunpack.c.h.b16 %v387
    %v771 = vunpack.c.l.b16 %v388
    %v772 = vunpack.c.h.b16 %v388
    %v773 = vunpack.c.l.b16 %v389
    %v774 = vunpack.c.h.b16 %v389
    %v775 = vunpack.c.l.b16 %v390
    %v776 = vunpack.c.h.b16 %v390
    %v777 = vunpack.c.l.b16 %v391
    %v778 = vunpack.c.h.b16 %v391
    %v779 = vunpack.c.l.b16 %v392
    %v780 = vunpack.c.h.b16 %v392
    %v781 = vunpack.c.l.b16 %v393
    %v782 = vunpack.c.h.b16 %v393
    %v783 = vunpack.c.l.b16 %v394
    %v784 = vunpack.c.h.b16 %v394
    %v785 = vunpack.c.l.b16 %v395
    %v786 = vunpack.c.h.b16 %v395
    %v787 = vunpack.c.l.b16 %v396
    %v788 = vunpack.c.h.b16 %v396
    %v789 = vunpack.c.l.b16 %v397
    %v790 = vunpack.c.h.b16 %v397
    %v791 = vunpack.c.l.b16 %v398
    %v792 = vunpack.c.h.b16 %v398
    %v793 = vunpack.c.l.b16 %v399
    %v794 = vunpack.c.h.b16 %v399
    %v795 = vunpack.c.l.b16 %v400
    %v796 = vunpack.c.h.b16 %v400
    %v797 = vunpack.c.l.b16 %v401
    %v798 = vunpack.c.h.b16 %v401
    %v799 = vunpack.c.l.b16 %v402
    %v800 = vunpack.c.h.b16 %v402
    %v801 = vunpack.c.l.b16 %v403
    %v802 = vunpack.c.h.b16 %v403
    %v803 = vunpack.c.l.b16 %v404
    %v804 = vunpack.c.h.b16 %v404
    %v805 = vunpack.c.l.b16 %v405
    %v806 = vunpack.c.h.b16 %v405
    %v807 = vunpack.c.l.b16 %v406
    %v808 = vunpack.c.h.b16 %v406
    %v809 = vunpack.c.l.b16 %v407
    %v810 = vunpack.c.h.b16 %v407
    %v811 = vunpack.c.l.b16 %v408
    %v812 = vunpack.c.h.b16 %v408
    %v813 = vunpack.c.l.b16 %v409
    %v814 = vunpack.c.h.b16 %v409
    %v815 = vunpack.c.l.b16 %v410
    %v816 = vunpack.c.h.b16 %v410
    %v817 = vpack.c.b16 %v565, %v561
    %v818 = vpack.c.b16 %v566, %v562
    %v819 = vpack.c.b16 %v567, %v563
    %v820 = vpack.c.b16 %v568, %v564
    %v821 = vpack.c.b16 %v573, %v569
    %v822 = vpack.c.b16 %v574, %v570
    %v823 = vpack.c.b16 %v575, %v571
    %v824 = vpack.c.b16 %v576, %v572
    %v825 = vpack.c.b16 %v581, %v577
    %v826 = vpack.c.b16 %v582, %v578
    %v827 = vpack.c.b16 %v583, %v579
    %v828 = vpack.c.b16 %v584, %v580
    %v829 = vpack.c.b16 %v589, %v585
    %v830 = vpack.c.b16 %v590, %v586
    %v831 = vpack.c.b16 %v591, %v587
    %v832 = vpack.c.b16 %v592, %v588
    %v833 = vpack.c.b16 %v597, %v593
    %v834 = vpack.c.b16 %v598, %v594
    %v835 = vpack.c.b16 %v599, %v595
    %v836 = vpack.c.b16 %v600, %v596
    %v837 = vpack.c.b16 %v605, %v601
    %v838 = vpack.c.b16 %v606, %v602
    %v839 = vpack.c.b16 %v607, %v603
    %v840 = vpack.c.b16 %v608, %v604
    %v841 = vpack.c.b16 %v613, %v609
    %v842 = vpack.c.b16 %v614, %v610
    %v843 = vpack.c.b16 %v615, %v611
    %v844 = vpack.c.b16 %v616, %v612
    %v845 = vpack.c.b16 %v621, %v617
    %v846 = vpack.c.b16 %v622, %v618
    %v847 = vpack.c.b16 %v623, %v619
    %v848 = vpack.c.b16 %v624, %v620
    %v849 = vpack.c.b16 %v629, %v625
    %v850 = vpack.c.b16 %v630, %v626
    %v851 = vpack.c.b16 %v631, %v627
    %v852 = vpack.c.b16 %v632, %v628
    %v853 = vpack.c.b16 %v637, %v633
    %v854 = vpack.c.b16 %v638, %v634
    %v855 = vpack.c.b16 %v639, %v635
    %v856 = vpack.c.b16 %v640, %v636
    %v857 = vpack.c.b16 %v645, %v641
    %v858 = vpack.c.b16 %v646, %v642
    %v859 = vpack.c.b16 %v647, %v643
    %v860 = vpack.c.b16 %v648, %v644
    %v861 = vpack.c.b16 %v653, %v649
    %v862 = vpack.c.b16 %v654, %v650
    %v863 = vpack.c.b16 %v655, %v651
    %v864 = vpack.c.b16 %v656, %v652
    %v865 = vpack.c.b16 %v661, %v657
    %v866 = vpack.c.b16 %v662, %v658
    %v867 = vpack.c.b16 %v663, %v659
    %v868 = vpack.c.b16 %v664, %v660
    %v869 = vpack.c.b16 %v669, %v665
    %v870 = vpack.c.b16 %v670, %v666
    %v871 = vpack.c.b16 %v671, %v667
    %v872 = vpack.c.b16 %v672, %v668
    %v873 = vpack.c.b16 %v677, %v673
    %v874 = vpack.c.b16 %v678, %v674
    %v875 = vpack.c.b16 %v679, %v675
    %v876 = vpack.c.b16 %v680, %v676
    %v877 = vpack.c.b16 %v685, %v681
    %v878 = vpack.c.b16 %v686, %v682
    %v879 = vpack.c.b16 %v687, %v683
    %v880 = vpack.c.b16 %v688, %v684
    %v881 = vpack.c.b16 %v693, %v689
    %v882 = vpack.c.b16 %v694, %v690
    %v883 = vpack.c.b16 %v695, %v691
    %v884 = vpack.c.b16 %v696, %v692
    %v885 = vpack.c.b16 %v701, %v697
    %v886 = vpack.c.b16 %v702, %v698
    %v887 = vpack.c.b16 %v703, %v699
    %v888 = vpack.c.b16 %v704, %v700
    %v889 = vpack.c.b16 %v709, %v705
    %v890 = vpack.c.b16 %v710, %v706
    %v891 = vpack.c.b16 %v711, %v707
    %v892 = vpack.c.b16 %v712, %v708
    %v893 = vpack.c.b16 %v717, %v713
    %v894 = vpack.c.b16 %v718, %v714
    %v895 = vpack.c.b16 %v719, %v715
    %v896 = vpack.c.b16 %v720, %v716
    %v897 = vpack.c.b16 %v725, %v721
    %v898 = vpack.c.b16 %v726, %v722
    %v899 = vpack.c.b16 %v727, %v723
    %v900 = vpack.c.b16 %v728, %v724
    %v901 = vpack.c.b16 %v733, %v729
    %v902 = vpack.c.b16 %v734, %v730
    %v903 = vpack.c.b16 %v735, %v731
    %v904 = vpack.c.b16 %v736, %v732
    %v905 = vpack.c.b16 %v741, %v737
    %v906 = vpack.c.b16 %v742, %v738
    %v907 = vpack.c.b16 %v743, %v739
    %v908 = vpack.c.b16 %v744, %v740
    %v909 = vpack.c.b16 %v749, %v745
    %v910 = vpack.c.b16 %v750, %v746
    %v911 = vpack.c.b16 %v751, %v747
    %v912 = vpack.c.b16 %v752, %v748
    %v913 = vpack.c.b16 %v757, %v753
    %v914 = vpack.c.b16 %v758, %v754
    %v915 = vpack.c.b16 %v759, %v755
    %v916 = vpack.c.b16 %v760, %v756
    %v917 = vpack.c.b16 %v765, %v761
    %v918 = vpack.c.b16 %v766, %v762
    %v919 = vpack.c.b16 %v767, %v763
    %v920 = vpack.c.b16 %v768, %v764
    %v921 = vpack.c.b16 %v773, %v769
    %v922 = vpack.c.b16 %v774, %v770
    %v923 = vpack.c.b16 %v775, %v771
    %v924 = vpack.c.b16 %v776, %v772
    %v925 = vpack.c.b16 %v781, %v777
    %v926 = vpack.c.b16 %v782, %v778
    %v927 = vpack.c.b16 %v783, %v779
    %v928 = vpack.c.b16 %v784, %v780
    %v929 = vpack.c.b16 %v789, %v785
    %v930 = vpack.c.b16 %v790, %v786
    %v931 = vpack.c.b16 %v791, %v787
    %v932 = vpack.c.b16 %v792, %v788
    %v933 = vpack.c.b16 %v797, %v793
    %v934 = vpack.c.b16 %v798, %v794
    %v935 = vpack.c.b16 %v799, %v795
    %v936 = vpack.c.b16 %v800, %v796
    %v937 = vpack.c.b16 %v805, %v801
    %v938 = vpack.c.b16 %v806, %v802
    %v939 = vpack.c.b16 %v807, %v803
    %v940 = vpack.c.b16 %v808, %v804
    %v941 = vpack.c.b16 %v813, %v809
    %v942 = vpack.c.b16 %v814, %v810
    %v943 = vpack.c.b16 %v815, %v811
    %v944 = vpack.c.b16 %v816, %v812
    %1073 = vmatprep.subr.bf16.mxu0 %v818
    %1074 = vmatpush1.bf16.msra.mxu0 %v817
    %1075 = vmatprep.subr.bf16.mxu0 %v822
    %1076 = vmatpush1.bf16.msra.mxu0 %v821
    %1077 = vmatprep.subr.bf16.mxu0 %v826
    %1078 = vmatpush1.bf16.msra.mxu0 %v825
    %1079 = vmatprep.subr.bf16.mxu0 %v830
    %1080 = vmatpush1.bf16.msra.mxu0 %v829
    %1081 = vmatprep.subr.bf16.mxu0 %v834
    %1082 = vmatpush1.bf16.msra.mxu0 %v833
    %1083 = vmatprep.subr.bf16.mxu0 %v838
    %1084 = vmatpush1.bf16.msra.mxu0 %v837
    %1085 = vmatprep.subr.bf16.mxu0 %v842
    %1086 = vmatpush1.bf16.msra.mxu0 %v841
    %1087 = vmatprep.subr.bf16.mxu0 %v846
    %1088 = vmatpush1.bf16.msra.mxu0 %v845
    %1089 = vmatprep.subr.bf16.mxu0 %v850
    %1090 = vmatpush1.bf16.msra.mxu0 %v849
    %1091 = vmatprep.subr.bf16.mxu0 %v854
    %1092 = vmatpush1.bf16.msra.mxu0 %v853
    %1093 = vmatprep.subr.bf16.mxu0 %v858
    %1094 = vmatpush1.bf16.msra.mxu0 %v857
    %1095 = vmatprep.subr.bf16.mxu0 %v862
    %1096 = vmatpush1.bf16.msra.mxu0 %v861
    %1097 = vmatprep.subr.bf16.mxu0 %v866
    %1098 = vmatpush1.bf16.msra.mxu0 %v865
    %1099 = vmatprep.subr.bf16.mxu0 %v870
    %1100 = vmatpush1.bf16.msra.mxu0 %v869
    %1101 = vmatprep.subr.bf16.mxu0 %v874
    %1102 = vmatpush1.bf16.msra.mxu0 %v873
    %1103 = vmatprep.subr.bf16.mxu0 %v878
    %1104 = vmatpush1.bf16.msra.mxu0 %v877
    %1105 = vmatprep.mubr.bf16.mxu0 %v280
    %1106 = vmatmul.mubr.bf16.gmra.mrb[0].mxu0 %v279
    %v1107 = vpop.f32.mrb[0].mxu0
    %v1108 = vadd.f32 %v416, %v1107
    %v1109 = vpop.f32.mrb[0].mxu0
    %v1110 = vadd.f32 %v420, %v1109
    %v1111 = vpop.f32.mrb[0].mxu0
    %v1112 = vpop.f32.mrb[0].mxu0
    %1113 = vdwg.mxu0
    %1114 = vmatprep.subr.bf16.mxu0 %v882
    %1115 = vmatpush1.bf16.msra.mxu0 %v881
    %1116 = vmatprep.subr.bf16.mxu0 %v886
    %1117 = vmatpush1.bf16.msra.mxu0 %v885
    %1118 = vmatprep.subr.bf16.mxu0 %v890
    %1119 = vmatpush1.bf16.msra.mxu0 %v889
    %1120 = vmatprep.subr.bf16.mxu0 %v894
    %1121 = vmatpush1.bf16.msra.mxu0 %v893
    %1122 = vmatprep.subr.bf16.mxu0 %v898
    %1123 = vmatpush1.bf16.msra.mxu0 %v897
    %1124 = vmatprep.subr.bf16.mxu0 %v902
    %1125 = vmatpush1.bf16.msra.mxu0 %v901
    %1126 = vmatprep.subr.bf16.mxu0 %v906
    %1127 = vmatpush1.bf16.msra.mxu0 %v905
    %1128 = vmatprep.subr.bf16.mxu0 %v910
    %1129 = vmatpush1.bf16.msra.mxu0 %v909
    %1130 = vmatprep.subr.bf16.mxu0 %v914
    %1131 = vmatpush1.bf16.msra.mxu0 %v913
    %1132 = vmatprep.subr.bf16.mxu0 %v918
    %1133 = vmatpush1.bf16.msra.mxu0 %v917
    %1134 = vmatprep.subr.bf16.mxu0 %v922
    %1135 = vmatpush1.bf16.msra.mxu0 %v921
    %1136 = vmatprep.subr.bf16.mxu0 %v926
    %1137 = vmatpush1.bf16.msra.mxu0 %v925
    %1138 = vmatprep.subr.bf16.mxu0 %v930
    %1139 = vmatpush1.bf16.msra.mxu0 %v929
    %1140 = vmatprep.subr.bf16.mxu0 %v934
    %1141 = vmatpush1.bf16.msra.mxu0 %v933
    %1142 = vmatprep.subr.bf16.mxu0 %v938
    %1143 = vmatpush1.bf16.msra.mxu0 %v937
    %1144 = vmatprep.subr.bf16.mxu0 %v942
    %1145 = vmatpush1.bf16.msra.mxu0 %v941
    %1146 = vmatprep.mubr.bf16.mxu0 %v282
    %1147 = vmatmul.mubr.bf16.gmra.mrb[0].mxu0 %v281
    %v1148 = vpop.f32.mrb[0].mxu0
    %v1149 = vadd.f32 %v1108, %v1148
    %v1150 = vpop.f32.mrb[0].mxu0
    %v1151 = vadd.f32 %v1110, %v1150
    %v1152 = vpop.f32.mrb[0].mxu0
    %v1153 = vpop.f32.mrb[0].mxu0
    %1154 = vdwg.mxu0
    %1155 = vmatprep.subr.bf16.mxu0 %v820
    %1156 = vmatpush1.bf16.msra.mxu0 %v819
    %1157 = vmatprep.subr.bf16.mxu0 %v824
    %1158 = vmatpush1.bf16.msra.mxu0 %v823
    %1159 = vmatprep.subr.bf16.mxu0 %v828
    %1160 = vmatpush1.bf16.msra.mxu0 %v827
    %1161 = vmatprep.subr.bf16.mxu0 %v832
    %1162 = vmatpush1.bf16.msra.mxu0 %v831
    %1163 = vmatprep.subr.bf16.mxu0 %v836
    %1164 = vmatpush1.bf16.msra.mxu0 %v835
    %1165 = vmatprep.subr.bf16.mxu0 %v840
    %1166 = vmatpush1.bf16.msra.mxu0 %v839
    %1167 = vmatprep.subr.bf16.mxu0 %v844
    %1168 = vmatpush1.bf16.msra.mxu0 %v843
    %1169 = vmatprep.subr.bf16.mxu0 %v848
    %1170 = vmatpush1.bf16.msra.mxu0 %v847
    %1171 = vmatprep.subr.bf16.mxu0 %v852
    %1172 = vmatpush1.bf16.msra.mxu0 %v851
    %1173 = vmatprep.subr.bf16.mxu0 %v856
    %1174 = vmatpush1.bf16.msra.mxu0 %v855
    %1175 = vmatprep.subr.bf16.mxu0 %v860
    %1176 = vmatpush1.bf16.msra.mxu0 %v859
    %1177 = vmatprep.subr.bf16.mxu0 %v864
    %1178 = vmatpush1.bf16.msra.mxu0 %v863
    %1179 = vmatprep.subr.bf16.mxu0 %v868
    %1180 = vmatpush1.bf16.msra.mxu0 %v867
    %1181 = vmatprep.subr.bf16.mxu0 %v872
    %1182 = vmatpush1.bf16.msra.mxu0 %v871
    %1183 = vmatprep.subr.bf16.mxu0 %v876
    %1184 = vmatpush1.bf16.msra.mxu0 %v875
    %1185 = vmatprep.subr.bf16.mxu0 %v880
    %1186 = vmatpush1.bf16.msra.mxu0 %v879
    %1187 = vmatprep.mubr.bf16.mxu0 %v280
    %1188 = vmatmul.mubr.bf16.gmra.mrb[0].mxu0 %v279
    %v1189 = vpop.f32.mrb[0].mxu0
    %v1190 = vadd.f32 %v424, %v1189
    %v1191 = vpop.f32.mrb[0].mxu0
    %v1192 = vadd.f32 %v428, %v1191
    %v1193 = vpop.f32.mrb[0].mxu0
    %v1194 = vpop.f32.mrb[0].mxu0
    %1195 = vdwg.mxu0
    %1196 = vmatprep.subr.bf16.mxu0 %v884
    %1197 = vmatpush1.bf16.msra.mxu0 %v883
    %1198 = vmatprep.subr.bf16.mxu0 %v888
    %1199 = vmatpush1.bf16.msra.mxu0 %v887
    %1200 = vmatprep.subr.bf16.mxu0 %v892
    %1201 = vmatpush1.bf16.msra.mxu0 %v891
    %1202 = vmatprep.subr.bf16.mxu0 %v896
    %1203 = vmatpush1.bf16.msra.mxu0 %v895
    %1204 = vmatprep.subr.bf16.mxu0 %v900
    %1205 = vmatpush1.bf16.msra.mxu0 %v899
    %1206 = vmatprep.subr.bf16.mxu0 %v904
    %1207 = vmatpush1.bf16.msra.mxu0 %v903
    %1208 = vmatprep.subr.bf16.mxu0 %v908
    %1209 = vmatpush1.bf16.msra.mxu0 %v907
    %1210 = vmatprep.subr.bf16.mxu0 %v912
    %1211 = vmatpush1.bf16.msra.mxu0 %v911
    %1212 = vmatprep.subr.bf16.mxu0 %v916
    %1213 = vmatpush1.bf16.msra.mxu0 %v915
    %1214 = vmatprep.subr.bf16.mxu0 %v920
    %1215 = vmatpush1.bf16.msra.mxu0 %v919
    %1216 = vmatprep.subr.bf16.mxu0 %v924
    %1217 = vmatpush1.bf16.msra.mxu0 %v923
    %1218 = vmatprep.subr.bf16.mxu0 %v928
    %1219 = vmatpush1.bf16.msra.mxu0 %v927
    %1220 = vmatprep.subr.bf16.mxu0 %v932
    %1221 = vmatpush1.bf16.msra.mxu0 %v931
    %1222 = vmatprep.subr.bf16.mxu0 %v936
    %1223 = vmatpush1.bf16.msra.mxu0 %v935
    %1224 = vmatprep.subr.bf16.mxu0 %v940
    %1225 = vmatpush1.bf16.msra.mxu0 %v939
    %1226 = vmatprep.subr.bf16.mxu0 %v944
    %1227 = vmatpush1.bf16.msra.mxu0 %v943
    %1228 = vmatprep.mubr.bf16.mxu0 %v282
    %1229 = vmatmul.mubr.bf16.gmra.mrb[0].mxu0 %v281
    %v1230 = vpop.f32.mrb[0].mxu0
    %v1231 = vadd.f32 %v1190, %v1230
    %v1232 = vpop.f32.mrb[0].mxu0
    %v1233 = vadd.f32 %v1192, %v1232
    %v1234 = vpop.f32.mrb[0].mxu0
    %v1235 = vpop.f32.mrb[0].mxu0
    %1236 = vdwg.mxu0
    %v1237 = vmax.f32 %v1149, 0.0
    %v1238 = vmax.f32 %v1151, 0.0
    %v1239 = vmax.f32 %v1231, 0.0
    %v1240 = vmax.f32 %v1233, 0.0
    %v1241 = vpack.c.bf16 %v1237, %v1237
    %v1242 = vpack.c.bf16 %v1238, %v1238
    %v1243 = vpack.c.bf16 %v1239, %v1239
    %v1244 = vpack.c.bf16 %v1240, %v1240
    %s1245 = scalar_lea.vmem [#allocation7], 1024
    %v1246 = vld [vmem:[%s1245] sm:$0xff]
    %v1247 = vld [vmem:[%s1245 + $0x8] sm:$0xff]
    %v1248 = vld [vmem:[%s1245 + $0x10] sm:$0xff]
    %v1249 = vld [vmem:[%s1245 + $0x18] sm:$0xff]
    %v1250 = vld [vmem:[%s1245 + $0x20] sm:$0xff]
    %v1251 = vld [vmem:[%s1245 + $0x28] sm:$0xff]
    %v1252 = vld [vmem:[%s1245 + $0x30] sm:$0xff]
    %v1253 = vld [vmem:[%s1245 + $0x38] sm:$0xff]
    %v1254 = vld [vmem:[%s1245 + $0x40] sm:$0xff]
    %v1255 = vld [vmem:[%s1245 + $0x48] sm:$0xff]
    %v1256 = vld [vmem:[%s1245 + $0x50] sm:$0xff]
    %v1257 = vld [vmem:[%s1245 + $0x58] sm:$0xff]
    %v1258 = vld [vmem:[%s1245 + $0x60] sm:$0xff]
    %v1259 = vld [vmem:[%s1245 + $0x68] sm:$0xff]
    %v1260 = vld [vmem:[%s1245 + $0x70] sm:$0xff]
    %v1261 = vld [vmem:[%s1245 + $0x78] sm:$0xff]
    %v1262 = vld [vmem:[%s1245 + $0x80] sm:$0xff]
    %v1263 = vld [vmem:[%s1245 + $0x88] sm:$0xff]
    %v1264 = vld [vmem:[%s1245 + $0x90] sm:$0xff]
    %v1265 = vld [vmem:[%s1245 + $0x98] sm:$0xff]
    %v1266 = vld [vmem:[%s1245 + $0xa0] sm:$0xff]
    %v1267 = vld [vmem:[%s1245 + $0xa8] sm:$0xff]
    %v1268 = vld [vmem:[%s1245 + $0xb0] sm:$0xff]
    %v1269 = vld [vmem:[%s1245 + $0xb8] sm:$0xff]
    %v1270 = vld [vmem:[%s1245 + $0xc0] sm:$0xff]
    %v1271 = vld [vmem:[%s1245 + $0xc8] sm:$0xff]
    %v1272 = vld [vmem:[%s1245 + $0xd0] sm:$0xff]
    %v1273 = vld [vmem:[%s1245 + $0xd8] sm:$0xff]
    %v1274 = vld [vmem:[%s1245 + $0xe0] sm:$0xff]
    %v1275 = vld [vmem:[%s1245 + $0xe8] sm:$0xff]
    %v1276 = vld [vmem:[%s1245 + $0xf0] sm:$0xff]
    %v1277 = vld [vmem:[%s1245 + $0xf8] sm:$0xff]
    %v1278 = vld [vmem:[%s1245 + $0x100] sm:$0xff]
    %v1279 = vld [vmem:[%s1245 + $0x108] sm:$0xff]
    %v1280 = vld [vmem:[%s1245 + $0x110] sm:$0xff]
    %v1281 = vld [vmem:[%s1245 + $0x118] sm:$0xff]
    %v1282 = vld [vmem:[%s1245 + $0x120] sm:$0xff]
    %v1283 = vld [vmem:[%s1245 + $0x128] sm:$0xff]
    %v1284 = vld [vmem:[%s1245 + $0x130] sm:$0xff]
    %v1285 = vld [vmem:[%s1245 + $0x138] sm:$0xff]
    %v1286 = vld [vmem:[%s1245 + $0x140] sm:$0xff]
    %v1287 = vld [vmem:[%s1245 + $0x148] sm:$0xff]
    %v1288 = vld [vmem:[%s1245 + $0x150] sm:$0xff]
    %v1289 = vld [vmem:[%s1245 + $0x158] sm:$0xff]
    %v1290 = vld [vmem:[%s1245 + $0x160] sm:$0xff]
    %v1291 = vld [vmem:[%s1245 + $0x168] sm:$0xff]
    %v1292 = vld [vmem:[%s1245 + $0x170] sm:$0xff]
    %v1293 = vld [vmem:[%s1245 + $0x178] sm:$0xff]
    %v1294 = vld [vmem:[%s1245 + $0x180] sm:$0xff]
    %v1295 = vld [vmem:[%s1245 + $0x188] sm:$0xff]
    %v1296 = vld [vmem:[%s1245 + $0x190] sm:$0xff]
    %v1297 = vld [vmem:[%s1245 + $0x198] sm:$0xff]
    %v1298 = vld [vmem:[%s1245 + $0x1a0] sm:$0xff]
    %v1299 = vld [vmem:[%s1245 + $0x1a8] sm:$0xff]
    %v1300 = vld [vmem:[%s1245 + $0x1b0] sm:$0xff]
    %v1301 = vld [vmem:[%s1245 + $0x1b8] sm:$0xff]
    %v1302 = vld [vmem:[%s1245 + $0x1c0] sm:$0xff]
    %v1303 = vld [vmem:[%s1245 + $0x1c8] sm:$0xff]
    %v1304 = vld [vmem:[%s1245 + $0x1d0] sm:$0xff]
    %v1305 = vld [vmem:[%s1245 + $0x1d8] sm:$0xff]
    %v1306 = vld [vmem:[%s1245 + $0x1e0] sm:$0xff]
    %v1307 = vld [vmem:[%s1245 + $0x1e8] sm:$0xff]
    %v1308 = vld [vmem:[%s1245 + $0x1f0] sm:$0xff]
    %v1309 = vld [vmem:[%s1245 + $0x1f8] sm:$0xff]
    %v1310 = vld [vmem:[%s1245 + $0x200] sm:$0xff]
    %v1311 = vld [vmem:[%s1245 + $0x208] sm:$0xff]
    %v1312 = vld [vmem:[%s1245 + $0x210] sm:$0xff]
    %v1313 = vld [vmem:[%s1245 + $0x218] sm:$0xff]
    %v1314 = vld [vmem:[%s1245 + $0x220] sm:$0xff]
    %v1315 = vld [vmem:[%s1245 + $0x228] sm:$0xff]
    %v1316 = vld [vmem:[%s1245 + $0x230] sm:$0xff]
    %v1317 = vld [vmem:[%s1245 + $0x238] sm:$0xff]
    %v1318 = vld [vmem:[%s1245 + $0x240] sm:$0xff]
    %v1319 = vld [vmem:[%s1245 + $0x248] sm:$0xff]
    %v1320 = vld [vmem:[%s1245 + $0x250] sm:$0xff]
    %v1321 = vld [vmem:[%s1245 + $0x258] sm:$0xff]
    %v1322 = vld [vmem:[%s1245 + $0x260] sm:$0xff]
    %v1323 = vld [vmem:[%s1245 + $0x268] sm:$0xff]
    %v1324 = vld [vmem:[%s1245 + $0x270] sm:$0xff]
    %v1325 = vld [vmem:[%s1245 + $0x278] sm:$0xff]
    %v1326 = vld [vmem:[%s1245 + $0x280] sm:$0xff]
    %v1327 = vld [vmem:[%s1245 + $0x288] sm:$0xff]
    %v1328 = vld [vmem:[%s1245 + $0x290] sm:$0xff]
    %v1329 = vld [vmem:[%s1245 + $0x298] sm:$0xff]
    %v1330 = vld [vmem:[%s1245 + $0x2a0] sm:$0xff]
    %v1331 = vld [vmem:[%s1245 + $0x2a8] sm:$0xff]
    %v1332 = vld [vmem:[%s1245 + $0x2b0] sm:$0xff]
    %v1333 = vld [vmem:[%s1245 + $0x2b8] sm:$0xff]
    %v1334 = vld [vmem:[%s1245 + $0x2c0] sm:$0xff]
    %v1335 = vld [vmem:[%s1245 + $0x2c8] sm:$0xff]
    %v1336 = vld [vmem:[%s1245 + $0x2d0] sm:$0xff]
    %v1337 = vld [vmem:[%s1245 + $0x2d8] sm:$0xff]
    %v1338 = vld [vmem:[%s1245 + $0x2e0] sm:$0xff]
    %v1339 = vld [vmem:[%s1245 + $0x2e8] sm:$0xff]
    %v1340 = vld [vmem:[%s1245 + $0x2f0] sm:$0xff]
    %v1341 = vld [vmem:[%s1245 + $0x2f8] sm:$0xff]
    %v1342 = vld [vmem:[%s1245 + $0x300] sm:$0xff]
    %v1343 = vld [vmem:[%s1245 + $0x308] sm:$0xff]
    %v1344 = vld [vmem:[%s1245 + $0x310] sm:$0xff]
    %v1345 = vld [vmem:[%s1245 + $0x318] sm:$0xff]
    %v1346 = vld [vmem:[%s1245 + $0x320] sm:$0xff]
    %v1347 = vld [vmem:[%s1245 + $0x328] sm:$0xff]
    %v1348 = vld [vmem:[%s1245 + $0x330] sm:$0xff]
    %v1349 = vld [vmem:[%s1245 + $0x338] sm:$0xff]
    %v1350 = vld [vmem:[%s1245 + $0x340] sm:$0xff]
    %v1351 = vld [vmem:[%s1245 + $0x348] sm:$0xff]
    %v1352 = vld [vmem:[%s1245 + $0x350] sm:$0xff]
    %v1353 = vld [vmem:[%s1245 + $0x358] sm:$0xff]
    %v1354 = vld [vmem:[%s1245 + $0x360] sm:$0xff]
    %v1355 = vld [vmem:[%s1245 + $0x368] sm:$0xff]
    %v1356 = vld [vmem:[%s1245 + $0x370] sm:$0xff]
    %v1357 = vld [vmem:[%s1245 + $0x378] sm:$0xff]
    %v1358 = vld [vmem:[%s1245 + $0x380] sm:$0xff]
    %v1359 = vld [vmem:[%s1245 + $0x388] sm:$0xff]
    %v1360 = vld [vmem:[%s1245 + $0x390] sm:$0xff]
    %v1361 = vld [vmem:[%s1245 + $0x398] sm:$0xff]
    %v1362 = vld [vmem:[%s1245 + $0x3a0] sm:$0xff]
    %v1363 = vld [vmem:[%s1245 + $0x3a8] sm:$0xff]
    %v1364 = vld [vmem:[%s1245 + $0x3b0] sm:$0xff]
    %v1365 = vld [vmem:[%s1245 + $0x3b8] sm:$0xff]
    %v1366 = vld [vmem:[%s1245 + $0x3c0] sm:$0xff]
    %v1367 = vld [vmem:[%s1245 + $0x3c8] sm:$0xff]
    %v1368 = vld [vmem:[%s1245 + $0x3d0] sm:$0xff]
    %v1369 = vld [vmem:[%s1245 + $0x3d8] sm:$0xff]
    %v1370 = vld [vmem:[%s1245 + $0x3e0] sm:$0xff]
    %v1371 = vld [vmem:[%s1245 + $0x3e8] sm:$0xff]
    %v1372 = vld [vmem:[%s1245 + $0x3f0] sm:$0xff]
    %v1373 = vld [vmem:[%s1245 + $0x3f8] sm:$0xff]
    %s1374 = scalar_lea.vmem [#allocation9], 4
    %v1375 = vld [vmem:[%s1374] sm:$0xf]
    %v1377 = vlaneseq
    %v1378 = vshrl.u32 %v1377, 7
    %v1379 = vsub.s32 0, %v1378
    %v1380 = vrot.slane %v1375, %v1379
    %v1381 = vlaneseq
    %v1382 = vshrl.u32 %v1381, 7
    %v1383 = vsub.s32 1, %v1382
    %v1384 = vrot.slane %v1375, %v1383
    %v1385 = vlaneseq
    %v1386 = vshrl.u32 %v1385, 7
    %v1387 = vsub.s32 2, %v1386
    %v1388 = vrot.slane %v1375, %v1387
    %v1389 = vlaneseq
    %v1390 = vshrl.u32 %v1389, 7
    %v1391 = vsub.s32 3, %v1390
    %v1392 = vrot.slane %v1375, %v1391
    %v1525 = vunpack.c.l.b16 %v1246
    %v1526 = vunpack.c.h.b16 %v1246
    %v1527 = vunpack.c.l.b16 %v1247
    %v1528 = vunpack.c.h.b16 %v1247
    %v1529 = vunpack.c.l.b16 %v1248
    %v1530 = vunpack.c.h.b16 %v1248
    %v1531 = vunpack.c.l.b16 %v1249
    %v1532 = vunpack.c.h.b16 %v1249
    %v1533 = vunpack.c.l.b16 %v1250
    %v1534 = vunpack.c.h.b16 %v1250
    %v1535 = vunpack.c.l.b16 %v1251
    %v1536 = vunpack.c.h.b16 %v1251
    %v1537 = vunpack.c.l.b16 %v1252
    %v1538 = vunpack.c.h.b16 %v1252
    %v1539 = vunpack.c.l.b16 %v1253
    %v1540 = vunpack.c.h.b16 %v1253
    %v1541 = vunpack.c.l.b16 %v1254
    %v1542 = vunpack.c.h.b16 %v1254
    %v1543 = vunpack.c.l.b16 %v1255
    %v1544 = vunpack.c.h.b16 %v1255
    %v1545 = vunpack.c.l.b16 %v1256
    %v1546 = vunpack.c.h.b16 %v1256
    %v1547 = vunpack.c.l.b16 %v1257
    %v1548 = vunpack.c.h.b16 %v1257
    %v1549 = vunpack.c.l.b16 %v1258
    %v1550 = vunpack.c.h.b16 %v1258
    %v1551 = vunpack.c.l.b16 %v1259
    %v1552 = vunpack.c.h.b16 %v1259
    %v1553 = vunpack.c.l.b16 %v1260
    %v1554 = vunpack.c.h.b16 %v1260
    %v1555 = vunpack.c.l.b16 %v1261
    %v1556 = vunpack.c.h.b16 %v1261
    %v1557 = vunpack.c.l.b16 %v1262
    %v1558 = vunpack.c.h.b16 %v1262
    %v1559 = vunpack.c.l.b16 %v1263
    %v1560 = vunpack.c.h.b16 %v1263
    %v1561 = vunpack.c.l.b16 %v1264
    %v1562 = vunpack.c.h.b16 %v1264
    %v1563 = vunpack.c.l.b16 %v1265
    %v1564 = vunpack.c.h.b16 %v1265
    %v1565 = vunpack.c.l.b16 %v1266
    %v1566 = vunpack.c.h.b16 %v1266
    %v1567 = vunpack.c.l.b16 %v1267
    %v1568 = vunpack.c.h.b16 %v1267
    %v1569 = vunpack.c.l.b16 %v1268
    %v1570 = vunpack.c.h.b16 %v1268
    %v1571 = vunpack.c.l.b16 %v1269
    %v1572 = vunpack.c.h.b16 %v1269
    %v1573 = vunpack.c.l.b16 %v1270
    %v1574 = vunpack.c.h.b16 %v1270
    %v1575 = vunpack.c.l.b16 %v1271
    %v1576 = vunpack.c.h.b16 %v1271
    %v1577 = vunpack.c.l.b16 %v1272
    %v1578 = vunpack.c.h.b16 %v1272
    %v1579 = vunpack.c.l.b16 %v1273
    %v1580 = vunpack.c.h.b16 %v1273
    %v1581 = vunpack.c.l.b16 %v1274
    %v1582 = vunpack.c.h.b16 %v1274
    %v1583 = vunpack.c.l.b16 %v1275
    %v1584 = vunpack.c.h.b16 %v1275
    %v1585 = vunpack.c.l.b16 %v1276
    %v1586 = vunpack.c.h.b16 %v1276
    %v1587 = vunpack.c.l.b16 %v1277
    %v1588 = vunpack.c.h.b16 %v1277
    %v1589 = vunpack.c.l.b16 %v1278
    %v1590 = vunpack.c.h.b16 %v1278
    %v1591 = vunpack.c.l.b16 %v1279
    %v1592 = vunpack.c.h.b16 %v1279
    %v1593 = vunpack.c.l.b16 %v1280
    %v1594 = vunpack.c.h.b16 %v1280
    %v1595 = vunpack.c.l.b16 %v1281
    %v1596 = vunpack.c.h.b16 %v1281
    %v1597 = vunpack.c.l.b16 %v1282
    %v1598 = vunpack.c.h.b16 %v1282
    %v1599 = vunpack.c.l.b16 %v1283
    %v1600 = vunpack.c.h.b16 %v1283
    %v1601 = vunpack.c.l.b16 %v1284
    %v1602 = vunpack.c.h.b16 %v1284
    %v1603 = vunpack.c.l.b16 %v1285
    %v1604 = vunpack.c.h.b16 %v1285
    %v1605 = vunpack.c.l.b16 %v1286
    %v1606 = vunpack.c.h.b16 %v1286
    %v1607 = vunpack.c.l.b16 %v1287
    %v1608 = vunpack.c.h.b16 %v1287
    %v1609 = vunpack.c.l.b16 %v1288
    %v1610 = vunpack.c.h.b16 %v1288
    %v1611 = vunpack.c.l.b16 %v1289
    %v1612 = vunpack.c.h.b16 %v1289
    %v1613 = vunpack.c.l.b16 %v1290
    %v1614 = vunpack.c.h.b16 %v1290
    %v1615 = vunpack.c.l.b16 %v1291
    %v1616 = vunpack.c.h.b16 %v1291
    %v1617 = vunpack.c.l.b16 %v1292
    %v1618 = vunpack.c.h.b16 %v1292
    %v1619 = vunpack.c.l.b16 %v1293
    %v1620 = vunpack.c.h.b16 %v1293
    %v1621 = vunpack.c.l.b16 %v1294
    %v1622 = vunpack.c.h.b16 %v1294
    %v1623 = vunpack.c.l.b16 %v1295
    %v1624 = vunpack.c.h.b16 %v1295
    %v1625 = vunpack.c.l.b16 %v1296
    %v1626 = vunpack.c.h.b16 %v1296
    %v1627 = vunpack.c.l.b16 %v1297
    %v1628 = vunpack.c.h.b16 %v1297
    %v1629 = vunpack.c.l.b16 %v1298
    %v1630 = vunpack.c.h.b16 %v1298
    %v1631 = vunpack.c.l.b16 %v1299
    %v1632 = vunpack.c.h.b16 %v1299
    %v1633 = vunpack.c.l.b16 %v1300
    %v1634 = vunpack.c.h.b16 %v1300
    %v1635 = vunpack.c.l.b16 %v1301
    %v1636 = vunpack.c.h.b16 %v1301
    %v1637 = vunpack.c.l.b16 %v1302
    %v1638 = vunpack.c.h.b16 %v1302
    %v1639 = vunpack.c.l.b16 %v1303
    %v1640 = vunpack.c.h.b16 %v1303
    %v1641 = vunpack.c.l.b16 %v1304
    %v1642 = vunpack.c.h.b16 %v1304
    %v1643 = vunpack.c.l.b16 %v1305
    %v1644 = vunpack.c.h.b16 %v1305
    %v1645 = vunpack.c.l.b16 %v1306
    %v1646 = vunpack.c.h.b16 %v1306
    %v1647 = vunpack.c.l.b16 %v1307
    %v1648 = vunpack.c.h.b16 %v1307
    %v1649 = vunpack.c.l.b16 %v1308
    %v1650 = vunpack.c.h.b16 %v1308
    %v1651 = vunpack.c.l.b16 %v1309
    %v1652 = vunpack.c.h.b16 %v1309
    %v1653 = vunpack.c.l.b16 %v1310
    %v1654 = vunpack.c.h.b16 %v1310
    %v1655 = vunpack.c.l.b16 %v1311
    %v1656 = vunpack.c.h.b16 %v1311
    %v1657 = vunpack.c.l.b16 %v1312
    %v1658 = vunpack.c.h.b16 %v1312
    %v1659 = vunpack.c.l.b16 %v1313
    %v1660 = vunpack.c.h.b16 %v1313
    %v1661 = vunpack.c.l.b16 %v1314
    %v1662 = vunpack.c.h.b16 %v1314
    %v1663 = vunpack.c.l.b16 %v1315
    %v1664 = vunpack.c.h.b16 %v1315
    %v1665 = vunpack.c.l.b16 %v1316
    %v1666 = vunpack.c.h.b16 %v1316
    %v1667 = vunpack.c.l.b16 %v1317
    %v1668 = vunpack.c.h.b16 %v1317
    %v1669 = vunpack.c.l.b16 %v1318
    %v1670 = vunpack.c.h.b16 %v1318
    %v1671 = vunpack.c.l.b16 %v1319
    %v1672 = vunpack.c.h.b16 %v1319
    %v1673 = vunpack.c.l.b16 %v1320
    %v1674 = vunpack.c.h.b16 %v1320
    %v1675 = vunpack.c.l.b16 %v1321
    %v1676 = vunpack.c.h.b16 %v1321
    %v1677 = vunpack.c.l.b16 %v1322
    %v1678 = vunpack.c.h.b16 %v1322
    %v1679 = vunpack.c.l.b16 %v1323
    %v1680 = vunpack.c.h.b16 %v1323
    %v1681 = vunpack.c.l.b16 %v1324
    %v1682 = vunpack.c.h.b16 %v1324
    %v1683 = vunpack.c.l.b16 %v1325
    %v1684 = vunpack.c.h.b16 %v1325
    %v1685 = vunpack.c.l.b16 %v1326
    %v1686 = vunpack.c.h.b16 %v1326
    %v1687 = vunpack.c.l.b16 %v1327
    %v1688 = vunpack.c.h.b16 %v1327
    %v1689 = vunpack.c.l.b16 %v1328
    %v1690 = vunpack.c.h.b16 %v1328
    %v1691 = vunpack.c.l.b16 %v1329
    %v1692 = vunpack.c.h.b16 %v1329
    %v1693 = vunpack.c.l.b16 %v1330
    %v1694 = vunpack.c.h.b16 %v1330
    %v1695 = vunpack.c.l.b16 %v1331
    %v1696 = vunpack.c.h.b16 %v1331
    %v1697 = vunpack.c.l.b16 %v1332
    %v1698 = vunpack.c.h.b16 %v1332
    %v1699 = vunpack.c.l.b16 %v1333
    %v1700 = vunpack.c.h.b16 %v1333
    %v1701 = vunpack.c.l.b16 %v1334
    %v1702 = vunpack.c.h.b16 %v1334
    %v1703 = vunpack.c.l.b16 %v1335
    %v1704 = vunpack.c.h.b16 %v1335
    %v1705 = vunpack.c.l.b16 %v1336
    %v1706 = vunpack.c.h.b16 %v1336
    %v1707 = vunpack.c.l.b16 %v1337
    %v1708 = vunpack.c.h.b16 %v1337
    %v1709 = vunpack.c.l.b16 %v1338
    %v1710 = vunpack.c.h.b16 %v1338
    %v1711 = vunpack.c.l.b16 %v1339
    %v1712 = vunpack.c.h.b16 %v1339
    %v1713 = vunpack.c.l.b16 %v1340
    %v1714 = vunpack.c.h.b16 %v1340
    %v1715 = vunpack.c.l.b16 %v1341
    %v1716 = vunpack.c.h.b16 %v1341
    %v1717 = vunpack.c.l.b16 %v1342
    %v1718 = vunpack.c.h.b16 %v1342
    %v1719 = vunpack.c.l.b16 %v1343
    %v1720 = vunpack.c.h.b16 %v1343
    %v1721 = vunpack.c.l.b16 %v1344
    %v1722 = vunpack.c.h.b16 %v1344
    %v1723 = vunpack.c.l.b16 %v1345
    %v1724 = vunpack.c.h.b16 %v1345
    %v1725 = vunpack.c.l.b16 %v1346
    %v1726 = vunpack.c.h.b16 %v1346
    %v1727 = vunpack.c.l.b16 %v1347
    %v1728 = vunpack.c.h.b16 %v1347
    %v1729 = vunpack.c.l.b16 %v1348
    %v1730 = vunpack.c.h.b16 %v1348
    %v1731 = vunpack.c.l.b16 %v1349
    %v1732 = vunpack.c.h.b16 %v1349
    %v1733 = vunpack.c.l.b16 %v1350
    %v1734 = vunpack.c.h.b16 %v1350
    %v1735 = vunpack.c.l.b16 %v1351
    %v1736 = vunpack.c.h.b16 %v1351
    %v1737 = vunpack.c.l.b16 %v1352
    %v1738 = vunpack.c.h.b16 %v1352
    %v1739 = vunpack.c.l.b16 %v1353
    %v1740 = vunpack.c.h.b16 %v1353
    %v1741 = vunpack.c.l.b16 %v1354
    %v1742 = vunpack.c.h.b16 %v1354
    %v1743 = vunpack.c.l.b16 %v1355
    %v1744 = vunpack.c.h.b16 %v1355
    %v1745 = vunpack.c.l.b16 %v1356
    %v1746 = vunpack.c.h.b16 %v1356
    %v1747 = vunpack.c.l.b16 %v1357
    %v1748 = vunpack.c.h.b16 %v1357
    %v1749 = vunpack.c.l.b16 %v1358
    %v1750 = vunpack.c.h.b16 %v1358
    %v1751 = vunpack.c.l.b16 %v1359
    %v1752 = vunpack.c.h.b16 %v1359
    %v1753 = vunpack.c.l.b16 %v1360
    %v1754 = vunpack.c.h.b16 %v1360
    %v1755 = vunpack.c.l.b16 %v1361
    %v1756 = vunpack.c.h.b16 %v1361
    %v1757 = vunpack.c.l.b16 %v1362
    %v1758 = vunpack.c.h.b16 %v1362
    %v1759 = vunpack.c.l.b16 %v1363
    %v1760 = vunpack.c.h.b16 %v1363
    %v1761 = vunpack.c.l.b16 %v1364
    %v1762 = vunpack.c.h.b16 %v1364
    %v1763 = vunpack.c.l.b16 %v1365
    %v1764 = vunpack.c.h.b16 %v1365
    %v1765 = vunpack.c.l.b16 %v1366
    %v1766 = vunpack.c.h.b16 %v1366
    %v1767 = vunpack.c.l.b16 %v1367
    %v1768 = vunpack.c.h.b16 %v1367
    %v1769 = vunpack.c.l.b16 %v1368
    %v1770 = vunpack.c.h.b16 %v1368
    %v1771 = vunpack.c.l.b16 %v1369
    %v1772 = vunpack.c.h.b16 %v1369
    %v1773 = vunpack.c.l.b16 %v1370
    %v1774 = vunpack.c.h.b16 %v1370
    %v1775 = vunpack.c.l.b16 %v1371
    %v1776 = vunpack.c.h.b16 %v1371
    %v1777 = vunpack.c.l.b16 %v1372
    %v1778 = vunpack.c.h.b16 %v1372
    %v1779 = vunpack.c.l.b16 %v1373
    %v1780 = vunpack.c.h.b16 %v1373
    %v1781 = vpack.c.b16 %v1529, %v1525
    %v1782 = vpack.c.b16 %v1530, %v1526
    %v1783 = vpack.c.b16 %v1531, %v1527
    %v1784 = vpack.c.b16 %v1532, %v1528
    %v1785 = vpack.c.b16 %v1537, %v1533
    %v1786 = vpack.c.b16 %v1538, %v1534
    %v1787 = vpack.c.b16 %v1539, %v1535
    %v1788 = vpack.c.b16 %v1540, %v1536
    %v1789 = vpack.c.b16 %v1545, %v1541
    %v1790 = vpack.c.b16 %v1546, %v1542
    %v1791 = vpack.c.b16 %v1547, %v1543
    %v1792 = vpack.c.b16 %v1548, %v1544
    %v1793 = vpack.c.b16 %v1553, %v1549
    %v1794 = vpack.c.b16 %v1554, %v1550
    %v1795 = vpack.c.b16 %v1555, %v1551
    %v1796 = vpack.c.b16 %v1556, %v1552
    %v1797 = vpack.c.b16 %v1561, %v1557
    %v1798 = vpack.c.b16 %v1562, %v1558
    %v1799 = vpack.c.b16 %v1563, %v1559
    %v1800 = vpack.c.b16 %v1564, %v1560
    %v1801 = vpack.c.b16 %v1569, %v1565
    %v1802 = vpack.c.b16 %v1570, %v1566
    %v1803 = vpack.c.b16 %v1571, %v1567
    %v1804 = vpack.c.b16 %v1572, %v1568
    %v1805 = vpack.c.b16 %v1577, %v1573
    %v1806 = vpack.c.b16 %v1578, %v1574
    %v1807 = vpack.c.b16 %v1579, %v1575
    %v1808 = vpack.c.b16 %v1580, %v1576
    %v1809 = vpack.c.b16 %v1585, %v1581
    %v1810 = vpack.c.b16 %v1586, %v1582
    %v1811 = vpack.c.b16 %v1587, %v1583
    %v1812 = vpack.c.b16 %v1588, %v1584
    %v1813 = vpack.c.b16 %v1593, %v1589
    %v1814 = vpack.c.b16 %v1594, %v1590
    %v1815 = vpack.c.b16 %v1595, %v1591
    %v1816 = vpack.c.b16 %v1596, %v1592
    %v1817 = vpack.c.b16 %v1601, %v1597
    %v1818 = vpack.c.b16 %v1602, %v1598
    %v1819 = vpack.c.b16 %v1603, %v1599
    %v1820 = vpack.c.b16 %v1604, %v1600
    %v1821 = vpack.c.b16 %v1609, %v1605
    %v1822 = vpack.c.b16 %v1610, %v1606
    %v1823 = vpack.c.b16 %v1611, %v1607
    %v1824 = vpack.c.b16 %v1612, %v1608
    %v1825 = vpack.c.b16 %v1617, %v1613
    %v1826 = vpack.c.b16 %v1618, %v1614
    %v1827 = vpack.c.b16 %v1619, %v1615
    %v1828 = vpack.c.b16 %v1620, %v1616
    %v1829 = vpack.c.b16 %v1625, %v1621
    %v1830 = vpack.c.b16 %v1626, %v1622
    %v1831 = vpack.c.b16 %v1627, %v1623
    %v1832 = vpack.c.b16 %v1628, %v1624
    %v1833 = vpack.c.b16 %v1633, %v1629
    %v1834 = vpack.c.b16 %v1634, %v1630
    %v1835 = vpack.c.b16 %v1635, %v1631
    %v1836 = vpack.c.b16 %v1636, %v1632
    %v1837 = vpack.c.b16 %v1641, %v1637
    %v1838 = vpack.c.b16 %v1642, %v1638
    %v1839 = vpack.c.b16 %v1643, %v1639
    %v1840 = vpack.c.b16 %v1644, %v1640
    %v1841 = vpack.c.b16 %v1649, %v1645
    %v1842 = vpack.c.b16 %v1650, %v1646
    %v1843 = vpack.c.b16 %v1651, %v1647
    %v1844 = vpack.c.b16 %v1652, %v1648
    %v1845 = vpack.c.b16 %v1657, %v1653
    %v1846 = vpack.c.b16 %v1658, %v1654
    %v1847 = vpack.c.b16 %v1659, %v1655
    %v1848 = vpack.c.b16 %v1660, %v1656
    %v1849 = vpack.c.b16 %v1665, %v1661
    %v1850 = vpack.c.b16 %v1666, %v1662
    %v1851 = vpack.c.b16 %v1667, %v1663
    %v1852 = vpack.c.b16 %v1668, %v1664
    %v1853 = vpack.c.b16 %v1673, %v1669
    %v1854 = vpack.c.b16 %v1674, %v1670
    %v1855 = vpack.c.b16 %v1675, %v1671
    %v1856 = vpack.c.b16 %v1676, %v1672
    %v1857 = vpack.c.b16 %v1681, %v1677
    %v1858 = vpack.c.b16 %v1682, %v1678
    %v1859 = vpack.c.b16 %v1683, %v1679
    %v1860 = vpack.c.b16 %v1684, %v1680
    %v1861 = vpack.c.b16 %v1689, %v1685
    %v1862 = vpack.c.b16 %v1690, %v1686
    %v1863 = vpack.c.b16 %v1691, %v1687
    %v1864 = vpack.c.b16 %v1692, %v1688
    %v1865 = vpack.c.b16 %v1697, %v1693
    %v1866 = vpack.c.b16 %v1698, %v1694
    %v1867 = vpack.c.b16 %v1699, %v1695
    %v1868 = vpack.c.b16 %v1700, %v1696
    %v1869 = vpack.c.b16 %v1705, %v1701
    %v1870 = vpack.c.b16 %v1706, %v1702
    %v1871 = vpack.c.b16 %v1707, %v1703
    %v1872 = vpack.c.b16 %v1708, %v1704
    %v1873 = vpack.c.b16 %v1713, %v1709
    %v1874 = vpack.c.b16 %v1714, %v1710
    %v1875 = vpack.c.b16 %v1715, %v1711
    %v1876 = vpack.c.b16 %v1716, %v1712
    %v1877 = vpack.c.b16 %v1721, %v1717
    %v1878 = vpack.c.b16 %v1722, %v1718
    %v1879 = vpack.c.b16 %v1723, %v1719
    %v1880 = vpack.c.b16 %v1724, %v1720
    %v1881 = vpack.c.b16 %v1729, %v1725
    %v1882 = vpack.c.b16 %v1730, %v1726
    %v1883 = vpack.c.b16 %v1731, %v1727
    %v1884 = vpack.c.b16 %v1732, %v1728
    %v1885 = vpack.c.b16 %v1737, %v1733
    %v1886 = vpack.c.b16 %v1738, %v1734
    %v1887 = vpack.c.b16 %v1739, %v1735
    %v1888 = vpack.c.b16 %v1740, %v1736
    %v1889 = vpack.c.b16 %v1745, %v1741
    %v1890 = vpack.c.b16 %v1746, %v1742
    %v1891 = vpack.c.b16 %v1747, %v1743
    %v1892 = vpack.c.b16 %v1748, %v1744
    %v1893 = vpack.c.b16 %v1753, %v1749
    %v1894 = vpack.c.b16 %v1754, %v1750
    %v1895 = vpack.c.b16 %v1755, %v1751
    %v1896 = vpack.c.b16 %v1756, %v1752
    %v1897 = vpack.c.b16 %v1761, %v1757
    %v1898 = vpack.c.b16 %v1762, %v1758
    %v1899 = vpack.c.b16 %v1763, %v1759
    %v1900 = vpack.c.b16 %v1764, %v1760
    %v1901 = vpack.c.b16 %v1769, %v1765
    %v1902 = vpack.c.b16 %v1770, %v1766
    %v1903 = vpack.c.b16 %v1771, %v1767
    %v1904 = vpack.c.b16 %v1772, %v1768
    %v1905 = vpack.c.b16 %v1777, %v1773
    %v1906 = vpack.c.b16 %v1778, %v1774
    %v1907 = vpack.c.b16 %v1779, %v1775
    %v1908 = vpack.c.b16 %v1780, %v1776
    %2037 = vmatprep.subr.bf16.mxu0 %v1782
    %2038 = vmatpush1.bf16.msra.mxu0 %v1781
    %2039 = vmatprep.subr.bf16.mxu0 %v1786
    %2040 = vmatpush1.bf16.msra.mxu0 %v1785
    %2041 = vmatprep.subr.bf16.mxu0 %v1790
    %2042 = vmatpush1.bf16.msra.mxu0 %v1789
    %2043 = vmatprep.subr.bf16.mxu0 %v1794
    %2044 = vmatpush1.bf16.msra.mxu0 %v1793
    %2045 = vmatprep.subr.bf16.mxu0 %v1798
    %2046 = vmatpush1.bf16.msra.mxu0 %v1797
    %2047 = vmatprep.subr.bf16.mxu0 %v1802
    %2048 = vmatpush1.bf16.msra.mxu0 %v1801
    %2049 = vmatprep.subr.bf16.mxu0 %v1806
    %2050 = vmatpush1.bf16.msra.mxu0 %v1805
    %2051 = vmatprep.subr.bf16.mxu0 %v1810
    %2052 = vmatpush1.bf16.msra.mxu0 %v1809
    %2053 = vmatprep.subr.bf16.mxu0 %v1814
    %2054 = vmatpush1.bf16.msra.mxu0 %v1813
    %2055 = vmatprep.subr.bf16.mxu0 %v1818
    %2056 = vmatpush1.bf16.msra.mxu0 %v1817
    %2057 = vmatprep.subr.bf16.mxu0 %v1822
    %2058 = vmatpush1.bf16.msra.mxu0 %v1821
    %2059 = vmatprep.subr.bf16.mxu0 %v1826
    %2060 = vmatpush1.bf16.msra.mxu0 %v1825
    %2061 = vmatprep.subr.bf16.mxu0 %v1830
    %2062 = vmatpush1.bf16.msra.mxu0 %v1829
    %2063 = vmatprep.subr.bf16.mxu0 %v1834
    %2064 = vmatpush1.bf16.msra.mxu0 %v1833
    %2065 = vmatprep.subr.bf16.mxu0 %v1838
    %2066 = vmatpush1.bf16.msra.mxu0 %v1837
    %2067 = vmatprep.subr.bf16.mxu0 %v1842
    %2068 = vmatpush1.bf16.msra.mxu0 %v1841
    %2069 = vmatprep.mubr.bf16.mxu0 %v1242
    %2070 = vmatmul.mubr.bf16.gmra.mrb[0].mxu0 %v1241
    %v2071 = vpop.f32.mrb[0].mxu0
    %v2072 = vadd.f32 %v1380, %v2071
    %v2073 = vpop.f32.mrb[0].mxu0
    %v2074 = vadd.f32 %v1384, %v2073
    %v2075 = vpop.f32.mrb[0].mxu0
    %v2076 = vpop.f32.mrb[0].mxu0
    %2077 = vdwg.mxu0
    %2078 = vmatprep.subr.bf16.mxu0 %v1846
    %2079 = vmatpush1.bf16.msra.mxu0 %v1845
    %2080 = vmatprep.subr.bf16.mxu0 %v1850
    %2081 = vmatpush1.bf16.msra.mxu0 %v1849
    %2082 = vmatprep.subr.bf16.mxu0 %v1854
    %2083 = vmatpush1.bf16.msra.mxu0 %v1853
    %2084 = vmatprep.subr.bf16.mxu0 %v1858
    %2085 = vmatpush1.bf16.msra.mxu0 %v1857
    %2086 = vmatprep.subr.bf16.mxu0 %v1862
    %2087 = vmatpush1.bf16.msra.mxu0 %v1861
    %2088 = vmatprep.subr.bf16.mxu0 %v1866
    %2089 = vmatpush1.bf16.msra.mxu0 %v1865
    %2090 = vmatprep.subr.bf16.mxu0 %v1870
    %2091 = vmatpush1.bf16.msra.mxu0 %v1869
    %2092 = vmatprep.subr.bf16.mxu0 %v1874
    %2093 = vmatpush1.bf16.msra.mxu0 %v1873
    %2094 = vmatprep.subr.bf16.mxu0 %v1878
    %2095 = vmatpush1.bf16.msra.mxu0 %v1877
    %2096 = vmatprep.subr.bf16.mxu0 %v1882
    %2097 = vmatpush1.bf16.msra.mxu0 %v1881
    %2098 = vmatprep.subr.bf16.mxu0 %v1886
    %2099 = vmatpush1.bf16.msra.mxu0 %v1885
    %2100 = vmatprep.subr.bf16.mxu0 %v1890
    %2101 = vmatpush1.bf16.msra.mxu0 %v1889
    %2102 = vmatprep.subr.bf16.mxu0 %v1894
    %2103 = vmatpush1.bf16.msra.mxu0 %v1893
    %2104 = vmatprep.subr.bf16.mxu0 %v1898
    %2105 = vmatpush1.bf16.msra.mxu0 %v1897
    %2106 = vmatprep.subr.bf16.mxu0 %v1902
    %2107 = vmatpush1.bf16.msra.mxu0 %v1901
    %2108 = vmatprep.subr.bf16.mxu0 %v1906
    %2109 = vmatpush1.bf16.msra.mxu0 %v1905
    %2110 = vmatprep.mubr.bf16.mxu0 %v1244
    %2111 = vmatmul.mubr.bf16.gmra.mrb[0].mxu0 %v1243
    %v2112 = vpop.f32.mrb[0].mxu0
    %v2113 = vadd.f32 %v2072, %v2112
    %v2114 = vpop.f32.mrb[0].mxu0
    %v2115 = vadd.f32 %v2074, %v2114
    %v2116 = vpop.f32.mrb[0].mxu0
    %v2117 = vpop.f32.mrb[0].mxu0
    %2118 = vdwg.mxu0
    %2119 = vmatprep.subr.bf16.mxu0 %v1784
    %2120 = vmatpush1.bf16.msra.mxu0 %v1783
    %2121 = vmatprep.subr.bf16.mxu0 %v1788
    %2122 = vmatpush1.bf16.msra.mxu0 %v1787
    %2123 = vmatprep.subr.bf16.mxu0 %v1792
    %2124 = vmatpush1.bf16.msra.mxu0 %v1791
    %2125 = vmatprep.subr.bf16.mxu0 %v1796
    %2126 = vmatpush1.bf16.msra.mxu0 %v1795
    %2127 = vmatprep.subr.bf16.mxu0 %v1800
    %2128 = vmatpush1.bf16.msra.mxu0 %v1799
    %2129 = vmatprep.subr.bf16.mxu0 %v1804
    %2130 = vmatpush1.bf16.msra.mxu0 %v1803
    %2131 = vmatprep.subr.bf16.mxu0 %v1808
    %2132 = vmatpush1.bf16.msra.mxu0 %v1807
    %2133 = vmatprep.subr.bf16.mxu0 %v1812
    %2134 = vmatpush1.bf16.msra.mxu0 %v1811
    %2135 = vmatprep.subr.bf16.mxu0 %v1816
    %2136 = vmatpush1.bf16.msra.mxu0 %v1815
    %2137 = vmatprep.subr.bf16.mxu0 %v1820
    %2138 = vmatpush1.bf16.msra.mxu0 %v1819
    %2139 = vmatprep.subr.bf16.mxu0 %v1824
    %2140 = vmatpush1.bf16.msra.mxu0 %v1823
    %2141 = vmatprep.subr.bf16.mxu0 %v1828
    %2142 = vmatpush1.bf16.msra.mxu0 %v1827
    %2143 = vmatprep.subr.bf16.mxu0 %v1832
    %2144 = vmatpush1.bf16.msra.mxu0 %v1831
    %2145 = vmatprep.subr.bf16.mxu0 %v1836
    %2146 = vmatpush1.bf16.msra.mxu0 %v1835
    %2147 = vmatprep.subr.bf16.mxu0 %v1840
    %2148 = vmatpush1.bf16.msra.mxu0 %v1839
    %2149 = vmatprep.subr.bf16.mxu0 %v1844
    %2150 = vmatpush1.bf16.msra.mxu0 %v1843
    %2151 = vmatprep.mubr.bf16.mxu0 %v1242
    %2152 = vmatmul.mubr.bf16.gmra.mrb[0].mxu0 %v1241
    %v2153 = vpop.f32.mrb[0].mxu0
    %v2154 = vadd.f32 %v1388, %v2153
    %v2155 = vpop.f32.mrb[0].mxu0
    %v2156 = vadd.f32 %v1392, %v2155
    %v2157 = vpop.f32.mrb[0].mxu0
    %v2158 = vpop.f32.mrb[0].mxu0
    %2159 = vdwg.mxu0
    %2160 = vmatprep.subr.bf16.mxu0 %v1848
    %2161 = vmatpush1.bf16.msra.mxu0 %v1847
    %2162 = vmatprep.subr.bf16.mxu0 %v1852
    %2163 = vmatpush1.bf16.msra.mxu0 %v1851
    %2164 = vmatprep.subr.bf16.mxu0 %v1856
    %2165 = vmatpush1.bf16.msra.mxu0 %v1855
    %2166 = vmatprep.subr.bf16.mxu0 %v1860
    %2167 = vmatpush1.bf16.msra.mxu0 %v1859
    %2168 = vmatprep.subr.bf16.mxu0 %v1864
    %2169 = vmatpush1.bf16.msra.mxu0 %v1863
    %2170 = vmatprep.subr.bf16.mxu0 %v1868
    %2171 = vmatpush1.bf16.msra.mxu0 %v1867
    %2172 = vmatprep.subr.bf16.mxu0 %v1872
    %2173 = vmatpush1.bf16.msra.mxu0 %v1871
    %2174 = vmatprep.subr.bf16.mxu0 %v1876
    %2175 = vmatpush1.bf16.msra.mxu0 %v1875
    %2176 = vmatprep.subr.bf16.mxu0 %v1880
    %2177 = vmatpush1.bf16.msra.mxu0 %v1879
    %2178 = vmatprep.subr.bf16.mxu0 %v1884
    %2179 = vmatpush1.bf16.msra.mxu0 %v1883
    %2180 = vmatprep.subr.bf16.mxu0 %v1888
    %2181 = vmatpush1.bf16.msra.mxu0 %v1887
    %2182 = vmatprep.subr.bf16.mxu0 %v1892
    %2183 = vmatpush1.bf16.msra.mxu0 %v1891
    %2184 = vmatprep.subr.bf16.mxu0 %v1896
    %2185 = vmatpush1.bf16.msra.mxu0 %v1895
    %2186 = vmatprep.subr.bf16.mxu0 %v1900
    %2187 = vmatpush1.bf16.msra.mxu0 %v1899
    %2188 = vmatprep.subr.bf16.mxu0 %v1904
    %2189 = vmatpush1.bf16.msra.mxu0 %v1903
    %2190 = vmatprep.subr.bf16.mxu0 %v1908
    %2191 = vmatpush1.bf16.msra.mxu0 %v1907
    %2192 = vmatprep.mubr.bf16.mxu0 %v1244
    %2193 = vmatmul.mubr.bf16.gmra.mrb[0].mxu0 %v1243
    %v2194 = vpop.f32.mrb[0].mxu0
    %v2195 = vadd.f32 %v2154, %v2194
    %v2196 = vpop.f32.mrb[0].mxu0
    %v2197 = vadd.f32 %v2156, %v2196
    %v2198 = vpop.f32.mrb[0].mxu0
    %v2199 = vpop.f32.mrb[0].mxu0
    %2200 = vdwg.mxu0
    %v2201 = vmax.f32 %v2113, 0.0
    %v2202 = vmax.f32 %v2115, 0.0
    %v2203 = vmax.f32 %v2195, 0.0
    %v2204 = vmax.f32 %v2197, 0.0
    %v2205 = vpack.c.bf16 %v2201, %v2201
    %v2206 = vpack.c.bf16 %v2202, %v2202
    %v2207 = vpack.c.bf16 %v2203, %v2203
    %v2208 = vpack.c.bf16 %v2204, %v2204
    %s2209 = scalar_lea.vmem [#allocation7], 2048
    %v2210 = vld [vmem:[%s2209] sm:$0xff]
    %v2211 = vld [vmem:[%s2209 + $0x8] sm:$0xff]
    %v2212 = vld [vmem:[%s2209 + $0x10] sm:$0xff]
    %v2213 = vld [vmem:[%s2209 + $0x18] sm:$0xff]
    %v2214 = vld [vmem:[%s2209 + $0x20] sm:$0xff]
    %v2215 = vld [vmem:[%s2209 + $0x28] sm:$0xff]
    %v2216 = vld [vmem:[%s2209 + $0x30] sm:$0xff]
    %v2217 = vld [vmem:[%s2209 + $0x38] sm:$0xff]
    %v2218 = vld [vmem:[%s2209 + $0x40] sm:$0xff]
    %v2219 = vld [vmem:[%s2209 + $0x48] sm:$0xff]
    %v2220 = vld [vmem:[%s2209 + $0x50] sm:$0xff]
    %v2221 = vld [vmem:[%s2209 + $0x58] sm:$0xff]
    %v2222 = vld [vmem:[%s2209 + $0x60] sm:$0xff]
    %v2223 = vld [vmem:[%s2209 + $0x68] sm:$0xff]
    %v2224 = vld [vmem:[%s2209 + $0x70] sm:$0xff]
    %v2225 = vld [vmem:[%s2209 + $0x78] sm:$0xff]
    %v2226 = vld [vmem:[%s2209 + $0x80] sm:$0xff]
    %v2227 = vld [vmem:[%s2209 + $0x88] sm:$0xff]
    %v2228 = vld [vmem:[%s2209 + $0x90] sm:$0xff]
    %v2229 = vld [vmem:[%s2209 + $0x98] sm:$0xff]
    %v2230 = vld [vmem:[%s2209 + $0xa0] sm:$0xff]
    %v2231 = vld [vmem:[%s2209 + $0xa8] sm:$0xff]
    %v2232 = vld [vmem:[%s2209 + $0xb0] sm:$0xff]
    %v2233 = vld [vmem:[%s2209 + $0xb8] sm:$0xff]
    %v2234 = vld [vmem:[%s2209 + $0xc0] sm:$0xff]
    %v2235 = vld [vmem:[%s2209 + $0xc8] sm:$0xff]
    %v2236 = vld [vmem:[%s2209 + $0xd0] sm:$0xff]
    %v2237 = vld [vmem:[%s2209 + $0xd8] sm:$0xff]
    %v2238 = vld [vmem:[%s2209 + $0xe0] sm:$0xff]
    %v2239 = vld [vmem:[%s2209 + $0xe8] sm:$0xff]
    %v2240 = vld [vmem:[%s2209 + $0xf0] sm:$0xff]
    %v2241 = vld [vmem:[%s2209 + $0xf8] sm:$0xff]
    %v2242 = vld [vmem:[%s2209 + $0x100] sm:$0xff]
    %v2243 = vld [vmem:[%s2209 + $0x108] sm:$0xff]
    %v2244 = vld [vmem:[%s2209 + $0x110] sm:$0xff]
    %v2245 = vld [vmem:[%s2209 + $0x118] sm:$0xff]
    %v2246 = vld [vmem:[%s2209 + $0x120] sm:$0xff]
    %v2247 = vld [vmem:[%s2209 + $0x128] sm:$0xff]
    %v2248 = vld [vmem:[%s2209 + $0x130] sm:$0xff]
    %v2249 = vld [vmem:[%s2209 + $0x138] sm:$0xff]
    %v2250 = vld [vmem:[%s2209 + $0x140] sm:$0xff]
    %v2251 = vld [vmem:[%s2209 + $0x148] sm:$0xff]
    %v2252 = vld [vmem:[%s2209 + $0x150] sm:$0xff]
    %v2253 = vld [vmem:[%s2209 + $0x158] sm:$0xff]
    %v2254 = vld [vmem:[%s2209 + $0x160] sm:$0xff]
    %v2255 = vld [vmem:[%s2209 + $0x168] sm:$0xff]
    %v2256 = vld [vmem:[%s2209 + $0x170] sm:$0xff]
    %v2257 = vld [vmem:[%s2209 + $0x178] sm:$0xff]
    %v2258 = vld [vmem:[%s2209 + $0x180] sm:$0xff]
    %v2259 = vld [vmem:[%s2209 + $0x188] sm:$0xff]
    %v2260 = vld [vmem:[%s2209 + $0x190] sm:$0xff]
    %v2261 = vld [vmem:[%s2209 + $0x198] sm:$0xff]
    %v2262 = vld [vmem:[%s2209 + $0x1a0] sm:$0xff]
    %v2263 = vld [vmem:[%s2209 + $0x1a8] sm:$0xff]
    %v2264 = vld [vmem:[%s2209 + $0x1b0] sm:$0xff]
    %v2265 = vld [vmem:[%s2209 + $0x1b8] sm:$0xff]
    %v2266 = vld [vmem:[%s2209 + $0x1c0] sm:$0xff]
    %v2267 = vld [vmem:[%s2209 + $0x1c8] sm:$0xff]
    %v2268 = vld [vmem:[%s2209 + $0x1d0] sm:$0xff]
    %v2269 = vld [vmem:[%s2209 + $0x1d8] sm:$0xff]
    %v2270 = vld [vmem:[%s2209 + $0x1e0] sm:$0xff]
    %v2271 = vld [vmem:[%s2209 + $0x1e8] sm:$0xff]
    %v2272 = vld [vmem:[%s2209 + $0x1f0] sm:$0xff]
    %v2273 = vld [vmem:[%s2209 + $0x1f8] sm:$0xff]
    %v2274 = vld [vmem:[%s2209 + $0x200] sm:$0xff]
    %v2275 = vld [vmem:[%s2209 + $0x208] sm:$0xff]
    %v2276 = vld [vmem:[%s2209 + $0x210] sm:$0xff]
    %v2277 = vld [vmem:[%s2209 + $0x218] sm:$0xff]
    %v2278 = vld [vmem:[%s2209 + $0x220] sm:$0xff]
    %v2279 = vld [vmem:[%s2209 + $0x228] sm:$0xff]
    %v2280 = vld [vmem:[%s2209 + $0x230] sm:$0xff]
    %v2281 = vld [vmem:[%s2209 + $0x238] sm:$0xff]
    %v2282 = vld [vmem:[%s2209 + $0x240] sm:$0xff]
    %v2283 = vld [vmem:[%s2209 + $0x248] sm:$0xff]
    %v2284 = vld [vmem:[%s2209 + $0x250] sm:$0xff]
    %v2285 = vld [vmem:[%s2209 + $0x258] sm:$0xff]
    %v2286 = vld [vmem:[%s2209 + $0x260] sm:$0xff]
    %v2287 = vld [vmem:[%s2209 + $0x268] sm:$0xff]
    %v2288 = vld [vmem:[%s2209 + $0x270] sm:$0xff]
    %v2289 = vld [vmem:[%s2209 + $0x278] sm:$0xff]
    %v2290 = vld [vmem:[%s2209 + $0x280] sm:$0xff]
    %v2291 = vld [vmem:[%s2209 + $0x288] sm:$0xff]
    %v2292 = vld [vmem:[%s2209 + $0x290] sm:$0xff]
    %v2293 = vld [vmem:[%s2209 + $0x298] sm:$0xff]
    %v2294 = vld [vmem:[%s2209 + $0x2a0] sm:$0xff]
    %v2295 = vld [vmem:[%s2209 + $0x2a8] sm:$0xff]
    %v2296 = vld [vmem:[%s2209 + $0x2b0] sm:$0xff]
    %v2297 = vld [vmem:[%s2209 + $0x2b8] sm:$0xff]
    %v2298 = vld [vmem:[%s2209 + $0x2c0] sm:$0xff]
    %v2299 = vld [vmem:[%s2209 + $0x2c8] sm:$0xff]
    %v2300 = vld [vmem:[%s2209 + $0x2d0] sm:$0xff]
    %v2301 = vld [vmem:[%s2209 + $0x2d8] sm:$0xff]
    %v2302 = vld [vmem:[%s2209 + $0x2e0] sm:$0xff]
    %v2303 = vld [vmem:[%s2209 + $0x2e8] sm:$0xff]
    %v2304 = vld [vmem:[%s2209 + $0x2f0] sm:$0xff]
    %v2305 = vld [vmem:[%s2209 + $0x2f8] sm:$0xff]
    %v2306 = vld [vmem:[%s2209 + $0x300] sm:$0xff]
    %v2307 = vld [vmem:[%s2209 + $0x308] sm:$0xff]
    %v2308 = vld [vmem:[%s2209 + $0x310] sm:$0xff]
    %v2309 = vld [vmem:[%s2209 + $0x318] sm:$0xff]
    %v2310 = vld [vmem:[%s2209 + $0x320] sm:$0xff]
    %v2311 = vld [vmem:[%s2209 + $0x328] sm:$0xff]
    %v2312 = vld [vmem:[%s2209 + $0x330] sm:$0xff]
    %v2313 = vld [vmem:[%s2209 + $0x338] sm:$0xff]
    %v2314 = vld [vmem:[%s2209 + $0x340] sm:$0xff]
    %v2315 = vld [vmem:[%s2209 + $0x348] sm:$0xff]
    %v2316 = vld [vmem:[%s2209 + $0x350] sm:$0xff]
    %v2317 = vld [vmem:[%s2209 + $0x358] sm:$0xff]
    %v2318 = vld [vmem:[%s2209 + $0x360] sm:$0xff]
    %v2319 = vld [vmem:[%s2209 + $0x368] sm:$0xff]
    %v2320 = vld [vmem:[%s2209 + $0x370] sm:$0xff]
    %v2321 = vld [vmem:[%s2209 + $0x378] sm:$0xff]
    %v2322 = vld [vmem:[%s2209 + $0x380] sm:$0xff]
    %v2323 = vld [vmem:[%s2209 + $0x388] sm:$0xff]
    %v2324 = vld [vmem:[%s2209 + $0x390] sm:$0xff]
    %v2325 = vld [vmem:[%s2209 + $0x398] sm:$0xff]
    %v2326 = vld [vmem:[%s2209 + $0x3a0] sm:$0xff]
    %v2327 = vld [vmem:[%s2209 + $0x3a8] sm:$0xff]
    %v2328 = vld [vmem:[%s2209 + $0x3b0] sm:$0xff]
    %v2329 = vld [vmem:[%s2209 + $0x3b8] sm:$0xff]
    %v2330 = vld [vmem:[%s2209 + $0x3c0] sm:$0xff]
    %v2331 = vld [vmem:[%s2209 + $0x3c8] sm:$0xff]
    %v2332 = vld [vmem:[%s2209 + $0x3d0] sm:$0xff]
    %v2333 = vld [vmem:[%s2209 + $0x3d8] sm:$0xff]
    %v2334 = vld [vmem:[%s2209 + $0x3e0] sm:$0xff]
    %v2335 = vld [vmem:[%s2209 + $0x3e8] sm:$0xff]
    %v2336 = vld [vmem:[%s2209 + $0x3f0] sm:$0xff]
    %v2337 = vld [vmem:[%s2209 + $0x3f8] sm:$0xff]
    %s2338 = scalar_lea.vmem [#allocation9], 8
    %v2339 = vld [vmem:[%s2338] sm:$0xf]
    %v2341 = vlaneseq
    %v2342 = vshrl.u32 %v2341, 7
    %v2343 = vsub.s32 0, %v2342
    %v2344 = vrot.slane %v2339, %v2343
    %v2345 = vlaneseq
    %v2346 = vshrl.u32 %v2345, 7
    %v2347 = vsub.s32 1, %v2346
    %v2348 = vrot.slane %v2339, %v2347
    %v2349 = vlaneseq
    %v2350 = vshrl.u32 %v2349, 7
    %v2351 = vsub.s32 2, %v2350
    %v2352 = vrot.slane %v2339, %v2351
    %v2353 = vlaneseq
    %v2354 = vshrl.u32 %v2353, 7
    %v2355 = vsub.s32 3, %v2354
    %v2356 = vrot.slane %v2339, %v2355
    %v2489 = vunpack.c.l.b16 %v2210
    %v2490 = vunpack.c.h.b16 %v2210
    %v2491 = vunpack.c.l.b16 %v2211
    %v2492 = vunpack.c.h.b16 %v2211
    %v2493 = vunpack.c.l.b16 %v2212
    %v2494 = vunpack.c.h.b16 %v2212
    %v2495 = vunpack.c.l.b16 %v2213
    %v2496 = vunpack.c.h.b16 %v2213
    %v2497 = vunpack.c.l.b16 %v2214
    %v2498 = vunpack.c.h.b16 %v2214
    %v2499 = vunpack.c.l.b16 %v2215
    %v2500 = vunpack.c.h.b16 %v2215
    %v2501 = vunpack.c.l.b16 %v2216
    %v2502 = vunpack.c.h.b16 %v2216
    %v2503 = vunpack.c.l.b16 %v2217
    %v2504 = vunpack.c.h.b16 %v2217
    %v2505 = vunpack.c.l.b16 %v2218
    %v2506 = vunpack.c.h.b16 %v2218
    %v2507 = vunpack.c.l.b16 %v2219
    %v2508 = vunpack.c.h.b16 %v2219
    %v2509 = vunpack.c.l.b16 %v2220
    %v2510 = vunpack.c.h.b16 %v2220
    %v2511 = vunpack.c.l.b16 %v2221
    %v2512 = vunpack.c.h.b16 %v2221
    %v2513 = vunpack.c.l.b16 %v2222
    %v2514 = vunpack.c.h.b16 %v2222
    %v2515 = vunpack.c.l.b16 %v2223
    %v2516 = vunpack.c.h.b16 %v2223
    %v2517 = vunpack.c.l.b16 %v2224
    %v2518 = vunpack.c.h.b16 %v2224
    %v2519 = vunpack.c.l.b16 %v2225
    %v2520 = vunpack.c.h.b16 %v2225
    %v2521 = vunpack.c.l.b16 %v2226
    %v2522 = vunpack.c.h.b16 %v2226
    %v2523 = vunpack.c.l.b16 %v2227
    %v2524 = vunpack.c.h.b16 %v2227
    %v2525 = vunpack.c.l.b16 %v2228
    %v2526 = vunpack.c.h.b16 %v2228
    %v2527 = vunpack.c.l.b16 %v2229
    %v2528 = vunpack.c.h.b16 %v2229
    %v2529 = vunpack.c.l.b16 %v2230
    %v2530 = vunpack.c.h.b16 %v2230
    %v2531 = vunpack.c.l.b16 %v2231
    %v2532 = vunpack.c.h.b16 %v2231
    %v2533 = vunpack.c.l.b16 %v2232
    %v2534 = vunpack.c.h.b16 %v2232
    %v2535 = vunpack.c.l.b16 %v2233
    %v2536 = vunpack.c.h.b16 %v2233
    %v2537 = vunpack.c.l.b16 %v2234
    %v2538 = vunpack.c.h.b16 %v2234
    %v2539 = vunpack.c.l.b16 %v2235
    %v2540 = vunpack.c.h.b16 %v2235
    %v2541 = vunpack.c.l.b16 %v2236
    %v2542 = vunpack.c.h.b16 %v2236
    %v2543 = vunpack.c.l.b16 %v2237
    %v2544 = vunpack.c.h.b16 %v2237
    %v2545 = vunpack.c.l.b16 %v2238
    %v2546 = vunpack.c.h.b16 %v2238
    %v2547 = vunpack.c.l.b16 %v2239
    %v2548 = vunpack.c.h.b16 %v2239
    %v2549 = vunpack.c.l.b16 %v2240
    %v2550 = vunpack.c.h.b16 %v2240
    %v2551 = vunpack.c.l.b16 %v2241
    %v2552 = vunpack.c.h.b16 %v2241
    %v2553 = vunpack.c.l.b16 %v2242
    %v2554 = vunpack.c.h.b16 %v2242
    %v2555 = vunpack.c.l.b16 %v2243
    %v2556 = vunpack.c.h.b16 %v2243
    %v2557 = vunpack.c.l.b16 %v2244
    %v2558 = vunpack.c.h.b16 %v2244
    %v2559 = vunpack.c.l.b16 %v2245
    %v2560 = vunpack.c.h.b16 %v2245
    %v2561 = vunpack.c.l.b16 %v2246
    %v2562 = vunpack.c.h.b16 %v2246
    %v2563 = vunpack.c.l.b16 %v2247
    %v2564 = vunpack.c.h.b16 %v2247
    %v2565 = vunpack.c.l.b16 %v2248
    %v2566 = vunpack.c.h.b16 %v2248
    %v2567 = vunpack.c.l.b16 %v2249
    %v2568 = vunpack.c.h.b16 %v2249
    %v2569 = vunpack.c.l.b16 %v2250
    %v2570 = vunpack.c.h.b16 %v2250
    %v2571 = vunpack.c.l.b16 %v2251
    %v2572 = vunpack.c.h.b16 %v2251
    %v2573 = vunpack.c.l.b16 %v2252
    %v2574 = vunpack.c.h.b16 %v2252
    %v2575 = vunpack.c.l.b16 %v2253
    %v2576 = vunpack.c.h.b16 %v2253
    %v2577 = vunpack.c.l.b16 %v2254
    %v2578 = vunpack.c.h.b16 %v2254
    %v2579 = vunpack.c.l.b16 %v2255
    %v2580 = vunpack.c.h.b16 %v2255
    %v2581 = vunpack.c.l.b16 %v2256
    %v2582 = vunpack.c.h.b16 %v2256
    %v2583 = vunpack.c.l.b16 %v2257
    %v2584 = vunpack.c.h.b16 %v2257
    %v2585 = vunpack.c.l.b16 %v2258
    %v2586 = vunpack.c.h.b16 %v2258
    %v2587 = vunpack.c.l.b16 %v2259
    %v2588 = vunpack.c.h.b16 %v2259
    %v2589 = vunpack.c.l.b16 %v2260
    %v2590 = vunpack.c.h.b16 %v2260
    %v2591 = vunpack.c.l.b16 %v2261
    %v2592 = vunpack.c.h.b16 %v2261
    %v2593 = vunpack.c.l.b16 %v2262
    %v2594 = vunpack.c.h.b16 %v2262
    %v2595 = vunpack.c.l.b16 %v2263
    %v2596 = vunpack.c.h.b16 %v2263
    %v2597 = vunpack.c.l.b16 %v2264
    %v2598 = vunpack.c.h.b16 %v2264
    %v2599 = vunpack.c.l.b16 %v2265
    %v2600 = vunpack.c.h.b16 %v2265
    %v2601 = vunpack.c.l.b16 %v2266
    %v2602 = vunpack.c.h.b16 %v2266
    %v2603 = vunpack.c.l.b16 %v2267
    %v2604 = vunpack.c.h.b16 %v2267
    %v2605 = vunpack.c.l.b16 %v2268
    %v2606 = vunpack.c.h.b16 %v2268
    %v2607 = vunpack.c.l.b16 %v2269
    %v2608 = vunpack.c.h.b16 %v2269
    %v2609 = vunpack.c.l.b16 %v2270
    %v2610 = vunpack.c.h.b16 %v2270
    %v2611 = vunpack.c.l.b16 %v2271
    %v2612 = vunpack.c.h.b16 %v2271
    %v2613 = vunpack.c.l.b16 %v2272
    %v2614 = vunpack.c.h.b16 %v2272
    %v2615 = vunpack.c.l.b16 %v2273
    %v2616 = vunpack.c.h.b16 %v2273
    %v2617 = vunpack.c.l.b16 %v2274
    %v2618 = vunpack.c.h.b16 %v2274
    %v2619 = vunpack.c.l.b16 %v2275
    %v2620 = vunpack.c.h.b16 %v2275
    %v2621 = vunpack.c.l.b16 %v2276
    %v2622 = vunpack.c.h.b16 %v2276
    %v2623 = vunpack.c.l.b16 %v2277
    %v2624 = vunpack.c.h.b16 %v2277
    %v2625 = vunpack.c.l.b16 %v2278
    %v2626 = vunpack.c.h.b16 %v2278
    %v2627 = vunpack.c.l.b16 %v2279
    %v2628 = vunpack.c.h.b16 %v2279
    %v2629 = vunpack.c.l.b16 %v2280
    %v2630 = vunpack.c.h.b16 %v2280
    %v2631 = vunpack.c.l.b16 %v2281
    %v2632 = vunpack.c.h.b16 %v2281
    %v2633 = vunpack.c.l.b16 %v2282
    %v2634 = vunpack.c.h.b16 %v2282
    %v2635 = vunpack.c.l.b16 %v2283
    %v2636 = vunpack.c.h.b16 %v2283
    %v2637 = vunpack.c.l.b16 %v2284
    %v2638 = vunpack.c.h.b16 %v2284
    %v2639 = vunpack.c.l.b16 %v2285
    %v2640 = vunpack.c.h.b16 %v2285
    %v2641 = vunpack.c.l.b16 %v2286
    %v2642 = vunpack.c.h.b16 %v2286
    %v2643 = vunpack.c.l.b16 %v2287
    %v2644 = vunpack.c.h.b16 %v2287
    %v2645 = vunpack.c.l.b16 %v2288
    %v2646 = vunpack.c.h.b16 %v2288
    %v2647 = vunpack.c.l.b16 %v2289
    %v2648 = vunpack.c.h.b16 %v2289
    %v2649 = vunpack.c.l.b16 %v2290
    %v2650 = vunpack.c.h.b16 %v2290
    %v2651 = vunpack.c.l.b16 %v2291
    %v2652 = vunpack.c.h.b16 %v2291
    %v2653 = vunpack.c.l.b16 %v2292
    %v2654 = vunpack.c.h.b16 %v2292
    %v2655 = vunpack.c.l.b16 %v2293
    %v2656 = vunpack.c.h.b16 %v2293
    %v2657 = vunpack.c.l.b16 %v2294
    %v2658 = vunpack.c.h.b16 %v2294
    %v2659 = vunpack.c.l.b16 %v2295
    %v2660 = vunpack.c.h.b16 %v2295
    %v2661 = vunpack.c.l.b16 %v2296
    %v2662 = vunpack.c.h.b16 %v2296
    %v2663 = vunpack.c.l.b16 %v2297
    %v2664 = vunpack.c.h.b16 %v2297
    %v2665 = vunpack.c.l.b16 %v2298
    %v2666 = vunpack.c.h.b16 %v2298
    %v2667 = vunpack.c.l.b16 %v2299
    %v2668 = vunpack.c.h.b16 %v2299
    %v2669 = vunpack.c.l.b16 %v2300
    %v2670 = vunpack.c.h.b16 %v2300
    %v2671 = vunpack.c.l.b16 %v2301
    %v2672 = vunpack.c.h.b16 %v2301
    %v2673 = vunpack.c.l.b16 %v2302
    %v2674 = vunpack.c.h.b16 %v2302
    %v2675 = vunpack.c.l.b16 %v2303
    %v2676 = vunpack.c.h.b16 %v2303
    %v2677 = vunpack.c.l.b16 %v2304
    %v2678 = vunpack.c.h.b16 %v2304
    %v2679 = vunpack.c.l.b16 %v2305
    %v2680 = vunpack.c.h.b16 %v2305
    %v2681 = vunpack.c.l.b16 %v2306
    %v2682 = vunpack.c.h.b16 %v2306
    %v2683 = vunpack.c.l.b16 %v2307
    %v2684 = vunpack.c.h.b16 %v2307
    %v2685 = vunpack.c.l.b16 %v2308
    %v2686 = vunpack.c.h.b16 %v2308
    %v2687 = vunpack.c.l.b16 %v2309
    %v2688 = vunpack.c.h.b16 %v2309
    %v2689 = vunpack.c.l.b16 %v2310
    %v2690 = vunpack.c.h.b16 %v2310
    %v2691 = vunpack.c.l.b16 %v2311
    %v2692 = vunpack.c.h.b16 %v2311
    %v2693 = vunpack.c.l.b16 %v2312
    %v2694 = vunpack.c.h.b16 %v2312
    %v2695 = vunpack.c.l.b16 %v2313
    %v2696 = vunpack.c.h.b16 %v2313
    %v2697 = vunpack.c.l.b16 %v2314
    %v2698 = vunpack.c.h.b16 %v2314
    %v2699 = vunpack.c.l.b16 %v2315
    %v2700 = vunpack.c.h.b16 %v2315
    %v2701 = vunpack.c.l.b16 %v2316
    %v2702 = vunpack.c.h.b16 %v2316
    %v2703 = vunpack.c.l.b16 %v2317
    %v2704 = vunpack.c.h.b16 %v2317
    %v2705 = vunpack.c.l.b16 %v2318
    %v2706 = vunpack.c.h.b16 %v2318
    %v2707 = vunpack.c.l.b16 %v2319
    %v2708 = vunpack.c.h.b16 %v2319
    %v2709 = vunpack.c.l.b16 %v2320
    %v2710 = vunpack.c.h.b16 %v2320
    %v2711 = vunpack.c.l.b16 %v2321
    %v2712 = vunpack.c.h.b16 %v2321
    %v2713 = vunpack.c.l.b16 %v2322
    %v2714 = vunpack.c.h.b16 %v2322
    %v2715 = vunpack.c.l.b16 %v2323
    %v2716 = vunpack.c.h.b16 %v2323
    %v2717 = vunpack.c.l.b16 %v2324
    %v2718 = vunpack.c.h.b16 %v2324
    %v2719 = vunpack.c.l.b16 %v2325
    %v2720 = vunpack.c.h.b16 %v2325
    %v2721 = vunpack.c.l.b16 %v2326
    %v2722 = vunpack.c.h.b16 %v2326
    %v2723 = vunpack.c.l.b16 %v2327
    %v2724 = vunpack.c.h.b16 %v2327
    %v2725 = vunpack.c.l.b16 %v2328
    %v2726 = vunpack.c.h.b16 %v2328
    %v2727 = vunpack.c.l.b16 %v2329
    %v2728 = vunpack.c.h.b16 %v2329
    %v2729 = vunpack.c.l.b16 %v2330
    %v2730 = vunpack.c.h.b16 %v2330
    %v2731 = vunpack.c.l.b16 %v2331
    %v2732 = vunpack.c.h.b16 %v2331
    %v2733 = vunpack.c.l.b16 %v2332
    %v2734 = vunpack.c.h.b16 %v2332
    %v2735 = vunpack.c.l.b16 %v2333
    %v2736 = vunpack.c.h.b16 %v2333
    %v2737 = vunpack.c.l.b16 %v2334
    %v2738 = vunpack.c.h.b16 %v2334
    %v2739 = vunpack.c.l.b16 %v2335
    %v2740 = vunpack.c.h.b16 %v2335
    %v2741 = vunpack.c.l.b16 %v2336
    %v2742 = vunpack.c.h.b16 %v2336
    %v2743 = vunpack.c.l.b16 %v2337
    %v2744 = vunpack.c.h.b16 %v2337
    %v2745 = vpack.c.b16 %v2493, %v2489
    %v2746 = vpack.c.b16 %v2494, %v2490
    %v2747 = vpack.c.b16 %v2495, %v2491
    %v2748 = vpack.c.b16 %v2496, %v2492
    %v2749 = vpack.c.b16 %v2501, %v2497
    %v2750 = vpack.c.b16 %v2502, %v2498
    %v2751 = vpack.c.b16 %v2503, %v2499
    %v2752 = vpack.c.b16 %v2504, %v2500
    %v2753 = vpack.c.b16 %v2509, %v2505
    %v2754 = vpack.c.b16 %v2510, %v2506
    %v2755 = vpack.c.b16 %v2511, %v2507
    %v2756 = vpack.c.b16 %v2512, %v2508
    %v2757 = vpack.c.b16 %v2517, %v2513
    %v2758 = vpack.c.b16 %v2518, %v2514
    %v2759 = vpack.c.b16 %v2519, %v2515
    %v2760 = vpack.c.b16 %v2520, %v2516
    %v2761 = vpack.c.b16 %v2525, %v2521
    %v2762 = vpack.c.b16 %v2526, %v2522
    %v2763 = vpack.c.b16 %v2527, %v2523
    %v2764 = vpack.c.b16 %v2528, %v2524
    %v2765 = vpack.c.b16 %v2533, %v2529
    %v2766 = vpack.c.b16 %v2534, %v2530
    %v2767 = vpack.c.b16 %v2535, %v2531
    %v2768 = vpack.c.b16 %v2536, %v2532
    %v2769 = vpack.c.b16 %v2541, %v2537
    %v2770 = vpack.c.b16 %v2542, %v2538
    %v2771 = vpack.c.b16 %v2543, %v2539
    %v2772 = vpack.c.b16 %v2544, %v2540
    %v2773 = vpack.c.b16 %v2549, %v2545
    %v2774 = vpack.c.b16 %v2550, %v2546
    %v2775 = vpack.c.b16 %v2551, %v2547
    %v2776 = vpack.c.b16 %v2552, %v2548
    %v2777 = vpack.c.b16 %v2557, %v2553
    %v2778 = vpack.c.b16 %v2558, %v2554
    %v2779 = vpack.c.b16 %v2559, %v2555
    %v2780 = vpack.c.b16 %v2560, %v2556
    %v2781 = vpack.c.b16 %v2565, %v2561
    %v2782 = vpack.c.b16 %v2566, %v2562
    %v2783 = vpack.c.b16 %v2567, %v2563
    %v2784 = vpack.c.b16 %v2568, %v2564
    %v2785 = vpack.c.b16 %v2573, %v2569
    %v2786 = vpack.c.b16 %v2574, %v2570
    %v2787 = vpack.c.b16 %v2575, %v2571
    %v2788 = vpack.c.b16 %v2576, %v2572
    %v2789 = vpack.c.b16 %v2581, %v2577
    %v2790 = vpack.c.b16 %v2582, %v2578
    %v2791 = vpack.c.b16 %v2583, %v2579
    %v2792 = vpack.c.b16 %v2584, %v2580
    %v2793 = vpack.c.b16 %v2589, %v2585
    %v2794 = vpack.c.b16 %v2590, %v2586
    %v2795 = vpack.c.b16 %v2591, %v2587
    %v2796 = vpack.c.b16 %v2592, %v2588
    %v2797 = vpack.c.b16 %v2597, %v2593
    %v2798 = vpack.c.b16 %v2598, %v2594
    %v2799 = vpack.c.b16 %v2599, %v2595
    %v2800 = vpack.c.b16 %v2600, %v2596
    %v2801 = vpack.c.b16 %v2605, %v2601
    %v2802 = vpack.c.b16 %v2606, %v2602
    %v2803 = vpack.c.b16 %v2607, %v2603
    %v2804 = vpack.c.b16 %v2608, %v2604
    %v2805 = vpack.c.b16 %v2613, %v2609
    %v2806 = vpack.c.b16 %v2614, %v2610
    %v2807 = vpack.c.b16 %v2615, %v2611
    %v2808 = vpack.c.b16 %v2616, %v2612
    %v2809 = vpack.c.b16 %v2621, %v2617
    %v2810 = vpack.c.b16 %v2622, %v2618
    %v2811 = vpack.c.b16 %v2623, %v2619
    %v2812 = vpack.c.b16 %v2624, %v2620
    %v2813 = vpack.c.b16 %v2629, %v2625
    %v2814 = vpack.c.b16 %v2630, %v2626
    %v2815 = vpack.c.b16 %v2631, %v2627
    %v2816 = vpack.c.b16 %v2632, %v2628
    %v2817 = vpack.c.b16 %v2637, %v2633
    %v2818 = vpack.c.b16 %v2638, %v2634
    %v2819 = vpack.c.b16 %v2639, %v2635
    %v2820 = vpack.c.b16 %v2640, %v2636
    %v2821 = vpack.c.b16 %v2645, %v2641
    %v2822 = vpack.c.b16 %v2646, %v2642
    %v2823 = vpack.c.b16 %v2647, %v2643
    %v2824 = vpack.c.b16 %v2648, %v2644
    %v2825 = vpack.c.b16 %v2653, %v2649
    %v2826 = vpack.c.b16 %v2654, %v2650
    %v2827 = vpack.c.b16 %v2655, %v2651
    %v2828 = vpack.c.b16 %v2656, %v2652
    %v2829 = vpack.c.b16 %v2661, %v2657
    %v2830 = vpack.c.b16 %v2662, %v2658
    %v2831 = vpack.c.b16 %v2663, %v2659
    %v2832 = vpack.c.b16 %v2664, %v2660
    %v2833 = vpack.c.b16 %v2669, %v2665
    %v2834 = vpack.c.b16 %v2670, %v2666
    %v2835 = vpack.c.b16 %v2671, %v2667
    %v2836 = vpack.c.b16 %v2672, %v2668
    %v2837 = vpack.c.b16 %v2677, %v2673
    %v2838 = vpack.c.b16 %v2678, %v2674
    %v2839 = vpack.c.b16 %v2679, %v2675
    %v2840 = vpack.c.b16 %v2680, %v2676
    %v2841 = vpack.c.b16 %v2685, %v2681
    %v2842 = vpack.c.b16 %v2686, %v2682
    %v2843 = vpack.c.b16 %v2687, %v2683
    %v2844 = vpack.c.b16 %v2688, %v2684
    %v2845 = vpack.c.b16 %v2693, %v2689
    %v2846 = vpack.c.b16 %v2694, %v2690
    %v2847 = vpack.c.b16 %v2695, %v2691
    %v2848 = vpack.c.b16 %v2696, %v2692
    %v2849 = vpack.c.b16 %v2701, %v2697
    %v2850 = vpack.c.b16 %v2702, %v2698
    %v2851 = vpack.c.b16 %v2703, %v2699
    %v2852 = vpack.c.b16 %v2704, %v2700
    %v2853 = vpack.c.b16 %v2709, %v2705
    %v2854 = vpack.c.b16 %v2710, %v2706
    %v2855 = vpack.c.b16 %v2711, %v2707
    %v2856 = vpack.c.b16 %v2712, %v2708
    %v2857 = vpack.c.b16 %v2717, %v2713
    %v2858 = vpack.c.b16 %v2718, %v2714
    %v2859 = vpack.c.b16 %v2719, %v2715
    %v2860 = vpack.c.b16 %v2720, %v2716
    %v2861 = vpack.c.b16 %v2725, %v2721
    %v2862 = vpack.c.b16 %v2726, %v2722
    %v2863 = vpack.c.b16 %v2727, %v2723
    %v2864 = vpack.c.b16 %v2728, %v2724
    %v2865 = vpack.c.b16 %v2733, %v2729
    %v2866 = vpack.c.b16 %v2734, %v2730
    %v2867 = vpack.c.b16 %v2735, %v2731
    %v2868 = vpack.c.b16 %v2736, %v2732
    %v2869 = vpack.c.b16 %v2741, %v2737
    %v2870 = vpack.c.b16 %v2742, %v2738
    %v2871 = vpack.c.b16 %v2743, %v2739
    %v2872 = vpack.c.b16 %v2744, %v2740
    %3001 = vmatprep.subr.bf16.mxu0 %v2746
    %3002 = vmatpush1.bf16.msra.mxu0 %v2745
    %3003 = vmatprep.subr.bf16.mxu0 %v2750
    %3004 = vmatpush1.bf16.msra.mxu0 %v2749
    %3005 = vmatprep.subr.bf16.mxu0 %v2754
    %3006 = vmatpush1.bf16.msra.mxu0 %v2753
    %3007 = vmatprep.subr.bf16.mxu0 %v2758
    %3008 = vmatpush1.bf16.msra.mxu0 %v2757
    %3009 = vmatprep.subr.bf16.mxu0 %v2762
    %3010 = vmatpush1.bf16.msra.mxu0 %v2761
    %3011 = vmatprep.subr.bf16.mxu0 %v2766
    %3012 = vmatpush1.bf16.msra.mxu0 %v2765
    %3013 = vmatprep.subr.bf16.mxu0 %v2770
    %3014 = vmatpush1.bf16.msra.mxu0 %v2769
    %3015 = vmatprep.subr.bf16.mxu0 %v2774
    %3016 = vmatpush1.bf16.msra.mxu0 %v2773
    %3017 = vmatprep.subr.bf16.mxu0 %v2778
    %3018 = vmatpush1.bf16.msra.mxu0 %v2777
    %3019 = vmatprep.subr.bf16.mxu0 %v2782
    %3020 = vmatpush1.bf16.msra.mxu0 %v2781
    %3021 = vmatprep.subr.bf16.mxu0 %v2786
    %3022 = vmatpush1.bf16.msra.mxu0 %v2785
    %3023 = vmatprep.subr.bf16.mxu0 %v2790
    %3024 = vmatpush1.bf16.msra.mxu0 %v2789
    %3025 = vmatprep.subr.bf16.mxu0 %v2794
    %3026 = vmatpush1.bf16.msra.mxu0 %v2793
    %3027 = vmatprep.subr.bf16.mxu0 %v2798
    %3028 = vmatpush1.bf16.msra.mxu0 %v2797
    %3029 = vmatprep.subr.bf16.mxu0 %v2802
    %3030 = vmatpush1.bf16.msra.mxu0 %v2801
    %3031 = vmatprep.subr.bf16.mxu0 %v2806
    %3032 = vmatpush1.bf16.msra.mxu0 %v2805
    %3033 = vmatprep.mubr.bf16.mxu0 %v2206
    %3034 = vmatmul.mubr.bf16.gmra.mrb[0].mxu0 %v2205
    %v3035 = vpop.f32.mrb[0].mxu0
    %v3036 = vadd.f32 %v2344, %v3035
    %v3037 = vpop.f32.mrb[0].mxu0
    %v3038 = vadd.f32 %v2348, %v3037
    %v3039 = vpop.f32.mrb[0].mxu0
    %v3040 = vpop.f32.mrb[0].mxu0
    %3041 = vdwg.mxu0
    %3042 = vmatprep.subr.bf16.mxu0 %v2810
    %3043 = vmatpush1.bf16.msra.mxu0 %v2809
    %3044 = vmatprep.subr.bf16.mxu0 %v2814
    %3045 = vmatpush1.bf16.msra.mxu0 %v2813
    %3046 = vmatprep.subr.bf16.mxu0 %v2818
    %3047 = vmatpush1.bf16.msra.mxu0 %v2817
    %3048 = vmatprep.subr.bf16.mxu0 %v2822
    %3049 = vmatpush1.bf16.msra.mxu0 %v2821
    %3050 = vmatprep.subr.bf16.mxu0 %v2826
    %3051 = vmatpush1.bf16.msra.mxu0 %v2825
    %3052 = vmatprep.subr.bf16.mxu0 %v2830
    %3053 = vmatpush1.bf16.msra.mxu0 %v2829
    %3054 = vmatprep.subr.bf16.mxu0 %v2834
    %3055 = vmatpush1.bf16.msra.mxu0 %v2833
    %3056 = vmatprep.subr.bf16.mxu0 %v2838
    %3057 = vmatpush1.bf16.msra.mxu0 %v2837
    %3058 = vmatprep.subr.bf16.mxu0 %v2842
    %3059 = vmatpush1.bf16.msra.mxu0 %v2841
    %3060 = vmatprep.subr.bf16.mxu0 %v2846
    %3061 = vmatpush1.bf16.msra.mxu0 %v2845
    %3062 = vmatprep.subr.bf16.mxu0 %v2850
    %3063 = vmatpush1.bf16.msra.mxu0 %v2849
    %3064 = vmatprep.subr.bf16.mxu0 %v2854
    %3065 = vmatpush1.bf16.msra.mxu0 %v2853
    %3066 = vmatprep.subr.bf16.mxu0 %v2858
    %3067 = vmatpush1.bf16.msra.mxu0 %v2857
    %3068 = vmatprep.subr.bf16.mxu0 %v2862
    %3069 = vmatpush1.bf16.msra.mxu0 %v2861
    %3070 = vmatprep.subr.bf16.mxu0 %v2866
    %3071 = vmatpush1.bf16.msra.mxu0 %v2865
    %3072 = vmatprep.subr.bf16.mxu0 %v2870
    %3073 = vmatpush1.bf16.msra.mxu0 %v2869
    %3074 = vmatprep.mubr.bf16.mxu0 %v2208
    %3075 = vmatmul.mubr.bf16.gmra.mrb[0].mxu0 %v2207
    %v3076 = vpop.f32.mrb[0].mxu0
    %v3077 = vadd.f32 %v3036, %v3076
    %v3078 = vpop.f32.mrb[0].mxu0
    %v3079 = vadd.f32 %v3038, %v3078
    %v3080 = vpop.f32.mrb[0].mxu0
    %v3081 = vpop.f32.mrb[0].mxu0
    %3082 = vdwg.mxu0
    %3083 = vmatprep.subr.bf16.mxu0 %v2748
    %3084 = vmatpush1.bf16.msra.mxu0 %v2747
    %3085 = vmatprep.subr.bf16.mxu0 %v2752
    %3086 = vmatpush1.bf16.msra.mxu0 %v2751
    %3087 = vmatprep.subr.bf16.mxu0 %v2756
    %3088 = vmatpush1.bf16.msra.mxu0 %v2755
    %3089 = vmatprep.subr.bf16.mxu0 %v2760
    %3090 = vmatpush1.bf16.msra.mxu0 %v2759
    %3091 = vmatprep.subr.bf16.mxu0 %v2764
    %3092 = vmatpush1.bf16.msra.mxu0 %v2763
    %3093 = vmatprep.subr.bf16.mxu0 %v2768
    %3094 = vmatpush1.bf16.msra.mxu0 %v2767
    %3095 = vmatprep.subr.bf16.mxu0 %v2772
    %3096 = vmatpush1.bf16.msra.mxu0 %v2771
    %3097 = vmatprep.subr.bf16.mxu0 %v2776
    %3098 = vmatpush1.bf16.msra.mxu0 %v2775
    %3099 = vmatprep.subr.bf16.mxu0 %v2780
    %3100 = vmatpush1.bf16.msra.mxu0 %v2779
    %3101 = vmatprep.subr.bf16.mxu0 %v2784
    %3102 = vmatpush1.bf16.msra.mxu0 %v2783
    %3103 = vmatprep.subr.bf16.mxu0 %v2788
    %3104 = vmatpush1.bf16.msra.mxu0 %v2787
    %3105 = vmatprep.subr.bf16.mxu0 %v2792
    %3106 = vmatpush1.bf16.msra.mxu0 %v2791
    %3107 = vmatprep.subr.bf16.mxu0 %v2796
    %3108 = vmatpush1.bf16.msra.mxu0 %v2795
    %3109 = vmatprep.subr.bf16.mxu0 %v2800
    %3110 = vmatpush1.bf16.msra.mxu0 %v2799
    %3111 = vmatprep.subr.bf16.mxu0 %v2804
    %3112 = vmatpush1.bf16.msra.mxu0 %v2803
    %3113 = vmatprep.subr.bf16.mxu0 %v2808
    %3114 = vmatpush1.bf16.msra.mxu0 %v2807
    %3115 = vmatprep.mubr.bf16.mxu0 %v2206
    %3116 = vmatmul.mubr.bf16.gmra.mrb[0].mxu0 %v2205
    %v3117 = vpop.f32.mrb[0].mxu0
    %v3118 = vadd.f32 %v2352, %v3117
    %v3119 = vpop.f32.mrb[0].mxu0
    %v3120 = vadd.f32 %v2356, %v3119
    %v3121 = vpop.f32.mrb[0].mxu0
    %v3122 = vpop.f32.mrb[0].mxu0
    %3123 = vdwg.mxu0
    %3124 = vmatprep.subr.bf16.mxu0 %v2812
    %3125 = vmatpush1.bf16.msra.mxu0 %v2811
    %3126 = vmatprep.subr.bf16.mxu0 %v2816
    %3127 = vmatpush1.bf16.msra.mxu0 %v2815
    %3128 = vmatprep.subr.bf16.mxu0 %v2820
    %3129 = vmatpush1.bf16.msra.mxu0 %v2819
    %3130 = vmatprep.subr.bf16.mxu0 %v2824
    %3131 = vmatpush1.bf16.msra.mxu0 %v2823
    %3132 = vmatprep.subr.bf16.mxu0 %v2828
    %3133 = vmatpush1.bf16.msra.mxu0 %v2827
    %3134 = vmatprep.subr.bf16.mxu0 %v2832
    %3135 = vmatpush1.bf16.msra.mxu0 %v2831
    %3136 = vmatprep.subr.bf16.mxu0 %v2836
    %3137 = vmatpush1.bf16.msra.mxu0 %v2835
    %3138 = vmatprep.subr.bf16.mxu0 %v2840
    %3139 = vmatpush1.bf16.msra.mxu0 %v2839
    %3140 = vmatprep.subr.bf16.mxu0 %v2844
    %3141 = vmatpush1.bf16.msra.mxu0 %v2843
    %3142 = vmatprep.subr.bf16.mxu0 %v2848
    %3143 = vmatpush1.bf16.msra.mxu0 %v2847
    %3144 = vmatprep.subr.bf16.mxu0 %v2852
    %3145 = vmatpush1.bf16.msra.mxu0 %v2851
    %3146 = vmatprep.subr.bf16.mxu0 %v2856
    %3147 = vmatpush1.bf16.msra.mxu0 %v2855
    %3148 = vmatprep.subr.bf16.mxu0 %v2860
    %3149 = vmatpush1.bf16.msra.mxu0 %v2859
    %3150 = vmatprep.subr.bf16.mxu0 %v2864
    %3151 = vmatpush1.bf16.msra.mxu0 %v2863
    %3152 = vmatprep.subr.bf16.mxu0 %v2868
    %3153 = vmatpush1.bf16.msra.mxu0 %v2867
    %3154 = vmatprep.subr.bf16.mxu0 %v2872
    %3155 = vmatpush1.bf16.msra.mxu0 %v2871
    %3156 = vmatprep.mubr.bf16.mxu0 %v2208
    %3157 = vmatmul.mubr.bf16.gmra.mrb[0].mxu0 %v2207
    %v3158 = vpop.f32.mrb[0].mxu0
    %v3159 = vadd.f32 %v3118, %v3158
    %v3160 = vpop.f32.mrb[0].mxu0
    %v3161 = vadd.f32 %v3120, %v3160
    %v3162 = vpop.f32.mrb[0].mxu0
    %v3163 = vpop.f32.mrb[0].mxu0
    %3164 = vdwg.mxu0
    %v3165 = vmax.f32 %v3077, 0.0
    %v3166 = vmax.f32 %v3079, 0.0
    %v3167 = vmax.f32 %v3159, 0.0
    %v3168 = vmax.f32 %v3161, 0.0
    %v3169 = vpack.c.bf16 %v3165, %v3165
    %v3170 = vpack.c.bf16 %v3166, %v3166
    %v3171 = vpack.c.bf16 %v3167, %v3167
    %v3172 = vpack.c.bf16 %v3168, %v3168
    %v3173 = vld [vmem:[#allocation10] sm:$0xff]
    %v3174 = vld [vmem:[#allocation10 + $0x8] sm:$0xff]
    %v3175 = vld [vmem:[#allocation10 + $0x10] sm:$0xff]
    %v3176 = vld [vmem:[#allocation10 + $0x18] sm:$0xff]
    %v3177 = vld [vmem:[#allocation10 + $0x20] sm:$0xff]
    %v3178 = vld [vmem:[#allocation10 + $0x28] sm:$0xff]
    %v3179 = vld [vmem:[#allocation10 + $0x30] sm:$0xff]
    %v3180 = vld [vmem:[#allocation10 + $0x38] sm:$0xff]
    %v3181 = vld [vmem:[#allocation10 + $0x40] sm:$0xff]
    %v3182 = vld [vmem:[#allocation10 + $0x48] sm:$0xff]
    %v3183 = vld [vmem:[#allocation10 + $0x50] sm:$0xff]
    %v3184 = vld [vmem:[#allocation10 + $0x58] sm:$0xff]
    %v3185 = vld [vmem:[#allocation10 + $0x60] sm:$0xff]
    %v3186 = vld [vmem:[#allocation10 + $0x68] sm:$0xff]
    %v3187 = vld [vmem:[#allocation10 + $0x70] sm:$0xff]
    %v3188 = vld [vmem:[#allocation10 + $0x78] sm:$0xff]
    %v3189 = vld [vmem:[#allocation10 + $0x80] sm:$0xff]
    %v3190 = vld [vmem:[#allocation10 + $0x88] sm:$0xff]
    %v3191 = vld [vmem:[#allocation10 + $0x90] sm:$0xff]
    %v3192 = vld [vmem:[#allocation10 + $0x98] sm:$0xff]
    %v3193 = vld [vmem:[#allocation10 + $0xa0] sm:$0xff]
    %v3194 = vld [vmem:[#allocation10 + $0xa8] sm:$0xff]
    %v3195 = vld [vmem:[#allocation10 + $0xb0] sm:$0xff]
    %v3196 = vld [vmem:[#allocation10 + $0xb8] sm:$0xff]
    %v3197 = vld [vmem:[#allocation10 + $0xc0] sm:$0xff]
    %v3198 = vld [vmem:[#allocation10 + $0xc8] sm:$0xff]
    %v3199 = vld [vmem:[#allocation10 + $0xd0] sm:$0xff]
    %v3200 = vld [vmem:[#allocation10 + $0xd8] sm:$0xff]
    %v3201 = vld [vmem:[#allocation10 + $0xe0] sm:$0xff]
    %v3202 = vld [vmem:[#allocation10 + $0xe8] sm:$0xff]
    %v3203 = vld [vmem:[#allocation10 + $0xf0] sm:$0xff]
    %v3204 = vld [vmem:[#allocation10 + $0xf8] sm:$0xff]
    %v3205 = vld [vmem:[#allocation10 + $0x100] sm:$0xff]
    %v3206 = vld [vmem:[#allocation10 + $0x108] sm:$0xff]
    %v3207 = vld [vmem:[#allocation10 + $0x110] sm:$0xff]
    %v3208 = vld [vmem:[#allocation10 + $0x118] sm:$0xff]
    %v3209 = vld [vmem:[#allocation10 + $0x120] sm:$0xff]
    %v3210 = vld [vmem:[#allocation10 + $0x128] sm:$0xff]
    %v3211 = vld [vmem:[#allocation10 + $0x130] sm:$0xff]
    %v3212 = vld [vmem:[#allocation10 + $0x138] sm:$0xff]
    %v3213 = vld [vmem:[#allocation10 + $0x140] sm:$0xff]
    %v3214 = vld [vmem:[#allocation10 + $0x148] sm:$0xff]
    %v3215 = vld [vmem:[#allocation10 + $0x150] sm:$0xff]
    %v3216 = vld [vmem:[#allocation10 + $0x158] sm:$0xff]
    %v3217 = vld [vmem:[#allocation10 + $0x160] sm:$0xff]
    %v3218 = vld [vmem:[#allocation10 + $0x168] sm:$0xff]
    %v3219 = vld [vmem:[#allocation10 + $0x170] sm:$0xff]
    %v3220 = vld [vmem:[#allocation10 + $0x178] sm:$0xff]
    %v3221 = vld [vmem:[#allocation10 + $0x180] sm:$0xff]
    %v3222 = vld [vmem:[#allocation10 + $0x188] sm:$0xff]
    %v3223 = vld [vmem:[#allocation10 + $0x190] sm:$0xff]
    %v3224 = vld [vmem:[#allocation10 + $0x198] sm:$0xff]
    %v3225 = vld [vmem:[#allocation10 + $0x1a0] sm:$0xff]
    %v3226 = vld [vmem:[#allocation10 + $0x1a8] sm:$0xff]
    %v3227 = vld [vmem:[#allocation10 + $0x1b0] sm:$0xff]
    %v3228 = vld [vmem:[#allocation10 + $0x1b8] sm:$0xff]
    %v3229 = vld [vmem:[#allocation10 + $0x1c0] sm:$0xff]
    %v3230 = vld [vmem:[#allocation10 + $0x1c8] sm:$0xff]
    %v3231 = vld [vmem:[#allocation10 + $0x1d0] sm:$0xff]
    %v3232 = vld [vmem:[#allocation10 + $0x1d8] sm:$0xff]
    %v3233 = vld [vmem:[#allocation10 + $0x1e0] sm:$0xff]
    %v3234 = vld [vmem:[#allocation10 + $0x1e8] sm:$0xff]
    %v3235 = vld [vmem:[#allocation10 + $0x1f0] sm:$0xff]
    %v3236 = vld [vmem:[#allocation10 + $0x1f8] sm:$0xff]
    %v3237 = vld [vmem:[#allocation10 + $0x200] sm:$0xff]
    %v3238 = vld [vmem:[#allocation10 + $0x208] sm:$0xff]
    %v3239 = vld [vmem:[#allocation10 + $0x210] sm:$0xff]
    %v3240 = vld [vmem:[#allocation10 + $0x218] sm:$0xff]
    %v3241 = vld [vmem:[#allocation10 + $0x220] sm:$0xff]
    %v3242 = vld [vmem:[#allocation10 + $0x228] sm:$0xff]
    %v3243 = vld [vmem:[#allocation10 + $0x230] sm:$0xff]
    %v3244 = vld [vmem:[#allocation10 + $0x238] sm:$0xff]
    %v3245 = vld [vmem:[#allocation10 + $0x240] sm:$0xff]
    %v3246 = vld [vmem:[#allocation10 + $0x248] sm:$0xff]
    %v3247 = vld [vmem:[#allocation10 + $0x250] sm:$0xff]
    %v3248 = vld [vmem:[#allocation10 + $0x258] sm:$0xff]
    %v3249 = vld [vmem:[#allocation10 + $0x260] sm:$0xff]
    %v3250 = vld [vmem:[#allocation10 + $0x268] sm:$0xff]
    %v3251 = vld [vmem:[#allocation10 + $0x270] sm:$0xff]
    %v3252 = vld [vmem:[#allocation10 + $0x278] sm:$0xff]
    %v3253 = vld [vmem:[#allocation10 + $0x280] sm:$0xff]
    %v3254 = vld [vmem:[#allocation10 + $0x288] sm:$0xff]
    %v3255 = vld [vmem:[#allocation10 + $0x290] sm:$0xff]
    %v3256 = vld [vmem:[#allocation10 + $0x298] sm:$0xff]
    %v3257 = vld [vmem:[#allocation10 + $0x2a0] sm:$0xff]
    %v3258 = vld [vmem:[#allocation10 + $0x2a8] sm:$0xff]
    %v3259 = vld [vmem:[#allocation10 + $0x2b0] sm:$0xff]
    %v3260 = vld [vmem:[#allocation10 + $0x2b8] sm:$0xff]
    %v3261 = vld [vmem:[#allocation10 + $0x2c0] sm:$0xff]
    %v3262 = vld [vmem:[#allocation10 + $0x2c8] sm:$0xff]
    %v3263 = vld [vmem:[#allocation10 + $0x2d0] sm:$0xff]
    %v3264 = vld [vmem:[#allocation10 + $0x2d8] sm:$0xff]
    %v3265 = vld [vmem:[#allocation10 + $0x2e0] sm:$0xff]
    %v3266 = vld [vmem:[#allocation10 + $0x2e8] sm:$0xff]
    %v3267 = vld [vmem:[#allocation10 + $0x2f0] sm:$0xff]
    %v3268 = vld [vmem:[#allocation10 + $0x2f8] sm:$0xff]
    %v3269 = vld [vmem:[#allocation10 + $0x300] sm:$0xff]
    %v3270 = vld [vmem:[#allocation10 + $0x308] sm:$0xff]
    %v3271 = vld [vmem:[#allocation10 + $0x310] sm:$0xff]
    %v3272 = vld [vmem:[#allocation10 + $0x318] sm:$0xff]
    %v3273 = vld [vmem:[#allocation10 + $0x320] sm:$0xff]
    %v3274 = vld [vmem:[#allocation10 + $0x328] sm:$0xff]
    %v3275 = vld [vmem:[#allocation10 + $0x330] sm:$0xff]
    %v3276 = vld [vmem:[#allocation10 + $0x338] sm:$0xff]
    %v3277 = vld [vmem:[#allocation10 + $0x340] sm:$0xff]
    %v3278 = vld [vmem:[#allocation10 + $0x348] sm:$0xff]
    %v3279 = vld [vmem:[#allocation10 + $0x350] sm:$0xff]
    %v3280 = vld [vmem:[#allocation10 + $0x358] sm:$0xff]
    %v3281 = vld [vmem:[#allocation10 + $0x360] sm:$0xff]
    %v3282 = vld [vmem:[#allocation10 + $0x368] sm:$0xff]
    %v3283 = vld [vmem:[#allocation10 + $0x370] sm:$0xff]
    %v3284 = vld [vmem:[#allocation10 + $0x378] sm:$0xff]
    %v3285 = vld [vmem:[#allocation10 + $0x380] sm:$0xff]
    %v3286 = vld [vmem:[#allocation10 + $0x388] sm:$0xff]
    %v3287 = vld [vmem:[#allocation10 + $0x390] sm:$0xff]
    %v3288 = vld [vmem:[#allocation10 + $0x398] sm:$0xff]
    %v3289 = vld [vmem:[#allocation10 + $0x3a0] sm:$0xff]
    %v3290 = vld [vmem:[#allocation10 + $0x3a8] sm:$0xff]
    %v3291 = vld [vmem:[#allocation10 + $0x3b0] sm:$0xff]
    %v3292 = vld [vmem:[#allocation10 + $0x3b8] sm:$0xff]
    %v3293 = vld [vmem:[#allocation10 + $0x3c0] sm:$0xff]
    %v3294 = vld [vmem:[#allocation10 + $0x3c8] sm:$0xff]
    %v3295 = vld [vmem:[#allocation10 + $0x3d0] sm:$0xff]
    %v3296 = vld [vmem:[#allocation10 + $0x3d8] sm:$0xff]
    %v3297 = vld [vmem:[#allocation10 + $0x3e0] sm:$0xff]
    %v3298 = vld [vmem:[#allocation10 + $0x3e8] sm:$0xff]
    %v3299 = vld [vmem:[#allocation10 + $0x3f0] sm:$0xff]
    %v3300 = vld [vmem:[#allocation10 + $0x3f8] sm:$0xff]
    %v3301 = vld [vmem:[#allocation12] sm:$0xf]
    %v3303 = vlaneseq
    %v3304 = vshrl.u32 %v3303, 7
    %v3305 = vsub.s32 0, %v3304
    %v3306 = vrot.slane %v3301, %v3305
    %v3307 = vlaneseq
    %v3308 = vshrl.u32 %v3307, 7
    %v3309 = vsub.s32 1, %v3308
    %v3310 = vrot.slane %v3301, %v3309
    %v3311 = vlaneseq
    %v3312 = vshrl.u32 %v3311, 7
    %v3313 = vsub.s32 2, %v3312
    %v3314 = vrot.slane %v3301, %v3313
    %v3315 = vlaneseq
    %v3316 = vshrl.u32 %v3315, 7
    %v3317 = vsub.s32 3, %v3316
    %v3318 = vrot.slane %v3301, %v3317
    %v3451 = vunpack.c.l.b16 %v3173
    %v3452 = vunpack.c.h.b16 %v3173
    %v3453 = vunpack.c.l.b16 %v3174
    %v3454 = vunpack.c.h.b16 %v3174
    %v3455 = vunpack.c.l.b16 %v3175
    %v3456 = vunpack.c.h.b16 %v3175
    %v3457 = vunpack.c.l.b16 %v3176
    %v3458 = vunpack.c.h.b16 %v3176
    %v3459 = vunpack.c.l.b16 %v3177
    %v3460 = vunpack.c.h.b16 %v3177
    %v3461 = vunpack.c.l.b16 %v3178
    %v3462 = vunpack.c.h.b16 %v3178
    %v3463 = vunpack.c.l.b16 %v3179
    %v3464 = vunpack.c.h.b16 %v3179
    %v3465 = vunpack.c.l.b16 %v3180
    %v3466 = vunpack.c.h.b16 %v3180
    %v3467 = vunpack.c.l.b16 %v3181
    %v3468 = vunpack.c.h.b16 %v3181
    %v3469 = vunpack.c.l.b16 %v3182
    %v3470 = vunpack.c.h.b16 %v3182
    %v3471 = vunpack.c.l.b16 %v3183
    %v3472 = vunpack.c.h.b16 %v3183
    %v3473 = vunpack.c.l.b16 %v3184
    %v3474 = vunpack.c.h.b16 %v3184
    %v3475 = vunpack.c.l.b16 %v3185
    %v3476 = vunpack.c.h.b16 %v3185
    %v3477 = vunpack.c.l.b16 %v3186
    %v3478 = vunpack.c.h.b16 %v3186
    %v3479 = vunpack.c.l.b16 %v3187
    %v3480 = vunpack.c.h.b16 %v3187
    %v3481 = vunpack.c.l.b16 %v3188
    %v3482 = vunpack.c.h.b16 %v3188
    %v3483 = vunpack.c.l.b16 %v3189
    %v3484 = vunpack.c.h.b16 %v3189
    %v3485 = vunpack.c.l.b16 %v3190
    %v3486 = vunpack.c.h.b16 %v3190
    %v3487 = vunpack.c.l.b16 %v3191
    %v3488 = vunpack.c.h.b16 %v3191
    %v3489 = vunpack.c.l.b16 %v3192
    %v3490 = vunpack.c.h.b16 %v3192
    %v3491 = vunpack.c.l.b16 %v3193
    %v3492 = vunpack.c.h.b16 %v3193
    %v3493 = vunpack.c.l.b16 %v3194
    %v3494 = vunpack.c.h.b16 %v3194
    %v3495 = vunpack.c.l.b16 %v3195
    %v3496 = vunpack.c.h.b16 %v3195
    %v3497 = vunpack.c.l.b16 %v3196
    %v3498 = vunpack.c.h.b16 %v3196
    %v3499 = vunpack.c.l.b16 %v3197
    %v3500 = vunpack.c.h.b16 %v3197
    %v3501 = vunpack.c.l.b16 %v3198
    %v3502 = vunpack.c.h.b16 %v3198
    %v3503 = vunpack.c.l.b16 %v3199
    %v3504 = vunpack.c.h.b16 %v3199
    %v3505 = vunpack.c.l.b16 %v3200
    %v3506 = vunpack.c.h.b16 %v3200
    %v3507 = vunpack.c.l.b16 %v3201
    %v3508 = vunpack.c.h.b16 %v3201
    %v3509 = vunpack.c.l.b16 %v3202
    %v3510 = vunpack.c.h.b16 %v3202
    %v3511 = vunpack.c.l.b16 %v3203
    %v3512 = vunpack.c.h.b16 %v3203
    %v3513 = vunpack.c.l.b16 %v3204
    %v3514 = vunpack.c.h.b16 %v3204
    %v3515 = vunpack.c.l.b16 %v3205
    %v3516 = vunpack.c.h.b16 %v3205
    %v3517 = vunpack.c.l.b16 %v3206
    %v3518 = vunpack.c.h.b16 %v3206
    %v3519 = vunpack.c.l.b16 %v3207
    %v3520 = vunpack.c.h.b16 %v3207
    %v3521 = vunpack.c.l.b16 %v3208
    %v3522 = vunpack.c.h.b16 %v3208
    %v3523 = vunpack.c.l.b16 %v3209
    %v3524 = vunpack.c.h.b16 %v3209
    %v3525 = vunpack.c.l.b16 %v3210
    %v3526 = vunpack.c.h.b16 %v3210
    %v3527 = vunpack.c.l.b16 %v3211
    %v3528 = vunpack.c.h.b16 %v3211
    %v3529 = vunpack.c.l.b16 %v3212
    %v3530 = vunpack.c.h.b16 %v3212
    %v3531 = vunpack.c.l.b16 %v3213
    %v3532 = vunpack.c.h.b16 %v3213
    %v3533 = vunpack.c.l.b16 %v3214
    %v3534 = vunpack.c.h.b16 %v3214
    %v3535 = vunpack.c.l.b16 %v3215
    %v3536 = vunpack.c.h.b16 %v3215
    %v3537 = vunpack.c.l.b16 %v3216
    %v3538 = vunpack.c.h.b16 %v3216
    %v3539 = vunpack.c.l.b16 %v3217
    %v3540 = vunpack.c.h.b16 %v3217
    %v3541 = vunpack.c.l.b16 %v3218
    %v3542 = vunpack.c.h.b16 %v3218
    %v3543 = vunpack.c.l.b16 %v3219
    %v3544 = vunpack.c.h.b16 %v3219
    %v3545 = vunpack.c.l.b16 %v3220
    %v3546 = vunpack.c.h.b16 %v3220
    %v3547 = vunpack.c.l.b16 %v3221
    %v3548 = vunpack.c.h.b16 %v3221
    %v3549 = vunpack.c.l.b16 %v3222
    %v3550 = vunpack.c.h.b16 %v3222
    %v3551 = vunpack.c.l.b16 %v3223
    %v3552 = vunpack.c.h.b16 %v3223
    %v3553 = vunpack.c.l.b16 %v3224
    %v3554 = vunpack.c.h.b16 %v3224
    %v3555 = vunpack.c.l.b16 %v3225
    %v3556 = vunpack.c.h.b16 %v3225
    %v3557 = vunpack.c.l.b16 %v3226
    %v3558 = vunpack.c.h.b16 %v3226
    %v3559 = vunpack.c.l.b16 %v3227
    %v3560 = vunpack.c.h.b16 %v3227
    %v3561 = vunpack.c.l.b16 %v3228
    %v3562 = vunpack.c.h.b16 %v3228
    %v3563 = vunpack.c.l.b16 %v3229
    %v3564 = vunpack.c.h.b16 %v3229
    %v3565 = vunpack.c.l.b16 %v3230
    %v3566 = vunpack.c.h.b16 %v3230
    %v3567 = vunpack.c.l.b16 %v3231
    %v3568 = vunpack.c.h.b16 %v3231
    %v3569 = vunpack.c.l.b16 %v3232
    %v3570 = vunpack.c.h.b16 %v3232
    %v3571 = vunpack.c.l.b16 %v3233
    %v3572 = vunpack.c.h.b16 %v3233
    %v3573 = vunpack.c.l.b16 %v3234
    %v3574 = vunpack.c.h.b16 %v3234
    %v3575 = vunpack.c.l.b16 %v3235
    %v3576 = vunpack.c.h.b16 %v3235
    %v3577 = vunpack.c.l.b16 %v3236
    %v3578 = vunpack.c.h.b16 %v3236
    %v3579 = vunpack.c.l.b16 %v3237
    %v3580 = vunpack.c.h.b16 %v3237
    %v3581 = vunpack.c.l.b16 %v3238
    %v3582 = vunpack.c.h.b16 %v3238
    %v3583 = vunpack.c.l.b16 %v3239
    %v3584 = vunpack.c.h.b16 %v3239
    %v3585 = vunpack.c.l.b16 %v3240
    %v3586 = vunpack.c.h.b16 %v3240
    %v3587 = vunpack.c.l.b16 %v3241
    %v3588 = vunpack.c.h.b16 %v3241
    %v3589 = vunpack.c.l.b16 %v3242
    %v3590 = vunpack.c.h.b16 %v3242
    %v3591 = vunpack.c.l.b16 %v3243
    %v3592 = vunpack.c.h.b16 %v3243
    %v3593 = vunpack.c.l.b16 %v3244
    %v3594 = vunpack.c.h.b16 %v3244
    %v3595 = vunpack.c.l.b16 %v3245
    %v3596 = vunpack.c.h.b16 %v3245
    %v3597 = vunpack.c.l.b16 %v3246
    %v3598 = vunpack.c.h.b16 %v3246
    %v3599 = vunpack.c.l.b16 %v3247
    %v3600 = vunpack.c.h.b16 %v3247
    %v3601 = vunpack.c.l.b16 %v3248
    %v3602 = vunpack.c.h.b16 %v3248
    %v3603 = vunpack.c.l.b16 %v3249
    %v3604 = vunpack.c.h.b16 %v3249
    %v3605 = vunpack.c.l.b16 %v3250
    %v3606 = vunpack.c.h.b16 %v3250
    %v3607 = vunpack.c.l.b16 %v3251
    %v3608 = vunpack.c.h.b16 %v3251
    %v3609 = vunpack.c.l.b16 %v3252
    %v3610 = vunpack.c.h.b16 %v3252
    %v3611 = vunpack.c.l.b16 %v3253
    %v3612 = vunpack.c.h.b16 %v3253
    %v3613 = vunpack.c.l.b16 %v3254
    %v3614 = vunpack.c.h.b16 %v3254
    %v3615 = vunpack.c.l.b16 %v3255
    %v3616 = vunpack.c.h.b16 %v3255
    %v3617 = vunpack.c.l.b16 %v3256
    %v3618 = vunpack.c.h.b16 %v3256
    %v3619 = vunpack.c.l.b16 %v3257
    %v3620 = vunpack.c.h.b16 %v3257
    %v3621 = vunpack.c.l.b16 %v3258
    %v3622 = vunpack.c.h.b16 %v3258
    %v3623 = vunpack.c.l.b16 %v3259
    %v3624 = vunpack.c.h.b16 %v3259
    %v3625 = vunpack.c.l.b16 %v3260
    %v3626 = vunpack.c.h.b16 %v3260
    %v3627 = vunpack.c.l.b16 %v3261
    %v3628 = vunpack.c.h.b16 %v3261
    %v3629 = vunpack.c.l.b16 %v3262
    %v3630 = vunpack.c.h.b16 %v3262
    %v3631 = vunpack.c.l.b16 %v3263
    %v3632 = vunpack.c.h.b16 %v3263
    %v3633 = vunpack.c.l.b16 %v3264
    %v3634 = vunpack.c.h.b16 %v3264
    %v3635 = vunpack.c.l.b16 %v3265
    %v3636 = vunpack.c.h.b16 %v3265
    %v3637 = vunpack.c.l.b16 %v3266
    %v3638 = vunpack.c.h.b16 %v3266
    %v3639 = vunpack.c.l.b16 %v3267
    %v3640 = vunpack.c.h.b16 %v3267
    %v3641 = vunpack.c.l.b16 %v3268
    %v3642 = vunpack.c.h.b16 %v3268
    %v3643 = vunpack.c.l.b16 %v3269
    %v3644 = vunpack.c.h.b16 %v3269
    %v3645 = vunpack.c.l.b16 %v3270
    %v3646 = vunpack.c.h.b16 %v3270
    %v3647 = vunpack.c.l.b16 %v3271
    %v3648 = vunpack.c.h.b16 %v3271
    %v3649 = vunpack.c.l.b16 %v3272
    %v3650 = vunpack.c.h.b16 %v3272
    %v3651 = vunpack.c.l.b16 %v3273
    %v3652 = vunpack.c.h.b16 %v3273
    %v3653 = vunpack.c.l.b16 %v3274
    %v3654 = vunpack.c.h.b16 %v3274
    %v3655 = vunpack.c.l.b16 %v3275
    %v3656 = vunpack.c.h.b16 %v3275
    %v3657 = vunpack.c.l.b16 %v3276
    %v3658 = vunpack.c.h.b16 %v3276
    %v3659 = vunpack.c.l.b16 %v3277
    %v3660 = vunpack.c.h.b16 %v3277
    %v3661 = vunpack.c.l.b16 %v3278
    %v3662 = vunpack.c.h.b16 %v3278
    %v3663 = vunpack.c.l.b16 %v3279
    %v3664 = vunpack.c.h.b16 %v3279
    %v3665 = vunpack.c.l.b16 %v3280
    %v3666 = vunpack.c.h.b16 %v3280
    %v3667 = vunpack.c.l.b16 %v3281
    %v3668 = vunpack.c.h.b16 %v3281
    %v3669 = vunpack.c.l.b16 %v3282
    %v3670 = vunpack.c.h.b16 %v3282
    %v3671 = vunpack.c.l.b16 %v3283
    %v3672 = vunpack.c.h.b16 %v3283
    %v3673 = vunpack.c.l.b16 %v3284
    %v3674 = vunpack.c.h.b16 %v3284
    %v3675 = vunpack.c.l.b16 %v3285
    %v3676 = vunpack.c.h.b16 %v3285
    %v3677 = vunpack.c.l.b16 %v3286
    %v3678 = vunpack.c.h.b16 %v3286
    %v3679 = vunpack.c.l.b16 %v3287
    %v3680 = vunpack.c.h.b16 %v3287
    %v3681 = vunpack.c.l.b16 %v3288
    %v3682 = vunpack.c.h.b16 %v3288
    %v3683 = vunpack.c.l.b16 %v3289
    %v3684 = vunpack.c.h.b16 %v3289
    %v3685 = vunpack.c.l.b16 %v3290
    %v3686 = vunpack.c.h.b16 %v3290
    %v3687 = vunpack.c.l.b16 %v3291
    %v3688 = vunpack.c.h.b16 %v3291
    %v3689 = vunpack.c.l.b16 %v3292
    %v3690 = vunpack.c.h.b16 %v3292
    %v3691 = vunpack.c.l.b16 %v3293
    %v3692 = vunpack.c.h.b16 %v3293
    %v3693 = vunpack.c.l.b16 %v3294
    %v3694 = vunpack.c.h.b16 %v3294
    %v3695 = vunpack.c.l.b16 %v3295
    %v3696 = vunpack.c.h.b16 %v3295
    %v3697 = vunpack.c.l.b16 %v3296
    %v3698 = vunpack.c.h.b16 %v3296
    %v3699 = vunpack.c.l.b16 %v3297
    %v3700 = vunpack.c.h.b16 %v3297
    %v3701 = vunpack.c.l.b16 %v3298
    %v3702 = vunpack.c.h.b16 %v3298
    %v3703 = vunpack.c.l.b16 %v3299
    %v3704 = vunpack.c.h.b16 %v3299
    %v3705 = vunpack.c.l.b16 %v3300
    %v3706 = vunpack.c.h.b16 %v3300
    %v3707 = vpack.c.b16 %v3455, %v3451
    %v3708 = vpack.c.b16 %v3456, %v3452
    %v3709 = vpack.c.b16 %v3457, %v3453
    %v3710 = vpack.c.b16 %v3458, %v3454
    %v3711 = vpack.c.b16 %v3463, %v3459
    %v3712 = vpack.c.b16 %v3464, %v3460
    %v3713 = vpack.c.b16 %v3465, %v3461
    %v3714 = vpack.c.b16 %v3466, %v3462
    %v3715 = vpack.c.b16 %v3471, %v3467
    %v3716 = vpack.c.b16 %v3472, %v3468
    %v3717 = vpack.c.b16 %v3473, %v3469
    %v3718 = vpack.c.b16 %v3474, %v3470
    %v3719 = vpack.c.b16 %v3479, %v3475
    %v3720 = vpack.c.b16 %v3480, %v3476
    %v3721 = vpack.c.b16 %v3481, %v3477
    %v3722 = vpack.c.b16 %v3482, %v3478
    %v3723 = vpack.c.b16 %v3487, %v3483
    %v3724 = vpack.c.b16 %v3488, %v3484
    %v3725 = vpack.c.b16 %v3489, %v3485
    %v3726 = vpack.c.b16 %v3490, %v3486
    %v3727 = vpack.c.b16 %v3495, %v3491
    %v3728 = vpack.c.b16 %v3496, %v3492
    %v3729 = vpack.c.b16 %v3497, %v3493
    %v3730 = vpack.c.b16 %v3498, %v3494
    %v3731 = vpack.c.b16 %v3503, %v3499
    %v3732 = vpack.c.b16 %v3504, %v3500
    %v3733 = vpack.c.b16 %v3505, %v3501
    %v3734 = vpack.c.b16 %v3506, %v3502
    %v3735 = vpack.c.b16 %v3511, %v3507
    %v3736 = vpack.c.b16 %v3512, %v3508
    %v3737 = vpack.c.b16 %v3513, %v3509
    %v3738 = vpack.c.b16 %v3514, %v3510
    %v3739 = vpack.c.b16 %v3519, %v3515
    %v3740 = vpack.c.b16 %v3520, %v3516
    %v3741 = vpack.c.b16 %v3521, %v3517
    %v3742 = vpack.c.b16 %v3522, %v3518
    %v3743 = vpack.c.b16 %v3527, %v3523
    %v3744 = vpack.c.b16 %v3528, %v3524
    %v3745 = vpack.c.b16 %v3529, %v3525
    %v3746 = vpack.c.b16 %v3530, %v3526
    %v3747 = vpack.c.b16 %v3535, %v3531
    %v3748 = vpack.c.b16 %v3536, %v3532
    %v3749 = vpack.c.b16 %v3537, %v3533
    %v3750 = vpack.c.b16 %v3538, %v3534
    %v3751 = vpack.c.b16 %v3543, %v3539
    %v3752 = vpack.c.b16 %v3544, %v3540
    %v3753 = vpack.c.b16 %v3545, %v3541
    %v3754 = vpack.c.b16 %v3546, %v3542
    %v3755 = vpack.c.b16 %v3551, %v3547
    %v3756 = vpack.c.b16 %v3552, %v3548
    %v3757 = vpack.c.b16 %v3553, %v3549
    %v3758 = vpack.c.b16 %v3554, %v3550
    %v3759 = vpack.c.b16 %v3559, %v3555
    %v3760 = vpack.c.b16 %v3560, %v3556
    %v3761 = vpack.c.b16 %v3561, %v3557
    %v3762 = vpack.c.b16 %v3562, %v3558
    %v3763 = vpack.c.b16 %v3567, %v3563
    %v3764 = vpack.c.b16 %v3568, %v3564
    %v3765 = vpack.c.b16 %v3569, %v3565
    %v3766 = vpack.c.b16 %v3570, %v3566
    %v3767 = vpack.c.b16 %v3575, %v3571
    %v3768 = vpack.c.b16 %v3576, %v3572
    %v3769 = vpack.c.b16 %v3577, %v3573
    %v3770 = vpack.c.b16 %v3578, %v3574
    %v3771 = vpack.c.b16 %v3583, %v3579
    %v3772 = vpack.c.b16 %v3584, %v3580
    %v3773 = vpack.c.b16 %v3585, %v3581
    %v3774 = vpack.c.b16 %v3586, %v3582
    %v3775 = vpack.c.b16 %v3591, %v3587
    %v3776 = vpack.c.b16 %v3592, %v3588
    %v3777 = vpack.c.b16 %v3593, %v3589
    %v3778 = vpack.c.b16 %v3594, %v3590
    %v3779 = vpack.c.b16 %v3599, %v3595
    %v3780 = vpack.c.b16 %v3600, %v3596
    %v3781 = vpack.c.b16 %v3601, %v3597
    %v3782 = vpack.c.b16 %v3602, %v3598
    %v3783 = vpack.c.b16 %v3607, %v3603
    %v3784 = vpack.c.b16 %v3608, %v3604
    %v3785 = vpack.c.b16 %v3609, %v3605
    %v3786 = vpack.c.b16 %v3610, %v3606
    %v3787 = vpack.c.b16 %v3615, %v3611
    %v3788 = vpack.c.b16 %v3616, %v3612
    %v3789 = vpack.c.b16 %v3617, %v3613
    %v3790 = vpack.c.b16 %v3618, %v3614
    %v3791 = vpack.c.b16 %v3623, %v3619
    %v3792 = vpack.c.b16 %v3624, %v3620
    %v3793 = vpack.c.b16 %v3625, %v3621
    %v3794 = vpack.c.b16 %v3626, %v3622
    %v3795 = vpack.c.b16 %v3631, %v3627
    %v3796 = vpack.c.b16 %v3632, %v3628
    %v3797 = vpack.c.b16 %v3633, %v3629
    %v3798 = vpack.c.b16 %v3634, %v3630
    %v3799 = vpack.c.b16 %v3639, %v3635
    %v3800 = vpack.c.b16 %v3640, %v3636
    %v3801 = vpack.c.b16 %v3641, %v3637
    %v3802 = vpack.c.b16 %v3642, %v3638
    %v3803 = vpack.c.b16 %v3647, %v3643
    %v3804 = vpack.c.b16 %v3648, %v3644
    %v3805 = vpack.c.b16 %v3649, %v3645
    %v3806 = vpack.c.b16 %v3650, %v3646
    %v3807 = vpack.c.b16 %v3655, %v3651
    %v3808 = vpack.c.b16 %v3656, %v3652
    %v3809 = vpack.c.b16 %v3657, %v3653
    %v3810 = vpack.c.b16 %v3658, %v3654
    %v3811 = vpack.c.b16 %v3663, %v3659
    %v3812 = vpack.c.b16 %v3664, %v3660
    %v3813 = vpack.c.b16 %v3665, %v3661
    %v3814 = vpack.c.b16 %v3666, %v3662
    %v3815 = vpack.c.b16 %v3671, %v3667
    %v3816 = vpack.c.b16 %v3672, %v3668
    %v3817 = vpack.c.b16 %v3673, %v3669
    %v3818 = vpack.c.b16 %v3674, %v3670
    %v3819 = vpack.c.b16 %v3679, %v3675
    %v3820 = vpack.c.b16 %v3680, %v3676
    %v3821 = vpack.c.b16 %v3681, %v3677
    %v3822 = vpack.c.b16 %v3682, %v3678
    %v3823 = vpack.c.b16 %v3687, %v3683
    %v3824 = vpack.c.b16 %v3688, %v3684
    %v3825 = vpack.c.b16 %v3689, %v3685
    %v3826 = vpack.c.b16 %v3690, %v3686
    %v3827 = vpack.c.b16 %v3695, %v3691
    %v3828 = vpack.c.b16 %v3696, %v3692
    %v3829 = vpack.c.b16 %v3697, %v3693
    %v3830 = vpack.c.b16 %v3698, %v3694
    %v3831 = vpack.c.b16 %v3703, %v3699
    %v3832 = vpack.c.b16 %v3704, %v3700
    %v3833 = vpack.c.b16 %v3705, %v3701
    %v3834 = vpack.c.b16 %v3706, %v3702
    %3963 = vmatprep.subr.bf16.mxu0 %v3708
    %3964 = vmatpush1.bf16.msra.mxu0 %v3707
    %3965 = vmatprep.subr.bf16.mxu0 %v3712
    %3966 = vmatpush1.bf16.msra.mxu0 %v3711
    %3967 = vmatprep.subr.bf16.mxu0 %v3716
    %3968 = vmatpush1.bf16.msra.mxu0 %v3715
    %3969 = vmatprep.subr.bf16.mxu0 %v3720
    %3970 = vmatpush1.bf16.msra.mxu0 %v3719
    %3971 = vmatprep.subr.bf16.mxu0 %v3724
    %3972 = vmatpush1.bf16.msra.mxu0 %v3723
    %3973 = vmatprep.subr.bf16.mxu0 %v3728
    %3974 = vmatpush1.bf16.msra.mxu0 %v3727
    %3975 = vmatprep.subr.bf16.mxu0 %v3732
    %3976 = vmatpush1.bf16.msra.mxu0 %v3731
    %3977 = vmatprep.subr.bf16.mxu0 %v3736
    %3978 = vmatpush1.bf16.msra.mxu0 %v3735
    %3979 = vmatprep.subr.bf16.mxu0 %v3740
    %3980 = vmatpush1.bf16.msra.mxu0 %v3739
    %3981 = vmatprep.subr.bf16.mxu0 %v3744
    %3982 = vmatpush1.bf16.msra.mxu0 %v3743
    %3983 = vmatprep.subr.bf16.mxu0 %v3748
    %3984 = vmatpush1.bf16.msra.mxu0 %v3747
    %3985 = vmatprep.subr.bf16.mxu0 %v3752
    %3986 = vmatpush1.bf16.msra.mxu0 %v3751
    %3987 = vmatprep.subr.bf16.mxu0 %v3756
    %3988 = vmatpush1.bf16.msra.mxu0 %v3755
    %3989 = vmatprep.subr.bf16.mxu0 %v3760
    %3990 = vmatpush1.bf16.msra.mxu0 %v3759
    %3991 = vmatprep.subr.bf16.mxu0 %v3764
    %3992 = vmatpush1.bf16.msra.mxu0 %v3763
    %3993 = vmatprep.subr.bf16.mxu0 %v3768
    %3994 = vmatpush1.bf16.msra.mxu0 %v3767
    %3995 = vmatprep.mubr.bf16.mxu0 %v3170
    %3996 = vmatmul.mubr.bf16.gmra.mrb[0].mxu0 %v3169
    %v3997 = vpop.f32.mrb[0].mxu0
    %v3998 = vadd.f32 %v3306, %v3997
    %v3999 = vpop.f32.mrb[0].mxu0
    %v4000 = vadd.f32 %v3310, %v3999
    %v4001 = vpop.f32.mrb[0].mxu0
    %v4002 = vpop.f32.mrb[0].mxu0
    %4003 = vdwg.mxu0
    %4004 = vmatprep.subr.bf16.mxu0 %v3772
    %4005 = vmatpush1.bf16.msra.mxu0 %v3771
    %4006 = vmatprep.subr.bf16.mxu0 %v3776
    %4007 = vmatpush1.bf16.msra.mxu0 %v3775
    %4008 = vmatprep.subr.bf16.mxu0 %v3780
    %4009 = vmatpush1.bf16.msra.mxu0 %v3779
    %4010 = vmatprep.subr.bf16.mxu0 %v3784
    %4011 = vmatpush1.bf16.msra.mxu0 %v3783
    %4012 = vmatprep.subr.bf16.mxu0 %v3788
    %4013 = vmatpush1.bf16.msra.mxu0 %v3787
    %4014 = vmatprep.subr.bf16.mxu0 %v3792
    %4015 = vmatpush1.bf16.msra.mxu0 %v3791
    %4016 = vmatprep.subr.bf16.mxu0 %v3796
    %4017 = vmatpush1.bf16.msra.mxu0 %v3795
    %4018 = vmatprep.subr.bf16.mxu0 %v3800
    %4019 = vmatpush1.bf16.msra.mxu0 %v3799
    %4020 = vmatprep.subr.bf16.mxu0 %v3804
    %4021 = vmatpush1.bf16.msra.mxu0 %v3803
    %4022 = vmatprep.subr.bf16.mxu0 %v3808
    %4023 = vmatpush1.bf16.msra.mxu0 %v3807
    %4024 = vmatprep.subr.bf16.mxu0 %v3812
    %4025 = vmatpush1.bf16.msra.mxu0 %v3811
    %4026 = vmatprep.subr.bf16.mxu0 %v3816
    %4027 = vmatpush1.bf16.msra.mxu0 %v3815
    %4028 = vmatprep.subr.bf16.mxu0 %v3820
    %4029 = vmatpush1.bf16.msra.mxu0 %v3819
    %4030 = vmatprep.subr.bf16.mxu0 %v3824
    %4031 = vmatpush1.bf16.msra.mxu0 %v3823
    %4032 = vmatprep.subr.bf16.mxu0 %v3828
    %4033 = vmatpush1.bf16.msra.mxu0 %v3827
    %4034 = vmatprep.subr.bf16.mxu0 %v3832
    %4035 = vmatpush1.bf16.msra.mxu0 %v3831
    %4036 = vmatprep.mubr.bf16.mxu0 %v3172
    %4037 = vmatmul.mubr.bf16.gmra.mrb[0].mxu0 %v3171
    %v4038 = vpop.f32.mrb[0].mxu0
    %v4039 = vadd.f32 %v3998, %v4038
    %v4040 = vpop.f32.mrb[0].mxu0
    %v4041 = vadd.f32 %v4000, %v4040
    %v4042 = vpop.f32.mrb[0].mxu0
    %v4043 = vpop.f32.mrb[0].mxu0
    %4044 = vdwg.mxu0
    %4045 = vmatprep.subr.bf16.mxu0 %v3710
    %4046 = vmatpush1.bf16.msra.mxu0 %v3709
    %4047 = vmatprep.subr.bf16.mxu0 %v3714
    %4048 = vmatpush1.bf16.msra.mxu0 %v3713
    %4049 = vmatprep.subr.bf16.mxu0 %v3718
    %4050 = vmatpush1.bf16.msra.mxu0 %v3717
    %4051 = vmatprep.subr.bf16.mxu0 %v3722
    %4052 = vmatpush1.bf16.msra.mxu0 %v3721
    %4053 = vmatprep.subr.bf16.mxu0 %v3726
    %4054 = vmatpush1.bf16.msra.mxu0 %v3725
    %4055 = vmatprep.subr.bf16.mxu0 %v3730
    %4056 = vmatpush1.bf16.msra.mxu0 %v3729
    %4057 = vmatprep.subr.bf16.mxu0 %v3734
    %4058 = vmatpush1.bf16.msra.mxu0 %v3733
    %4059 = vmatprep.subr.bf16.mxu0 %v3738
    %4060 = vmatpush1.bf16.msra.mxu0 %v3737
    %4061 = vmatprep.subr.bf16.mxu0 %v3742
    %4062 = vmatpush1.bf16.msra.mxu0 %v3741
    %4063 = vmatprep.subr.bf16.mxu0 %v3746
    %4064 = vmatpush1.bf16.msra.mxu0 %v3745
    %4065 = vmatprep.subr.bf16.mxu0 %v3750
    %4066 = vmatpush1.bf16.msra.mxu0 %v3749
    %4067 = vmatprep.subr.bf16.mxu0 %v3754
    %4068 = vmatpush1.bf16.msra.mxu0 %v3753
    %4069 = vmatprep.subr.bf16.mxu0 %v3758
    %4070 = vmatpush1.bf16.msra.mxu0 %v3757
    %4071 = vmatprep.subr.bf16.mxu0 %v3762
    %4072 = vmatpush1.bf16.msra.mxu0 %v3761
    %4073 = vmatprep.subr.bf16.mxu0 %v3766
    %4074 = vmatpush1.bf16.msra.mxu0 %v3765
    %4075 = vmatprep.subr.bf16.mxu0 %v3770
    %4076 = vmatpush1.bf16.msra.mxu0 %v3769
    %4077 = vmatprep.mubr.bf16.mxu0 %v3170
    %4078 = vmatmul.mubr.bf16.gmra.mrb[0].mxu0 %v3169
    %v4079 = vpop.f32.mrb[0].mxu0
    %v4080 = vadd.f32 %v3314, %v4079
    %v4081 = vpop.f32.mrb[0].mxu0
    %v4082 = vadd.f32 %v3318, %v4081
    %v4083 = vpop.f32.mrb[0].mxu0
    %v4084 = vpop.f32.mrb[0].mxu0
    %4085 = vdwg.mxu0
    %4086 = vmatprep.subr.bf16.mxu0 %v3774
    %4087 = vmatpush1.bf16.msra.mxu0 %v3773
    %4088 = vmatprep.subr.bf16.mxu0 %v3778
    %4089 = vmatpush1.bf16.msra.mxu0 %v3777
    %4090 = vmatprep.subr.bf16.mxu0 %v3782
    %4091 = vmatpush1.bf16.msra.mxu0 %v3781
    %4092 = vmatprep.subr.bf16.mxu0 %v3786
    %4093 = vmatpush1.bf16.msra.mxu0 %v3785
    %4094 = vmatprep.subr.bf16.mxu0 %v3790
    %4095 = vmatpush1.bf16.msra.mxu0 %v3789
    %4096 = vmatprep.subr.bf16.mxu0 %v3794
    %4097 = vmatpush1.bf16.msra.mxu0 %v3793
    %4098 = vmatprep.subr.bf16.mxu0 %v3798
    %4099 = vmatpush1.bf16.msra.mxu0 %v3797
    %4100 = vmatprep.subr.bf16.mxu0 %v3802
    %4101 = vmatpush1.bf16.msra.mxu0 %v3801
    %4102 = vmatprep.subr.bf16.mxu0 %v3806
    %4103 = vmatpush1.bf16.msra.mxu0 %v3805
    %4104 = vmatprep.subr.bf16.mxu0 %v3810
    %4105 = vmatpush1.bf16.msra.mxu0 %v3809
    %4106 = vmatprep.subr.bf16.mxu0 %v3814
    %4107 = vmatpush1.bf16.msra.mxu0 %v3813
    %4108 = vmatprep.subr.bf16.mxu0 %v3818
    %4109 = vmatpush1.bf16.msra.mxu0 %v3817
    %4110 = vmatprep.subr.bf16.mxu0 %v3822
    %4111 = vmatpush1.bf16.msra.mxu0 %v3821
    %4112 = vmatprep.subr.bf16.mxu0 %v3826
    %4113 = vmatpush1.bf16.msra.mxu0 %v3825
    %4114 = vmatprep.subr.bf16.mxu0 %v3830
    %4115 = vmatpush1.bf16.msra.mxu0 %v3829
    %4116 = vmatprep.subr.bf16.mxu0 %v3834
    %4117 = vmatpush1.bf16.msra.mxu0 %v3833
    %4118 = vmatprep.mubr.bf16.mxu0 %v3172
    %4119 = vmatmul.mubr.bf16.gmra.mrb[0].mxu0 %v3171
    %v4120 = vpop.f32.mrb[0].mxu0
    %v4121 = vadd.f32 %v4080, %v4120
    %v4122 = vpop.f32.mrb[0].mxu0
    %v4123 = vadd.f32 %v4082, %v4122
    %v4124 = vpop.f32.mrb[0].mxu0
    %v4125 = vpop.f32.mrb[0].mxu0
    %4126 = vdwg.mxu0
    %v4127 = vmax.f32 %v4039, 0.0
    %v4128 = vmax.f32 %v4041, 0.0
    %v4129 = vmax.f32 %v4121, 0.0
    %v4130 = vmax.f32 %v4123, 0.0
    %v4131 = vpack.c.bf16 %v4127, %v4127
    %v4132 = vpack.c.bf16 %v4128, %v4128
    %v4133 = vpack.c.bf16 %v4129, %v4129
    %v4134 = vpack.c.bf16 %v4130, %v4130
    %s4135 = scalar_lea.vmem [#allocation10], 1024
    %v4136 = vld [vmem:[%s4135] sm:$0xff]
    %v4137 = vld [vmem:[%s4135 + $0x8] sm:$0xff]
    %v4138 = vld [vmem:[%s4135 + $0x10] sm:$0xff]
    %v4139 = vld [vmem:[%s4135 + $0x18] sm:$0xff]
    %v4140 = vld [vmem:[%s4135 + $0x20] sm:$0xff]
    %v4141 = vld [vmem:[%s4135 + $0x28] sm:$0xff]
    %v4142 = vld [vmem:[%s4135 + $0x30] sm:$0xff]
    %v4143 = vld [vmem:[%s4135 + $0x38] sm:$0xff]
    %v4144 = vld [vmem:[%s4135 + $0x40] sm:$0xff]
    %v4145 = vld [vmem:[%s4135 + $0x48] sm:$0xff]
    %v4146 = vld [vmem:[%s4135 + $0x50] sm:$0xff]
    %v4147 = vld [vmem:[%s4135 + $0x58] sm:$0xff]
    %v4148 = vld [vmem:[%s4135 + $0x60] sm:$0xff]
    %v4149 = vld [vmem:[%s4135 + $0x68] sm:$0xff]
    %v4150 = vld [vmem:[%s4135 + $0x70] sm:$0xff]
    %v4151 = vld [vmem:[%s4135 + $0x78] sm:$0xff]
    %v4152 = vld [vmem:[%s4135 + $0x80] sm:$0xff]
    %v4153 = vld [vmem:[%s4135 + $0x88] sm:$0xff]
    %v4154 = vld [vmem:[%s4135 + $0x90] sm:$0xff]
    %v4155 = vld [vmem:[%s4135 + $0x98] sm:$0xff]
    %v4156 = vld [vmem:[%s4135 + $0xa0] sm:$0xff]
    %v4157 = vld [vmem:[%s4135 + $0xa8] sm:$0xff]
    %v4158 = vld [vmem:[%s4135 + $0xb0] sm:$0xff]
    %v4159 = vld [vmem:[%s4135 + $0xb8] sm:$0xff]
    %v4160 = vld [vmem:[%s4135 + $0xc0] sm:$0xff]
    %v4161 = vld [vmem:[%s4135 + $0xc8] sm:$0xff]
    %v4162 = vld [vmem:[%s4135 + $0xd0] sm:$0xff]
    %v4163 = vld [vmem:[%s4135 + $0xd8] sm:$0xff]
    %v4164 = vld [vmem:[%s4135 + $0xe0] sm:$0xff]
    %v4165 = vld [vmem:[%s4135 + $0xe8] sm:$0xff]
    %v4166 = vld [vmem:[%s4135 + $0xf0] sm:$0xff]
    %v4167 = vld [vmem:[%s4135 + $0xf8] sm:$0xff]
    %v4168 = vld [vmem:[%s4135 + $0x100] sm:$0xff]
    %v4169 = vld [vmem:[%s4135 + $0x108] sm:$0xff]
    %v4170 = vld [vmem:[%s4135 + $0x110] sm:$0xff]
    %v4171 = vld [vmem:[%s4135 + $0x118] sm:$0xff]
    %v4172 = vld [vmem:[%s4135 + $0x120] sm:$0xff]
    %v4173 = vld [vmem:[%s4135 + $0x128] sm:$0xff]
    %v4174 = vld [vmem:[%s4135 + $0x130] sm:$0xff]
    %v4175 = vld [vmem:[%s4135 + $0x138] sm:$0xff]
    %v4176 = vld [vmem:[%s4135 + $0x140] sm:$0xff]
    %v4177 = vld [vmem:[%s4135 + $0x148] sm:$0xff]
    %v4178 = vld [vmem:[%s4135 + $0x150] sm:$0xff]
    %v4179 = vld [vmem:[%s4135 + $0x158] sm:$0xff]
    %v4180 = vld [vmem:[%s4135 + $0x160] sm:$0xff]
    %v4181 = vld [vmem:[%s4135 + $0x168] sm:$0xff]
    %v4182 = vld [vmem:[%s4135 + $0x170] sm:$0xff]
    %v4183 = vld [vmem:[%s4135 + $0x178] sm:$0xff]
    %v4184 = vld [vmem:[%s4135 + $0x180] sm:$0xff]
    %v4185 = vld [vmem:[%s4135 + $0x188] sm:$0xff]
    %v4186 = vld [vmem:[%s4135 + $0x190] sm:$0xff]
    %v4187 = vld [vmem:[%s4135 + $0x198] sm:$0xff]
    %v4188 = vld [vmem:[%s4135 + $0x1a0] sm:$0xff]
    %v4189 = vld [vmem:[%s4135 + $0x1a8] sm:$0xff]
    %v4190 = vld [vmem:[%s4135 + $0x1b0] sm:$0xff]
    %v4191 = vld [vmem:[%s4135 + $0x1b8] sm:$0xff]
    %v4192 = vld [vmem:[%s4135 + $0x1c0] sm:$0xff]
    %v4193 = vld [vmem:[%s4135 + $0x1c8] sm:$0xff]
    %v4194 = vld [vmem:[%s4135 + $0x1d0] sm:$0xff]
    %v4195 = vld [vmem:[%s4135 + $0x1d8] sm:$0xff]
    %v4196 = vld [vmem:[%s4135 + $0x1e0] sm:$0xff]
    %v4197 = vld [vmem:[%s4135 + $0x1e8] sm:$0xff]
    %v4198 = vld [vmem:[%s4135 + $0x1f0] sm:$0xff]
    %v4199 = vld [vmem:[%s4135 + $0x1f8] sm:$0xff]
    %v4200 = vld [vmem:[%s4135 + $0x200] sm:$0xff]
    %v4201 = vld [vmem:[%s4135 + $0x208] sm:$0xff]
    %v4202 = vld [vmem:[%s4135 + $0x210] sm:$0xff]
    %v4203 = vld [vmem:[%s4135 + $0x218] sm:$0xff]
    %v4204 = vld [vmem:[%s4135 + $0x220] sm:$0xff]
    %v4205 = vld [vmem:[%s4135 + $0x228] sm:$0xff]
    %v4206 = vld [vmem:[%s4135 + $0x230] sm:$0xff]
    %v4207 = vld [vmem:[%s4135 + $0x238] sm:$0xff]
    %v4208 = vld [vmem:[%s4135 + $0x240] sm:$0xff]
    %v4209 = vld [vmem:[%s4135 + $0x248] sm:$0xff]
    %v4210 = vld [vmem:[%s4135 + $0x250] sm:$0xff]
    %v4211 = vld [vmem:[%s4135 + $0x258] sm:$0xff]
    %v4212 = vld [vmem:[%s4135 + $0x260] sm:$0xff]
    %v4213 = vld [vmem:[%s4135 + $0x268] sm:$0xff]
    %v4214 = vld [vmem:[%s4135 + $0x270] sm:$0xff]
    %v4215 = vld [vmem:[%s4135 + $0x278] sm:$0xff]
    %v4216 = vld [vmem:[%s4135 + $0x280] sm:$0xff]
    %v4217 = vld [vmem:[%s4135 + $0x288] sm:$0xff]
    %v4218 = vld [vmem:[%s4135 + $0x290] sm:$0xff]
    %v4219 = vld [vmem:[%s4135 + $0x298] sm:$0xff]
    %v4220 = vld [vmem:[%s4135 + $0x2a0] sm:$0xff]
    %v4221 = vld [vmem:[%s4135 + $0x2a8] sm:$0xff]
    %v4222 = vld [vmem:[%s4135 + $0x2b0] sm:$0xff]
    %v4223 = vld [vmem:[%s4135 + $0x2b8] sm:$0xff]
    %v4224 = vld [vmem:[%s4135 + $0x2c0] sm:$0xff]
    %v4225 = vld [vmem:[%s4135 + $0x2c8] sm:$0xff]
    %v4226 = vld [vmem:[%s4135 + $0x2d0] sm:$0xff]
    %v4227 = vld [vmem:[%s4135 + $0x2d8] sm:$0xff]
    %v4228 = vld [vmem:[%s4135 + $0x2e0] sm:$0xff]
    %v4229 = vld [vmem:[%s4135 + $0x2e8] sm:$0xff]
    %v4230 = vld [vmem:[%s4135 + $0x2f0] sm:$0xff]
    %v4231 = vld [vmem:[%s4135 + $0x2f8] sm:$0xff]
    %v4232 = vld [vmem:[%s4135 + $0x300] sm:$0xff]
    %v4233 = vld [vmem:[%s4135 + $0x308] sm:$0xff]
    %v4234 = vld [vmem:[%s4135 + $0x310] sm:$0xff]
    %v4235 = vld [vmem:[%s4135 + $0x318] sm:$0xff]
    %v4236 = vld [vmem:[%s4135 + $0x320] sm:$0xff]
    %v4237 = vld [vmem:[%s4135 + $0x328] sm:$0xff]
    %v4238 = vld [vmem:[%s4135 + $0x330] sm:$0xff]
    %v4239 = vld [vmem:[%s4135 + $0x338] sm:$0xff]
    %v4240 = vld [vmem:[%s4135 + $0x340] sm:$0xff]
    %v4241 = vld [vmem:[%s4135 + $0x348] sm:$0xff]
    %v4242 = vld [vmem:[%s4135 + $0x350] sm:$0xff]
    %v4243 = vld [vmem:[%s4135 + $0x358] sm:$0xff]
    %v4244 = vld [vmem:[%s4135 + $0x360] sm:$0xff]
    %v4245 = vld [vmem:[%s4135 + $0x368] sm:$0xff]
    %v4246 = vld [vmem:[%s4135 + $0x370] sm:$0xff]
    %v4247 = vld [vmem:[%s4135 + $0x378] sm:$0xff]
    %v4248 = vld [vmem:[%s4135 + $0x380] sm:$0xff]
    %v4249 = vld [vmem:[%s4135 + $0x388] sm:$0xff]
    %v4250 = vld [vmem:[%s4135 + $0x390] sm:$0xff]
    %v4251 = vld [vmem:[%s4135 + $0x398] sm:$0xff]
    %v4252 = vld [vmem:[%s4135 + $0x3a0] sm:$0xff]
    %v4253 = vld [vmem:[%s4135 + $0x3a8] sm:$0xff]
    %v4254 = vld [vmem:[%s4135 + $0x3b0] sm:$0xff]
    %v4255 = vld [vmem:[%s4135 + $0x3b8] sm:$0xff]
    %v4256 = vld [vmem:[%s4135 + $0x3c0] sm:$0xff]
    %v4257 = vld [vmem:[%s4135 + $0x3c8] sm:$0xff]
    %v4258 = vld [vmem:[%s4135 + $0x3d0] sm:$0xff]
    %v4259 = vld [vmem:[%s4135 + $0x3d8] sm:$0xff]
    %v4260 = vld [vmem:[%s4135 + $0x3e0] sm:$0xff]
    %v4261 = vld [vmem:[%s4135 + $0x3e8] sm:$0xff]
    %v4262 = vld [vmem:[%s4135 + $0x3f0] sm:$0xff]
    %v4263 = vld [vmem:[%s4135 + $0x3f8] sm:$0xff]
    %s4264 = scalar_lea.vmem [#allocation12], 4
    %v4265 = vld [vmem:[%s4264] sm:$0xf]
    %v4267 = vlaneseq
    %v4268 = vshrl.u32 %v4267, 7
    %v4269 = vsub.s32 0, %v4268
    %v4270 = vrot.slane %v4265, %v4269
    %v4271 = vlaneseq
    %v4272 = vshrl.u32 %v4271, 7
    %v4273 = vsub.s32 1, %v4272
    %v4274 = vrot.slane %v4265, %v4273
    %v4275 = vlaneseq
    %v4276 = vshrl.u32 %v4275, 7
    %v4277 = vsub.s32 2, %v4276
    %v4278 = vrot.slane %v4265, %v4277
    %v4279 = vlaneseq
    %v4280 = vshrl.u32 %v4279, 7
    %v4281 = vsub.s32 3, %v4280
    %v4282 = vrot.slane %v4265, %v4281
    %v4415 = vunpack.c.l.b16 %v4136
    %v4416 = vunpack.c.h.b16 %v4136
    %v4417 = vunpack.c.l.b16 %v4137
    %v4418 = vunpack.c.h.b16 %v4137
    %v4419 = vunpack.c.l.b16 %v4138
    %v4420 = vunpack.c.h.b16 %v4138
    %v4421 = vunpack.c.l.b16 %v4139
    %v4422 = vunpack.c.h.b16 %v4139
    %v4423 = vunpack.c.l.b16 %v4140
    %v4424 = vunpack.c.h.b16 %v4140
    %v4425 = vunpack.c.l.b16 %v4141
    %v4426 = vunpack.c.h.b16 %v4141
    %v4427 = vunpack.c.l.b16 %v4142
    %v4428 = vunpack.c.h.b16 %v4142
    %v4429 = vunpack.c.l.b16 %v4143
    %v4430 = vunpack.c.h.b16 %v4143
    %v4431 = vunpack.c.l.b16 %v4144
    %v4432 = vunpack.c.h.b16 %v4144
    %v4433 = vunpack.c.l.b16 %v4145
    %v4434 = vunpack.c.h.b16 %v4145
    %v4435 = vunpack.c.l.b16 %v4146
    %v4436 = vunpack.c.h.b16 %v4146
    %v4437 = vunpack.c.l.b16 %v4147
    %v4438 = vunpack.c.h.b16 %v4147
    %v4439 = vunpack.c.l.b16 %v4148
    %v4440 = vunpack.c.h.b16 %v4148
    %v4441 = vunpack.c.l.b16 %v4149
    %v4442 = vunpack.c.h.b16 %v4149
    %v4443 = vunpack.c.l.b16 %v4150
    %v4444 = vunpack.c.h.b16 %v4150
    %v4445 = vunpack.c.l.b16 %v4151
    %v4446 = vunpack.c.h.b16 %v4151
    %v4447 = vunpack.c.l.b16 %v4152
    %v4448 = vunpack.c.h.b16 %v4152
    %v4449 = vunpack.c.l.b16 %v4153
    %v4450 = vunpack.c.h.b16 %v4153
    %v4451 = vunpack.c.l.b16 %v4154
    %v4452 = vunpack.c.h.b16 %v4154
    %v4453 = vunpack.c.l.b16 %v4155
    %v4454 = vunpack.c.h.b16 %v4155
    %v4455 = vunpack.c.l.b16 %v4156
    %v4456 = vunpack.c.h.b16 %v4156
    %v4457 = vunpack.c.l.b16 %v4157
    %v4458 = vunpack.c.h.b16 %v4157
    %v4459 = vunpack.c.l.b16 %v4158
    %v4460 = vunpack.c.h.b16 %v4158
    %v4461 = vunpack.c.l.b16 %v4159
    %v4462 = vunpack.c.h.b16 %v4159
    %v4463 = vunpack.c.l.b16 %v4160
    %v4464 = vunpack.c.h.b16 %v4160
    %v4465 = vunpack.c.l.b16 %v4161
    %v4466 = vunpack.c.h.b16 %v4161
    %v4467 = vunpack.c.l.b16 %v4162
    %v4468 = vunpack.c.h.b16 %v4162
    %v4469 = vunpack.c.l.b16 %v4163
    %v4470 = vunpack.c.h.b16 %v4163
    %v4471 = vunpack.c.l.b16 %v4164
    %v4472 = vunpack.c.h.b16 %v4164
    %v4473 = vunpack.c.l.b16 %v4165
    %v4474 = vunpack.c.h.b16 %v4165
    %v4475 = vunpack.c.l.b16 %v4166
    %v4476 = vunpack.c.h.b16 %v4166
    %v4477 = vunpack.c.l.b16 %v4167
    %v4478 = vunpack.c.h.b16 %v4167
    %v4479 = vunpack.c.l.b16 %v4168
    %v4480 = vunpack.c.h.b16 %v4168
    %v4481 = vunpack.c.l.b16 %v4169
    %v4482 = vunpack.c.h.b16 %v4169
    %v4483 = vunpack.c.l.b16 %v4170
    %v4484 = vunpack.c.h.b16 %v4170
    %v4485 = vunpack.c.l.b16 %v4171
    %v4486 = vunpack.c.h.b16 %v4171
    %v4487 = vunpack.c.l.b16 %v4172
    %v4488 = vunpack.c.h.b16 %v4172
    %v4489 = vunpack.c.l.b16 %v4173
    %v4490 = vunpack.c.h.b16 %v4173
    %v4491 = vunpack.c.l.b16 %v4174
    %v4492 = vunpack.c.h.b16 %v4174
    %v4493 = vunpack.c.l.b16 %v4175
    %v4494 = vunpack.c.h.b16 %v4175
    %v4495 = vunpack.c.l.b16 %v4176
    %v4496 = vunpack.c.h.b16 %v4176
    %v4497 = vunpack.c.l.b16 %v4177
    %v4498 = vunpack.c.h.b16 %v4177
    %v4499 = vunpack.c.l.b16 %v4178
    %v4500 = vunpack.c.h.b16 %v4178
    %v4501 = vunpack.c.l.b16 %v4179
    %v4502 = vunpack.c.h.b16 %v4179
    %v4503 = vunpack.c.l.b16 %v4180
    %v4504 = vunpack.c.h.b16 %v4180
    %v4505 = vunpack.c.l.b16 %v4181
    %v4506 = vunpack.c.h.b16 %v4181
    %v4507 = vunpack.c.l.b16 %v4182
    %v4508 = vunpack.c.h.b16 %v4182
    %v4509 = vunpack.c.l.b16 %v4183
    %v4510 = vunpack.c.h.b16 %v4183
    %v4511 = vunpack.c.l.b16 %v4184
    %v4512 = vunpack.c.h.b16 %v4184
    %v4513 = vunpack.c.l.b16 %v4185
    %v4514 = vunpack.c.h.b16 %v4185
    %v4515 = vunpack.c.l.b16 %v4186
    %v4516 = vunpack.c.h.b16 %v4186
    %v4517 = vunpack.c.l.b16 %v4187
    %v4518 = vunpack.c.h.b16 %v4187
    %v4519 = vunpack.c.l.b16 %v4188
    %v4520 = vunpack.c.h.b16 %v4188
    %v4521 = vunpack.c.l.b16 %v4189
    %v4522 = vunpack.c.h.b16 %v4189
    %v4523 = vunpack.c.l.b16 %v4190
    %v4524 = vunpack.c.h.b16 %v4190
    %v4525 = vunpack.c.l.b16 %v4191
    %v4526 = vunpack.c.h.b16 %v4191
    %v4527 = vunpack.c.l.b16 %v4192
    %v4528 = vunpack.c.h.b16 %v4192
    %v4529 = vunpack.c.l.b16 %v4193
    %v4530 = vunpack.c.h.b16 %v4193
    %v4531 = vunpack.c.l.b16 %v4194
    %v4532 = vunpack.c.h.b16 %v4194
    %v4533 = vunpack.c.l.b16 %v4195
    %v4534 = vunpack.c.h.b16 %v4195
    %v4535 = vunpack.c.l.b16 %v4196
    %v4536 = vunpack.c.h.b16 %v4196
    %v4537 = vunpack.c.l.b16 %v4197
    %v4538 = vunpack.c.h.b16 %v4197
    %v4539 = vunpack.c.l.b16 %v4198
    %v4540 = vunpack.c.h.b16 %v4198
    %v4541 = vunpack.c.l.b16 %v4199
    %v4542 = vunpack.c.h.b16 %v4199
    %v4543 = vunpack.c.l.b16 %v4200
    %v4544 = vunpack.c.h.b16 %v4200
    %v4545 = vunpack.c.l.b16 %v4201
    %v4546 = vunpack.c.h.b16 %v4201
    %v4547 = vunpack.c.l.b16 %v4202
    %v4548 = vunpack.c.h.b16 %v4202
    %v4549 = vunpack.c.l.b16 %v4203
    %v4550 = vunpack.c.h.b16 %v4203
    %v4551 = vunpack.c.l.b16 %v4204
    %v4552 = vunpack.c.h.b16 %v4204
    %v4553 = vunpack.c.l.b16 %v4205
    %v4554 = vunpack.c.h.b16 %v4205
    %v4555 = vunpack.c.l.b16 %v4206
    %v4556 = vunpack.c.h.b16 %v4206
    %v4557 = vunpack.c.l.b16 %v4207
    %v4558 = vunpack.c.h.b16 %v4207
    %v4559 = vunpack.c.l.b16 %v4208
    %v4560 = vunpack.c.h.b16 %v4208
    %v4561 = vunpack.c.l.b16 %v4209
    %v4562 = vunpack.c.h.b16 %v4209
    %v4563 = vunpack.c.l.b16 %v4210
    %v4564 = vunpack.c.h.b16 %v4210
    %v4565 = vunpack.c.l.b16 %v4211
    %v4566 = vunpack.c.h.b16 %v4211
    %v4567 = vunpack.c.l.b16 %v4212
    %v4568 = vunpack.c.h.b16 %v4212
    %v4569 = vunpack.c.l.b16 %v4213
    %v4570 = vunpack.c.h.b16 %v4213
    %v4571 = vunpack.c.l.b16 %v4214
    %v4572 = vunpack.c.h.b16 %v4214
    %v4573 = vunpack.c.l.b16 %v4215
    %v4574 = vunpack.c.h.b16 %v4215
    %v4575 = vunpack.c.l.b16 %v4216
    %v4576 = vunpack.c.h.b16 %v4216
    %v4577 = vunpack.c.l.b16 %v4217
    %v4578 = vunpack.c.h.b16 %v4217
    %v4579 = vunpack.c.l.b16 %v4218
    %v4580 = vunpack.c.h.b16 %v4218
    %v4581 = vunpack.c.l.b16 %v4219
    %v4582 = vunpack.c.h.b16 %v4219
    %v4583 = vunpack.c.l.b16 %v4220
    %v4584 = vunpack.c.h.b16 %v4220
    %v4585 = vunpack.c.l.b16 %v4221
    %v4586 = vunpack.c.h.b16 %v4221
    %v4587 = vunpack.c.l.b16 %v4222
    %v4588 = vunpack.c.h.b16 %v4222
    %v4589 = vunpack.c.l.b16 %v4223
    %v4590 = vunpack.c.h.b16 %v4223
    %v4591 = vunpack.c.l.b16 %v4224
    %v4592 = vunpack.c.h.b16 %v4224
    %v4593 = vunpack.c.l.b16 %v4225
    %v4594 = vunpack.c.h.b16 %v4225
    %v4595 = vunpack.c.l.b16 %v4226
    %v4596 = vunpack.c.h.b16 %v4226
    %v4597 = vunpack.c.l.b16 %v4227
    %v4598 = vunpack.c.h.b16 %v4227
    %v4599 = vunpack.c.l.b16 %v4228
    %v4600 = vunpack.c.h.b16 %v4228
    %v4601 = vunpack.c.l.b16 %v4229
    %v4602 = vunpack.c.h.b16 %v4229
    %v4603 = vunpack.c.l.b16 %v4230
    %v4604 = vunpack.c.h.b16 %v4230
    %v4605 = vunpack.c.l.b16 %v4231
    %v4606 = vunpack.c.h.b16 %v4231
    %v4607 = vunpack.c.l.b16 %v4232
    %v4608 = vunpack.c.h.b16 %v4232
    %v4609 = vunpack.c.l.b16 %v4233
    %v4610 = vunpack.c.h.b16 %v4233
    %v4611 = vunpack.c.l.b16 %v4234
    %v4612 = vunpack.c.h.b16 %v4234
    %v4613 = vunpack.c.l.b16 %v4235
    %v4614 = vunpack.c.h.b16 %v4235
    %v4615 = vunpack.c.l.b16 %v4236
    %v4616 = vunpack.c.h.b16 %v4236
    %v4617 = vunpack.c.l.b16 %v4237
    %v4618 = vunpack.c.h.b16 %v4237
    %v4619 = vunpack.c.l.b16 %v4238
    %v4620 = vunpack.c.h.b16 %v4238
    %v4621 = vunpack.c.l.b16 %v4239
    %v4622 = vunpack.c.h.b16 %v4239
    %v4623 = vunpack.c.l.b16 %v4240
    %v4624 = vunpack.c.h.b16 %v4240
    %v4625 = vunpack.c.l.b16 %v4241
    %v4626 = vunpack.c.h.b16 %v4241
    %v4627 = vunpack.c.l.b16 %v4242
    %v4628 = vunpack.c.h.b16 %v4242
    %v4629 = vunpack.c.l.b16 %v4243
    %v4630 = vunpack.c.h.b16 %v4243
    %v4631 = vunpack.c.l.b16 %v4244
    %v4632 = vunpack.c.h.b16 %v4244
    %v4633 = vunpack.c.l.b16 %v4245
    %v4634 = vunpack.c.h.b16 %v4245
    %v4635 = vunpack.c.l.b16 %v4246
    %v4636 = vunpack.c.h.b16 %v4246
    %v4637 = vunpack.c.l.b16 %v4247
    %v4638 = vunpack.c.h.b16 %v4247
    %v4639 = vunpack.c.l.b16 %v4248
    %v4640 = vunpack.c.h.b16 %v4248
    %v4641 = vunpack.c.l.b16 %v4249
    %v4642 = vunpack.c.h.b16 %v4249
    %v4643 = vunpack.c.l.b16 %v4250
    %v4644 = vunpack.c.h.b16 %v4250
    %v4645 = vunpack.c.l.b16 %v4251
    %v4646 = vunpack.c.h.b16 %v4251
    %v4647 = vunpack.c.l.b16 %v4252
    %v4648 = vunpack.c.h.b16 %v4252
    %v4649 = vunpack.c.l.b16 %v4253
    %v4650 = vunpack.c.h.b16 %v4253
    %v4651 = vunpack.c.l.b16 %v4254
    %v4652 = vunpack.c.h.b16 %v4254
    %v4653 = vunpack.c.l.b16 %v4255
    %v4654 = vunpack.c.h.b16 %v4255
    %v4655 = vunpack.c.l.b16 %v4256
    %v4656 = vunpack.c.h.b16 %v4256
    %v4657 = vunpack.c.l.b16 %v4257
    %v4658 = vunpack.c.h.b16 %v4257
    %v4659 = vunpack.c.l.b16 %v4258
    %v4660 = vunpack.c.h.b16 %v4258
    %v4661 = vunpack.c.l.b16 %v4259
    %v4662 = vunpack.c.h.b16 %v4259
    %v4663 = vunpack.c.l.b16 %v4260
    %v4664 = vunpack.c.h.b16 %v4260
    %v4665 = vunpack.c.l.b16 %v4261
    %v4666 = vunpack.c.h.b16 %v4261
    %v4667 = vunpack.c.l.b16 %v4262
    %v4668 = vunpack.c.h.b16 %v4262
    %v4669 = vunpack.c.l.b16 %v4263
    %v4670 = vunpack.c.h.b16 %v4263
    %v4671 = vpack.c.b16 %v4419, %v4415
    %v4672 = vpack.c.b16 %v4420, %v4416
    %v4673 = vpack.c.b16 %v4421, %v4417
    %v4674 = vpack.c.b16 %v4422, %v4418
    %v4675 = vpack.c.b16 %v4427, %v4423
    %v4676 = vpack.c.b16 %v4428, %v4424
    %v4677 = vpack.c.b16 %v4429, %v4425
    %v4678 = vpack.c.b16 %v4430, %v4426
    %v4679 = vpack.c.b16 %v4435, %v4431
    %v4680 = vpack.c.b16 %v4436, %v4432
    %v4681 = vpack.c.b16 %v4437, %v4433
    %v4682 = vpack.c.b16 %v4438, %v4434
    %v4683 = vpack.c.b16 %v4443, %v4439
    %v4684 = vpack.c.b16 %v4444, %v4440
    %v4685 = vpack.c.b16 %v4445, %v4441
    %v4686 = vpack.c.b16 %v4446, %v4442
    %v4687 = vpack.c.b16 %v4451, %v4447
    %v4688 = vpack.c.b16 %v4452, %v4448
    %v4689 = vpack.c.b16 %v4453, %v4449
    %v4690 = vpack.c.b16 %v4454, %v4450
    %v4691 = vpack.c.b16 %v4459, %v4455
    %v4692 = vpack.c.b16 %v4460, %v4456
    %v4693 = vpack.c.b16 %v4461, %v4457
    %v4694 = vpack.c.b16 %v4462, %v4458
    %v4695 = vpack.c.b16 %v4467, %v4463
    %v4696 = vpack.c.b16 %v4468, %v4464
    %v4697 = vpack.c.b16 %v4469, %v4465
    %v4698 = vpack.c.b16 %v4470, %v4466
    %v4699 = vpack.c.b16 %v4475, %v4471
    %v4700 = vpack.c.b16 %v4476, %v4472
    %v4701 = vpack.c.b16 %v4477, %v4473
    %v4702 = vpack.c.b16 %v4478, %v4474
    %v4703 = vpack.c.b16 %v4483, %v4479
    %v4704 = vpack.c.b16 %v4484, %v4480
    %v4705 = vpack.c.b16 %v4485, %v4481
    %v4706 = vpack.c.b16 %v4486, %v4482
    %v4707 = vpack.c.b16 %v4491, %v4487
    %v4708 = vpack.c.b16 %v4492, %v4488
    %v4709 = vpack.c.b16 %v4493, %v4489
    %v4710 = vpack.c.b16 %v4494, %v4490
    %v4711 = vpack.c.b16 %v4499, %v4495
    %v4712 = vpack.c.b16 %v4500, %v4496
    %v4713 = vpack.c.b16 %v4501, %v4497
    %v4714 = vpack.c.b16 %v4502, %v4498
    %v4715 = vpack.c.b16 %v4507, %v4503
    %v4716 = vpack.c.b16 %v4508, %v4504
    %v4717 = vpack.c.b16 %v4509, %v4505
    %v4718 = vpack.c.b16 %v4510, %v4506
    %v4719 = vpack.c.b16 %v4515, %v4511
    %v4720 = vpack.c.b16 %v4516, %v4512
    %v4721 = vpack.c.b16 %v4517, %v4513
    %v4722 = vpack.c.b16 %v4518, %v4514
    %v4723 = vpack.c.b16 %v4523, %v4519
    %v4724 = vpack.c.b16 %v4524, %v4520
    %v4725 = vpack.c.b16 %v4525, %v4521
    %v4726 = vpack.c.b16 %v4526, %v4522
    %v4727 = vpack.c.b16 %v4531, %v4527
    %v4728 = vpack.c.b16 %v4532, %v4528
    %v4729 = vpack.c.b16 %v4533, %v4529
    %v4730 = vpack.c.b16 %v4534, %v4530
    %v4731 = vpack.c.b16 %v4539, %v4535
    %v4732 = vpack.c.b16 %v4540, %v4536
    %v4733 = vpack.c.b16 %v4541, %v4537
    %v4734 = vpack.c.b16 %v4542, %v4538
    %v4735 = vpack.c.b16 %v4547, %v4543
    %v4736 = vpack.c.b16 %v4548, %v4544
    %v4737 = vpack.c.b16 %v4549, %v4545
    %v4738 = vpack.c.b16 %v4550, %v4546
    %v4739 = vpack.c.b16 %v4555, %v4551
    %v4740 = vpack.c.b16 %v4556, %v4552
    %v4741 = vpack.c.b16 %v4557, %v4553
    %v4742 = vpack.c.b16 %v4558, %v4554
    %v4743 = vpack.c.b16 %v4563, %v4559
    %v4744 = vpack.c.b16 %v4564, %v4560
    %v4745 = vpack.c.b16 %v4565, %v4561
    %v4746 = vpack.c.b16 %v4566, %v4562
    %v4747 = vpack.c.b16 %v4571, %v4567
    %v4748 = vpack.c.b16 %v4572, %v4568
    %v4749 = vpack.c.b16 %v4573, %v4569
    %v4750 = vpack.c.b16 %v4574, %v4570
    %v4751 = vpack.c.b16 %v4579, %v4575
    %v4752 = vpack.c.b16 %v4580, %v4576
    %v4753 = vpack.c.b16 %v4581, %v4577
    %v4754 = vpack.c.b16 %v4582, %v4578
    %v4755 = vpack.c.b16 %v4587, %v4583
    %v4756 = vpack.c.b16 %v4588, %v4584
    %v4757 = vpack.c.b16 %v4589, %v4585
    %v4758 = vpack.c.b16 %v4590, %v4586
    %v4759 = vpack.c.b16 %v4595, %v4591
    %v4760 = vpack.c.b16 %v4596, %v4592
    %v4761 = vpack.c.b16 %v4597, %v4593
    %v4762 = vpack.c.b16 %v4598, %v4594
    %v4763 = vpack.c.b16 %v4603, %v4599
    %v4764 = vpack.c.b16 %v4604, %v4600
    %v4765 = vpack.c.b16 %v4605, %v4601
    %v4766 = vpack.c.b16 %v4606, %v4602
    %v4767 = vpack.c.b16 %v4611, %v4607
    %v4768 = vpack.c.b16 %v4612, %v4608
    %v4769 = vpack.c.b16 %v4613, %v4609
    %v4770 = vpack.c.b16 %v4614, %v4610
    %v4771 = vpack.c.b16 %v4619, %v4615
    %v4772 = vpack.c.b16 %v4620, %v4616
    %v4773 = vpack.c.b16 %v4621, %v4617
    %v4774 = vpack.c.b16 %v4622, %v4618
    %v4775 = vpack.c.b16 %v4627, %v4623
    %v4776 = vpack.c.b16 %v4628, %v4624
    %v4777 = vpack.c.b16 %v4629, %v4625
    %v4778 = vpack.c.b16 %v4630, %v4626
    %v4779 = vpack.c.b16 %v4635, %v4631
    %v4780 = vpack.c.b16 %v4636, %v4632
    %v4781 = vpack.c.b16 %v4637, %v4633
    %v4782 = vpack.c.b16 %v4638, %v4634
    %v4783 = vpack.c.b16 %v4643, %v4639
    %v4784 = vpack.c.b16 %v4644, %v4640
    %v4785 = vpack.c.b16 %v4645, %v4641
    %v4786 = vpack.c.b16 %v4646, %v4642
    %v4787 = vpack.c.b16 %v4651, %v4647
    %v4788 = vpack.c.b16 %v4652, %v4648
    %v4789 = vpack.c.b16 %v4653, %v4649
    %v4790 = vpack.c.b16 %v4654, %v4650
    %v4791 = vpack.c.b16 %v4659, %v4655
    %v4792 = vpack.c.b16 %v4660, %v4656
    %v4793 = vpack.c.b16 %v4661, %v4657
    %v4794 = vpack.c.b16 %v4662, %v4658
    %v4795 = vpack.c.b16 %v4667, %v4663
    %v4796 = vpack.c.b16 %v4668, %v4664
    %v4797 = vpack.c.b16 %v4669, %v4665
    %v4798 = vpack.c.b16 %v4670, %v4666
    %4927 = vmatprep.subr.bf16.mxu0 %v4672
    %4928 = vmatpush1.bf16.msra.mxu0 %v4671
    %4929 = vmatprep.subr.bf16.mxu0 %v4676
    %4930 = vmatpush1.bf16.msra.mxu0 %v4675
    %4931 = vmatprep.subr.bf16.mxu0 %v4680
    %4932 = vmatpush1.bf16.msra.mxu0 %v4679
    %4933 = vmatprep.subr.bf16.mxu0 %v4684
    %4934 = vmatpush1.bf16.msra.mxu0 %v4683
    %4935 = vmatprep.subr.bf16.mxu0 %v4688
    %4936 = vmatpush1.bf16.msra.mxu0 %v4687
    %4937 = vmatprep.subr.bf16.mxu0 %v4692
    %4938 = vmatpush1.bf16.msra.mxu0 %v4691
    %4939 = vmatprep.subr.bf16.mxu0 %v4696
    %4940 = vmatpush1.bf16.msra.mxu0 %v4695
    %4941 = vmatprep.subr.bf16.mxu0 %v4700
    %4942 = vmatpush1.bf16.msra.mxu0 %v4699
    %4943 = vmatprep.subr.bf16.mxu0 %v4704
    %4944 = vmatpush1.bf16.msra.mxu0 %v4703
    %4945 = vmatprep.subr.bf16.mxu0 %v4708
    %4946 = vmatpush1.bf16.msra.mxu0 %v4707
    %4947 = vmatprep.subr.bf16.mxu0 %v4712
    %4948 = vmatpush1.bf16.msra.mxu0 %v4711
    %4949 = vmatprep.subr.bf16.mxu0 %v4716
    %4950 = vmatpush1.bf16.msra.mxu0 %v4715
    %4951 = vmatprep.subr.bf16.mxu0 %v4720
    %4952 = vmatpush1.bf16.msra.mxu0 %v4719
    %4953 = vmatprep.subr.bf16.mxu0 %v4724
    %4954 = vmatpush1.bf16.msra.mxu0 %v4723
    %4955 = vmatprep.subr.bf16.mxu0 %v4728
    %4956 = vmatpush1.bf16.msra.mxu0 %v4727
    %4957 = vmatprep.subr.bf16.mxu0 %v4732
    %4958 = vmatpush1.bf16.msra.mxu0 %v4731
    %4959 = vmatprep.mubr.bf16.mxu0 %v4132
    %4960 = vmatmul.mubr.bf16.gmra.mrb[0].mxu0 %v4131
    %v4961 = vpop.f32.mrb[0].mxu0
    %v4962 = vadd.f32 %v4270, %v4961
    %v4963 = vpop.f32.mrb[0].mxu0
    %v4964 = vadd.f32 %v4274, %v4963
    %v4965 = vpop.f32.mrb[0].mxu0
    %v4966 = vpop.f32.mrb[0].mxu0
    %4967 = vdwg.mxu0
    %4968 = vmatprep.subr.bf16.mxu0 %v4736
    %4969 = vmatpush1.bf16.msra.mxu0 %v4735
    %4970 = vmatprep.subr.bf16.mxu0 %v4740
    %4971 = vmatpush1.bf16.msra.mxu0 %v4739
    %4972 = vmatprep.subr.bf16.mxu0 %v4744
    %4973 = vmatpush1.bf16.msra.mxu0 %v4743
    %4974 = vmatprep.subr.bf16.mxu0 %v4748
    %4975 = vmatpush1.bf16.msra.mxu0 %v4747
    %4976 = vmatprep.subr.bf16.mxu0 %v4752
    %4977 = vmatpush1.bf16.msra.mxu0 %v4751
    %4978 = vmatprep.subr.bf16.mxu0 %v4756
    %4979 = vmatpush1.bf16.msra.mxu0 %v4755
    %4980 = vmatprep.subr.bf16.mxu0 %v4760
    %4981 = vmatpush1.bf16.msra.mxu0 %v4759
    %4982 = vmatprep.subr.bf16.mxu0 %v4764
    %4983 = vmatpush1.bf16.msra.mxu0 %v4763
    %4984 = vmatprep.subr.bf16.mxu0 %v4768
    %4985 = vmatpush1.bf16.msra.mxu0 %v4767
    %4986 = vmatprep.subr.bf16.mxu0 %v4772
    %4987 = vmatpush1.bf16.msra.mxu0 %v4771
    %4988 = vmatprep.subr.bf16.mxu0 %v4776
    %4989 = vmatpush1.bf16.msra.mxu0 %v4775
    %4990 = vmatprep.subr.bf16.mxu0 %v4780
    %4991 = vmatpush1.bf16.msra.mxu0 %v4779
    %4992 = vmatprep.subr.bf16.mxu0 %v4784
    %4993 = vmatpush1.bf16.msra.mxu0 %v4783
    %4994 = vmatprep.subr.bf16.mxu0 %v4788
    %4995 = vmatpush1.bf16.msra.mxu0 %v4787
    %4996 = vmatprep.subr.bf16.mxu0 %v4792
    %4997 = vmatpush1.bf16.msra.mxu0 %v4791
    %4998 = vmatprep.subr.bf16.mxu0 %v4796
    %4999 = vmatpush1.bf16.msra.mxu0 %v4795
    %5000 = vmatprep.mubr.bf16.mxu0 %v4134
    %5001 = vmatmul.mubr.bf16.gmra.mrb[0].mxu0 %v4133
    %v5002 = vpop.f32.mrb[0].mxu0
    %v5003 = vadd.f32 %v4962, %v5002
    %v5004 = vpop.f32.mrb[0].mxu0
    %v5005 = vadd.f32 %v4964, %v5004
    %v5006 = vpop.f32.mrb[0].mxu0
    %v5007 = vpop.f32.mrb[0].mxu0
    %5008 = vdwg.mxu0
    %5009 = vmatprep.subr.bf16.mxu0 %v4674
    %5010 = vmatpush1.bf16.msra.mxu0 %v4673
    %5011 = vmatprep.subr.bf16.mxu0 %v4678
    %5012 = vmatpush1.bf16.msra.mxu0 %v4677
    %5013 = vmatprep.subr.bf16.mxu0 %v4682
    %5014 = vmatpush1.bf16.msra.mxu0 %v4681
    %5015 = vmatprep.subr.bf16.mxu0 %v4686
    %5016 = vmatpush1.bf16.msra.mxu0 %v4685
    %5017 = vmatprep.subr.bf16.mxu0 %v4690
    %5018 = vmatpush1.bf16.msra.mxu0 %v4689
    %5019 = vmatprep.subr.bf16.mxu0 %v4694
    %5020 = vmatpush1.bf16.msra.mxu0 %v4693
    %5021 = vmatprep.subr.bf16.mxu0 %v4698
    %5022 = vmatpush1.bf16.msra.mxu0 %v4697
    %5023 = vmatprep.subr.bf16.mxu0 %v4702
    %5024 = vmatpush1.bf16.msra.mxu0 %v4701
    %5025 = vmatprep.subr.bf16.mxu0 %v4706
    %5026 = vmatpush1.bf16.msra.mxu0 %v4705
    %5027 = vmatprep.subr.bf16.mxu0 %v4710
    %5028 = vmatpush1.bf16.msra.mxu0 %v4709
    %5029 = vmatprep.subr.bf16.mxu0 %v4714
    %5030 = vmatpush1.bf16.msra.mxu0 %v4713
    %5031 = vmatprep.subr.bf16.mxu0 %v4718
    %5032 = vmatpush1.bf16.msra.mxu0 %v4717
    %5033 = vmatprep.subr.bf16.mxu0 %v4722
    %5034 = vmatpush1.bf16.msra.mxu0 %v4721
    %5035 = vmatprep.subr.bf16.mxu0 %v4726
    %5036 = vmatpush1.bf16.msra.mxu0 %v4725
    %5037 = vmatprep.subr.bf16.mxu0 %v4730
    %5038 = vmatpush1.bf16.msra.mxu0 %v4729
    %5039 = vmatprep.subr.bf16.mxu0 %v4734
    %5040 = vmatpush1.bf16.msra.mxu0 %v4733
    %5041 = vmatprep.mubr.bf16.mxu0 %v4132
    %5042 = vmatmul.mubr.bf16.gmra.mrb[0].mxu0 %v4131
    %v5043 = vpop.f32.mrb[0].mxu0
    %v5044 = vadd.f32 %v4278, %v5043
    %v5045 = vpop.f32.mrb[0].mxu0
    %v5046 = vadd.f32 %v4282, %v5045
    %v5047 = vpop.f32.mrb[0].mxu0
    %v5048 = vpop.f32.mrb[0].mxu0
    %5049 = vdwg.mxu0
    %5050 = vmatprep.subr.bf16.mxu0 %v4738
    %5051 = vmatpush1.bf16.msra.mxu0 %v4737
    %5052 = vmatprep.subr.bf16.mxu0 %v4742
    %5053 = vmatpush1.bf16.msra.mxu0 %v4741
    %5054 = vmatprep.subr.bf16.mxu0 %v4746
    %5055 = vmatpush1.bf16.msra.mxu0 %v4745
    %5056 = vmatprep.subr.bf16.mxu0 %v4750
    %5057 = vmatpush1.bf16.msra.mxu0 %v4749
    %5058 = vmatprep.subr.bf16.mxu0 %v4754
    %5059 = vmatpush1.bf16.msra.mxu0 %v4753
    %5060 = vmatprep.subr.bf16.mxu0 %v4758
    %5061 = vmatpush1.bf16.msra.mxu0 %v4757
    %5062 = vmatprep.subr.bf16.mxu0 %v4762
    %5063 = vmatpush1.bf16.msra.mxu0 %v4761
    %5064 = vmatprep.subr.bf16.mxu0 %v4766
    %5065 = vmatpush1.bf16.msra.mxu0 %v4765
    %5066 = vmatprep.subr.bf16.mxu0 %v4770
    %5067 = vmatpush1.bf16.msra.mxu0 %v4769
    %5068 = vmatprep.subr.bf16.mxu0 %v4774
    %5069 = vmatpush1.bf16.msra.mxu0 %v4773
    %5070 = vmatprep.subr.bf16.mxu0 %v4778
    %5071 = vmatpush1.bf16.msra.mxu0 %v4777
    %5072 = vmatprep.subr.bf16.mxu0 %v4782
    %5073 = vmatpush1.bf16.msra.mxu0 %v4781
    %5074 = vmatprep.subr.bf16.mxu0 %v4786
    %5075 = vmatpush1.bf16.msra.mxu0 %v4785
    %5076 = vmatprep.subr.bf16.mxu0 %v4790
    %5077 = vmatpush1.bf16.msra.mxu0 %v4789
    %5078 = vmatprep.subr.bf16.mxu0 %v4794
    %5079 = vmatpush1.bf16.msra.mxu0 %v4793
    %5080 = vmatprep.subr.bf16.mxu0 %v4798
    %5081 = vmatpush1.bf16.msra.mxu0 %v4797
    %5082 = vmatprep.mubr.bf16.mxu0 %v4134
    %5083 = vmatmul.mubr.bf16.gmra.mrb[0].mxu0 %v4133
    %v5084 = vpop.f32.mrb[0].mxu0
    %v5085 = vadd.f32 %v5044, %v5084
    %v5086 = vpop.f32.mrb[0].mxu0
    %v5087 = vadd.f32 %v5046, %v5086
    %v5088 = vpop.f32.mrb[0].mxu0
    %v5089 = vpop.f32.mrb[0].mxu0
    %5090 = vdwg.mxu0
    %v5091 = vmax.f32 %v5003, 0.0
    %v5092 = vmax.f32 %v5005, 0.0
    %v5093 = vmax.f32 %v5085, 0.0
    %v5094 = vmax.f32 %v5087, 0.0
    %v5095 = vpack.c.bf16 %v5091, %v5091
    %v5096 = vpack.c.bf16 %v5092, %v5092
    %v5097 = vpack.c.bf16 %v5093, %v5093
    %v5098 = vpack.c.bf16 %v5094, %v5094
    %s5099 = scalar_lea.vmem [#allocation10], 2048
    %v5100 = vld [vmem:[%s5099] sm:$0xff]
    %v5101 = vld [vmem:[%s5099 + $0x8] sm:$0xff]
    %v5102 = vld [vmem:[%s5099 + $0x10] sm:$0xff]
    %v5103 = vld [vmem:[%s5099 + $0x18] sm:$0xff]
    %v5104 = vld [vmem:[%s5099 + $0x20] sm:$0xff]
    %v5105 = vld [vmem:[%s5099 + $0x28] sm:$0xff]
    %v5106 = vld [vmem:[%s5099 + $0x30] sm:$0xff]
    %v5107 = vld [vmem:[%s5099 + $0x38] sm:$0xff]
    %v5108 = vld [vmem:[%s5099 + $0x40] sm:$0xff]
    %v5109 = vld [vmem:[%s5099 + $0x48] sm:$0xff]
    %v5110 = vld [vmem:[%s5099 + $0x50] sm:$0xff]
    %v5111 = vld [vmem:[%s5099 + $0x58] sm:$0xff]
    %v5112 = vld [vmem:[%s5099 + $0x60] sm:$0xff]
    %v5113 = vld [vmem:[%s5099 + $0x68] sm:$0xff]
    %v5114 = vld [vmem:[%s5099 + $0x70] sm:$0xff]
    %v5115 = vld [vmem:[%s5099 + $0x78] sm:$0xff]
    %v5116 = vld [vmem:[%s5099 + $0x80] sm:$0xff]
    %v5117 = vld [vmem:[%s5099 + $0x88] sm:$0xff]
    %v5118 = vld [vmem:[%s5099 + $0x90] sm:$0xff]
    %v5119 = vld [vmem:[%s5099 + $0x98] sm:$0xff]
    %v5120 = vld [vmem:[%s5099 + $0xa0] sm:$0xff]
    %v5121 = vld [vmem:[%s5099 + $0xa8] sm:$0xff]
    %v5122 = vld [vmem:[%s5099 + $0xb0] sm:$0xff]
    %v5123 = vld [vmem:[%s5099 + $0xb8] sm:$0xff]
    %v5124 = vld [vmem:[%s5099 + $0xc0] sm:$0xff]
    %v5125 = vld [vmem:[%s5099 + $0xc8] sm:$0xff]
    %v5126 = vld [vmem:[%s5099 + $0xd0] sm:$0xff]
    %v5127 = vld [vmem:[%s5099 + $0xd8] sm:$0xff]
    %v5128 = vld [vmem:[%s5099 + $0xe0] sm:$0xff]
    %v5129 = vld [vmem:[%s5099 + $0xe8] sm:$0xff]
    %v5130 = vld [vmem:[%s5099 + $0xf0] sm:$0xff]
    %v5131 = vld [vmem:[%s5099 + $0xf8] sm:$0xff]
    %v5132 = vld [vmem:[%s5099 + $0x100] sm:$0xff]
    %v5133 = vld [vmem:[%s5099 + $0x108] sm:$0xff]
    %v5134 = vld [vmem:[%s5099 + $0x110] sm:$0xff]
    %v5135 = vld [vmem:[%s5099 + $0x118] sm:$0xff]
    %v5136 = vld [vmem:[%s5099 + $0x120] sm:$0xff]
    %v5137 = vld [vmem:[%s5099 + $0x128] sm:$0xff]
    %v5138 = vld [vmem:[%s5099 + $0x130] sm:$0xff]
    %v5139 = vld [vmem:[%s5099 + $0x138] sm:$0xff]
    %v5140 = vld [vmem:[%s5099 + $0x140] sm:$0xff]
    %v5141 = vld [vmem:[%s5099 + $0x148] sm:$0xff]
    %v5142 = vld [vmem:[%s5099 + $0x150] sm:$0xff]
    %v5143 = vld [vmem:[%s5099 + $0x158] sm:$0xff]
    %v5144 = vld [vmem:[%s5099 + $0x160] sm:$0xff]
    %v5145 = vld [vmem:[%s5099 + $0x168] sm:$0xff]
    %v5146 = vld [vmem:[%s5099 + $0x170] sm:$0xff]
    %v5147 = vld [vmem:[%s5099 + $0x178] sm:$0xff]
    %v5148 = vld [vmem:[%s5099 + $0x180] sm:$0xff]
    %v5149 = vld [vmem:[%s5099 + $0x188] sm:$0xff]
    %v5150 = vld [vmem:[%s5099 + $0x190] sm:$0xff]
    %v5151 = vld [vmem:[%s5099 + $0x198] sm:$0xff]
    %v5152 = vld [vmem:[%s5099 + $0x1a0] sm:$0xff]
    %v5153 = vld [vmem:[%s5099 + $0x1a8] sm:$0xff]
    %v5154 = vld [vmem:[%s5099 + $0x1b0] sm:$0xff]
    %v5155 = vld [vmem:[%s5099 + $0x1b8] sm:$0xff]
    %v5156 = vld [vmem:[%s5099 + $0x1c0] sm:$0xff]
    %v5157 = vld [vmem:[%s5099 + $0x1c8] sm:$0xff]
    %v5158 = vld [vmem:[%s5099 + $0x1d0] sm:$0xff]
    %v5159 = vld [vmem:[%s5099 + $0x1d8] sm:$0xff]
    %v5160 = vld [vmem:[%s5099 + $0x1e0] sm:$0xff]
    %v5161 = vld [vmem:[%s5099 + $0x1e8] sm:$0xff]
    %v5162 = vld [vmem:[%s5099 + $0x1f0] sm:$0xff]
    %v5163 = vld [vmem:[%s5099 + $0x1f8] sm:$0xff]
    %v5164 = vld [vmem:[%s5099 + $0x200] sm:$0xff]
    %v5165 = vld [vmem:[%s5099 + $0x208] sm:$0xff]
    %v5166 = vld [vmem:[%s5099 + $0x210] sm:$0xff]
    %v5167 = vld [vmem:[%s5099 + $0x218] sm:$0xff]
    %v5168 = vld [vmem:[%s5099 + $0x220] sm:$0xff]
    %v5169 = vld [vmem:[%s5099 + $0x228] sm:$0xff]
    %v5170 = vld [vmem:[%s5099 + $0x230] sm:$0xff]
    %v5171 = vld [vmem:[%s5099 + $0x238] sm:$0xff]
    %v5172 = vld [vmem:[%s5099 + $0x240] sm:$0xff]
    %v5173 = vld [vmem:[%s5099 + $0x248] sm:$0xff]
    %v5174 = vld [vmem:[%s5099 + $0x250] sm:$0xff]
    %v5175 = vld [vmem:[%s5099 + $0x258] sm:$0xff]
    %v5176 = vld [vmem:[%s5099 + $0x260] sm:$0xff]
    %v5177 = vld [vmem:[%s5099 + $0x268] sm:$0xff]
    %v5178 = vld [vmem:[%s5099 + $0x270] sm:$0xff]
    %v5179 = vld [vmem:[%s5099 + $0x278] sm:$0xff]
    %v5180 = vld [vmem:[%s5099 + $0x280] sm:$0xff]
    %v5181 = vld [vmem:[%s5099 + $0x288] sm:$0xff]
    %v5182 = vld [vmem:[%s5099 + $0x290] sm:$0xff]
    %v5183 = vld [vmem:[%s5099 + $0x298] sm:$0xff]
    %v5184 = vld [vmem:[%s5099 + $0x2a0] sm:$0xff]
    %v5185 = vld [vmem:[%s5099 + $0x2a8] sm:$0xff]
    %v5186 = vld [vmem:[%s5099 + $0x2b0] sm:$0xff]
    %v5187 = vld [vmem:[%s5099 + $0x2b8] sm:$0xff]
    %v5188 = vld [vmem:[%s5099 + $0x2c0] sm:$0xff]
    %v5189 = vld [vmem:[%s5099 + $0x2c8] sm:$0xff]
    %v5190 = vld [vmem:[%s5099 + $0x2d0] sm:$0xff]
    %v5191 = vld [vmem:[%s5099 + $0x2d8] sm:$0xff]
    %v5192 = vld [vmem:[%s5099 + $0x2e0] sm:$0xff]
    %v5193 = vld [vmem:[%s5099 + $0x2e8] sm:$0xff]
    %v5194 = vld [vmem:[%s5099 + $0x2f0] sm:$0xff]
    %v5195 = vld [vmem:[%s5099 + $0x2f8] sm:$0xff]
    %v5196 = vld [vmem:[%s5099 + $0x300] sm:$0xff]
    %v5197 = vld [vmem:[%s5099 + $0x308] sm:$0xff]
    %v5198 = vld [vmem:[%s5099 + $0x310] sm:$0xff]
    %v5199 = vld [vmem:[%s5099 + $0x318] sm:$0xff]
    %v5200 = vld [vmem:[%s5099 + $0x320] sm:$0xff]
    %v5201 = vld [vmem:[%s5099 + $0x328] sm:$0xff]
    %v5202 = vld [vmem:[%s5099 + $0x330] sm:$0xff]
    %v5203 = vld [vmem:[%s5099 + $0x338] sm:$0xff]
    %v5204 = vld [vmem:[%s5099 + $0x340] sm:$0xff]
    %v5205 = vld [vmem:[%s5099 + $0x348] sm:$0xff]
    %v5206 = vld [vmem:[%s5099 + $0x350] sm:$0xff]
    %v5207 = vld [vmem:[%s5099 + $0x358] sm:$0xff]
    %v5208 = vld [vmem:[%s5099 + $0x360] sm:$0xff]
    %v5209 = vld [vmem:[%s5099 + $0x368] sm:$0xff]
    %v5210 = vld [vmem:[%s5099 + $0x370] sm:$0xff]
    %v5211 = vld [vmem:[%s5099 + $0x378] sm:$0xff]
    %v5212 = vld [vmem:[%s5099 + $0x380] sm:$0xff]
    %v5213 = vld [vmem:[%s5099 + $0x388] sm:$0xff]
    %v5214 = vld [vmem:[%s5099 + $0x390] sm:$0xff]
    %v5215 = vld [vmem:[%s5099 + $0x398] sm:$0xff]
    %v5216 = vld [vmem:[%s5099 + $0x3a0] sm:$0xff]
    %v5217 = vld [vmem:[%s5099 + $0x3a8] sm:$0xff]
    %v5218 = vld [vmem:[%s5099 + $0x3b0] sm:$0xff]
    %v5219 = vld [vmem:[%s5099 + $0x3b8] sm:$0xff]
    %v5220 = vld [vmem:[%s5099 + $0x3c0] sm:$0xff]
    %v5221 = vld [vmem:[%s5099 + $0x3c8] sm:$0xff]
    %v5222 = vld [vmem:[%s5099 + $0x3d0] sm:$0xff]
    %v5223 = vld [vmem:[%s5099 + $0x3d8] sm:$0xff]
    %v5224 = vld [vmem:[%s5099 + $0x3e0] sm:$0xff]
    %v5225 = vld [vmem:[%s5099 + $0x3e8] sm:$0xff]
    %v5226 = vld [vmem:[%s5099 + $0x3f0] sm:$0xff]
    %v5227 = vld [vmem:[%s5099 + $0x3f8] sm:$0xff]
    %s5228 = scalar_lea.vmem [#allocation12], 8
    %v5229 = vld [vmem:[%s5228] sm:$0xf]
    %v5231 = vlaneseq
    %v5232 = vshrl.u32 %v5231, 7
    %v5233 = vsub.s32 0, %v5232
    %v5234 = vrot.slane %v5229, %v5233
    %v5235 = vlaneseq
    %v5236 = vshrl.u32 %v5235, 7
    %v5237 = vsub.s32 1, %v5236
    %v5238 = vrot.slane %v5229, %v5237
    %v5239 = vlaneseq
    %v5240 = vshrl.u32 %v5239, 7
    %v5241 = vsub.s32 2, %v5240
    %v5242 = vrot.slane %v5229, %v5241
    %v5243 = vlaneseq
    %v5244 = vshrl.u32 %v5243, 7
    %v5245 = vsub.s32 3, %v5244
    %v5246 = vrot.slane %v5229, %v5245
    %v5379 = vunpack.c.l.b16 %v5100
    %v5380 = vunpack.c.h.b16 %v5100
    %v5381 = vunpack.c.l.b16 %v5101
    %v5382 = vunpack.c.h.b16 %v5101
    %v5383 = vunpack.c.l.b16 %v5102
    %v5384 = vunpack.c.h.b16 %v5102
    %v5385 = vunpack.c.l.b16 %v5103
    %v5386 = vunpack.c.h.b16 %v5103
    %v5387 = vunpack.c.l.b16 %v5104
    %v5388 = vunpack.c.h.b16 %v5104
    %v5389 = vunpack.c.l.b16 %v5105
    %v5390 = vunpack.c.h.b16 %v5105
    %v5391 = vunpack.c.l.b16 %v5106
    %v5392 = vunpack.c.h.b16 %v5106
    %v5393 = vunpack.c.l.b16 %v5107
    %v5394 = vunpack.c.h.b16 %v5107
    %v5395 = vunpack.c.l.b16 %v5108
    %v5396 = vunpack.c.h.b16 %v5108
    %v5397 = vunpack.c.l.b16 %v5109
    %v5398 = vunpack.c.h.b16 %v5109
    %v5399 = vunpack.c.l.b16 %v5110
    %v5400 = vunpack.c.h.b16 %v5110
    %v5401 = vunpack.c.l.b16 %v5111
    %v5402 = vunpack.c.h.b16 %v5111
    %v5403 = vunpack.c.l.b16 %v5112
    %v5404 = vunpack.c.h.b16 %v5112
    %v5405 = vunpack.c.l.b16 %v5113
    %v5406 = vunpack.c.h.b16 %v5113
    %v5407 = vunpack.c.l.b16 %v5114
    %v5408 = vunpack.c.h.b16 %v5114
    %v5409 = vunpack.c.l.b16 %v5115
    %v5410 = vunpack.c.h.b16 %v5115
    %v5411 = vunpack.c.l.b16 %v5116
    %v5412 = vunpack.c.h.b16 %v5116
    %v5413 = vunpack.c.l.b16 %v5117
    %v5414 = vunpack.c.h.b16 %v5117
    %v5415 = vunpack.c.l.b16 %v5118
    %v5416 = vunpack.c.h.b16 %v5118
    %v5417 = vunpack.c.l.b16 %v5119
    %v5418 = vunpack.c.h.b16 %v5119
    %v5419 = vunpack.c.l.b16 %v5120
    %v5420 = vunpack.c.h.b16 %v5120
    %v5421 = vunpack.c.l.b16 %v5121
    %v5422 = vunpack.c.h.b16 %v5121
    %v5423 = vunpack.c.l.b16 %v5122
    %v5424 = vunpack.c.h.b16 %v5122
    %v5425 = vunpack.c.l.b16 %v5123
    %v5426 = vunpack.c.h.b16 %v5123
    %v5427 = vunpack.c.l.b16 %v5124
    %v5428 = vunpack.c.h.b16 %v5124
    %v5429 = vunpack.c.l.b16 %v5125
    %v5430 = vunpack.c.h.b16 %v5125
    %v5431 = vunpack.c.l.b16 %v5126
    %v5432 = vunpack.c.h.b16 %v5126
    %v5433 = vunpack.c.l.b16 %v5127
    %v5434 = vunpack.c.h.b16 %v5127
    %v5435 = vunpack.c.l.b16 %v5128
    %v5436 = vunpack.c.h.b16 %v5128
    %v5437 = vunpack.c.l.b16 %v5129
    %v5438 = vunpack.c.h.b16 %v5129
    %v5439 = vunpack.c.l.b16 %v5130
    %v5440 = vunpack.c.h.b16 %v5130
    %v5441 = vunpack.c.l.b16 %v5131
    %v5442 = vunpack.c.h.b16 %v5131
    %v5443 = vunpack.c.l.b16 %v5132
    %v5444 = vunpack.c.h.b16 %v5132
    %v5445 = vunpack.c.l.b16 %v5133
    %v5446 = vunpack.c.h.b16 %v5133
    %v5447 = vunpack.c.l.b16 %v5134
    %v5448 = vunpack.c.h.b16 %v5134
    %v5449 = vunpack.c.l.b16 %v5135
    %v5450 = vunpack.c.h.b16 %v5135
    %v5451 = vunpack.c.l.b16 %v5136
    %v5452 = vunpack.c.h.b16 %v5136
    %v5453 = vunpack.c.l.b16 %v5137
    %v5454 = vunpack.c.h.b16 %v5137
    %v5455 = vunpack.c.l.b16 %v5138
    %v5456 = vunpack.c.h.b16 %v5138
    %v5457 = vunpack.c.l.b16 %v5139
    %v5458 = vunpack.c.h.b16 %v5139
    %v5459 = vunpack.c.l.b16 %v5140
    %v5460 = vunpack.c.h.b16 %v5140
    %v5461 = vunpack.c.l.b16 %v5141
    %v5462 = vunpack.c.h.b16 %v5141
    %v5463 = vunpack.c.l.b16 %v5142
    %v5464 = vunpack.c.h.b16 %v5142
    %v5465 = vunpack.c.l.b16 %v5143
    %v5466 = vunpack.c.h.b16 %v5143
    %v5467 = vunpack.c.l.b16 %v5144
    %v5468 = vunpack.c.h.b16 %v5144
    %v5469 = vunpack.c.l.b16 %v5145
    %v5470 = vunpack.c.h.b16 %v5145
    %v5471 = vunpack.c.l.b16 %v5146
    %v5472 = vunpack.c.h.b16 %v5146
    %v5473 = vunpack.c.l.b16 %v5147
    %v5474 = vunpack.c.h.b16 %v5147
    %v5475 = vunpack.c.l.b16 %v5148
    %v5476 = vunpack.c.h.b16 %v5148
    %v5477 = vunpack.c.l.b16 %v5149
    %v5478 = vunpack.c.h.b16 %v5149
    %v5479 = vunpack.c.l.b16 %v5150
    %v5480 = vunpack.c.h.b16 %v5150
    %v5481 = vunpack.c.l.b16 %v5151
    %v5482 = vunpack.c.h.b16 %v5151
    %v5483 = vunpack.c.l.b16 %v5152
    %v5484 = vunpack.c.h.b16 %v5152
    %v5485 = vunpack.c.l.b16 %v5153
    %v5486 = vunpack.c.h.b16 %v5153
    %v5487 = vunpack.c.l.b16 %v5154
    %v5488 = vunpack.c.h.b16 %v5154
    %v5489 = vunpack.c.l.b16 %v5155
    %v5490 = vunpack.c.h.b16 %v5155
    %v5491 = vunpack.c.l.b16 %v5156
    %v5492 = vunpack.c.h.b16 %v5156
    %v5493 = vunpack.c.l.b16 %v5157
    %v5494 = vunpack.c.h.b16 %v5157
    %v5495 = vunpack.c.l.b16 %v5158
    %v5496 = vunpack.c.h.b16 %v5158
    %v5497 = vunpack.c.l.b16 %v5159
    %v5498 = vunpack.c.h.b16 %v5159
    %v5499 = vunpack.c.l.b16 %v5160
    %v5500 = vunpack.c.h.b16 %v5160
    %v5501 = vunpack.c.l.b16 %v5161
    %v5502 = vunpack.c.h.b16 %v5161
    %v5503 = vunpack.c.l.b16 %v5162
    %v5504 = vunpack.c.h.b16 %v5162
    %v5505 = vunpack.c.l.b16 %v5163
    %v5506 = vunpack.c.h.b16 %v5163
    %v5507 = vunpack.c.l.b16 %v5164
    %v5508 = vunpack.c.h.b16 %v5164
    %v5509 = vunpack.c.l.b16 %v5165
    %v5510 = vunpack.c.h.b16 %v5165
    %v5511 = vunpack.c.l.b16 %v5166
    %v5512 = vunpack.c.h.b16 %v5166
    %v5513 = vunpack.c.l.b16 %v5167
    %v5514 = vunpack.c.h.b16 %v5167
    %v5515 = vunpack.c.l.b16 %v5168
    %v5516 = vunpack.c.h.b16 %v5168
    %v5517 = vunpack.c.l.b16 %v5169
    %v5518 = vunpack.c.h.b16 %v5169
    %v5519 = vunpack.c.l.b16 %v5170
    %v5520 = vunpack.c.h.b16 %v5170
    %v5521 = vunpack.c.l.b16 %v5171
    %v5522 = vunpack.c.h.b16 %v5171
    %v5523 = vunpack.c.l.b16 %v5172
    %v5524 = vunpack.c.h.b16 %v5172
    %v5525 = vunpack.c.l.b16 %v5173
    %v5526 = vunpack.c.h.b16 %v5173
    %v5527 = vunpack.c.l.b16 %v5174
    %v5528 = vunpack.c.h.b16 %v5174
    %v5529 = vunpack.c.l.b16 %v5175
    %v5530 = vunpack.c.h.b16 %v5175
    %v5531 = vunpack.c.l.b16 %v5176
    %v5532 = vunpack.c.h.b16 %v5176
    %v5533 = vunpack.c.l.b16 %v5177
    %v5534 = vunpack.c.h.b16 %v5177
    %v5535 = vunpack.c.l.b16 %v5178
    %v5536 = vunpack.c.h.b16 %v5178
    %v5537 = vunpack.c.l.b16 %v5179
    %v5538 = vunpack.c.h.b16 %v5179
    %v5539 = vunpack.c.l.b16 %v5180
    %v5540 = vunpack.c.h.b16 %v5180
    %v5541 = vunpack.c.l.b16 %v5181
    %v5542 = vunpack.c.h.b16 %v5181
    %v5543 = vunpack.c.l.b16 %v5182
    %v5544 = vunpack.c.h.b16 %v5182
    %v5545 = vunpack.c.l.b16 %v5183
    %v5546 = vunpack.c.h.b16 %v5183
    %v5547 = vunpack.c.l.b16 %v5184
    %v5548 = vunpack.c.h.b16 %v5184
    %v5549 = vunpack.c.l.b16 %v5185
    %v5550 = vunpack.c.h.b16 %v5185
    %v5551 = vunpack.c.l.b16 %v5186
    %v5552 = vunpack.c.h.b16 %v5186
    %v5553 = vunpack.c.l.b16 %v5187
    %v5554 = vunpack.c.h.b16 %v5187
    %v5555 = vunpack.c.l.b16 %v5188
    %v5556 = vunpack.c.h.b16 %v5188
    %v5557 = vunpack.c.l.b16 %v5189
    %v5558 = vunpack.c.h.b16 %v5189
    %v5559 = vunpack.c.l.b16 %v5190
    %v5560 = vunpack.c.h.b16 %v5190
    %v5561 = vunpack.c.l.b16 %v5191
    %v5562 = vunpack.c.h.b16 %v5191
    %v5563 = vunpack.c.l.b16 %v5192
    %v5564 = vunpack.c.h.b16 %v5192
    %v5565 = vunpack.c.l.b16 %v5193
    %v5566 = vunpack.c.h.b16 %v5193
    %v5567 = vunpack.c.l.b16 %v5194
    %v5568 = vunpack.c.h.b16 %v5194
    %v5569 = vunpack.c.l.b16 %v5195
    %v5570 = vunpack.c.h.b16 %v5195
    %v5571 = vunpack.c.l.b16 %v5196
    %v5572 = vunpack.c.h.b16 %v5196
    %v5573 = vunpack.c.l.b16 %v5197
    %v5574 = vunpack.c.h.b16 %v5197
    %v5575 = vunpack.c.l.b16 %v5198
    %v5576 = vunpack.c.h.b16 %v5198
    %v5577 = vunpack.c.l.b16 %v5199
    %v5578 = vunpack.c.h.b16 %v5199
    %v5579 = vunpack.c.l.b16 %v5200
    %v5580 = vunpack.c.h.b16 %v5200
    %v5581 = vunpack.c.l.b16 %v5201
    %v5582 = vunpack.c.h.b16 %v5201
    %v5583 = vunpack.c.l.b16 %v5202
    %v5584 = vunpack.c.h.b16 %v5202
    %v5585 = vunpack.c.l.b16 %v5203
    %v5586 = vunpack.c.h.b16 %v5203
    %v5587 = vunpack.c.l.b16 %v5204
    %v5588 = vunpack.c.h.b16 %v5204
    %v5589 = vunpack.c.l.b16 %v5205
    %v5590 = vunpack.c.h.b16 %v5205
    %v5591 = vunpack.c.l.b16 %v5206
    %v5592 = vunpack.c.h.b16 %v5206
    %v5593 = vunpack.c.l.b16 %v5207
    %v5594 = vunpack.c.h.b16 %v5207
    %v5595 = vunpack.c.l.b16 %v5208
    %v5596 = vunpack.c.h.b16 %v5208
    %v5597 = vunpack.c.l.b16 %v5209
    %v5598 = vunpack.c.h.b16 %v5209
    %v5599 = vunpack.c.l.b16 %v5210
    %v5600 = vunpack.c.h.b16 %v5210
    %v5601 = vunpack.c.l.b16 %v5211
    %v5602 = vunpack.c.h.b16 %v5211
    %v5603 = vunpack.c.l.b16 %v5212
    %v5604 = vunpack.c.h.b16 %v5212
    %v5605 = vunpack.c.l.b16 %v5213
    %v5606 = vunpack.c.h.b16 %v5213
    %v5607 = vunpack.c.l.b16 %v5214
    %v5608 = vunpack.c.h.b16 %v5214
    %v5609 = vunpack.c.l.b16 %v5215
    %v5610 = vunpack.c.h.b16 %v5215
    %v5611 = vunpack.c.l.b16 %v5216
    %v5612 = vunpack.c.h.b16 %v5216
    %v5613 = vunpack.c.l.b16 %v5217
    %v5614 = vunpack.c.h.b16 %v5217
    %v5615 = vunpack.c.l.b16 %v5218
    %v5616 = vunpack.c.h.b16 %v5218
    %v5617 = vunpack.c.l.b16 %v5219
    %v5618 = vunpack.c.h.b16 %v5219
    %v5619 = vunpack.c.l.b16 %v5220
    %v5620 = vunpack.c.h.b16 %v5220
    %v5621 = vunpack.c.l.b16 %v5221
    %v5622 = vunpack.c.h.b16 %v5221
    %v5623 = vunpack.c.l.b16 %v5222
    %v5624 = vunpack.c.h.b16 %v5222
    %v5625 = vunpack.c.l.b16 %v5223
    %v5626 = vunpack.c.h.b16 %v5223
    %v5627 = vunpack.c.l.b16 %v5224
    %v5628 = vunpack.c.h.b16 %v5224
    %v5629 = vunpack.c.l.b16 %v5225
    %v5630 = vunpack.c.h.b16 %v5225
    %v5631 = vunpack.c.l.b16 %v5226
    %v5632 = vunpack.c.h.b16 %v5226
    %v5633 = vunpack.c.l.b16 %v5227
    %v5634 = vunpack.c.h.b16 %v5227
    %v5635 = vpack.c.b16 %v5383, %v5379
    %v5636 = vpack.c.b16 %v5384, %v5380
    %v5637 = vpack.c.b16 %v5385, %v5381
    %v5638 = vpack.c.b16 %v5386, %v5382
    %v5639 = vpack.c.b16 %v5391, %v5387
    %v5640 = vpack.c.b16 %v5392, %v5388
    %v5641 = vpack.c.b16 %v5393, %v5389
    %v5642 = vpack.c.b16 %v5394, %v5390
    %v5643 = vpack.c.b16 %v5399, %v5395
    %v5644 = vpack.c.b16 %v5400, %v5396
    %v5645 = vpack.c.b16 %v5401, %v5397
    %v5646 = vpack.c.b16 %v5402, %v5398
    %v5647 = vpack.c.b16 %v5407, %v5403
    %v5648 = vpack.c.b16 %v5408, %v5404
    %v5649 = vpack.c.b16 %v5409, %v5405
    %v5650 = vpack.c.b16 %v5410, %v5406
    %v5651 = vpack.c.b16 %v5415, %v5411
    %v5652 = vpack.c.b16 %v5416, %v5412
    %v5653 = vpack.c.b16 %v5417, %v5413
    %v5654 = vpack.c.b16 %v5418, %v5414
    %v5655 = vpack.c.b16 %v5423, %v5419
    %v5656 = vpack.c.b16 %v5424, %v5420
    %v5657 = vpack.c.b16 %v5425, %v5421
    %v5658 = vpack.c.b16 %v5426, %v5422
    %v5659 = vpack.c.b16 %v5431, %v5427
    %v5660 = vpack.c.b16 %v5432, %v5428
    %v5661 = vpack.c.b16 %v5433, %v5429
    %v5662 = vpack.c.b16 %v5434, %v5430
    %v5663 = vpack.c.b16 %v5439, %v5435
    %v5664 = vpack.c.b16 %v5440, %v5436
    %v5665 = vpack.c.b16 %v5441, %v5437
    %v5666 = vpack.c.b16 %v5442, %v5438
    %v5667 = vpack.c.b16 %v5447, %v5443
    %v5668 = vpack.c.b16 %v5448, %v5444
    %v5669 = vpack.c.b16 %v5449, %v5445
    %v5670 = vpack.c.b16 %v5450, %v5446
    %v5671 = vpack.c.b16 %v5455, %v5451
    %v5672 = vpack.c.b16 %v5456, %v5452
    %v5673 = vpack.c.b16 %v5457, %v5453
    %v5674 = vpack.c.b16 %v5458, %v5454
    %v5675 = vpack.c.b16 %v5463, %v5459
    %v5676 = vpack.c.b16 %v5464, %v5460
    %v5677 = vpack.c.b16 %v5465, %v5461
    %v5678 = vpack.c.b16 %v5466, %v5462
    %v5679 = vpack.c.b16 %v5471, %v5467
    %v5680 = vpack.c.b16 %v5472, %v5468
    %v5681 = vpack.c.b16 %v5473, %v5469
    %v5682 = vpack.c.b16 %v5474, %v5470
    %v5683 = vpack.c.b16 %v5479, %v5475
    %v5684 = vpack.c.b16 %v5480, %v5476
    %v5685 = vpack.c.b16 %v5481, %v5477
    %v5686 = vpack.c.b16 %v5482, %v5478
    %v5687 = vpack.c.b16 %v5487, %v5483
    %v5688 = vpack.c.b16 %v5488, %v5484
    %v5689 = vpack.c.b16 %v5489, %v5485
    %v5690 = vpack.c.b16 %v5490, %v5486
    %v5691 = vpack.c.b16 %v5495, %v5491
    %v5692 = vpack.c.b16 %v5496, %v5492
    %v5693 = vpack.c.b16 %v5497, %v5493
    %v5694 = vpack.c.b16 %v5498, %v5494
    %v5695 = vpack.c.b16 %v5503, %v5499
    %v5696 = vpack.c.b16 %v5504, %v5500
    %v5697 = vpack.c.b16 %v5505, %v5501
    %v5698 = vpack.c.b16 %v5506, %v5502
    %v5699 = vpack.c.b16 %v5511, %v5507
    %v5700 = vpack.c.b16 %v5512, %v5508
    %v5701 = vpack.c.b16 %v5513, %v5509
    %v5702 = vpack.c.b16 %v5514, %v5510
    %v5703 = vpack.c.b16 %v5519, %v5515
    %v5704 = vpack.c.b16 %v5520, %v5516
    %v5705 = vpack.c.b16 %v5521, %v5517
    %v5706 = vpack.c.b16 %v5522, %v5518
    %v5707 = vpack.c.b16 %v5527, %v5523
    %v5708 = vpack.c.b16 %v5528, %v5524
    %v5709 = vpack.c.b16 %v5529, %v5525
    %v5710 = vpack.c.b16 %v5530, %v5526
    %v5711 = vpack.c.b16 %v5535, %v5531
    %v5712 = vpack.c.b16 %v5536, %v5532
    %v5713 = vpack.c.b16 %v5537, %v5533
    %v5714 = vpack.c.b16 %v5538, %v5534
    %v5715 = vpack.c.b16 %v5543, %v5539
    %v5716 = vpack.c.b16 %v5544, %v5540
    %v5717 = vpack.c.b16 %v5545, %v5541
    %v5718 = vpack.c.b16 %v5546, %v5542
    %v5719 = vpack.c.b16 %v5551, %v5547
    %v5720 = vpack.c.b16 %v5552, %v5548
    %v5721 = vpack.c.b16 %v5553, %v5549
    %v5722 = vpack.c.b16 %v5554, %v5550
    %v5723 = vpack.c.b16 %v5559, %v5555
    %v5724 = vpack.c.b16 %v5560, %v5556
    %v5725 = vpack.c.b16 %v5561, %v5557
    %v5726 = vpack.c.b16 %v5562, %v5558
    %v5727 = vpack.c.b16 %v5567, %v5563
    %v5728 = vpack.c.b16 %v5568, %v5564
    %v5729 = vpack.c.b16 %v5569, %v5565
    %v5730 = vpack.c.b16 %v5570, %v5566
    %v5731 = vpack.c.b16 %v5575, %v5571
    %v5732 = vpack.c.b16 %v5576, %v5572
    %v5733 = vpack.c.b16 %v5577, %v5573
    %v5734 = vpack.c.b16 %v5578, %v5574
    %v5735 = vpack.c.b16 %v5583, %v5579
    %v5736 = vpack.c.b16 %v5584, %v5580
    %v5737 = vpack.c.b16 %v5585, %v5581
    %v5738 = vpack.c.b16 %v5586, %v5582
    %v5739 = vpack.c.b16 %v5591, %v5587
    %v5740 = vpack.c.b16 %v5592, %v5588
    %v5741 = vpack.c.b16 %v5593, %v5589
    %v5742 = vpack.c.b16 %v5594, %v5590
    %v5743 = vpack.c.b16 %v5599, %v5595
    %v5744 = vpack.c.b16 %v5600, %v5596
    %v5745 = vpack.c.b16 %v5601, %v5597
    %v5746 = vpack.c.b16 %v5602, %v5598
    %v5747 = vpack.c.b16 %v5607, %v5603
    %v5748 = vpack.c.b16 %v5608, %v5604
    %v5749 = vpack.c.b16 %v5609, %v5605
    %v5750 = vpack.c.b16 %v5610, %v5606
    %v5751 = vpack.c.b16 %v5615, %v5611
    %v5752 = vpack.c.b16 %v5616, %v5612
    %v5753 = vpack.c.b16 %v5617, %v5613
    %v5754 = vpack.c.b16 %v5618, %v5614
    %v5755 = vpack.c.b16 %v5623, %v5619
    %v5756 = vpack.c.b16 %v5624, %v5620
    %v5757 = vpack.c.b16 %v5625, %v5621
    %v5758 = vpack.c.b16 %v5626, %v5622
    %v5759 = vpack.c.b16 %v5631, %v5627
    %v5760 = vpack.c.b16 %v5632, %v5628
    %v5761 = vpack.c.b16 %v5633, %v5629
    %v5762 = vpack.c.b16 %v5634, %v5630
    %5891 = vmatprep.subr.bf16.mxu0 %v5636
    %5892 = vmatpush1.bf16.msra.mxu0 %v5635
    %5893 = vmatprep.subr.bf16.mxu0 %v5640
    %5894 = vmatpush1.bf16.msra.mxu0 %v5639
    %5895 = vmatprep.subr.bf16.mxu0 %v5644
    %5896 = vmatpush1.bf16.msra.mxu0 %v5643
    %5897 = vmatprep.subr.bf16.mxu0 %v5648
    %5898 = vmatpush1.bf16.msra.mxu0 %v5647
    %5899 = vmatprep.subr.bf16.mxu0 %v5652
    %5900 = vmatpush1.bf16.msra.mxu0 %v5651
    %5901 = vmatprep.subr.bf16.mxu0 %v5656
    %5902 = vmatpush1.bf16.msra.mxu0 %v5655
    %5903 = vmatprep.subr.bf16.mxu0 %v5660
    %5904 = vmatpush1.bf16.msra.mxu0 %v5659
    %5905 = vmatprep.subr.bf16.mxu0 %v5664
    %5906 = vmatpush1.bf16.msra.mxu0 %v5663
    %5907 = vmatprep.subr.bf16.mxu0 %v5668
    %5908 = vmatpush1.bf16.msra.mxu0 %v5667
    %5909 = vmatprep.subr.bf16.mxu0 %v5672
    %5910 = vmatpush1.bf16.msra.mxu0 %v5671
    %5911 = vmatprep.subr.bf16.mxu0 %v5676
    %5912 = vmatpush1.bf16.msra.mxu0 %v5675
    %5913 = vmatprep.subr.bf16.mxu0 %v5680
    %5914 = vmatpush1.bf16.msra.mxu0 %v5679
    %5915 = vmatprep.subr.bf16.mxu0 %v5684
    %5916 = vmatpush1.bf16.msra.mxu0 %v5683
    %5917 = vmatprep.subr.bf16.mxu0 %v5688
    %5918 = vmatpush1.bf16.msra.mxu0 %v5687
    %5919 = vmatprep.subr.bf16.mxu0 %v5692
    %5920 = vmatpush1.bf16.msra.mxu0 %v5691
    %5921 = vmatprep.subr.bf16.mxu0 %v5696
    %5922 = vmatpush1.bf16.msra.mxu0 %v5695
    %5923 = vmatprep.mubr.bf16.mxu0 %v5096
    %5924 = vmatmul.mubr.bf16.gmra.mrb[0].mxu0 %v5095
    %v5925 = vpop.f32.mrb[0].mxu0
    %v5926 = vadd.f32 %v5234, %v5925
    %v5927 = vpop.f32.mrb[0].mxu0
    %v5928 = vadd.f32 %v5238, %v5927
    %v5929 = vpop.f32.mrb[0].mxu0
    %v5930 = vpop.f32.mrb[0].mxu0
    %5931 = vdwg.mxu0
    %5932 = vmatprep.subr.bf16.mxu0 %v5700
    %5933 = vmatpush1.bf16.msra.mxu0 %v5699
    %5934 = vmatprep.subr.bf16.mxu0 %v5704
    %5935 = vmatpush1.bf16.msra.mxu0 %v5703
    %5936 = vmatprep.subr.bf16.mxu0 %v5708
    %5937 = vmatpush1.bf16.msra.mxu0 %v5707
    %5938 = vmatprep.subr.bf16.mxu0 %v5712
    %5939 = vmatpush1.bf16.msra.mxu0 %v5711
    %5940 = vmatprep.subr.bf16.mxu0 %v5716
    %5941 = vmatpush1.bf16.msra.mxu0 %v5715
    %5942 = vmatprep.subr.bf16.mxu0 %v5720
    %5943 = vmatpush1.bf16.msra.mxu0 %v5719
    %5944 = vmatprep.subr.bf16.mxu0 %v5724
    %5945 = vmatpush1.bf16.msra.mxu0 %v5723
    %5946 = vmatprep.subr.bf16.mxu0 %v5728
    %5947 = vmatpush1.bf16.msra.mxu0 %v5727
    %5948 = vmatprep.subr.bf16.mxu0 %v5732
    %5949 = vmatpush1.bf16.msra.mxu0 %v5731
    %5950 = vmatprep.subr.bf16.mxu0 %v5736
    %5951 = vmatpush1.bf16.msra.mxu0 %v5735
    %5952 = vmatprep.subr.bf16.mxu0 %v5740
    %5953 = vmatpush1.bf16.msra.mxu0 %v5739
    %5954 = vmatprep.subr.bf16.mxu0 %v5744
    %5955 = vmatpush1.bf16.msra.mxu0 %v5743
    %5956 = vmatprep.subr.bf16.mxu0 %v5748
    %5957 = vmatpush1.bf16.msra.mxu0 %v5747
    %5958 = vmatprep.subr.bf16.mxu0 %v5752
    %5959 = vmatpush1.bf16.msra.mxu0 %v5751
    %5960 = vmatprep.subr.bf16.mxu0 %v5756
    %5961 = vmatpush1.bf16.msra.mxu0 %v5755
    %5962 = vmatprep.subr.bf16.mxu0 %v5760
    %5963 = vmatpush1.bf16.msra.mxu0 %v5759
    %5964 = vmatprep.mubr.bf16.mxu0 %v5098
    %5965 = vmatmul.mubr.bf16.gmra.mrb[0].mxu0 %v5097
    %v5966 = vpop.f32.mrb[0].mxu0
    %v5967 = vadd.f32 %v5926, %v5966
    %v5968 = vpop.f32.mrb[0].mxu0
    %v5969 = vadd.f32 %v5928, %v5968
    %v5970 = vpop.f32.mrb[0].mxu0
    %v5971 = vpop.f32.mrb[0].mxu0
    %5972 = vdwg.mxu0
    %5973 = vmatprep.subr.bf16.mxu0 %v5638
    %5974 = vmatpush1.bf16.msra.mxu0 %v5637
    %5975 = vmatprep.subr.bf16.mxu0 %v5642
    %5976 = vmatpush1.bf16.msra.mxu0 %v5641
    %5977 = vmatprep.subr.bf16.mxu0 %v5646
    %5978 = vmatpush1.bf16.msra.mxu0 %v5645
    %5979 = vmatprep.subr.bf16.mxu0 %v5650
    %5980 = vmatpush1.bf16.msra.mxu0 %v5649
    %5981 = vmatprep.subr.bf16.mxu0 %v5654
    %5982 = vmatpush1.bf16.msra.mxu0 %v5653
    %5983 = vmatprep.subr.bf16.mxu0 %v5658
    %5984 = vmatpush1.bf16.msra.mxu0 %v5657
    %5985 = vmatprep.subr.bf16.mxu0 %v5662
    %5986 = vmatpush1.bf16.msra.mxu0 %v5661
    %5987 = vmatprep.subr.bf16.mxu0 %v5666
    %5988 = vmatpush1.bf16.msra.mxu0 %v5665
    %5989 = vmatprep.subr.bf16.mxu0 %v5670
    %5990 = vmatpush1.bf16.msra.mxu0 %v5669
    %5991 = vmatprep.subr.bf16.mxu0 %v5674
    %5992 = vmatpush1.bf16.msra.mxu0 %v5673
    %5993 = vmatprep.subr.bf16.mxu0 %v5678
    %5994 = vmatpush1.bf16.msra.mxu0 %v5677
    %5995 = vmatprep.subr.bf16.mxu0 %v5682
    %5996 = vmatpush1.bf16.msra.mxu0 %v5681
    %5997 = vmatprep.subr.bf16.mxu0 %v5686
    %5998 = vmatpush1.bf16.msra.mxu0 %v5685
    %5999 = vmatprep.subr.bf16.mxu0 %v5690
    %6000 = vmatpush1.bf16.msra.mxu0 %v5689
    %6001 = vmatprep.subr.bf16.mxu0 %v5694
    %6002 = vmatpush1.bf16.msra.mxu0 %v5693
    %6003 = vmatprep.subr.bf16.mxu0 %v5698
    %6004 = vmatpush1.bf16.msra.mxu0 %v5697
    %6005 = vmatprep.mubr.bf16.mxu0 %v5096
    %6006 = vmatmul.mubr.bf16.gmra.mrb[0].mxu0 %v5095
    %v6007 = vpop.f32.mrb[0].mxu0
    %v6008 = vadd.f32 %v5242, %v6007
    %v6009 = vpop.f32.mrb[0].mxu0
    %v6010 = vadd.f32 %v5246, %v6009
    %v6011 = vpop.f32.mrb[0].mxu0
    %v6012 = vpop.f32.mrb[0].mxu0
    %6013 = vdwg.mxu0
    %6014 = vmatprep.subr.bf16.mxu0 %v5702
    %6015 = vmatpush1.bf16.msra.mxu0 %v5701
    %6016 = vmatprep.subr.bf16.mxu0 %v5706
    %6017 = vmatpush1.bf16.msra.mxu0 %v5705
    %6018 = vmatprep.subr.bf16.mxu0 %v5710
    %6019 = vmatpush1.bf16.msra.mxu0 %v5709
    %6020 = vmatprep.subr.bf16.mxu0 %v5714
    %6021 = vmatpush1.bf16.msra.mxu0 %v5713
    %6022 = vmatprep.subr.bf16.mxu0 %v5718
    %6023 = vmatpush1.bf16.msra.mxu0 %v5717
    %6024 = vmatprep.subr.bf16.mxu0 %v5722
    %6025 = vmatpush1.bf16.msra.mxu0 %v5721
    %6026 = vmatprep.subr.bf16.mxu0 %v5726
    %6027 = vmatpush1.bf16.msra.mxu0 %v5725
    %6028 = vmatprep.subr.bf16.mxu0 %v5730
    %6029 = vmatpush1.bf16.msra.mxu0 %v5729
    %6030 = vmatprep.subr.bf16.mxu0 %v5734
    %6031 = vmatpush1.bf16.msra.mxu0 %v5733
    %6032 = vmatprep.subr.bf16.mxu0 %v5738
    %6033 = vmatpush1.bf16.msra.mxu0 %v5737
    %6034 = vmatprep.subr.bf16.mxu0 %v5742
    %6035 = vmatpush1.bf16.msra.mxu0 %v5741
    %6036 = vmatprep.subr.bf16.mxu0 %v5746
    %6037 = vmatpush1.bf16.msra.mxu0 %v5745
    %6038 = vmatprep.subr.bf16.mxu0 %v5750
    %6039 = vmatpush1.bf16.msra.mxu0 %v5749
    %6040 = vmatprep.subr.bf16.mxu0 %v5754
    %6041 = vmatpush1.bf16.msra.mxu0 %v5753
    %6042 = vmatprep.subr.bf16.mxu0 %v5758
    %6043 = vmatpush1.bf16.msra.mxu0 %v5757
    %6044 = vmatprep.subr.bf16.mxu0 %v5762
    %6045 = vmatpush1.bf16.msra.mxu0 %v5761
    %6046 = vmatprep.mubr.bf16.mxu0 %v5098
    %6047 = vmatmul.mubr.bf16.gmra.mrb[0].mxu0 %v5097
    %v6048 = vpop.f32.mrb[0].mxu0
    %v6049 = vadd.f32 %v6008, %v6048
    %v6050 = vpop.f32.mrb[0].mxu0
    %v6051 = vadd.f32 %v6010, %v6050
    %v6052 = vpop.f32.mrb[0].mxu0
    %v6053 = vpop.f32.mrb[0].mxu0
    %6054 = vdwg.mxu0
    %v6055 = vmax.f32 %v5967, 0.0
    %v6056 = vmax.f32 %v5969, 0.0
    %v6057 = vmax.f32 %v6049, 0.0
    %v6058 = vmax.f32 %v6051, 0.0
    %v6059 = vpack.c.bf16 %v6055, %v6055
    %v6060 = vpack.c.bf16 %v6056, %v6056
    %v6061 = vpack.c.bf16 %v6057, %v6057
    %v6062 = vpack.c.bf16 %v6058, %v6058
    %v6063 = vld [vmem:[%s7] sm:$0xf]
    %v6064 = vld [vmem:[%s7 + $0x4] sm:$0xf]
    %v6065 = vld [vmem:[%s7 + $0x8] sm:$0xf]
    %v6066 = vld [vmem:[%s7 + $0xc] sm:$0xf]
    %v6067 = vld [vmem:[%s7 + $0x10] sm:$0xf]
    %v6068 = vld [vmem:[%s7 + $0x14] sm:$0xf]
    %v6069 = vld [vmem:[%s7 + $0x18] sm:$0xf]
    %v6070 = vld [vmem:[%s7 + $0x1c] sm:$0xf]
    %v6071 = vld [vmem:[%s7 + $0x20] sm:$0xf]
    %v6072 = vld [vmem:[%s7 + $0x24] sm:$0xf]
    %v6073 = vld [vmem:[%s7 + $0x28] sm:$0xf]
    %v6074 = vld [vmem:[%s7 + $0x2c] sm:$0xf]
    %v6075 = vld [vmem:[%s7 + $0x30] sm:$0xf]
    %v6076 = vld [vmem:[%s7 + $0x34] sm:$0xf]
    %v6077 = vld [vmem:[%s7 + $0x38] sm:$0xf]
    %v6078 = vld [vmem:[%s7 + $0x3c] sm:$0xf]
    %v6079 = vld [vmem:[%s7 + $0x40] sm:$0xf]
    %v6080 = vld [vmem:[%s7 + $0x44] sm:$0xf]
    %v6081 = vld [vmem:[%s7 + $0x48] sm:$0xf]
    %v6082 = vld [vmem:[%s7 + $0x4c] sm:$0xf]
    %v6083 = vld [vmem:[%s7 + $0x50] sm:$0xf]
    %v6084 = vld [vmem:[%s7 + $0x54] sm:$0xf]
    %v6085 = vld [vmem:[%s7 + $0x58] sm:$0xf]
    %v6086 = vld [vmem:[%s7 + $0x5c] sm:$0xf]
    %v6087 = vld [vmem:[%s7 + $0x60] sm:$0xf]
    %v6088 = vld [vmem:[%s7 + $0x64] sm:$0xf]
    %v6089 = vld [vmem:[%s7 + $0x68] sm:$0xf]
    %v6090 = vld [vmem:[%s7 + $0x6c] sm:$0xf]
    %v6091 = vld [vmem:[%s7 + $0x70] sm:$0xf]
    %v6092 = vld [vmem:[%s7 + $0x74] sm:$0xf]
    %v6093 = vld [vmem:[%s7 + $0x78] sm:$0xf]
    %v6094 = vld [vmem:[%s7 + $0x7c] sm:$0xf]
    %v6095 = vld [vmem:[%s7 + $0x80] sm:$0xf]
    %v6096 = vld [vmem:[%s7 + $0x84] sm:$0xf]
    %v6097 = vld [vmem:[%s7 + $0x88] sm:$0xf]
    %v6098 = vld [vmem:[%s7 + $0x8c] sm:$0xf]
    %v6099 = vld [vmem:[%s7 + $0x90] sm:$0xf]
    %v6100 = vld [vmem:[%s7 + $0x94] sm:$0xf]
    %v6101 = vld [vmem:[%s7 + $0x98] sm:$0xf]
    %v6102 = vld [vmem:[%s7 + $0x9c] sm:$0xf]
    %v6103 = vld [vmem:[%s7 + $0xa0] sm:$0xf]
    %v6104 = vld [vmem:[%s7 + $0xa4] sm:$0xf]
    %v6105 = vld [vmem:[%s7 + $0xa8] sm:$0xf]
    %v6106 = vld [vmem:[%s7 + $0xac] sm:$0xf]
    %v6107 = vld [vmem:[%s7 + $0xb0] sm:$0xf]
    %v6108 = vld [vmem:[%s7 + $0xb4] sm:$0xf]
    %v6109 = vld [vmem:[%s7 + $0xb8] sm:$0xf]
    %v6110 = vld [vmem:[%s7 + $0xbc] sm:$0xf]
    %v6111 = vld [vmem:[%s7 + $0xc0] sm:$0xf]
    %v6112 = vld [vmem:[%s7 + $0xc4] sm:$0xf]
    %v6113 = vld [vmem:[%s7 + $0xc8] sm:$0xf]
    %v6114 = vld [vmem:[%s7 + $0xcc] sm:$0xf]
    %v6115 = vld [vmem:[%s7 + $0xd0] sm:$0xf]
    %v6116 = vld [vmem:[%s7 + $0xd4] sm:$0xf]
    %v6117 = vld [vmem:[%s7 + $0xd8] sm:$0xf]
    %v6118 = vld [vmem:[%s7 + $0xdc] sm:$0xf]
    %v6119 = vld [vmem:[%s7 + $0xe0] sm:$0xf]
    %v6120 = vld [vmem:[%s7 + $0xe4] sm:$0xf]
    %v6121 = vld [vmem:[%s7 + $0xe8] sm:$0xf]
    %v6122 = vld [vmem:[%s7 + $0xec] sm:$0xf]
    %v6123 = vld [vmem:[%s7 + $0xf0] sm:$0xf]
    %v6124 = vld [vmem:[%s7 + $0xf4] sm:$0xf]
    %v6125 = vld [vmem:[%s7 + $0xf8] sm:$0xf]
    %v6126 = vld [vmem:[%s7 + $0xfc] sm:$0xf]
    %v6127 = vld [vmem:[#allocation13] sm:$0x1]
    %v6129 = vlaneseq
    %v6130 = vshrl.u32 %v6129, 7
    %v6131 = vsub.s32 0, %v6130
    %v6132 = vrot.slane %v6127, %v6131
    %v6198 = vunpack.c.l.b16 %v6063
    %v6199 = vunpack.c.l.b16 %v6064
    %v6200 = vunpack.c.l.b16 %v6065
    %v6201 = vunpack.c.l.b16 %v6066
    %v6202 = vunpack.c.l.b16 %v6067
    %v6203 = vunpack.c.l.b16 %v6068
    %v6204 = vunpack.c.l.b16 %v6069
    %v6205 = vunpack.c.l.b16 %v6070
    %v6206 = vunpack.c.l.b16 %v6071
    %v6207 = vunpack.c.l.b16 %v6072
    %v6208 = vunpack.c.l.b16 %v6073
    %v6209 = vunpack.c.l.b16 %v6074
    %v6210 = vunpack.c.l.b16 %v6075
    %v6211 = vunpack.c.l.b16 %v6076
    %v6212 = vunpack.c.l.b16 %v6077
    %v6213 = vunpack.c.l.b16 %v6078
    %v6214 = vunpack.c.l.b16 %v6079
    %v6215 = vunpack.c.l.b16 %v6080
    %v6216 = vunpack.c.l.b16 %v6081
    %v6217 = vunpack.c.l.b16 %v6082
    %v6218 = vunpack.c.l.b16 %v6083
    %v6219 = vunpack.c.l.b16 %v6084
    %v6220 = vunpack.c.l.b16 %v6085
    %v6221 = vunpack.c.l.b16 %v6086
    %v6222 = vunpack.c.l.b16 %v6087
    %v6223 = vunpack.c.l.b16 %v6088
    %v6224 = vunpack.c.l.b16 %v6089
    %v6225 = vunpack.c.l.b16 %v6090
    %v6226 = vunpack.c.l.b16 %v6091
    %v6227 = vunpack.c.l.b16 %v6092
    %v6228 = vunpack.c.l.b16 %v6093
    %v6229 = vunpack.c.l.b16 %v6094
    %v6230 = vunpack.c.l.b16 %v6095
    %v6231 = vunpack.c.l.b16 %v6096
    %v6232 = vunpack.c.l.b16 %v6097
    %v6233 = vunpack.c.l.b16 %v6098
    %v6234 = vunpack.c.l.b16 %v6099
    %v6235 = vunpack.c.l.b16 %v6100
    %v6236 = vunpack.c.l.b16 %v6101
    %v6237 = vunpack.c.l.b16 %v6102
    %v6238 = vunpack.c.l.b16 %v6103
    %v6239 = vunpack.c.l.b16 %v6104
    %v6240 = vunpack.c.l.b16 %v6105
    %v6241 = vunpack.c.l.b16 %v6106
    %v6242 = vunpack.c.l.b16 %v6107
    %v6243 = vunpack.c.l.b16 %v6108
    %v6244 = vunpack.c.l.b16 %v6109
    %v6245 = vunpack.c.l.b16 %v6110
    %v6246 = vunpack.c.l.b16 %v6111
    %v6247 = vunpack.c.l.b16 %v6112
    %v6248 = vunpack.c.l.b16 %v6113
    %v6249 = vunpack.c.l.b16 %v6114
    %v6250 = vunpack.c.l.b16 %v6115
    %v6251 = vunpack.c.l.b16 %v6116
    %v6252 = vunpack.c.l.b16 %v6117
    %v6253 = vunpack.c.l.b16 %v6118
    %v6254 = vunpack.c.l.b16 %v6119
    %v6255 = vunpack.c.l.b16 %v6120
    %v6256 = vunpack.c.l.b16 %v6121
    %v6257 = vunpack.c.l.b16 %v6122
    %v6258 = vunpack.c.l.b16 %v6123
    %v6259 = vunpack.c.l.b16 %v6124
    %v6260 = vunpack.c.l.b16 %v6125
    %v6261 = vunpack.c.l.b16 %v6126
    %v6262 = vpack.c.b16 %v6199, %v6198
    %v6263 = vpack.c.b16 %v6201, %v6200
    %v6264 = vpack.c.b16 %v6203, %v6202
    %v6265 = vpack.c.b16 %v6205, %v6204
    %v6266 = vpack.c.b16 %v6207, %v6206
    %v6267 = vpack.c.b16 %v6209, %v6208
    %v6268 = vpack.c.b16 %v6211, %v6210
    %v6269 = vpack.c.b16 %v6213, %v6212
    %v6270 = vpack.c.b16 %v6215, %v6214
    %v6271 = vpack.c.b16 %v6217, %v6216
    %v6272 = vpack.c.b16 %v6219, %v6218
    %v6273 = vpack.c.b16 %v6221, %v6220
    %v6274 = vpack.c.b16 %v6223, %v6222
    %v6275 = vpack.c.b16 %v6225, %v6224
    %v6276 = vpack.c.b16 %v6227, %v6226
    %v6277 = vpack.c.b16 %v6229, %v6228
    %v6278 = vpack.c.b16 %v6231, %v6230
    %v6279 = vpack.c.b16 %v6233, %v6232
    %v6280 = vpack.c.b16 %v6235, %v6234
    %v6281 = vpack.c.b16 %v6237, %v6236
    %v6282 = vpack.c.b16 %v6239, %v6238
    %v6283 = vpack.c.b16 %v6241, %v6240
    %v6284 = vpack.c.b16 %v6243, %v6242
    %v6285 = vpack.c.b16 %v6245, %v6244
    %v6286 = vpack.c.b16 %v6247, %v6246
    %v6287 = vpack.c.b16 %v6249, %v6248
    %v6288 = vpack.c.b16 %v6251, %v6250
    %v6289 = vpack.c.b16 %v6253, %v6252
    %v6290 = vpack.c.b16 %v6255, %v6254
    %v6291 = vpack.c.b16 %v6257, %v6256
    %v6292 = vpack.c.b16 %v6259, %v6258
    %v6293 = vpack.c.b16 %v6261, %v6260
    %6326 = vmatprep.subr.bf16.mxu0 0
    %6327 = vmatpush1.bf16.msra.mxu0 %v6262
    %6328 = vmatprep.subr.bf16.mxu0 0
    %6329 = vmatpush1.bf16.msra.mxu0 %v6263
    %6330 = vmatprep.subr.bf16.mxu0 0
    %6331 = vmatpush1.bf16.msra.mxu0 %v6264
    %6332 = vmatprep.subr.bf16.mxu0 0
    %6333 = vmatpush1.bf16.msra.mxu0 %v6265
    %6334 = vmatprep.subr.bf16.mxu0 0
    %6335 = vmatpush1.bf16.msra.mxu0 %v6266
    %6336 = vmatprep.subr.bf16.mxu0 0
    %6337 = vmatpush1.bf16.msra.mxu0 %v6267
    %6338 = vmatprep.subr.bf16.mxu0 0
    %6339 = vmatpush1.bf16.msra.mxu0 %v6268
    %6340 = vmatprep.subr.bf16.mxu0 0
    %6341 = vmatpush1.bf16.msra.mxu0 %v6269
    %6342 = vmatprep.subr.bf16.mxu0 0
    %6343 = vmatpush1.bf16.msra.mxu0 %v6270
    %6344 = vmatprep.subr.bf16.mxu0 0
    %6345 = vmatpush1.bf16.msra.mxu0 %v6271
    %6346 = vmatprep.subr.bf16.mxu0 0
    %6347 = vmatpush1.bf16.msra.mxu0 %v6272
    %6348 = vmatprep.subr.bf16.mxu0 0
    %6349 = vmatpush1.bf16.msra.mxu0 %v6273
    %6350 = vmatprep.subr.bf16.mxu0 0
    %6351 = vmatpush1.bf16.msra.mxu0 %v6274
    %6352 = vmatprep.subr.bf16.mxu0 0
    %6353 = vmatpush1.bf16.msra.mxu0 %v6275
    %6354 = vmatprep.subr.bf16.mxu0 0
    %6355 = vmatpush1.bf16.msra.mxu0 %v6276
    %6356 = vmatprep.subr.bf16.mxu0 0
    %6357 = vmatpush1.bf16.msra.mxu0 %v6277
    %6358 = vmatprep.mubr.bf16.mxu0 %v6060
    %6359 = vmatmul.mubr.bf16.gmra.mrb[0].mxu0 %v6059
    %v6360 = vpop.f32.mrb[0].mxu0
    %v6361 = vadd.f32 %v6132, %v6360
    %v6362 = vpop.f32.mrb[0].mxu0
    %v6363 = vpop.f32.mrb[0].mxu0
    %v6364 = vpop.f32.mrb[0].mxu0
    %6365 = vdwg.mxu0
    %6366 = vmatprep.subr.bf16.mxu0 0
    %6367 = vmatpush1.bf16.msra.mxu0 %v6278
    %6368 = vmatprep.subr.bf16.mxu0 0
    %6369 = vmatpush1.bf16.msra.mxu0 %v6279
    %6370 = vmatprep.subr.bf16.mxu0 0
    %6371 = vmatpush1.bf16.msra.mxu0 %v6280
    %6372 = vmatprep.subr.bf16.mxu0 0
    %6373 = vmatpush1.bf16.msra.mxu0 %v6281
    %6374 = vmatprep.subr.bf16.mxu0 0
    %6375 = vmatpush1.bf16.msra.mxu0 %v6282
    %6376 = vmatprep.subr.bf16.mxu0 0
    %6377 = vmatpush1.bf16.msra.mxu0 %v6283
    %6378 = vmatprep.subr.bf16.mxu0 0
    %6379 = vmatpush1.bf16.msra.mxu0 %v6284
    %6380 = vmatprep.subr.bf16.mxu0 0
    %6381 = vmatpush1.bf16.msra.mxu0 %v6285
    %6382 = vmatprep.subr.bf16.mxu0 0
    %6383 = vmatpush1.bf16.msra.mxu0 %v6286
    %6384 = vmatprep.subr.bf16.mxu0 0
    %6385 = vmatpush1.bf16.msra.mxu0 %v6287
    %6386 = vmatprep.subr.bf16.mxu0 0
    %6387 = vmatpush1.bf16.msra.mxu0 %v6288
    %6388 = vmatprep.subr.bf16.mxu0 0
    %6389 = vmatpush1.bf16.msra.mxu0 %v6289
    %6390 = vmatprep.subr.bf16.mxu0 0
    %6391 = vmatpush1.bf16.msra.mxu0 %v6290
    %6392 = vmatprep.subr.bf16.mxu0 0
    %6393 = vmatpush1.bf16.msra.mxu0 %v6291
    %6394 = vmatprep.subr.bf16.mxu0 0
    %6395 = vmatpush1.bf16.msra.mxu0 %v6292
    %6396 = vmatprep.subr.bf16.mxu0 0
    %6397 = vmatpush1.bf16.msra.mxu0 %v6293
    %6398 = vmatprep.mubr.bf16.mxu0 %v6062
    %6399 = vmatmul.mubr.bf16.gmra.mrb[0].mxu0 %v6061
    %v6400 = vpop.f32.mrb[0].mxu0
    %v6401 = vadd.f32 %v6361, %v6400
    %v6402 = vpop.f32.mrb[0].mxu0
    %v6403 = vpop.f32.mrb[0].mxu0
    %v6404 = vpop.f32.mrb[0].mxu0
    %6405 = vdwg.mxu0
    %s6406 = scalar_lea.vmem [#allocation10], 3072
    %v6407 = vld [vmem:[%s6406] sm:$0xff]
    %v6408 = vld [vmem:[%s6406 + $0x8] sm:$0xff]
    %v6409 = vld [vmem:[%s6406 + $0x10] sm:$0xff]
    %v6410 = vld [vmem:[%s6406 + $0x18] sm:$0xff]
    %v6411 = vld [vmem:[%s6406 + $0x20] sm:$0xff]
    %v6412 = vld [vmem:[%s6406 + $0x28] sm:$0xff]
    %v6413 = vld [vmem:[%s6406 + $0x30] sm:$0xff]
    %v6414 = vld [vmem:[%s6406 + $0x38] sm:$0xff]
    %v6415 = vld [vmem:[%s6406 + $0x40] sm:$0xff]
    %v6416 = vld [vmem:[%s6406 + $0x48] sm:$0xff]
    %v6417 = vld [vmem:[%s6406 + $0x50] sm:$0xff]
    %v6418 = vld [vmem:[%s6406 + $0x58] sm:$0xff]
    %v6419 = vld [vmem:[%s6406 + $0x60] sm:$0xff]
    %v6420 = vld [vmem:[%s6406 + $0x68] sm:$0xff]
    %v6421 = vld [vmem:[%s6406 + $0x70] sm:$0xff]
    %v6422 = vld [vmem:[%s6406 + $0x78] sm:$0xff]
    %v6423 = vld [vmem:[%s6406 + $0x80] sm:$0xff]
    %v6424 = vld [vmem:[%s6406 + $0x88] sm:$0xff]
    %v6425 = vld [vmem:[%s6406 + $0x90] sm:$0xff]
    %v6426 = vld [vmem:[%s6406 + $0x98] sm:$0xff]
    %v6427 = vld [vmem:[%s6406 + $0xa0] sm:$0xff]
    %v6428 = vld [vmem:[%s6406 + $0xa8] sm:$0xff]
    %v6429 = vld [vmem:[%s6406 + $0xb0] sm:$0xff]
    %v6430 = vld [vmem:[%s6406 + $0xb8] sm:$0xff]
    %v6431 = vld [vmem:[%s6406 + $0xc0] sm:$0xff]
    %v6432 = vld [vmem:[%s6406 + $0xc8] sm:$0xff]
    %v6433 = vld [vmem:[%s6406 + $0xd0] sm:$0xff]
    %v6434 = vld [vmem:[%s6406 + $0xd8] sm:$0xff]
    %v6435 = vld [vmem:[%s6406 + $0xe0] sm:$0xff]
    %v6436 = vld [vmem:[%s6406 + $0xe8] sm:$0xff]
    %v6437 = vld [vmem:[%s6406 + $0xf0] sm:$0xff]
    %v6438 = vld [vmem:[%s6406 + $0xf8] sm:$0xff]
    %v6439 = vld [vmem:[%s6406 + $0x100] sm:$0xff]
    %v6440 = vld [vmem:[%s6406 + $0x108] sm:$0xff]
    %v6441 = vld [vmem:[%s6406 + $0x110] sm:$0xff]
    %v6442 = vld [vmem:[%s6406 + $0x118] sm:$0xff]
    %v6443 = vld [vmem:[%s6406 + $0x120] sm:$0xff]
    %v6444 = vld [vmem:[%s6406 + $0x128] sm:$0xff]
    %v6445 = vld [vmem:[%s6406 + $0x130] sm:$0xff]
    %v6446 = vld [vmem:[%s6406 + $0x138] sm:$0xff]
    %v6447 = vld [vmem:[%s6406 + $0x140] sm:$0xff]
    %v6448 = vld [vmem:[%s6406 + $0x148] sm:$0xff]
    %v6449 = vld [vmem:[%s6406 + $0x150] sm:$0xff]
    %v6450 = vld [vmem:[%s6406 + $0x158] sm:$0xff]
    %v6451 = vld [vmem:[%s6406 + $0x160] sm:$0xff]
    %v6452 = vld [vmem:[%s6406 + $0x168] sm:$0xff]
    %v6453 = vld [vmem:[%s6406 + $0x170] sm:$0xff]
    %v6454 = vld [vmem:[%s6406 + $0x178] sm:$0xff]
    %v6455 = vld [vmem:[%s6406 + $0x180] sm:$0xff]
    %v6456 = vld [vmem:[%s6406 + $0x188] sm:$0xff]
    %v6457 = vld [vmem:[%s6406 + $0x190] sm:$0xff]
    %v6458 = vld [vmem:[%s6406 + $0x198] sm:$0xff]
    %v6459 = vld [vmem:[%s6406 + $0x1a0] sm:$0xff]
    %v6460 = vld [vmem:[%s6406 + $0x1a8] sm:$0xff]
    %v6461 = vld [vmem:[%s6406 + $0x1b0] sm:$0xff]
    %v6462 = vld [vmem:[%s6406 + $0x1b8] sm:$0xff]
    %v6463 = vld [vmem:[%s6406 + $0x1c0] sm:$0xff]
    %v6464 = vld [vmem:[%s6406 + $0x1c8] sm:$0xff]
    %v6465 = vld [vmem:[%s6406 + $0x1d0] sm:$0xff]
    %v6466 = vld [vmem:[%s6406 + $0x1d8] sm:$0xff]
    %v6467 = vld [vmem:[%s6406 + $0x1e0] sm:$0xff]
    %v6468 = vld [vmem:[%s6406 + $0x1e8] sm:$0xff]
    %v6469 = vld [vmem:[%s6406 + $0x1f0] sm:$0xff]
    %v6470 = vld [vmem:[%s6406 + $0x1f8] sm:$0xff]
    %v6471 = vld [vmem:[%s6406 + $0x200] sm:$0xff]
    %v6472 = vld [vmem:[%s6406 + $0x208] sm:$0xff]
    %v6473 = vld [vmem:[%s6406 + $0x210] sm:$0xff]
    %v6474 = vld [vmem:[%s6406 + $0x218] sm:$0xff]
    %v6475 = vld [vmem:[%s6406 + $0x220] sm:$0xff]
    %v6476 = vld [vmem:[%s6406 + $0x228] sm:$0xff]
    %v6477 = vld [vmem:[%s6406 + $0x230] sm:$0xff]
    %v6478 = vld [vmem:[%s6406 + $0x238] sm:$0xff]
    %v6479 = vld [vmem:[%s6406 + $0x240] sm:$0xff]
    %v6480 = vld [vmem:[%s6406 + $0x248] sm:$0xff]
    %v6481 = vld [vmem:[%s6406 + $0x250] sm:$0xff]
    %v6482 = vld [vmem:[%s6406 + $0x258] sm:$0xff]
    %v6483 = vld [vmem:[%s6406 + $0x260] sm:$0xff]
    %v6484 = vld [vmem:[%s6406 + $0x268] sm:$0xff]
    %v6485 = vld [vmem:[%s6406 + $0x270] sm:$0xff]
    %v6486 = vld [vmem:[%s6406 + $0x278] sm:$0xff]
    %v6487 = vld [vmem:[%s6406 + $0x280] sm:$0xff]
    %v6488 = vld [vmem:[%s6406 + $0x288] sm:$0xff]
    %v6489 = vld [vmem:[%s6406 + $0x290] sm:$0xff]
    %v6490 = vld [vmem:[%s6406 + $0x298] sm:$0xff]
    %v6491 = vld [vmem:[%s6406 + $0x2a0] sm:$0xff]
    %v6492 = vld [vmem:[%s6406 + $0x2a8] sm:$0xff]
    %v6493 = vld [vmem:[%s6406 + $0x2b0] sm:$0xff]
    %v6494 = vld [vmem:[%s6406 + $0x2b8] sm:$0xff]
    %v6495 = vld [vmem:[%s6406 + $0x2c0] sm:$0xff]
    %v6496 = vld [vmem:[%s6406 + $0x2c8] sm:$0xff]
    %v6497 = vld [vmem:[%s6406 + $0x2d0] sm:$0xff]
    %v6498 = vld [vmem:[%s6406 + $0x2d8] sm:$0xff]
    %v6499 = vld [vmem:[%s6406 + $0x2e0] sm:$0xff]
    %v6500 = vld [vmem:[%s6406 + $0x2e8] sm:$0xff]
    %v6501 = vld [vmem:[%s6406 + $0x2f0] sm:$0xff]
    %v6502 = vld [vmem:[%s6406 + $0x2f8] sm:$0xff]
    %v6503 = vld [vmem:[%s6406 + $0x300] sm:$0xff]
    %v6504 = vld [vmem:[%s6406 + $0x308] sm:$0xff]
    %v6505 = vld [vmem:[%s6406 + $0x310] sm:$0xff]
    %v6506 = vld [vmem:[%s6406 + $0x318] sm:$0xff]
    %v6507 = vld [vmem:[%s6406 + $0x320] sm:$0xff]
    %v6508 = vld [vmem:[%s6406 + $0x328] sm:$0xff]
    %v6509 = vld [vmem:[%s6406 + $0x330] sm:$0xff]
    %v6510 = vld [vmem:[%s6406 + $0x338] sm:$0xff]
    %v6511 = vld [vmem:[%s6406 + $0x340] sm:$0xff]
    %v6512 = vld [vmem:[%s6406 + $0x348] sm:$0xff]
    %v6513 = vld [vmem:[%s6406 + $0x350] sm:$0xff]
    %v6514 = vld [vmem:[%s6406 + $0x358] sm:$0xff]
    %v6515 = vld [vmem:[%s6406 + $0x360] sm:$0xff]
    %v6516 = vld [vmem:[%s6406 + $0x368] sm:$0xff]
    %v6517 = vld [vmem:[%s6406 + $0x370] sm:$0xff]
    %v6518 = vld [vmem:[%s6406 + $0x378] sm:$0xff]
    %v6519 = vld [vmem:[%s6406 + $0x380] sm:$0xff]
    %v6520 = vld [vmem:[%s6406 + $0x388] sm:$0xff]
    %v6521 = vld [vmem:[%s6406 + $0x390] sm:$0xff]
    %v6522 = vld [vmem:[%s6406 + $0x398] sm:$0xff]
    %v6523 = vld [vmem:[%s6406 + $0x3a0] sm:$0xff]
    %v6524 = vld [vmem:[%s6406 + $0x3a8] sm:$0xff]
    %v6525 = vld [vmem:[%s6406 + $0x3b0] sm:$0xff]
    %v6526 = vld [vmem:[%s6406 + $0x3b8] sm:$0xff]
    %v6527 = vld [vmem:[%s6406 + $0x3c0] sm:$0xff]
    %v6528 = vld [vmem:[%s6406 + $0x3c8] sm:$0xff]
    %v6529 = vld [vmem:[%s6406 + $0x3d0] sm:$0xff]
    %v6530 = vld [vmem:[%s6406 + $0x3d8] sm:$0xff]
    %v6531 = vld [vmem:[%s6406 + $0x3e0] sm:$0xff]
    %v6532 = vld [vmem:[%s6406 + $0x3e8] sm:$0xff]
    %v6533 = vld [vmem:[%s6406 + $0x3f0] sm:$0xff]
    %v6534 = vld [vmem:[%s6406 + $0x3f8] sm:$0xff]
    %s6535 = scalar_lea.vmem [#allocation12], 12
    %v6536 = vld [vmem:[%s6535] sm:$0xf]
    %v6538 = vlaneseq
    %v6539 = vshrl.u32 %v6538, 7
    %v6540 = vsub.s32 0, %v6539
    %v6541 = vrot.slane %v6536, %v6540
    %v6542 = vlaneseq
    %v6543 = vshrl.u32 %v6542, 7
    %v6544 = vsub.s32 1, %v6543
    %v6545 = vrot.slane %v6536, %v6544
    %v6546 = vlaneseq
    %v6547 = vshrl.u32 %v6546, 7
    %v6548 = vsub.s32 2, %v6547
    %v6549 = vrot.slane %v6536, %v6548
    %v6550 = vlaneseq
    %v6551 = vshrl.u32 %v6550, 7
    %v6552 = vsub.s32 3, %v6551
    %v6553 = vrot.slane %v6536, %v6552
    %v6686 = vunpack.c.l.b16 %v6407
    %v6687 = vunpack.c.h.b16 %v6407
    %v6688 = vunpack.c.l.b16 %v6408
    %v6689 = vunpack.c.h.b16 %v6408
    %v6690 = vunpack.c.l.b16 %v6409
    %v6691 = vunpack.c.h.b16 %v6409
    %v6692 = vunpack.c.l.b16 %v6410
    %v6693 = vunpack.c.h.b16 %v6410
    %v6694 = vunpack.c.l.b16 %v6411
    %v6695 = vunpack.c.h.b16 %v6411
    %v6696 = vunpack.c.l.b16 %v6412
    %v6697 = vunpack.c.h.b16 %v6412
    %v6698 = vunpack.c.l.b16 %v6413
    %v6699 = vunpack.c.h.b16 %v6413
    %v6700 = vunpack.c.l.b16 %v6414
    %v6701 = vunpack.c.h.b16 %v6414
    %v6702 = vunpack.c.l.b16 %v6415
    %v6703 = vunpack.c.h.b16 %v6415
    %v6704 = vunpack.c.l.b16 %v6416
    %v6705 = vunpack.c.h.b16 %v6416
    %v6706 = vunpack.c.l.b16 %v6417
    %v6707 = vunpack.c.h.b16 %v6417
    %v6708 = vunpack.c.l.b16 %v6418
    %v6709 = vunpack.c.h.b16 %v6418
    %v6710 = vunpack.c.l.b16 %v6419
    %v6711 = vunpack.c.h.b16 %v6419
    %v6712 = vunpack.c.l.b16 %v6420
    %v6713 = vunpack.c.h.b16 %v6420
    %v6714 = vunpack.c.l.b16 %v6421
    %v6715 = vunpack.c.h.b16 %v6421
    %v6716 = vunpack.c.l.b16 %v6422
    %v6717 = vunpack.c.h.b16 %v6422
    %v6718 = vunpack.c.l.b16 %v6423
    %v6719 = vunpack.c.h.b16 %v6423
    %v6720 = vunpack.c.l.b16 %v6424
    %v6721 = vunpack.c.h.b16 %v6424
    %v6722 = vunpack.c.l.b16 %v6425
    %v6723 = vunpack.c.h.b16 %v6425
    %v6724 = vunpack.c.l.b16 %v6426
    %v6725 = vunpack.c.h.b16 %v6426
    %v6726 = vunpack.c.l.b16 %v6427
    %v6727 = vunpack.c.h.b16 %v6427
    %v6728 = vunpack.c.l.b16 %v6428
    %v6729 = vunpack.c.h.b16 %v6428
    %v6730 = vunpack.c.l.b16 %v6429
    %v6731 = vunpack.c.h.b16 %v6429
    %v6732 = vunpack.c.l.b16 %v6430
    %v6733 = vunpack.c.h.b16 %v6430
    %v6734 = vunpack.c.l.b16 %v6431
    %v6735 = vunpack.c.h.b16 %v6431
    %v6736 = vunpack.c.l.b16 %v6432
    %v6737 = vunpack.c.h.b16 %v6432
    %v6738 = vunpack.c.l.b16 %v6433
    %v6739 = vunpack.c.h.b16 %v6433
    %v6740 = vunpack.c.l.b16 %v6434
    %v6741 = vunpack.c.h.b16 %v6434
    %v6742 = vunpack.c.l.b16 %v6435
    %v6743 = vunpack.c.h.b16 %v6435
    %v6744 = vunpack.c.l.b16 %v6436
    %v6745 = vunpack.c.h.b16 %v6436
    %v6746 = vunpack.c.l.b16 %v6437
    %v6747 = vunpack.c.h.b16 %v6437
    %v6748 = vunpack.c.l.b16 %v6438
    %v6749 = vunpack.c.h.b16 %v6438
    %v6750 = vunpack.c.l.b16 %v6439
    %v6751 = vunpack.c.h.b16 %v6439
    %v6752 = vunpack.c.l.b16 %v6440
    %v6753 = vunpack.c.h.b16 %v6440
    %v6754 = vunpack.c.l.b16 %v6441
    %v6755 = vunpack.c.h.b16 %v6441
    %v6756 = vunpack.c.l.b16 %v6442
    %v6757 = vunpack.c.h.b16 %v6442
    %v6758 = vunpack.c.l.b16 %v6443
    %v6759 = vunpack.c.h.b16 %v6443
    %v6760 = vunpack.c.l.b16 %v6444
    %v6761 = vunpack.c.h.b16 %v6444
    %v6762 = vunpack.c.l.b16 %v6445
    %v6763 = vunpack.c.h.b16 %v6445
    %v6764 = vunpack.c.l.b16 %v6446
    %v6765 = vunpack.c.h.b16 %v6446
    %v6766 = vunpack.c.l.b16 %v6447
    %v6767 = vunpack.c.h.b16 %v6447
    %v6768 = vunpack.c.l.b16 %v6448
    %v6769 = vunpack.c.h.b16 %v6448
    %v6770 = vunpack.c.l.b16 %v6449
    %v6771 = vunpack.c.h.b16 %v6449
    %v6772 = vunpack.c.l.b16 %v6450
    %v6773 = vunpack.c.h.b16 %v6450
    %v6774 = vunpack.c.l.b16 %v6451
    %v6775 = vunpack.c.h.b16 %v6451
    %v6776 = vunpack.c.l.b16 %v6452
    %v6777 = vunpack.c.h.b16 %v6452
    %v6778 = vunpack.c.l.b16 %v6453
    %v6779 = vunpack.c.h.b16 %v6453
    %v6780 = vunpack.c.l.b16 %v6454
    %v6781 = vunpack.c.h.b16 %v6454
    %v6782 = vunpack.c.l.b16 %v6455
    %v6783 = vunpack.c.h.b16 %v6455
    %v6784 = vunpack.c.l.b16 %v6456
    %v6785 = vunpack.c.h.b16 %v6456
    %v6786 = vunpack.c.l.b16 %v6457
    %v6787 = vunpack.c.h.b16 %v6457
    %v6788 = vunpack.c.l.b16 %v6458
    %v6789 = vunpack.c.h.b16 %v6458
    %v6790 = vunpack.c.l.b16 %v6459
    %v6791 = vunpack.c.h.b16 %v6459
    %v6792 = vunpack.c.l.b16 %v6460
    %v6793 = vunpack.c.h.b16 %v6460
    %v6794 = vunpack.c.l.b16 %v6461
    %v6795 = vunpack.c.h.b16 %v6461
    %v6796 = vunpack.c.l.b16 %v6462
    %v6797 = vunpack.c.h.b16 %v6462
    %v6798 = vunpack.c.l.b16 %v6463
    %v6799 = vunpack.c.h.b16 %v6463
    %v6800 = vunpack.c.l.b16 %v6464
    %v6801 = vunpack.c.h.b16 %v6464
    %v6802 = vunpack.c.l.b16 %v6465
    %v6803 = vunpack.c.h.b16 %v6465
    %v6804 = vunpack.c.l.b16 %v6466
    %v6805 = vunpack.c.h.b16 %v6466
    %v6806 = vunpack.c.l.b16 %v6467
    %v6807 = vunpack.c.h.b16 %v6467
    %v6808 = vunpack.c.l.b16 %v6468
    %v6809 = vunpack.c.h.b16 %v6468
    %v6810 = vunpack.c.l.b16 %v6469
    %v6811 = vunpack.c.h.b16 %v6469
    %v6812 = vunpack.c.l.b16 %v6470
    %v6813 = vunpack.c.h.b16 %v6470
    %v6814 = vunpack.c.l.b16 %v6471
    %v6815 = vunpack.c.h.b16 %v6471
    %v6816 = vunpack.c.l.b16 %v6472
    %v6817 = vunpack.c.h.b16 %v6472
    %v6818 = vunpack.c.l.b16 %v6473
    %v6819 = vunpack.c.h.b16 %v6473
    %v6820 = vunpack.c.l.b16 %v6474
    %v6821 = vunpack.c.h.b16 %v6474
    %v6822 = vunpack.c.l.b16 %v6475
    %v6823 = vunpack.c.h.b16 %v6475
    %v6824 = vunpack.c.l.b16 %v6476
    %v6825 = vunpack.c.h.b16 %v6476
    %v6826 = vunpack.c.l.b16 %v6477
    %v6827 = vunpack.c.h.b16 %v6477
    %v6828 = vunpack.c.l.b16 %v6478
    %v6829 = vunpack.c.h.b16 %v6478
    %v6830 = vunpack.c.l.b16 %v6479
    %v6831 = vunpack.c.h.b16 %v6479
    %v6832 = vunpack.c.l.b16 %v6480
    %v6833 = vunpack.c.h.b16 %v6480
    %v6834 = vunpack.c.l.b16 %v6481
    %v6835 = vunpack.c.h.b16 %v6481
    %v6836 = vunpack.c.l.b16 %v6482
    %v6837 = vunpack.c.h.b16 %v6482
    %v6838 = vunpack.c.l.b16 %v6483
    %v6839 = vunpack.c.h.b16 %v6483
    %v6840 = vunpack.c.l.b16 %v6484
    %v6841 = vunpack.c.h.b16 %v6484
    %v6842 = vunpack.c.l.b16 %v6485
    %v6843 = vunpack.c.h.b16 %v6485
    %v6844 = vunpack.c.l.b16 %v6486
    %v6845 = vunpack.c.h.b16 %v6486
    %v6846 = vunpack.c.l.b16 %v6487
    %v6847 = vunpack.c.h.b16 %v6487
    %v6848 = vunpack.c.l.b16 %v6488
    %v6849 = vunpack.c.h.b16 %v6488
    %v6850 = vunpack.c.l.b16 %v6489
    %v6851 = vunpack.c.h.b16 %v6489
    %v6852 = vunpack.c.l.b16 %v6490
    %v6853 = vunpack.c.h.b16 %v6490
    %v6854 = vunpack.c.l.b16 %v6491
    %v6855 = vunpack.c.h.b16 %v6491
    %v6856 = vunpack.c.l.b16 %v6492
    %v6857 = vunpack.c.h.b16 %v6492
    %v6858 = vunpack.c.l.b16 %v6493
    %v6859 = vunpack.c.h.b16 %v6493
    %v6860 = vunpack.c.l.b16 %v6494
    %v6861 = vunpack.c.h.b16 %v6494
    %v6862 = vunpack.c.l.b16 %v6495
    %v6863 = vunpack.c.h.b16 %v6495
    %v6864 = vunpack.c.l.b16 %v6496
    %v6865 = vunpack.c.h.b16 %v6496
    %v6866 = vunpack.c.l.b16 %v6497
    %v6867 = vunpack.c.h.b16 %v6497
    %v6868 = vunpack.c.l.b16 %v6498
    %v6869 = vunpack.c.h.b16 %v6498
    %v6870 = vunpack.c.l.b16 %v6499
    %v6871 = vunpack.c.h.b16 %v6499
    %v6872 = vunpack.c.l.b16 %v6500
    %v6873 = vunpack.c.h.b16 %v6500
    %v6874 = vunpack.c.l.b16 %v6501
    %v6875 = vunpack.c.h.b16 %v6501
    %v6876 = vunpack.c.l.b16 %v6502
    %v6877 = vunpack.c.h.b16 %v6502
    %v6878 = vunpack.c.l.b16 %v6503
    %v6879 = vunpack.c.h.b16 %v6503
    %v6880 = vunpack.c.l.b16 %v6504
    %v6881 = vunpack.c.h.b16 %v6504
    %v6882 = vunpack.c.l.b16 %v6505
    %v6883 = vunpack.c.h.b16 %v6505
    %v6884 = vunpack.c.l.b16 %v6506
    %v6885 = vunpack.c.h.b16 %v6506
    %v6886 = vunpack.c.l.b16 %v6507
    %v6887 = vunpack.c.h.b16 %v6507
    %v6888 = vunpack.c.l.b16 %v6508
    %v6889 = vunpack.c.h.b16 %v6508
    %v6890 = vunpack.c.l.b16 %v6509
    %v6891 = vunpack.c.h.b16 %v6509
    %v6892 = vunpack.c.l.b16 %v6510
    %v6893 = vunpack.c.h.b16 %v6510
    %v6894 = vunpack.c.l.b16 %v6511
    %v6895 = vunpack.c.h.b16 %v6511
    %v6896 = vunpack.c.l.b16 %v6512
    %v6897 = vunpack.c.h.b16 %v6512
    %v6898 = vunpack.c.l.b16 %v6513
    %v6899 = vunpack.c.h.b16 %v6513
    %v6900 = vunpack.c.l.b16 %v6514
    %v6901 = vunpack.c.h.b16 %v6514
    %v6902 = vunpack.c.l.b16 %v6515
    %v6903 = vunpack.c.h.b16 %v6515
    %v6904 = vunpack.c.l.b16 %v6516
    %v6905 = vunpack.c.h.b16 %v6516
    %v6906 = vunpack.c.l.b16 %v6517
    %v6907 = vunpack.c.h.b16 %v6517
    %v6908 = vunpack.c.l.b16 %v6518
    %v6909 = vunpack.c.h.b16 %v6518
    %v6910 = vunpack.c.l.b16 %v6519
    %v6911 = vunpack.c.h.b16 %v6519
    %v6912 = vunpack.c.l.b16 %v6520
    %v6913 = vunpack.c.h.b16 %v6520
    %v6914 = vunpack.c.l.b16 %v6521
    %v6915 = vunpack.c.h.b16 %v6521
    %v6916 = vunpack.c.l.b16 %v6522
    %v6917 = vunpack.c.h.b16 %v6522
    %v6918 = vunpack.c.l.b16 %v6523
    %v6919 = vunpack.c.h.b16 %v6523
    %v6920 = vunpack.c.l.b16 %v6524
    %v6921 = vunpack.c.h.b16 %v6524
    %v6922 = vunpack.c.l.b16 %v6525
    %v6923 = vunpack.c.h.b16 %v6525
    %v6924 = vunpack.c.l.b16 %v6526
    %v6925 = vunpack.c.h.b16 %v6526
    %v6926 = vunpack.c.l.b16 %v6527
    %v6927 = vunpack.c.h.b16 %v6527
    %v6928 = vunpack.c.l.b16 %v6528
    %v6929 = vunpack.c.h.b16 %v6528
    %v6930 = vunpack.c.l.b16 %v6529
    %v6931 = vunpack.c.h.b16 %v6529
    %v6932 = vunpack.c.l.b16 %v6530
    %v6933 = vunpack.c.h.b16 %v6530
    %v6934 = vunpack.c.l.b16 %v6531
    %v6935 = vunpack.c.h.b16 %v6531
    %v6936 = vunpack.c.l.b16 %v6532
    %v6937 = vunpack.c.h.b16 %v6532
    %v6938 = vunpack.c.l.b16 %v6533
    %v6939 = vunpack.c.h.b16 %v6533
    %v6940 = vunpack.c.l.b16 %v6534
    %v6941 = vunpack.c.h.b16 %v6534
    %v6942 = vpack.c.b16 %v6690, %v6686
    %v6943 = vpack.c.b16 %v6691, %v6687
    %v6944 = vpack.c.b16 %v6692, %v6688
    %v6945 = vpack.c.b16 %v6693, %v6689
    %v6946 = vpack.c.b16 %v6698, %v6694
    %v6947 = vpack.c.b16 %v6699, %v6695
    %v6948 = vpack.c.b16 %v6700, %v6696
    %v6949 = vpack.c.b16 %v6701, %v6697
    %v6950 = vpack.c.b16 %v6706, %v6702
    %v6951 = vpack.c.b16 %v6707, %v6703
    %v6952 = vpack.c.b16 %v6708, %v6704
    %v6953 = vpack.c.b16 %v6709, %v6705
    %v6954 = vpack.c.b16 %v6714, %v6710
    %v6955 = vpack.c.b16 %v6715, %v6711
    %v6956 = vpack.c.b16 %v6716, %v6712
    %v6957 = vpack.c.b16 %v6717, %v6713
    %v6958 = vpack.c.b16 %v6722, %v6718
    %v6959 = vpack.c.b16 %v6723, %v6719
    %v6960 = vpack.c.b16 %v6724, %v6720
    %v6961 = vpack.c.b16 %v6725, %v6721
    %v6962 = vpack.c.b16 %v6730, %v6726
    %v6963 = vpack.c.b16 %v6731, %v6727
    %v6964 = vpack.c.b16 %v6732, %v6728
    %v6965 = vpack.c.b16 %v6733, %v6729
    %v6966 = vpack.c.b16 %v6738, %v6734
    %v6967 = vpack.c.b16 %v6739, %v6735
    %v6968 = vpack.c.b16 %v6740, %v6736
    %v6969 = vpack.c.b16 %v6741, %v6737
    %v6970 = vpack.c.b16 %v6746, %v6742
    %v6971 = vpack.c.b16 %v6747, %v6743
    %v6972 = vpack.c.b16 %v6748, %v6744
    %v6973 = vpack.c.b16 %v6749, %v6745
    %v6974 = vpack.c.b16 %v6754, %v6750
    %v6975 = vpack.c.b16 %v6755, %v6751
    %v6976 = vpack.c.b16 %v6756, %v6752
    %v6977 = vpack.c.b16 %v6757, %v6753
    %v6978 = vpack.c.b16 %v6762, %v6758
    %v6979 = vpack.c.b16 %v6763, %v6759
    %v6980 = vpack.c.b16 %v6764, %v6760
    %v6981 = vpack.c.b16 %v6765, %v6761
    %v6982 = vpack.c.b16 %v6770, %v6766
    %v6983 = vpack.c.b16 %v6771, %v6767
    %v6984 = vpack.c.b16 %v6772, %v6768
    %v6985 = vpack.c.b16 %v6773, %v6769
    %v6986 = vpack.c.b16 %v6778, %v6774
    %v6987 = vpack.c.b16 %v6779, %v6775
    %v6988 = vpack.c.b16 %v6780, %v6776
    %v6989 = vpack.c.b16 %v6781, %v6777
    %v6990 = vpack.c.b16 %v6786, %v6782
    %v6991 = vpack.c.b16 %v6787, %v6783
    %v6992 = vpack.c.b16 %v6788, %v6784
    %v6993 = vpack.c.b16 %v6789, %v6785
    %v6994 = vpack.c.b16 %v6794, %v6790
    %v6995 = vpack.c.b16 %v6795, %v6791
    %v6996 = vpack.c.b16 %v6796, %v6792
    %v6997 = vpack.c.b16 %v6797, %v6793
    %v6998 = vpack.c.b16 %v6802, %v6798
    %v6999 = vpack.c.b16 %v6803, %v6799
    %v7000 = vpack.c.b16 %v6804, %v6800
    %v7001 = vpack.c.b16 %v6805, %v6801
    %v7002 = vpack.c.b16 %v6810, %v6806
    %v7003 = vpack.c.b16 %v6811, %v6807
    %v7004 = vpack.c.b16 %v6812, %v6808
    %v7005 = vpack.c.b16 %v6813, %v6809
    %v7006 = vpack.c.b16 %v6818, %v6814
    %v7007 = vpack.c.b16 %v6819, %v6815
    %v7008 = vpack.c.b16 %v6820, %v6816
    %v7009 = vpack.c.b16 %v6821, %v6817
    %v7010 = vpack.c.b16 %v6826, %v6822
    %v7011 = vpack.c.b16 %v6827, %v6823
    %v7012 = vpack.c.b16 %v6828, %v6824
    %v7013 = vpack.c.b16 %v6829, %v6825
    %v7014 = vpack.c.b16 %v6834, %v6830
    %v7015 = vpack.c.b16 %v6835, %v6831
    %v7016 = vpack.c.b16 %v6836, %v6832
    %v7017 = vpack.c.b16 %v6837, %v6833
    %v7018 = vpack.c.b16 %v6842, %v6838
    %v7019 = vpack.c.b16 %v6843, %v6839
    %v7020 = vpack.c.b16 %v6844, %v6840
    %v7021 = vpack.c.b16 %v6845, %v6841
    %v7022 = vpack.c.b16 %v6850, %v6846
    %v7023 = vpack.c.b16 %v6851, %v6847
    %v7024 = vpack.c.b16 %v6852, %v6848
    %v7025 = vpack.c.b16 %v6853, %v6849
    %v7026 = vpack.c.b16 %v6858, %v6854
    %v7027 = vpack.c.b16 %v6859, %v6855
    %v7028 = vpack.c.b16 %v6860, %v6856
    %v7029 = vpack.c.b16 %v6861, %v6857
    %v7030 = vpack.c.b16 %v6866, %v6862
    %v7031 = vpack.c.b16 %v6867, %v6863
    %v7032 = vpack.c.b16 %v6868, %v6864
    %v7033 = vpack.c.b16 %v6869, %v6865
    %v7034 = vpack.c.b16 %v6874, %v6870
    %v7035 = vpack.c.b16 %v6875, %v6871
    %v7036 = vpack.c.b16 %v6876, %v6872
    %v7037 = vpack.c.b16 %v6877, %v6873
    %v7038 = vpack.c.b16 %v6882, %v6878
    %v7039 = vpack.c.b16 %v6883, %v6879
    %v7040 = vpack.c.b16 %v6884, %v6880
    %v7041 = vpack.c.b16 %v6885, %v6881
    %v7042 = vpack.c.b16 %v6890, %v6886
    %v7043 = vpack.c.b16 %v6891, %v6887
    %v7044 = vpack.c.b16 %v6892, %v6888
    %v7045 = vpack.c.b16 %v6893, %v6889
    %v7046 = vpack.c.b16 %v6898, %v6894
    %v7047 = vpack.c.b16 %v6899, %v6895
    %v7048 = vpack.c.b16 %v6900, %v6896
    %v7049 = vpack.c.b16 %v6901, %v6897
    %v7050 = vpack.c.b16 %v6906, %v6902
    %v7051 = vpack.c.b16 %v6907, %v6903
    %v7052 = vpack.c.b16 %v6908, %v6904
    %v7053 = vpack.c.b16 %v6909, %v6905
    %v7054 = vpack.c.b16 %v6914, %v6910
    %v7055 = vpack.c.b16 %v6915, %v6911
    %v7056 = vpack.c.b16 %v6916, %v6912
    %v7057 = vpack.c.b16 %v6917, %v6913
    %v7058 = vpack.c.b16 %v6922, %v6918
    %v7059 = vpack.c.b16 %v6923, %v6919
    %v7060 = vpack.c.b16 %v6924, %v6920
    %v7061 = vpack.c.b16 %v6925, %v6921
    %v7062 = vpack.c.b16 %v6930, %v6926
    %v7063 = vpack.c.b16 %v6931, %v6927
    %v7064 = vpack.c.b16 %v6932, %v6928
    %v7065 = vpack.c.b16 %v6933, %v6929
    %v7066 = vpack.c.b16 %v6938, %v6934
    %v7067 = vpack.c.b16 %v6939, %v6935
    %v7068 = vpack.c.b16 %v6940, %v6936
    %v7069 = vpack.c.b16 %v6941, %v6937
    %7198 = vmatprep.subr.bf16.mxu0 %v6943
    %7199 = vmatpush1.bf16.msra.mxu0 %v6942
    %7200 = vmatprep.subr.bf16.mxu0 %v6947
    %7201 = vmatpush1.bf16.msra.mxu0 %v6946
    %7202 = vmatprep.subr.bf16.mxu0 %v6951
    %7203 = vmatpush1.bf16.msra.mxu0 %v6950
    %7204 = vmatprep.subr.bf16.mxu0 %v6955
    %7205 = vmatpush1.bf16.msra.mxu0 %v6954
    %7206 = vmatprep.subr.bf16.mxu0 %v6959
    %7207 = vmatpush1.bf16.msra.mxu0 %v6958
    %7208 = vmatprep.subr.bf16.mxu0 %v6963
    %7209 = vmatpush1.bf16.msra.mxu0 %v6962
    %7210 = vmatprep.subr.bf16.mxu0 %v6967
    %7211 = vmatpush1.bf16.msra.mxu0 %v6966
    %7212 = vmatprep.subr.bf16.mxu0 %v6971
    %7213 = vmatpush1.bf16.msra.mxu0 %v6970
    %7214 = vmatprep.subr.bf16.mxu0 %v6975
    %7215 = vmatpush1.bf16.msra.mxu0 %v6974
    %7216 = vmatprep.subr.bf16.mxu0 %v6979
    %7217 = vmatpush1.bf16.msra.mxu0 %v6978
    %7218 = vmatprep.subr.bf16.mxu0 %v6983
    %7219 = vmatpush1.bf16.msra.mxu0 %v6982
    %7220 = vmatprep.subr.bf16.mxu0 %v6987
    %7221 = vmatpush1.bf16.msra.mxu0 %v6986
    %7222 = vmatprep.subr.bf16.mxu0 %v6991
    %7223 = vmatpush1.bf16.msra.mxu0 %v6990
    %7224 = vmatprep.subr.bf16.mxu0 %v6995
    %7225 = vmatpush1.bf16.msra.mxu0 %v6994
    %7226 = vmatprep.subr.bf16.mxu0 %v6999
    %7227 = vmatpush1.bf16.msra.mxu0 %v6998
    %7228 = vmatprep.subr.bf16.mxu0 %v7003
    %7229 = vmatpush1.bf16.msra.mxu0 %v7002
    %7230 = vmatprep.mubr.bf16.mxu0 %v3170
    %7231 = vmatmul.mubr.bf16.gmra.mrb[0].mxu0 %v3169
    %v7232 = vpop.f32.mrb[0].mxu0
    %v7233 = vadd.f32 %v6541, %v7232
    %v7234 = vpop.f32.mrb[0].mxu0
    %v7235 = vadd.f32 %v6545, %v7234
    %v7236 = vpop.f32.mrb[0].mxu0
    %v7237 = vpop.f32.mrb[0].mxu0
    %7238 = vdwg.mxu0
    %7239 = vmatprep.subr.bf16.mxu0 %v7007
    %7240 = vmatpush1.bf16.msra.mxu0 %v7006
    %7241 = vmatprep.subr.bf16.mxu0 %v7011
    %7242 = vmatpush1.bf16.msra.mxu0 %v7010
    %7243 = vmatprep.subr.bf16.mxu0 %v7015
    %7244 = vmatpush1.bf16.msra.mxu0 %v7014
    %7245 = vmatprep.subr.bf16.mxu0 %v7019
    %7246 = vmatpush1.bf16.msra.mxu0 %v7018
    %7247 = vmatprep.subr.bf16.mxu0 %v7023
    %7248 = vmatpush1.bf16.msra.mxu0 %v7022
    %7249 = vmatprep.subr.bf16.mxu0 %v7027
    %7250 = vmatpush1.bf16.msra.mxu0 %v7026
    %7251 = vmatprep.subr.bf16.mxu0 %v7031
    %7252 = vmatpush1.bf16.msra.mxu0 %v7030
    %7253 = vmatprep.subr.bf16.mxu0 %v7035
    %7254 = vmatpush1.bf16.msra.mxu0 %v7034
    %7255 = vmatprep.subr.bf16.mxu0 %v7039
    %7256 = vmatpush1.bf16.msra.mxu0 %v7038
    %7257 = vmatprep.subr.bf16.mxu0 %v7043
    %7258 = vmatpush1.bf16.msra.mxu0 %v7042
    %7259 = vmatprep.subr.bf16.mxu0 %v7047
    %7260 = vmatpush1.bf16.msra.mxu0 %v7046
    %7261 = vmatprep.subr.bf16.mxu0 %v7051
    %7262 = vmatpush1.bf16.msra.mxu0 %v7050
    %7263 = vmatprep.subr.bf16.mxu0 %v7055
    %7264 = vmatpush1.bf16.msra.mxu0 %v7054
    %7265 = vmatprep.subr.bf16.mxu0 %v7059
    %7266 = vmatpush1.bf16.msra.mxu0 %v7058
    %7267 = vmatprep.subr.bf16.mxu0 %v7063
    %7268 = vmatpush1.bf16.msra.mxu0 %v7062
    %7269 = vmatprep.subr.bf16.mxu0 %v7067
    %7270 = vmatpush1.bf16.msra.mxu0 %v7066
    %7271 = vmatprep.mubr.bf16.mxu0 %v3172
    %7272 = vmatmul.mubr.bf16.gmra.mrb[0].mxu0 %v3171
    %v7273 = vpop.f32.mrb[0].mxu0
    %v7274 = vadd.f32 %v7233, %v7273
    %v7275 = vpop.f32.mrb[0].mxu0
    %v7276 = vadd.f32 %v7235, %v7275
    %v7277 = vpop.f32.mrb[0].mxu0
    %v7278 = vpop.f32.mrb[0].mxu0
    %7279 = vdwg.mxu0
    %7280 = vmatprep.subr.bf16.mxu0 %v6945
    %7281 = vmatpush1.bf16.msra.mxu0 %v6944
    %7282 = vmatprep.subr.bf16.mxu0 %v6949
    %7283 = vmatpush1.bf16.msra.mxu0 %v6948
    %7284 = vmatprep.subr.bf16.mxu0 %v6953
    %7285 = vmatpush1.bf16.msra.mxu0 %v6952
    %7286 = vmatprep.subr.bf16.mxu0 %v6957
    %7287 = vmatpush1.bf16.msra.mxu0 %v6956
    %7288 = vmatprep.subr.bf16.mxu0 %v6961
    %7289 = vmatpush1.bf16.msra.mxu0 %v6960
    %7290 = vmatprep.subr.bf16.mxu0 %v6965
    %7291 = vmatpush1.bf16.msra.mxu0 %v6964
    %7292 = vmatprep.subr.bf16.mxu0 %v6969
    %7293 = vmatpush1.bf16.msra.mxu0 %v6968
    %7294 = vmatprep.subr.bf16.mxu0 %v6973
    %7295 = vmatpush1.bf16.msra.mxu0 %v6972
    %7296 = vmatprep.subr.bf16.mxu0 %v6977
    %7297 = vmatpush1.bf16.msra.mxu0 %v6976
    %7298 = vmatprep.subr.bf16.mxu0 %v6981
    %7299 = vmatpush1.bf16.msra.mxu0 %v6980
    %7300 = vmatprep.subr.bf16.mxu0 %v6985
    %7301 = vmatpush1.bf16.msra.mxu0 %v6984
    %7302 = vmatprep.subr.bf16.mxu0 %v6989
    %7303 = vmatpush1.bf16.msra.mxu0 %v6988
    %7304 = vmatprep.subr.bf16.mxu0 %v6993
    %7305 = vmatpush1.bf16.msra.mxu0 %v6992
    %7306 = vmatprep.subr.bf16.mxu0 %v6997
    %7307 = vmatpush1.bf16.msra.mxu0 %v6996
    %7308 = vmatprep.subr.bf16.mxu0 %v7001
    %7309 = vmatpush1.bf16.msra.mxu0 %v7000
    %7310 = vmatprep.subr.bf16.mxu0 %v7005
    %7311 = vmatpush1.bf16.msra.mxu0 %v7004
    %7312 = vmatprep.mubr.bf16.mxu0 %v3170
    %7313 = vmatmul.mubr.bf16.gmra.mrb[0].mxu0 %v3169
    %v7314 = vpop.f32.mrb[0].mxu0
    %v7315 = vadd.f32 %v6549, %v7314
    %v7316 = vpop.f32.mrb[0].mxu0
    %v7317 = vadd.f32 %v6553, %v7316
    %v7318 = vpop.f32.mrb[0].mxu0
    %v7319 = vpop.f32.mrb[0].mxu0
    %7320 = vdwg.mxu0
    %7321 = vmatprep.subr.bf16.mxu0 %v7009
    %7322 = vmatpush1.bf16.msra.mxu0 %v7008
    %7323 = vmatprep.subr.bf16.mxu0 %v7013
    %7324 = vmatpush1.bf16.msra.mxu0 %v7012
    %7325 = vmatprep.subr.bf16.mxu0 %v7017
    %7326 = vmatpush1.bf16.msra.mxu0 %v7016
    %7327 = vmatprep.subr.bf16.mxu0 %v7021
    %7328 = vmatpush1.bf16.msra.mxu0 %v7020
    %7329 = vmatprep.subr.bf16.mxu0 %v7025
    %7330 = vmatpush1.bf16.msra.mxu0 %v7024
    %7331 = vmatprep.subr.bf16.mxu0 %v7029
    %7332 = vmatpush1.bf16.msra.mxu0 %v7028
    %7333 = vmatprep.subr.bf16.mxu0 %v7033
    %7334 = vmatpush1.bf16.msra.mxu0 %v7032
    %7335 = vmatprep.subr.bf16.mxu0 %v7037
    %7336 = vmatpush1.bf16.msra.mxu0 %v7036
    %7337 = vmatprep.subr.bf16.mxu0 %v7041
    %7338 = vmatpush1.bf16.msra.mxu0 %v7040
    %7339 = vmatprep.subr.bf16.mxu0 %v7045
    %7340 = vmatpush1.bf16.msra.mxu0 %v7044
    %7341 = vmatprep.subr.bf16.mxu0 %v7049
    %7342 = vmatpush1.bf16.msra.mxu0 %v7048
    %7343 = vmatprep.subr.bf16.mxu0 %v7053
    %7344 = vmatpush1.bf16.msra.mxu0 %v7052
    %7345 = vmatprep.subr.bf16.mxu0 %v7057
    %7346 = vmatpush1.bf16.msra.mxu0 %v7056
    %7347 = vmatprep.subr.bf16.mxu0 %v7061
    %7348 = vmatpush1.bf16.msra.mxu0 %v7060
    %7349 = vmatprep.subr.bf16.mxu0 %v7065
    %7350 = vmatpush1.bf16.msra.mxu0 %v7064
    %7351 = vmatprep.subr.bf16.mxu0 %v7069
    %7352 = vmatpush1.bf16.msra.mxu0 %v7068
    %7353 = vmatprep.mubr.bf16.mxu0 %v3172
    %7354 = vmatmul.mubr.bf16.gmra.mrb[0].mxu0 %v3171
    %v7355 = vpop.f32.mrb[0].mxu0
    %v7356 = vadd.f32 %v7315, %v7355
    %v7357 = vpop.f32.mrb[0].mxu0
    %v7358 = vadd.f32 %v7317, %v7357
    %v7359 = vpop.f32.mrb[0].mxu0
    %v7360 = vpop.f32.mrb[0].mxu0
    %7361 = vdwg.mxu0
    %v7362 = vmax.f32 %v7274, 0.0
    %v7363 = vmax.f32 %v7276, 0.0
    %v7364 = vmax.f32 %v7356, 0.0
    %v7365 = vmax.f32 %v7358, 0.0
    %v7366 = vpack.c.bf16 %v7362, %v7362
    %v7367 = vpack.c.bf16 %v7363, %v7363
    %v7368 = vpack.c.bf16 %v7364, %v7364
    %v7369 = vpack.c.bf16 %v7365, %v7365
    %s7370 = scalar_lea.vmem [#allocation10], 4096
    %v7371 = vld [vmem:[%s7370] sm:$0xff]
    %v7372 = vld [vmem:[%s7370 + $0x8] sm:$0xff]
    %v7373 = vld [vmem:[%s7370 + $0x10] sm:$0xff]
    %v7374 = vld [vmem:[%s7370 + $0x18] sm:$0xff]
    %v7375 = vld [vmem:[%s7370 + $0x20] sm:$0xff]
    %v7376 = vld [vmem:[%s7370 + $0x28] sm:$0xff]
    %v7377 = vld [vmem:[%s7370 + $0x30] sm:$0xff]
    %v7378 = vld [vmem:[%s7370 + $0x38] sm:$0xff]
    %v7379 = vld [vmem:[%s7370 + $0x40] sm:$0xff]
    %v7380 = vld [vmem:[%s7370 + $0x48] sm:$0xff]
    %v7381 = vld [vmem:[%s7370 + $0x50] sm:$0xff]
    %v7382 = vld [vmem:[%s7370 + $0x58] sm:$0xff]
    %v7383 = vld [vmem:[%s7370 + $0x60] sm:$0xff]
    %v7384 = vld [vmem:[%s7370 + $0x68] sm:$0xff]
    %v7385 = vld [vmem:[%s7370 + $0x70] sm:$0xff]
    %v7386 = vld [vmem:[%s7370 + $0x78] sm:$0xff]
    %v7387 = vld [vmem:[%s7370 + $0x80] sm:$0xff]
    %v7388 = vld [vmem:[%s7370 + $0x88] sm:$0xff]
    %v7389 = vld [vmem:[%s7370 + $0x90] sm:$0xff]
    %v7390 = vld [vmem:[%s7370 + $0x98] sm:$0xff]
    %v7391 = vld [vmem:[%s7370 + $0xa0] sm:$0xff]
    %v7392 = vld [vmem:[%s7370 + $0xa8] sm:$0xff]
    %v7393 = vld [vmem:[%s7370 + $0xb0] sm:$0xff]
    %v7394 = vld [vmem:[%s7370 + $0xb8] sm:$0xff]
    %v7395 = vld [vmem:[%s7370 + $0xc0] sm:$0xff]
    %v7396 = vld [vmem:[%s7370 + $0xc8] sm:$0xff]
    %v7397 = vld [vmem:[%s7370 + $0xd0] sm:$0xff]
    %v7398 = vld [vmem:[%s7370 + $0xd8] sm:$0xff]
    %v7399 = vld [vmem:[%s7370 + $0xe0] sm:$0xff]
    %v7400 = vld [vmem:[%s7370 + $0xe8] sm:$0xff]
    %v7401 = vld [vmem:[%s7370 + $0xf0] sm:$0xff]
    %v7402 = vld [vmem:[%s7370 + $0xf8] sm:$0xff]
    %v7403 = vld [vmem:[%s7370 + $0x100] sm:$0xff]
    %v7404 = vld [vmem:[%s7370 + $0x108] sm:$0xff]
    %v7405 = vld [vmem:[%s7370 + $0x110] sm:$0xff]
    %v7406 = vld [vmem:[%s7370 + $0x118] sm:$0xff]
    %v7407 = vld [vmem:[%s7370 + $0x120] sm:$0xff]
    %v7408 = vld [vmem:[%s7370 + $0x128] sm:$0xff]
    %v7409 = vld [vmem:[%s7370 + $0x130] sm:$0xff]
    %v7410 = vld [vmem:[%s7370 + $0x138] sm:$0xff]
    %v7411 = vld [vmem:[%s7370 + $0x140] sm:$0xff]
    %v7412 = vld [vmem:[%s7370 + $0x148] sm:$0xff]
    %v7413 = vld [vmem:[%s7370 + $0x150] sm:$0xff]
    %v7414 = vld [vmem:[%s7370 + $0x158] sm:$0xff]
    %v7415 = vld [vmem:[%s7370 + $0x160] sm:$0xff]
    %v7416 = vld [vmem:[%s7370 + $0x168] sm:$0xff]
    %v7417 = vld [vmem:[%s7370 + $0x170] sm:$0xff]
    %v7418 = vld [vmem:[%s7370 + $0x178] sm:$0xff]
    %v7419 = vld [vmem:[%s7370 + $0x180] sm:$0xff]
    %v7420 = vld [vmem:[%s7370 + $0x188] sm:$0xff]
    %v7421 = vld [vmem:[%s7370 + $0x190] sm:$0xff]
    %v7422 = vld [vmem:[%s7370 + $0x198] sm:$0xff]
    %v7423 = vld [vmem:[%s7370 + $0x1a0] sm:$0xff]
    %v7424 = vld [vmem:[%s7370 + $0x1a8] sm:$0xff]
    %v7425 = vld [vmem:[%s7370 + $0x1b0] sm:$0xff]
    %v7426 = vld [vmem:[%s7370 + $0x1b8] sm:$0xff]
    %v7427 = vld [vmem:[%s7370 + $0x1c0] sm:$0xff]
    %v7428 = vld [vmem:[%s7370 + $0x1c8] sm:$0xff]
    %v7429 = vld [vmem:[%s7370 + $0x1d0] sm:$0xff]
    %v7430 = vld [vmem:[%s7370 + $0x1d8] sm:$0xff]
    %v7431 = vld [vmem:[%s7370 + $0x1e0] sm:$0xff]
    %v7432 = vld [vmem:[%s7370 + $0x1e8] sm:$0xff]
    %v7433 = vld [vmem:[%s7370 + $0x1f0] sm:$0xff]
    %v7434 = vld [vmem:[%s7370 + $0x1f8] sm:$0xff]
    %v7435 = vld [vmem:[%s7370 + $0x200] sm:$0xff]
    %v7436 = vld [vmem:[%s7370 + $0x208] sm:$0xff]
    %v7437 = vld [vmem:[%s7370 + $0x210] sm:$0xff]
    %v7438 = vld [vmem:[%s7370 + $0x218] sm:$0xff]
    %v7439 = vld [vmem:[%s7370 + $0x220] sm:$0xff]
    %v7440 = vld [vmem:[%s7370 + $0x228] sm:$0xff]
    %v7441 = vld [vmem:[%s7370 + $0x230] sm:$0xff]
    %v7442 = vld [vmem:[%s7370 + $0x238] sm:$0xff]
    %v7443 = vld [vmem:[%s7370 + $0x240] sm:$0xff]
    %v7444 = vld [vmem:[%s7370 + $0x248] sm:$0xff]
    %v7445 = vld [vmem:[%s7370 + $0x250] sm:$0xff]
    %v7446 = vld [vmem:[%s7370 + $0x258] sm:$0xff]
    %v7447 = vld [vmem:[%s7370 + $0x260] sm:$0xff]
    %v7448 = vld [vmem:[%s7370 + $0x268] sm:$0xff]
    %v7449 = vld [vmem:[%s7370 + $0x270] sm:$0xff]
    %v7450 = vld [vmem:[%s7370 + $0x278] sm:$0xff]
    %v7451 = vld [vmem:[%s7370 + $0x280] sm:$0xff]
    %v7452 = vld [vmem:[%s7370 + $0x288] sm:$0xff]
    %v7453 = vld [vmem:[%s7370 + $0x290] sm:$0xff]
    %v7454 = vld [vmem:[%s7370 + $0x298] sm:$0xff]
    %v7455 = vld [vmem:[%s7370 + $0x2a0] sm:$0xff]
    %v7456 = vld [vmem:[%s7370 + $0x2a8] sm:$0xff]
    %v7457 = vld [vmem:[%s7370 + $0x2b0] sm:$0xff]
    %v7458 = vld [vmem:[%s7370 + $0x2b8] sm:$0xff]
    %v7459 = vld [vmem:[%s7370 + $0x2c0] sm:$0xff]
    %v7460 = vld [vmem:[%s7370 + $0x2c8] sm:$0xff]
    %v7461 = vld [vmem:[%s7370 + $0x2d0] sm:$0xff]
    %v7462 = vld [vmem:[%s7370 + $0x2d8] sm:$0xff]
    %v7463 = vld [vmem:[%s7370 + $0x2e0] sm:$0xff]
    %v7464 = vld [vmem:[%s7370 + $0x2e8] sm:$0xff]
    %v7465 = vld [vmem:[%s7370 + $0x2f0] sm:$0xff]
    %v7466 = vld [vmem:[%s7370 + $0x2f8] sm:$0xff]
    %v7467 = vld [vmem:[%s7370 + $0x300] sm:$0xff]
    %v7468 = vld [vmem:[%s7370 + $0x308] sm:$0xff]
    %v7469 = vld [vmem:[%s7370 + $0x310] sm:$0xff]
    %v7470 = vld [vmem:[%s7370 + $0x318] sm:$0xff]
    %v7471 = vld [vmem:[%s7370 + $0x320] sm:$0xff]
    %v7472 = vld [vmem:[%s7370 + $0x328] sm:$0xff]
    %v7473 = vld [vmem:[%s7370 + $0x330] sm:$0xff]
    %v7474 = vld [vmem:[%s7370 + $0x338] sm:$0xff]
    %v7475 = vld [vmem:[%s7370 + $0x340] sm:$0xff]
    %v7476 = vld [vmem:[%s7370 + $0x348] sm:$0xff]
    %v7477 = vld [vmem:[%s7370 + $0x350] sm:$0xff]
    %v7478 = vld [vmem:[%s7370 + $0x358] sm:$0xff]
    %v7479 = vld [vmem:[%s7370 + $0x360] sm:$0xff]
    %v7480 = vld [vmem:[%s7370 + $0x368] sm:$0xff]
    %v7481 = vld [vmem:[%s7370 + $0x370] sm:$0xff]
    %v7482 = vld [vmem:[%s7370 + $0x378] sm:$0xff]
    %v7483 = vld [vmem:[%s7370 + $0x380] sm:$0xff]
    %v7484 = vld [vmem:[%s7370 + $0x388] sm:$0xff]
    %v7485 = vld [vmem:[%s7370 + $0x390] sm:$0xff]
    %v7486 = vld [vmem:[%s7370 + $0x398] sm:$0xff]
    %v7487 = vld [vmem:[%s7370 + $0x3a0] sm:$0xff]
    %v7488 = vld [vmem:[%s7370 + $0x3a8] sm:$0xff]
    %v7489 = vld [vmem:[%s7370 + $0x3b0] sm:$0xff]
    %v7490 = vld [vmem:[%s7370 + $0x3b8] sm:$0xff]
    %v7491 = vld [vmem:[%s7370 + $0x3c0] sm:$0xff]
    %v7492 = vld [vmem:[%s7370 + $0x3c8] sm:$0xff]
    %v7493 = vld [vmem:[%s7370 + $0x3d0] sm:$0xff]
    %v7494 = vld [vmem:[%s7370 + $0x3d8] sm:$0xff]
    %v7495 = vld [vmem:[%s7370 + $0x3e0] sm:$0xff]
    %v7496 = vld [vmem:[%s7370 + $0x3e8] sm:$0xff]
    %v7497 = vld [vmem:[%s7370 + $0x3f0] sm:$0xff]
    %v7498 = vld [vmem:[%s7370 + $0x3f8] sm:$0xff]
    %s7499 = scalar_lea.vmem [#allocation12], 16
    %v7500 = vld [vmem:[%s7499] sm:$0xf]
    %v7502 = vlaneseq
    %v7503 = vshrl.u32 %v7502, 7
    %v7504 = vsub.s32 0, %v7503
    %v7505 = vrot.slane %v7500, %v7504
    %v7506 = vlaneseq
    %v7507 = vshrl.u32 %v7506, 7
    %v7508 = vsub.s32 1, %v7507
    %v7509 = vrot.slane %v7500, %v7508
    %v7510 = vlaneseq
    %v7511 = vshrl.u32 %v7510, 7
    %v7512 = vsub.s32 2, %v7511
    %v7513 = vrot.slane %v7500, %v7512
    %v7514 = vlaneseq
    %v7515 = vshrl.u32 %v7514, 7
    %v7516 = vsub.s32 3, %v7515
    %v7517 = vrot.slane %v7500, %v7516
    %v7650 = vunpack.c.l.b16 %v7371
    %v7651 = vunpack.c.h.b16 %v7371
    %v7652 = vunpack.c.l.b16 %v7372
    %v7653 = vunpack.c.h.b16 %v7372
    %v7654 = vunpack.c.l.b16 %v7373
    %v7655 = vunpack.c.h.b16 %v7373
    %v7656 = vunpack.c.l.b16 %v7374
    %v7657 = vunpack.c.h.b16 %v7374
    %v7658 = vunpack.c.l.b16 %v7375
    %v7659 = vunpack.c.h.b16 %v7375
    %v7660 = vunpack.c.l.b16 %v7376
    %v7661 = vunpack.c.h.b16 %v7376
    %v7662 = vunpack.c.l.b16 %v7377
    %v7663 = vunpack.c.h.b16 %v7377
    %v7664 = vunpack.c.l.b16 %v7378
    %v7665 = vunpack.c.h.b16 %v7378
    %v7666 = vunpack.c.l.b16 %v7379
    %v7667 = vunpack.c.h.b16 %v7379
    %v7668 = vunpack.c.l.b16 %v7380
    %v7669 = vunpack.c.h.b16 %v7380
    %v7670 = vunpack.c.l.b16 %v7381
    %v7671 = vunpack.c.h.b16 %v7381
    %v7672 = vunpack.c.l.b16 %v7382
    %v7673 = vunpack.c.h.b16 %v7382
    %v7674 = vunpack.c.l.b16 %v7383
    %v7675 = vunpack.c.h.b16 %v7383
    %v7676 = vunpack.c.l.b16 %v7384
    %v7677 = vunpack.c.h.b16 %v7384
    %v7678 = vunpack.c.l.b16 %v7385
    %v7679 = vunpack.c.h.b16 %v7385
    %v7680 = vunpack.c.l.b16 %v7386
    %v7681 = vunpack.c.h.b16 %v7386
    %v7682 = vunpack.c.l.b16 %v7387
    %v7683 = vunpack.c.h.b16 %v7387
    %v7684 = vunpack.c.l.b16 %v7388
    %v7685 = vunpack.c.h.b16 %v7388
    %v7686 = vunpack.c.l.b16 %v7389
    %v7687 = vunpack.c.h.b16 %v7389
    %v7688 = vunpack.c.l.b16 %v7390
    %v7689 = vunpack.c.h.b16 %v7390
    %v7690 = vunpack.c.l.b16 %v7391
    %v7691 = vunpack.c.h.b16 %v7391
    %v7692 = vunpack.c.l.b16 %v7392
    %v7693 = vunpack.c.h.b16 %v7392
    %v7694 = vunpack.c.l.b16 %v7393
    %v7695 = vunpack.c.h.b16 %v7393
    %v7696 = vunpack.c.l.b16 %v7394
    %v7697 = vunpack.c.h.b16 %v7394
    %v7698 = vunpack.c.l.b16 %v7395
    %v7699 = vunpack.c.h.b16 %v7395
    %v7700 = vunpack.c.l.b16 %v7396
    %v7701 = vunpack.c.h.b16 %v7396
    %v7702 = vunpack.c.l.b16 %v7397
    %v7703 = vunpack.c.h.b16 %v7397
    %v7704 = vunpack.c.l.b16 %v7398
    %v7705 = vunpack.c.h.b16 %v7398
    %v7706 = vunpack.c.l.b16 %v7399
    %v7707 = vunpack.c.h.b16 %v7399
    %v7708 = vunpack.c.l.b16 %v7400
    %v7709 = vunpack.c.h.b16 %v7400
    %v7710 = vunpack.c.l.b16 %v7401
    %v7711 = vunpack.c.h.b16 %v7401
    %v7712 = vunpack.c.l.b16 %v7402
    %v7713 = vunpack.c.h.b16 %v7402
    %v7714 = vunpack.c.l.b16 %v7403
    %v7715 = vunpack.c.h.b16 %v7403
    %v7716 = vunpack.c.l.b16 %v7404
    %v7717 = vunpack.c.h.b16 %v7404
    %v7718 = vunpack.c.l.b16 %v7405
    %v7719 = vunpack.c.h.b16 %v7405
    %v7720 = vunpack.c.l.b16 %v7406
    %v7721 = vunpack.c.h.b16 %v7406
    %v7722 = vunpack.c.l.b16 %v7407
    %v7723 = vunpack.c.h.b16 %v7407
    %v7724 = vunpack.c.l.b16 %v7408
    %v7725 = vunpack.c.h.b16 %v7408
    %v7726 = vunpack.c.l.b16 %v7409
    %v7727 = vunpack.c.h.b16 %v7409
    %v7728 = vunpack.c.l.b16 %v7410
    %v7729 = vunpack.c.h.b16 %v7410
    %v7730 = vunpack.c.l.b16 %v7411
    %v7731 = vunpack.c.h.b16 %v7411
    %v7732 = vunpack.c.l.b16 %v7412
    %v7733 = vunpack.c.h.b16 %v7412
    %v7734 = vunpack.c.l.b16 %v7413
    %v7735 = vunpack.c.h.b16 %v7413
    %v7736 = vunpack.c.l.b16 %v7414
    %v7737 = vunpack.c.h.b16 %v7414
    %v7738 = vunpack.c.l.b16 %v7415
    %v7739 = vunpack.c.h.b16 %v7415
    %v7740 = vunpack.c.l.b16 %v7416
    %v7741 = vunpack.c.h.b16 %v7416
    %v7742 = vunpack.c.l.b16 %v7417
    %v7743 = vunpack.c.h.b16 %v7417
    %v7744 = vunpack.c.l.b16 %v7418
    %v7745 = vunpack.c.h.b16 %v7418
    %v7746 = vunpack.c.l.b16 %v7419
    %v7747 = vunpack.c.h.b16 %v7419
    %v7748 = vunpack.c.l.b16 %v7420
    %v7749 = vunpack.c.h.b16 %v7420
    %v7750 = vunpack.c.l.b16 %v7421
    %v7751 = vunpack.c.h.b16 %v7421
    %v7752 = vunpack.c.l.b16 %v7422
    %v7753 = vunpack.c.h.b16 %v7422
    %v7754 = vunpack.c.l.b16 %v7423
    %v7755 = vunpack.c.h.b16 %v7423
    %v7756 = vunpack.c.l.b16 %v7424
    %v7757 = vunpack.c.h.b16 %v7424
    %v7758 = vunpack.c.l.b16 %v7425
    %v7759 = vunpack.c.h.b16 %v7425
    %v7760 = vunpack.c.l.b16 %v7426
    %v7761 = vunpack.c.h.b16 %v7426
    %v7762 = vunpack.c.l.b16 %v7427
    %v7763 = vunpack.c.h.b16 %v7427
    %v7764 = vunpack.c.l.b16 %v7428
    %v7765 = vunpack.c.h.b16 %v7428
    %v7766 = vunpack.c.l.b16 %v7429
    %v7767 = vunpack.c.h.b16 %v7429
    %v7768 = vunpack.c.l.b16 %v7430
    %v7769 = vunpack.c.h.b16 %v7430
    %v7770 = vunpack.c.l.b16 %v7431
    %v7771 = vunpack.c.h.b16 %v7431
    %v7772 = vunpack.c.l.b16 %v7432
    %v7773 = vunpack.c.h.b16 %v7432
    %v7774 = vunpack.c.l.b16 %v7433
    %v7775 = vunpack.c.h.b16 %v7433
    %v7776 = vunpack.c.l.b16 %v7434
    %v7777 = vunpack.c.h.b16 %v7434
    %v7778 = vunpack.c.l.b16 %v7435
    %v7779 = vunpack.c.h.b16 %v7435
    %v7780 = vunpack.c.l.b16 %v7436
    %v7781 = vunpack.c.h.b16 %v7436
    %v7782 = vunpack.c.l.b16 %v7437
    %v7783 = vunpack.c.h.b16 %v7437
    %v7784 = vunpack.c.l.b16 %v7438
    %v7785 = vunpack.c.h.b16 %v7438
    %v7786 = vunpack.c.l.b16 %v7439
    %v7787 = vunpack.c.h.b16 %v7439
    %v7788 = vunpack.c.l.b16 %v7440
    %v7789 = vunpack.c.h.b16 %v7440
    %v7790 = vunpack.c.l.b16 %v7441
    %v7791 = vunpack.c.h.b16 %v7441
    %v7792 = vunpack.c.l.b16 %v7442
    %v7793 = vunpack.c.h.b16 %v7442
    %v7794 = vunpack.c.l.b16 %v7443
    %v7795 = vunpack.c.h.b16 %v7443
    %v7796 = vunpack.c.l.b16 %v7444
    %v7797 = vunpack.c.h.b16 %v7444
    %v7798 = vunpack.c.l.b16 %v7445
    %v7799 = vunpack.c.h.b16 %v7445
    %v7800 = vunpack.c.l.b16 %v7446
    %v7801 = vunpack.c.h.b16 %v7446
    %v7802 = vunpack.c.l.b16 %v7447
    %v7803 = vunpack.c.h.b16 %v7447
    %v7804 = vunpack.c.l.b16 %v7448
    %v7805 = vunpack.c.h.b16 %v7448
    %v7806 = vunpack.c.l.b16 %v7449
    %v7807 = vunpack.c.h.b16 %v7449
    %v7808 = vunpack.c.l.b16 %v7450
    %v7809 = vunpack.c.h.b16 %v7450
    %v7810 = vunpack.c.l.b16 %v7451
    %v7811 = vunpack.c.h.b16 %v7451
    %v7812 = vunpack.c.l.b16 %v7452
    %v7813 = vunpack.c.h.b16 %v7452
    %v7814 = vunpack.c.l.b16 %v7453
    %v7815 = vunpack.c.h.b16 %v7453
    %v7816 = vunpack.c.l.b16 %v7454
    %v7817 = vunpack.c.h.b16 %v7454
    %v7818 = vunpack.c.l.b16 %v7455
    %v7819 = vunpack.c.h.b16 %v7455
    %v7820 = vunpack.c.l.b16 %v7456
    %v7821 = vunpack.c.h.b16 %v7456
    %v7822 = vunpack.c.l.b16 %v7457
    %v7823 = vunpack.c.h.b16 %v7457
    %v7824 = vunpack.c.l.b16 %v7458
    %v7825 = vunpack.c.h.b16 %v7458
    %v7826 = vunpack.c.l.b16 %v7459
    %v7827 = vunpack.c.h.b16 %v7459
    %v7828 = vunpack.c.l.b16 %v7460
    %v7829 = vunpack.c.h.b16 %v7460
    %v7830 = vunpack.c.l.b16 %v7461
    %v7831 = vunpack.c.h.b16 %v7461
    %v7832 = vunpack.c.l.b16 %v7462
    %v7833 = vunpack.c.h.b16 %v7462
    %v7834 = vunpack.c.l.b16 %v7463
    %v7835 = vunpack.c.h.b16 %v7463
    %v7836 = vunpack.c.l.b16 %v7464
    %v7837 = vunpack.c.h.b16 %v7464
    %v7838 = vunpack.c.l.b16 %v7465
    %v7839 = vunpack.c.h.b16 %v7465
    %v7840 = vunpack.c.l.b16 %v7466
    %v7841 = vunpack.c.h.b16 %v7466
    %v7842 = vunpack.c.l.b16 %v7467
    %v7843 = vunpack.c.h.b16 %v7467
    %v7844 = vunpack.c.l.b16 %v7468
    %v7845 = vunpack.c.h.b16 %v7468
    %v7846 = vunpack.c.l.b16 %v7469
    %v7847 = vunpack.c.h.b16 %v7469
    %v7848 = vunpack.c.l.b16 %v7470
    %v7849 = vunpack.c.h.b16 %v7470
    %v7850 = vunpack.c.l.b16 %v7471
    %v7851 = vunpack.c.h.b16 %v7471
    %v7852 = vunpack.c.l.b16 %v7472
    %v7853 = vunpack.c.h.b16 %v7472
    %v7854 = vunpack.c.l.b16 %v7473
    %v7855 = vunpack.c.h.b16 %v7473
    %v7856 = vunpack.c.l.b16 %v7474
    %v7857 = vunpack.c.h.b16 %v7474
    %v7858 = vunpack.c.l.b16 %v7475
    %v7859 = vunpack.c.h.b16 %v7475
    %v7860 = vunpack.c.l.b16 %v7476
    %v7861 = vunpack.c.h.b16 %v7476
    %v7862 = vunpack.c.l.b16 %v7477
    %v7863 = vunpack.c.h.b16 %v7477
    %v7864 = vunpack.c.l.b16 %v7478
    %v7865 = vunpack.c.h.b16 %v7478
    %v7866 = vunpack.c.l.b16 %v7479
    %v7867 = vunpack.c.h.b16 %v7479
    %v7868 = vunpack.c.l.b16 %v7480
    %v7869 = vunpack.c.h.b16 %v7480
    %v7870 = vunpack.c.l.b16 %v7481
    %v7871 = vunpack.c.h.b16 %v7481
    %v7872 = vunpack.c.l.b16 %v7482
    %v7873 = vunpack.c.h.b16 %v7482
    %v7874 = vunpack.c.l.b16 %v7483
    %v7875 = vunpack.c.h.b16 %v7483
    %v7876 = vunpack.c.l.b16 %v7484
    %v7877 = vunpack.c.h.b16 %v7484
    %v7878 = vunpack.c.l.b16 %v7485
    %v7879 = vunpack.c.h.b16 %v7485
    %v7880 = vunpack.c.l.b16 %v7486
    %v7881 = vunpack.c.h.b16 %v7486
    %v7882 = vunpack.c.l.b16 %v7487
    %v7883 = vunpack.c.h.b16 %v7487
    %v7884 = vunpack.c.l.b16 %v7488
    %v7885 = vunpack.c.h.b16 %v7488
    %v7886 = vunpack.c.l.b16 %v7489
    %v7887 = vunpack.c.h.b16 %v7489
    %v7888 = vunpack.c.l.b16 %v7490
    %v7889 = vunpack.c.h.b16 %v7490
    %v7890 = vunpack.c.l.b16 %v7491
    %v7891 = vunpack.c.h.b16 %v7491
    %v7892 = vunpack.c.l.b16 %v7492
    %v7893 = vunpack.c.h.b16 %v7492
    %v7894 = vunpack.c.l.b16 %v7493
    %v7895 = vunpack.c.h.b16 %v7493
    %v7896 = vunpack.c.l.b16 %v7494
    %v7897 = vunpack.c.h.b16 %v7494
    %v7898 = vunpack.c.l.b16 %v7495
    %v7899 = vunpack.c.h.b16 %v7495
    %v7900 = vunpack.c.l.b16 %v7496
    %v7901 = vunpack.c.h.b16 %v7496
    %v7902 = vunpack.c.l.b16 %v7497
    %v7903 = vunpack.c.h.b16 %v7497
    %v7904 = vunpack.c.l.b16 %v7498
    %v7905 = vunpack.c.h.b16 %v7498
    %v7906 = vpack.c.b16 %v7654, %v7650
    %v7907 = vpack.c.b16 %v7655, %v7651
    %v7908 = vpack.c.b16 %v7656, %v7652
    %v7909 = vpack.c.b16 %v7657, %v7653
    %v7910 = vpack.c.b16 %v7662, %v7658
    %v7911 = vpack.c.b16 %v7663, %v7659
    %v7912 = vpack.c.b16 %v7664, %v7660
    %v7913 = vpack.c.b16 %v7665, %v7661
    %v7914 = vpack.c.b16 %v7670, %v7666
    %v7915 = vpack.c.b16 %v7671, %v7667
    %v7916 = vpack.c.b16 %v7672, %v7668
    %v7917 = vpack.c.b16 %v7673, %v7669
    %v7918 = vpack.c.b16 %v7678, %v7674
    %v7919 = vpack.c.b16 %v7679, %v7675
    %v7920 = vpack.c.b16 %v7680, %v7676
    %v7921 = vpack.c.b16 %v7681, %v7677
    %v7922 = vpack.c.b16 %v7686, %v7682
    %v7923 = vpack.c.b16 %v7687, %v7683
    %v7924 = vpack.c.b16 %v7688, %v7684
    %v7925 = vpack.c.b16 %v7689, %v7685
    %v7926 = vpack.c.b16 %v7694, %v7690
    %v7927 = vpack.c.b16 %v7695, %v7691
    %v7928 = vpack.c.b16 %v7696, %v7692
    %v7929 = vpack.c.b16 %v7697, %v7693
    %v7930 = vpack.c.b16 %v7702, %v7698
    %v7931 = vpack.c.b16 %v7703, %v7699
    %v7932 = vpack.c.b16 %v7704, %v7700
    %v7933 = vpack.c.b16 %v7705, %v7701
    %v7934 = vpack.c.b16 %v7710, %v7706
    %v7935 = vpack.c.b16 %v7711, %v7707
    %v7936 = vpack.c.b16 %v7712, %v7708
    %v7937 = vpack.c.b16 %v7713, %v7709
    %v7938 = vpack.c.b16 %v7718, %v7714
    %v7939 = vpack.c.b16 %v7719, %v7715
    %v7940 = vpack.c.b16 %v7720, %v7716
    %v7941 = vpack.c.b16 %v7721, %v7717
    %v7942 = vpack.c.b16 %v7726, %v7722
    %v7943 = vpack.c.b16 %v7727, %v7723
    %v7944 = vpack.c.b16 %v7728, %v7724
    %v7945 = vpack.c.b16 %v7729, %v7725
    %v7946 = vpack.c.b16 %v7734, %v7730
    %v7947 = vpack.c.b16 %v7735, %v7731
    %v7948 = vpack.c.b16 %v7736, %v7732
    %v7949 = vpack.c.b16 %v7737, %v7733
    %v7950 = vpack.c.b16 %v7742, %v7738
    %v7951 = vpack.c.b16 %v7743, %v7739
    %v7952 = vpack.c.b16 %v7744, %v7740
    %v7953 = vpack.c.b16 %v7745, %v7741
    %v7954 = vpack.c.b16 %v7750, %v7746
    %v7955 = vpack.c.b16 %v7751, %v7747
    %v7956 = vpack.c.b16 %v7752, %v7748
    %v7957 = vpack.c.b16 %v7753, %v7749
    %v7958 = vpack.c.b16 %v7758, %v7754
    %v7959 = vpack.c.b16 %v7759, %v7755
    %v7960 = vpack.c.b16 %v7760, %v7756
    %v7961 = vpack.c.b16 %v7761, %v7757
    %v7962 = vpack.c.b16 %v7766, %v7762
    %v7963 = vpack.c.b16 %v7767, %v7763
    %v7964 = vpack.c.b16 %v7768, %v7764
    %v7965 = vpack.c.b16 %v7769, %v7765
    %v7966 = vpack.c.b16 %v7774, %v7770
    %v7967 = vpack.c.b16 %v7775, %v7771
    %v7968 = vpack.c.b16 %v7776, %v7772
    %v7969 = vpack.c.b16 %v7777, %v7773
    %v7970 = vpack.c.b16 %v7782, %v7778
    %v7971 = vpack.c.b16 %v7783, %v7779
    %v7972 = vpack.c.b16 %v7784, %v7780
    %v7973 = vpack.c.b16 %v7785, %v7781
    %v7974 = vpack.c.b16 %v7790, %v7786
    %v7975 = vpack.c.b16 %v7791, %v7787
    %v7976 = vpack.c.b16 %v7792, %v7788
    %v7977 = vpack.c.b16 %v7793, %v7789
    %v7978 = vpack.c.b16 %v7798, %v7794
    %v7979 = vpack.c.b16 %v7799, %v7795
    %v7980 = vpack.c.b16 %v7800, %v7796
    %v7981 = vpack.c.b16 %v7801, %v7797
    %v7982 = vpack.c.b16 %v7806, %v7802
    %v7983 = vpack.c.b16 %v7807, %v7803
    %v7984 = vpack.c.b16 %v7808, %v7804
    %v7985 = vpack.c.b16 %v7809, %v7805
    %v7986 = vpack.c.b16 %v7814, %v7810
    %v7987 = vpack.c.b16 %v7815, %v7811
    %v7988 = vpack.c.b16 %v7816, %v7812
    %v7989 = vpack.c.b16 %v7817, %v7813
    %v7990 = vpack.c.b16 %v7822, %v7818
    %v7991 = vpack.c.b16 %v7823, %v7819
    %v7992 = vpack.c.b16 %v7824, %v7820
    %v7993 = vpack.c.b16 %v7825, %v7821
    %v7994 = vpack.c.b16 %v7830, %v7826
    %v7995 = vpack.c.b16 %v7831, %v7827
    %v7996 = vpack.c.b16 %v7832, %v7828
    %v7997 = vpack.c.b16 %v7833, %v7829
    %v7998 = vpack.c.b16 %v7838, %v7834
    %v7999 = vpack.c.b16 %v7839, %v7835
    %v8000 = vpack.c.b16 %v7840, %v7836
    %v8001 = vpack.c.b16 %v7841, %v7837
    %v8002 = vpack.c.b16 %v7846, %v7842
    %v8003 = vpack.c.b16 %v7847, %v7843
    %v8004 = vpack.c.b16 %v7848, %v7844
    %v8005 = vpack.c.b16 %v7849, %v7845
    %v8006 = vpack.c.b16 %v7854, %v7850
    %v8007 = vpack.c.b16 %v7855, %v7851
    %v8008 = vpack.c.b16 %v7856, %v7852
    %v8009 = vpack.c.b16 %v7857, %v7853
    %v8010 = vpack.c.b16 %v7862, %v7858
    %v8011 = vpack.c.b16 %v7863, %v7859
    %v8012 = vpack.c.b16 %v7864, %v7860
    %v8013 = vpack.c.b16 %v7865, %v7861
    %v8014 = vpack.c.b16 %v7870, %v7866
    %v8015 = vpack.c.b16 %v7871, %v7867
    %v8016 = vpack.c.b16 %v7872, %v7868
    %v8017 = vpack.c.b16 %v7873, %v7869
    %v8018 = vpack.c.b16 %v7878, %v7874
    %v8019 = vpack.c.b16 %v7879, %v7875
    %v8020 = vpack.c.b16 %v7880, %v7876
    %v8021 = vpack.c.b16 %v7881, %v7877
    %v8022 = vpack.c.b16 %v7886, %v7882
    %v8023 = vpack.c.b16 %v7887, %v7883
    %v8024 = vpack.c.b16 %v7888, %v7884
    %v8025 = vpack.c.b16 %v7889, %v7885
    %v8026 = vpack.c.b16 %v7894, %v7890
    %v8027 = vpack.c.b16 %v7895, %v7891
    %v8028 = vpack.c.b16 %v7896, %v7892
    %v8029 = vpack.c.b16 %v7897, %v7893
    %v8030 = vpack.c.b16 %v7902, %v7898
    %v8031 = vpack.c.b16 %v7903, %v7899
    %v8032 = vpack.c.b16 %v7904, %v7900
    %v8033 = vpack.c.b16 %v7905, %v7901
    %8162 = vmatprep.subr.bf16.mxu0 %v7907
    %8163 = vmatpush1.bf16.msra.mxu0 %v7906
    %8164 = vmatprep.subr.bf16.mxu0 %v7911
    %8165 = vmatpush1.bf16.msra.mxu0 %v7910
    %8166 = vmatprep.subr.bf16.mxu0 %v7915
    %8167 = vmatpush1.bf16.msra.mxu0 %v7914
    %8168 = vmatprep.subr.bf16.mxu0 %v7919
    %8169 = vmatpush1.bf16.msra.mxu0 %v7918
    %8170 = vmatprep.subr.bf16.mxu0 %v7923
    %8171 = vmatpush1.bf16.msra.mxu0 %v7922
    %8172 = vmatprep.subr.bf16.mxu0 %v7927
    %8173 = vmatpush1.bf16.msra.mxu0 %v7926
    %8174 = vmatprep.subr.bf16.mxu0 %v7931
    %8175 = vmatpush1.bf16.msra.mxu0 %v7930
    %8176 = vmatprep.subr.bf16.mxu0 %v7935
    %8177 = vmatpush1.bf16.msra.mxu0 %v7934
    %8178 = vmatprep.subr.bf16.mxu0 %v7939
    %8179 = vmatpush1.bf16.msra.mxu0 %v7938
    %8180 = vmatprep.subr.bf16.mxu0 %v7943
    %8181 = vmatpush1.bf16.msra.mxu0 %v7942
    %8182 = vmatprep.subr.bf16.mxu0 %v7947
    %8183 = vmatpush1.bf16.msra.mxu0 %v7946
    %8184 = vmatprep.subr.bf16.mxu0 %v7951
    %8185 = vmatpush1.bf16.msra.mxu0 %v7950
    %8186 = vmatprep.subr.bf16.mxu0 %v7955
    %8187 = vmatpush1.bf16.msra.mxu0 %v7954
    %8188 = vmatprep.subr.bf16.mxu0 %v7959
    %8189 = vmatpush1.bf16.msra.mxu0 %v7958
    %8190 = vmatprep.subr.bf16.mxu0 %v7963
    %8191 = vmatpush1.bf16.msra.mxu0 %v7962
    %8192 = vmatprep.subr.bf16.mxu0 %v7967
    %8193 = vmatpush1.bf16.msra.mxu0 %v7966
    %8194 = vmatprep.mubr.bf16.mxu0 %v7367
    %8195 = vmatmul.mubr.bf16.gmra.mrb[0].mxu0 %v7366
    %v8196 = vpop.f32.mrb[0].mxu0
    %v8197 = vadd.f32 %v7505, %v8196
    %v8198 = vpop.f32.mrb[0].mxu0
    %v8199 = vadd.f32 %v7509, %v8198
    %v8200 = vpop.f32.mrb[0].mxu0
    %v8201 = vpop.f32.mrb[0].mxu0
    %8202 = vdwg.mxu0
    %8203 = vmatprep.subr.bf16.mxu0 %v7971
    %8204 = vmatpush1.bf16.msra.mxu0 %v7970
    %8205 = vmatprep.subr.bf16.mxu0 %v7975
    %8206 = vmatpush1.bf16.msra.mxu0 %v7974
    %8207 = vmatprep.subr.bf16.mxu0 %v7979
    %8208 = vmatpush1.bf16.msra.mxu0 %v7978
    %8209 = vmatprep.subr.bf16.mxu0 %v7983
    %8210 = vmatpush1.bf16.msra.mxu0 %v7982
    %8211 = vmatprep.subr.bf16.mxu0 %v7987
    %8212 = vmatpush1.bf16.msra.mxu0 %v7986
    %8213 = vmatprep.subr.bf16.mxu0 %v7991
    %8214 = vmatpush1.bf16.msra.mxu0 %v7990
    %8215 = vmatprep.subr.bf16.mxu0 %v7995
    %8216 = vmatpush1.bf16.msra.mxu0 %v7994
    %8217 = vmatprep.subr.bf16.mxu0 %v7999
    %8218 = vmatpush1.bf16.msra.mxu0 %v7998
    %8219 = vmatprep.subr.bf16.mxu0 %v8003
    %8220 = vmatpush1.bf16.msra.mxu0 %v8002
    %8221 = vmatprep.subr.bf16.mxu0 %v8007
    %8222 = vmatpush1.bf16.msra.mxu0 %v8006
    %8223 = vmatprep.subr.bf16.mxu0 %v8011
    %8224 = vmatpush1.bf16.msra.mxu0 %v8010
    %8225 = vmatprep.subr.bf16.mxu0 %v8015
    %8226 = vmatpush1.bf16.msra.mxu0 %v8014
    %8227 = vmatprep.subr.bf16.mxu0 %v8019
    %8228 = vmatpush1.bf16.msra.mxu0 %v8018
    %8229 = vmatprep.subr.bf16.mxu0 %v8023
    %8230 = vmatpush1.bf16.msra.mxu0 %v8022
    %8231 = vmatprep.subr.bf16.mxu0 %v8027
    %8232 = vmatpush1.bf16.msra.mxu0 %v8026
    %8233 = vmatprep.subr.bf16.mxu0 %v8031
    %8234 = vmatpush1.bf16.msra.mxu0 %v8030
    %8235 = vmatprep.mubr.bf16.mxu0 %v7369
    %8236 = vmatmul.mubr.bf16.gmra.mrb[0].mxu0 %v7368
    %v8237 = vpop.f32.mrb[0].mxu0
    %v8238 = vadd.f32 %v8197, %v8237
    %v8239 = vpop.f32.mrb[0].mxu0
    %v8240 = vadd.f32 %v8199, %v8239
    %v8241 = vpop.f32.mrb[0].mxu0
    %v8242 = vpop.f32.mrb[0].mxu0
    %8243 = vdwg.mxu0
    %8244 = vmatprep.subr.bf16.mxu0 %v7909
    %8245 = vmatpush1.bf16.msra.mxu0 %v7908
    %8246 = vmatprep.subr.bf16.mxu0 %v7913
    %8247 = vmatpush1.bf16.msra.mxu0 %v7912
    %8248 = vmatprep.subr.bf16.mxu0 %v7917
    %8249 = vmatpush1.bf16.msra.mxu0 %v7916
    %8250 = vmatprep.subr.bf16.mxu0 %v7921
    %8251 = vmatpush1.bf16.msra.mxu0 %v7920
    %8252 = vmatprep.subr.bf16.mxu0 %v7925
    %8253 = vmatpush1.bf16.msra.mxu0 %v7924
    %8254 = vmatprep.subr.bf16.mxu0 %v7929
    %8255 = vmatpush1.bf16.msra.mxu0 %v7928
    %8256 = vmatprep.subr.bf16.mxu0 %v7933
    %8257 = vmatpush1.bf16.msra.mxu0 %v7932
    %8258 = vmatprep.subr.bf16.mxu0 %v7937
    %8259 = vmatpush1.bf16.msra.mxu0 %v7936
    %8260 = vmatprep.subr.bf16.mxu0 %v7941
    %8261 = vmatpush1.bf16.msra.mxu0 %v7940
    %8262 = vmatprep.subr.bf16.mxu0 %v7945
    %8263 = vmatpush1.bf16.msra.mxu0 %v7944
    %8264 = vmatprep.subr.bf16.mxu0 %v7949
    %8265 = vmatpush1.bf16.msra.mxu0 %v7948
    %8266 = vmatprep.subr.bf16.mxu0 %v7953
    %8267 = vmatpush1.bf16.msra.mxu0 %v7952
    %8268 = vmatprep.subr.bf16.mxu0 %v7957
    %8269 = vmatpush1.bf16.msra.mxu0 %v7956
    %8270 = vmatprep.subr.bf16.mxu0 %v7961
    %8271 = vmatpush1.bf16.msra.mxu0 %v7960
    %8272 = vmatprep.subr.bf16.mxu0 %v7965
    %8273 = vmatpush1.bf16.msra.mxu0 %v7964
    %8274 = vmatprep.subr.bf16.mxu0 %v7969
    %8275 = vmatpush1.bf16.msra.mxu0 %v7968
    %8276 = vmatprep.mubr.bf16.mxu0 %v7367
    %8277 = vmatmul.mubr.bf16.gmra.mrb[0].mxu0 %v7366
    %v8278 = vpop.f32.mrb[0].mxu0
    %v8279 = vadd.f32 %v7513, %v8278
    %v8280 = vpop.f32.mrb[0].mxu0
    %v8281 = vadd.f32 %v7517, %v8280
    %v8282 = vpop.f32.mrb[0].mxu0
    %v8283 = vpop.f32.mrb[0].mxu0
    %8284 = vdwg.mxu0
    %8285 = vmatprep.subr.bf16.mxu0 %v7973
    %8286 = vmatpush1.bf16.msra.mxu0 %v7972
    %8287 = vmatprep.subr.bf16.mxu0 %v7977
    %8288 = vmatpush1.bf16.msra.mxu0 %v7976
    %8289 = vmatprep.subr.bf16.mxu0 %v7981
    %8290 = vmatpush1.bf16.msra.mxu0 %v7980
    %8291 = vmatprep.subr.bf16.mxu0 %v7985
    %8292 = vmatpush1.bf16.msra.mxu0 %v7984
    %8293 = vmatprep.subr.bf16.mxu0 %v7989
    %8294 = vmatpush1.bf16.msra.mxu0 %v7988
    %8295 = vmatprep.subr.bf16.mxu0 %v7993
    %8296 = vmatpush1.bf16.msra.mxu0 %v7992
    %8297 = vmatprep.subr.bf16.mxu0 %v7997
    %8298 = vmatpush1.bf16.msra.mxu0 %v7996
    %8299 = vmatprep.subr.bf16.mxu0 %v8001
    %8300 = vmatpush1.bf16.msra.mxu0 %v8000
    %8301 = vmatprep.subr.bf16.mxu0 %v8005
    %8302 = vmatpush1.bf16.msra.mxu0 %v8004
    %8303 = vmatprep.subr.bf16.mxu0 %v8009
    %8304 = vmatpush1.bf16.msra.mxu0 %v8008
    %8305 = vmatprep.subr.bf16.mxu0 %v8013
    %8306 = vmatpush1.bf16.msra.mxu0 %v8012
    %8307 = vmatprep.subr.bf16.mxu0 %v8017
    %8308 = vmatpush1.bf16.msra.mxu0 %v8016
    %8309 = vmatprep.subr.bf16.mxu0 %v8021
    %8310 = vmatpush1.bf16.msra.mxu0 %v8020
    %8311 = vmatprep.subr.bf16.mxu0 %v8025
    %8312 = vmatpush1.bf16.msra.mxu0 %v8024
    %8313 = vmatprep.subr.bf16.mxu0 %v8029
    %8314 = vmatpush1.bf16.msra.mxu0 %v8028
    %8315 = vmatprep.subr.bf16.mxu0 %v8033
    %8316 = vmatpush1.bf16.msra.mxu0 %v8032
    %8317 = vmatprep.mubr.bf16.mxu0 %v7369
    %8318 = vmatmul.mubr.bf16.gmra.mrb[0].mxu0 %v7368
    %v8319 = vpop.f32.mrb[0].mxu0
    %v8320 = vadd.f32 %v8279, %v8319
    %v8321 = vpop.f32.mrb[0].mxu0
    %v8322 = vadd.f32 %v8281, %v8321
    %v8323 = vpop.f32.mrb[0].mxu0
    %v8324 = vpop.f32.mrb[0].mxu0
    %8325 = vdwg.mxu0
    %v8326 = vmax.f32 %v8238, 0.0
    %v8327 = vmax.f32 %v8240, 0.0
    %v8328 = vmax.f32 %v8320, 0.0
    %v8329 = vmax.f32 %v8322, 0.0
    %v8330 = vpack.c.bf16 %v8326, %v8326
    %v8331 = vpack.c.bf16 %v8327, %v8327
    %v8332 = vpack.c.bf16 %v8328, %v8328
    %v8333 = vpack.c.bf16 %v8329, %v8329
    %s8334 = scalar_lea.vmem [#allocation10], 5120
    %v8335 = vld [vmem:[%s8334] sm:$0xff]
    %v8336 = vld [vmem:[%s8334 + $0x8] sm:$0xff]
    %v8337 = vld [vmem:[%s8334 + $0x10] sm:$0xff]
    %v8338 = vld [vmem:[%s8334 + $0x18] sm:$0xff]
    %v8339 = vld [vmem:[%s8334 + $0x20] sm:$0xff]
    %v8340 = vld [vmem:[%s8334 + $0x28] sm:$0xff]
    %v8341 = vld [vmem:[%s8334 + $0x30] sm:$0xff]
    %v8342 = vld [vmem:[%s8334 + $0x38] sm:$0xff]
    %v8343 = vld [vmem:[%s8334 + $0x40] sm:$0xff]
    %v8344 = vld [vmem:[%s8334 + $0x48] sm:$0xff]
    %v8345 = vld [vmem:[%s8334 + $0x50] sm:$0xff]
    %v8346 = vld [vmem:[%s8334 + $0x58] sm:$0xff]
    %v8347 = vld [vmem:[%s8334 + $0x60] sm:$0xff]
    %v8348 = vld [vmem:[%s8334 + $0x68] sm:$0xff]
    %v8349 = vld [vmem:[%s8334 + $0x70] sm:$0xff]
    %v8350 = vld [vmem:[%s8334 + $0x78] sm:$0xff]
    %v8351 = vld [vmem:[%s8334 + $0x80] sm:$0xff]
    %v8352 = vld [vmem:[%s8334 + $0x88] sm:$0xff]
    %v8353 = vld [vmem:[%s8334 + $0x90] sm:$0xff]
    %v8354 = vld [vmem:[%s8334 + $0x98] sm:$0xff]
    %v8355 = vld [vmem:[%s8334 + $0xa0] sm:$0xff]
    %v8356 = vld [vmem:[%s8334 + $0xa8] sm:$0xff]
    %v8357 = vld [vmem:[%s8334 + $0xb0] sm:$0xff]
    %v8358 = vld [vmem:[%s8334 + $0xb8] sm:$0xff]
    %v8359 = vld [vmem:[%s8334 + $0xc0] sm:$0xff]
    %v8360 = vld [vmem:[%s8334 + $0xc8] sm:$0xff]
    %v8361 = vld [vmem:[%s8334 + $0xd0] sm:$0xff]
    %v8362 = vld [vmem:[%s8334 + $0xd8] sm:$0xff]
    %v8363 = vld [vmem:[%s8334 + $0xe0] sm:$0xff]
    %v8364 = vld [vmem:[%s8334 + $0xe8] sm:$0xff]
    %v8365 = vld [vmem:[%s8334 + $0xf0] sm:$0xff]
    %v8366 = vld [vmem:[%s8334 + $0xf8] sm:$0xff]
    %v8367 = vld [vmem:[%s8334 + $0x100] sm:$0xff]
    %v8368 = vld [vmem:[%s8334 + $0x108] sm:$0xff]
    %v8369 = vld [vmem:[%s8334 + $0x110] sm:$0xff]
    %v8370 = vld [vmem:[%s8334 + $0x118] sm:$0xff]
    %v8371 = vld [vmem:[%s8334 + $0x120] sm:$0xff]
    %v8372 = vld [vmem:[%s8334 + $0x128] sm:$0xff]
    %v8373 = vld [vmem:[%s8334 + $0x130] sm:$0xff]
    %v8374 = vld [vmem:[%s8334 + $0x138] sm:$0xff]
    %v8375 = vld [vmem:[%s8334 + $0x140] sm:$0xff]
    %v8376 = vld [vmem:[%s8334 + $0x148] sm:$0xff]
    %v8377 = vld [vmem:[%s8334 + $0x150] sm:$0xff]
    %v8378 = vld [vmem:[%s8334 + $0x158] sm:$0xff]
    %v8379 = vld [vmem:[%s8334 + $0x160] sm:$0xff]
    %v8380 = vld [vmem:[%s8334 + $0x168] sm:$0xff]
    %v8381 = vld [vmem:[%s8334 + $0x170] sm:$0xff]
    %v8382 = vld [vmem:[%s8334 + $0x178] sm:$0xff]
    %v8383 = vld [vmem:[%s8334 + $0x180] sm:$0xff]
    %v8384 = vld [vmem:[%s8334 + $0x188] sm:$0xff]
    %v8385 = vld [vmem:[%s8334 + $0x190] sm:$0xff]
    %v8386 = vld [vmem:[%s8334 + $0x198] sm:$0xff]
    %v8387 = vld [vmem:[%s8334 + $0x1a0] sm:$0xff]
    %v8388 = vld [vmem:[%s8334 + $0x1a8] sm:$0xff]
    %v8389 = vld [vmem:[%s8334 + $0x1b0] sm:$0xff]
    %v8390 = vld [vmem:[%s8334 + $0x1b8] sm:$0xff]
    %v8391 = vld [vmem:[%s8334 + $0x1c0] sm:$0xff]
    %v8392 = vld [vmem:[%s8334 + $0x1c8] sm:$0xff]
    %v8393 = vld [vmem:[%s8334 + $0x1d0] sm:$0xff]
    %v8394 = vld [vmem:[%s8334 + $0x1d8] sm:$0xff]
    %v8395 = vld [vmem:[%s8334 + $0x1e0] sm:$0xff]
    %v8396 = vld [vmem:[%s8334 + $0x1e8] sm:$0xff]
    %v8397 = vld [vmem:[%s8334 + $0x1f0] sm:$0xff]
    %v8398 = vld [vmem:[%s8334 + $0x1f8] sm:$0xff]
    %v8399 = vld [vmem:[%s8334 + $0x200] sm:$0xff]
    %v8400 = vld [vmem:[%s8334 + $0x208] sm:$0xff]
    %v8401 = vld [vmem:[%s8334 + $0x210] sm:$0xff]
    %v8402 = vld [vmem:[%s8334 + $0x218] sm:$0xff]
    %v8403 = vld [vmem:[%s8334 + $0x220] sm:$0xff]
    %v8404 = vld [vmem:[%s8334 + $0x228] sm:$0xff]
    %v8405 = vld [vmem:[%s8334 + $0x230] sm:$0xff]
    %v8406 = vld [vmem:[%s8334 + $0x238] sm:$0xff]
    %v8407 = vld [vmem:[%s8334 + $0x240] sm:$0xff]
    %v8408 = vld [vmem:[%s8334 + $0x248] sm:$0xff]
    %v8409 = vld [vmem:[%s8334 + $0x250] sm:$0xff]
    %v8410 = vld [vmem:[%s8334 + $0x258] sm:$0xff]
    %v8411 = vld [vmem:[%s8334 + $0x260] sm:$0xff]
    %v8412 = vld [vmem:[%s8334 + $0x268] sm:$0xff]
    %v8413 = vld [vmem:[%s8334 + $0x270] sm:$0xff]
    %v8414 = vld [vmem:[%s8334 + $0x278] sm:$0xff]
    %v8415 = vld [vmem:[%s8334 + $0x280] sm:$0xff]
    %v8416 = vld [vmem:[%s8334 + $0x288] sm:$0xff]
    %v8417 = vld [vmem:[%s8334 + $0x290] sm:$0xff]
    %v8418 = vld [vmem:[%s8334 + $0x298] sm:$0xff]
    %v8419 = vld [vmem:[%s8334 + $0x2a0] sm:$0xff]
    %v8420 = vld [vmem:[%s8334 + $0x2a8] sm:$0xff]
    %v8421 = vld [vmem:[%s8334 + $0x2b0] sm:$0xff]
    %v8422 = vld [vmem:[%s8334 + $0x2b8] sm:$0xff]
    %v8423 = vld [vmem:[%s8334 + $0x2c0] sm:$0xff]
    %v8424 = vld [vmem:[%s8334 + $0x2c8] sm:$0xff]
    %v8425 = vld [vmem:[%s8334 + $0x2d0] sm:$0xff]
    %v8426 = vld [vmem:[%s8334 + $0x2d8] sm:$0xff]
    %v8427 = vld [vmem:[%s8334 + $0x2e0] sm:$0xff]
    %v8428 = vld [vmem:[%s8334 + $0x2e8] sm:$0xff]
    %v8429 = vld [vmem:[%s8334 + $0x2f0] sm:$0xff]
    %v8430 = vld [vmem:[%s8334 + $0x2f8] sm:$0xff]
    %v8431 = vld [vmem:[%s8334 + $0x300] sm:$0xff]
    %v8432 = vld [vmem:[%s8334 + $0x308] sm:$0xff]
    %v8433 = vld [vmem:[%s8334 + $0x310] sm:$0xff]
    %v8434 = vld [vmem:[%s8334 + $0x318] sm:$0xff]
    %v8435 = vld [vmem:[%s8334 + $0x320] sm:$0xff]
    %v8436 = vld [vmem:[%s8334 + $0x328] sm:$0xff]
    %v8437 = vld [vmem:[%s8334 + $0x330] sm:$0xff]
    %v8438 = vld [vmem:[%s8334 + $0x338] sm:$0xff]
    %v8439 = vld [vmem:[%s8334 + $0x340] sm:$0xff]
    %v8440 = vld [vmem:[%s8334 + $0x348] sm:$0xff]
    %v8441 = vld [vmem:[%s8334 + $0x350] sm:$0xff]
    %v8442 = vld [vmem:[%s8334 + $0x358] sm:$0xff]
    %v8443 = vld [vmem:[%s8334 + $0x360] sm:$0xff]
    %v8444 = vld [vmem:[%s8334 + $0x368] sm:$0xff]
    %v8445 = vld [vmem:[%s8334 + $0x370] sm:$0xff]
    %v8446 = vld [vmem:[%s8334 + $0x378] sm:$0xff]
    %v8447 = vld [vmem:[%s8334 + $0x380] sm:$0xff]
    %v8448 = vld [vmem:[%s8334 + $0x388] sm:$0xff]
    %v8449 = vld [vmem:[%s8334 + $0x390] sm:$0xff]
    %v8450 = vld [vmem:[%s8334 + $0x398] sm:$0xff]
    %v8451 = vld [vmem:[%s8334 + $0x3a0] sm:$0xff]
    %v8452 = vld [vmem:[%s8334 + $0x3a8] sm:$0xff]
    %v8453 = vld [vmem:[%s8334 + $0x3b0] sm:$0xff]
    %v8454 = vld [vmem:[%s8334 + $0x3b8] sm:$0xff]
    %v8455 = vld [vmem:[%s8334 + $0x3c0] sm:$0xff]
    %v8456 = vld [vmem:[%s8334 + $0x3c8] sm:$0xff]
    %v8457 = vld [vmem:[%s8334 + $0x3d0] sm:$0xff]
    %v8458 = vld [vmem:[%s8334 + $0x3d8] sm:$0xff]
    %v8459 = vld [vmem:[%s8334 + $0x3e0] sm:$0xff]
    %v8460 = vld [vmem:[%s8334 + $0x3e8] sm:$0xff]
    %v8461 = vld [vmem:[%s8334 + $0x3f0] sm:$0xff]
    %v8462 = vld [vmem:[%s8334 + $0x3f8] sm:$0xff]
    %s8463 = scalar_lea.vmem [#allocation12], 20
    %v8464 = vld [vmem:[%s8463] sm:$0xf]
    %v8466 = vlaneseq
    %v8467 = vshrl.u32 %v8466, 7
    %v8468 = vsub.s32 0, %v8467
    %v8469 = vrot.slane %v8464, %v8468
    %v8470 = vlaneseq
    %v8471 = vshrl.u32 %v8470, 7
    %v8472 = vsub.s32 1, %v8471
    %v8473 = vrot.slane %v8464, %v8472
    %v8474 = vlaneseq
    %v8475 = vshrl.u32 %v8474, 7
    %v8476 = vsub.s32 2, %v8475
    %v8477 = vrot.slane %v8464, %v8476
    %v8478 = vlaneseq
    %v8479 = vshrl.u32 %v8478, 7
    %v8480 = vsub.s32 3, %v8479
    %v8481 = vrot.slane %v8464, %v8480
    %v8614 = vunpack.c.l.b16 %v8335
    %v8615 = vunpack.c.h.b16 %v8335
    %v8616 = vunpack.c.l.b16 %v8336
    %v8617 = vunpack.c.h.b16 %v8336
    %v8618 = vunpack.c.l.b16 %v8337
    %v8619 = vunpack.c.h.b16 %v8337
    %v8620 = vunpack.c.l.b16 %v8338
    %v8621 = vunpack.c.h.b16 %v8338
    %v8622 = vunpack.c.l.b16 %v8339
    %v8623 = vunpack.c.h.b16 %v8339
    %v8624 = vunpack.c.l.b16 %v8340
    %v8625 = vunpack.c.h.b16 %v8340
    %v8626 = vunpack.c.l.b16 %v8341
    %v8627 = vunpack.c.h.b16 %v8341
    %v8628 = vunpack.c.l.b16 %v8342
    %v8629 = vunpack.c.h.b16 %v8342
    %v8630 = vunpack.c.l.b16 %v8343
    %v8631 = vunpack.c.h.b16 %v8343
    %v8632 = vunpack.c.l.b16 %v8344
    %v8633 = vunpack.c.h.b16 %v8344
    %v8634 = vunpack.c.l.b16 %v8345
    %v8635 = vunpack.c.h.b16 %v8345
    %v8636 = vunpack.c.l.b16 %v8346
    %v8637 = vunpack.c.h.b16 %v8346
    %v8638 = vunpack.c.l.b16 %v8347
    %v8639 = vunpack.c.h.b16 %v8347
    %v8640 = vunpack.c.l.b16 %v8348
    %v8641 = vunpack.c.h.b16 %v8348
    %v8642 = vunpack.c.l.b16 %v8349
    %v8643 = vunpack.c.h.b16 %v8349
    %v8644 = vunpack.c.l.b16 %v8350
    %v8645 = vunpack.c.h.b16 %v8350
    %v8646 = vunpack.c.l.b16 %v8351
    %v8647 = vunpack.c.h.b16 %v8351
    %v8648 = vunpack.c.l.b16 %v8352
    %v8649 = vunpack.c.h.b16 %v8352
    %v8650 = vunpack.c.l.b16 %v8353
    %v8651 = vunpack.c.h.b16 %v8353
    %v8652 = vunpack.c.l.b16 %v8354
    %v8653 = vunpack.c.h.b16 %v8354
    %v8654 = vunpack.c.l.b16 %v8355
    %v8655 = vunpack.c.h.b16 %v8355
    %v8656 = vunpack.c.l.b16 %v8356
    %v8657 = vunpack.c.h.b16 %v8356
    %v8658 = vunpack.c.l.b16 %v8357
    %v8659 = vunpack.c.h.b16 %v8357
    %v8660 = vunpack.c.l.b16 %v8358
    %v8661 = vunpack.c.h.b16 %v8358
    %v8662 = vunpack.c.l.b16 %v8359
    %v8663 = vunpack.c.h.b16 %v8359
    %v8664 = vunpack.c.l.b16 %v8360
    %v8665 = vunpack.c.h.b16 %v8360
    %v8666 = vunpack.c.l.b16 %v8361
    %v8667 = vunpack.c.h.b16 %v8361
    %v8668 = vunpack.c.l.b16 %v8362
    %v8669 = vunpack.c.h.b16 %v8362
    %v8670 = vunpack.c.l.b16 %v8363
    %v8671 = vunpack.c.h.b16 %v8363
    %v8672 = vunpack.c.l.b16 %v8364
    %v8673 = vunpack.c.h.b16 %v8364
    %v8674 = vunpack.c.l.b16 %v8365
    %v8675 = vunpack.c.h.b16 %v8365
    %v8676 = vunpack.c.l.b16 %v8366
    %v8677 = vunpack.c.h.b16 %v8366
    %v8678 = vunpack.c.l.b16 %v8367
    %v8679 = vunpack.c.h.b16 %v8367
    %v8680 = vunpack.c.l.b16 %v8368
    %v8681 = vunpack.c.h.b16 %v8368
    %v8682 = vunpack.c.l.b16 %v8369
    %v8683 = vunpack.c.h.b16 %v8369
    %v8684 = vunpack.c.l.b16 %v8370
    %v8685 = vunpack.c.h.b16 %v8370
    %v8686 = vunpack.c.l.b16 %v8371
    %v8687 = vunpack.c.h.b16 %v8371
    %v8688 = vunpack.c.l.b16 %v8372
    %v8689 = vunpack.c.h.b16 %v8372
    %v8690 = vunpack.c.l.b16 %v8373
    %v8691 = vunpack.c.h.b16 %v8373
    %v8692 = vunpack.c.l.b16 %v8374
    %v8693 = vunpack.c.h.b16 %v8374
    %v8694 = vunpack.c.l.b16 %v8375
    %v8695 = vunpack.c.h.b16 %v8375
    %v8696 = vunpack.c.l.b16 %v8376
    %v8697 = vunpack.c.h.b16 %v8376
    %v8698 = vunpack.c.l.b16 %v8377
    %v8699 = vunpack.c.h.b16 %v8377
    %v8700 = vunpack.c.l.b16 %v8378
    %v8701 = vunpack.c.h.b16 %v8378
    %v8702 = vunpack.c.l.b16 %v8379
    %v8703 = vunpack.c.h.b16 %v8379
    %v8704 = vunpack.c.l.b16 %v8380
    %v8705 = vunpack.c.h.b16 %v8380
    %v8706 = vunpack.c.l.b16 %v8381
    %v8707 = vunpack.c.h.b16 %v8381
    %v8708 = vunpack.c.l.b16 %v8382
    %v8709 = vunpack.c.h.b16 %v8382
    %v8710 = vunpack.c.l.b16 %v8383
    %v8711 = vunpack.c.h.b16 %v8383
    %v8712 = vunpack.c.l.b16 %v8384
    %v8713 = vunpack.c.h.b16 %v8384
    %v8714 = vunpack.c.l.b16 %v8385
    %v8715 = vunpack.c.h.b16 %v8385
    %v8716 = vunpack.c.l.b16 %v8386
    %v8717 = vunpack.c.h.b16 %v8386
    %v8718 = vunpack.c.l.b16 %v8387
    %v8719 = vunpack.c.h.b16 %v8387
    %v8720 = vunpack.c.l.b16 %v8388
    %v8721 = vunpack.c.h.b16 %v8388
    %v8722 = vunpack.c.l.b16 %v8389
    %v8723 = vunpack.c.h.b16 %v8389
    %v8724 = vunpack.c.l.b16 %v8390
    %v8725 = vunpack.c.h.b16 %v8390
    %v8726 = vunpack.c.l.b16 %v8391
    %v8727 = vunpack.c.h.b16 %v8391
    %v8728 = vunpack.c.l.b16 %v8392
    %v8729 = vunpack.c.h.b16 %v8392
    %v8730 = vunpack.c.l.b16 %v8393
    %v8731 = vunpack.c.h.b16 %v8393
    %v8732 = vunpack.c.l.b16 %v8394
    %v8733 = vunpack.c.h.b16 %v8394
    %v8734 = vunpack.c.l.b16 %v8395
    %v8735 = vunpack.c.h.b16 %v8395
    %v8736 = vunpack.c.l.b16 %v8396
    %v8737 = vunpack.c.h.b16 %v8396
    %v8738 = vunpack.c.l.b16 %v8397
    %v8739 = vunpack.c.h.b16 %v8397
    %v8740 = vunpack.c.l.b16 %v8398
    %v8741 = vunpack.c.h.b16 %v8398
    %v8742 = vunpack.c.l.b16 %v8399
    %v8743 = vunpack.c.h.b16 %v8399
    %v8744 = vunpack.c.l.b16 %v8400
    %v8745 = vunpack.c.h.b16 %v8400
    %v8746 = vunpack.c.l.b16 %v8401
    %v8747 = vunpack.c.h.b16 %v8401
    %v8748 = vunpack.c.l.b16 %v8402
    %v8749 = vunpack.c.h.b16 %v8402
    %v8750 = vunpack.c.l.b16 %v8403
    %v8751 = vunpack.c.h.b16 %v8403
    %v8752 = vunpack.c.l.b16 %v8404
    %v8753 = vunpack.c.h.b16 %v8404
    %v8754 = vunpack.c.l.b16 %v8405
    %v8755 = vunpack.c.h.b16 %v8405
    %v8756 = vunpack.c.l.b16 %v8406
    %v8757 = vunpack.c.h.b16 %v8406
    %v8758 = vunpack.c.l.b16 %v8407
    %v8759 = vunpack.c.h.b16 %v8407
    %v8760 = vunpack.c.l.b16 %v8408
    %v8761 = vunpack.c.h.b16 %v8408
    %v8762 = vunpack.c.l.b16 %v8409
    %v8763 = vunpack.c.h.b16 %v8409
    %v8764 = vunpack.c.l.b16 %v8410
    %v8765 = vunpack.c.h.b16 %v8410
    %v8766 = vunpack.c.l.b16 %v8411
    %v8767 = vunpack.c.h.b16 %v8411
    %v8768 = vunpack.c.l.b16 %v8412
    %v8769 = vunpack.c.h.b16 %v8412
    %v8770 = vunpack.c.l.b16 %v8413
    %v8771 = vunpack.c.h.b16 %v8413
    %v8772 = vunpack.c.l.b16 %v8414
    %v8773 = vunpack.c.h.b16 %v8414
    %v8774 = vunpack.c.l.b16 %v8415
    %v8775 = vunpack.c.h.b16 %v8415
    %v8776 = vunpack.c.l.b16 %v8416
    %v8777 = vunpack.c.h.b16 %v8416
    %v8778 = vunpack.c.l.b16 %v8417
    %v8779 = vunpack.c.h.b16 %v8417
    %v8780 = vunpack.c.l.b16 %v8418
    %v8781 = vunpack.c.h.b16 %v8418
    %v8782 = vunpack.c.l.b16 %v8419
    %v8783 = vunpack.c.h.b16 %v8419
    %v8784 = vunpack.c.l.b16 %v8420
    %v8785 = vunpack.c.h.b16 %v8420
    %v8786 = vunpack.c.l.b16 %v8421
    %v8787 = vunpack.c.h.b16 %v8421
    %v8788 = vunpack.c.l.b16 %v8422
    %v8789 = vunpack.c.h.b16 %v8422
    %v8790 = vunpack.c.l.b16 %v8423
    %v8791 = vunpack.c.h.b16 %v8423
    %v8792 = vunpack.c.l.b16 %v8424
    %v8793 = vunpack.c.h.b16 %v8424
    %v8794 = vunpack.c.l.b16 %v8425
    %v8795 = vunpack.c.h.b16 %v8425
    %v8796 = vunpack.c.l.b16 %v8426
    %v8797 = vunpack.c.h.b16 %v8426
    %v8798 = vunpack.c.l.b16 %v8427
    %v8799 = vunpack.c.h.b16 %v8427
    %v8800 = vunpack.c.l.b16 %v8428
    %v8801 = vunpack.c.h.b16 %v8428
    %v8802 = vunpack.c.l.b16 %v8429
    %v8803 = vunpack.c.h.b16 %v8429
    %v8804 = vunpack.c.l.b16 %v8430
    %v8805 = vunpack.c.h.b16 %v8430
    %v8806 = vunpack.c.l.b16 %v8431
    %v8807 = vunpack.c.h.b16 %v8431
    %v8808 = vunpack.c.l.b16 %v8432
    %v8809 = vunpack.c.h.b16 %v8432
    %v8810 = vunpack.c.l.b16 %v8433
    %v8811 = vunpack.c.h.b16 %v8433
    %v8812 = vunpack.c.l.b16 %v8434
    %v8813 = vunpack.c.h.b16 %v8434
    %v8814 = vunpack.c.l.b16 %v8435
    %v8815 = vunpack.c.h.b16 %v8435
    %v8816 = vunpack.c.l.b16 %v8436
    %v8817 = vunpack.c.h.b16 %v8436
    %v8818 = vunpack.c.l.b16 %v8437
    %v8819 = vunpack.c.h.b16 %v8437
    %v8820 = vunpack.c.l.b16 %v8438
    %v8821 = vunpack.c.h.b16 %v8438
    %v8822 = vunpack.c.l.b16 %v8439
    %v8823 = vunpack.c.h.b16 %v8439
    %v8824 = vunpack.c.l.b16 %v8440
    %v8825 = vunpack.c.h.b16 %v8440
    %v8826 = vunpack.c.l.b16 %v8441
    %v8827 = vunpack.c.h.b16 %v8441
    %v8828 = vunpack.c.l.b16 %v8442
    %v8829 = vunpack.c.h.b16 %v8442
    %v8830 = vunpack.c.l.b16 %v8443
    %v8831 = vunpack.c.h.b16 %v8443
    %v8832 = vunpack.c.l.b16 %v8444
    %v8833 = vunpack.c.h.b16 %v8444
    %v8834 = vunpack.c.l.b16 %v8445
    %v8835 = vunpack.c.h.b16 %v8445
    %v8836 = vunpack.c.l.b16 %v8446
    %v8837 = vunpack.c.h.b16 %v8446
    %v8838 = vunpack.c.l.b16 %v8447
    %v8839 = vunpack.c.h.b16 %v8447
    %v8840 = vunpack.c.l.b16 %v8448
    %v8841 = vunpack.c.h.b16 %v8448
    %v8842 = vunpack.c.l.b16 %v8449
    %v8843 = vunpack.c.h.b16 %v8449
    %v8844 = vunpack.c.l.b16 %v8450
    %v8845 = vunpack.c.h.b16 %v8450
    %v8846 = vunpack.c.l.b16 %v8451
    %v8847 = vunpack.c.h.b16 %v8451
    %v8848 = vunpack.c.l.b16 %v8452
    %v8849 = vunpack.c.h.b16 %v8452
    %v8850 = vunpack.c.l.b16 %v8453
    %v8851 = vunpack.c.h.b16 %v8453
    %v8852 = vunpack.c.l.b16 %v8454
    %v8853 = vunpack.c.h.b16 %v8454
    %v8854 = vunpack.c.l.b16 %v8455
    %v8855 = vunpack.c.h.b16 %v8455
    %v8856 = vunpack.c.l.b16 %v8456
    %v8857 = vunpack.c.h.b16 %v8456
    %v8858 = vunpack.c.l.b16 %v8457
    %v8859 = vunpack.c.h.b16 %v8457
    %v8860 = vunpack.c.l.b16 %v8458
    %v8861 = vunpack.c.h.b16 %v8458
    %v8862 = vunpack.c.l.b16 %v8459
    %v8863 = vunpack.c.h.b16 %v8459
    %v8864 = vunpack.c.l.b16 %v8460
    %v8865 = vunpack.c.h.b16 %v8460
    %v8866 = vunpack.c.l.b16 %v8461
    %v8867 = vunpack.c.h.b16 %v8461
    %v8868 = vunpack.c.l.b16 %v8462
    %v8869 = vunpack.c.h.b16 %v8462
    %v8870 = vpack.c.b16 %v8618, %v8614
    %v8871 = vpack.c.b16 %v8619, %v8615
    %v8872 = vpack.c.b16 %v8620, %v8616
    %v8873 = vpack.c.b16 %v8621, %v8617
    %v8874 = vpack.c.b16 %v8626, %v8622
    %v8875 = vpack.c.b16 %v8627, %v8623
    %v8876 = vpack.c.b16 %v8628, %v8624
    %v8877 = vpack.c.b16 %v8629, %v8625
    %v8878 = vpack.c.b16 %v8634, %v8630
    %v8879 = vpack.c.b16 %v8635, %v8631
    %v8880 = vpack.c.b16 %v8636, %v8632
    %v8881 = vpack.c.b16 %v8637, %v8633
    %v8882 = vpack.c.b16 %v8642, %v8638
    %v8883 = vpack.c.b16 %v8643, %v8639
    %v8884 = vpack.c.b16 %v8644, %v8640
    %v8885 = vpack.c.b16 %v8645, %v8641
    %v8886 = vpack.c.b16 %v8650, %v8646
    %v8887 = vpack.c.b16 %v8651, %v8647
    %v8888 = vpack.c.b16 %v8652, %v8648
    %v8889 = vpack.c.b16 %v8653, %v8649
    %v8890 = vpack.c.b16 %v8658, %v8654
    %v8891 = vpack.c.b16 %v8659, %v8655
    %v8892 = vpack.c.b16 %v8660, %v8656
    %v8893 = vpack.c.b16 %v8661, %v8657
    %v8894 = vpack.c.b16 %v8666, %v8662
    %v8895 = vpack.c.b16 %v8667, %v8663
    %v8896 = vpack.c.b16 %v8668, %v8664
    %v8897 = vpack.c.b16 %v8669, %v8665
    %v8898 = vpack.c.b16 %v8674, %v8670
    %v8899 = vpack.c.b16 %v8675, %v8671
    %v8900 = vpack.c.b16 %v8676, %v8672
    %v8901 = vpack.c.b16 %v8677, %v8673
    %v8902 = vpack.c.b16 %v8682, %v8678
    %v8903 = vpack.c.b16 %v8683, %v8679
    %v8904 = vpack.c.b16 %v8684, %v8680
    %v8905 = vpack.c.b16 %v8685, %v8681
    %v8906 = vpack.c.b16 %v8690, %v8686
    %v8907 = vpack.c.b16 %v8691, %v8687
    %v8908 = vpack.c.b16 %v8692, %v8688
    %v8909 = vpack.c.b16 %v8693, %v8689
    %v8910 = vpack.c.b16 %v8698, %v8694
    %v8911 = vpack.c.b16 %v8699, %v8695
    %v8912 = vpack.c.b16 %v8700, %v8696
    %v8913 = vpack.c.b16 %v8701, %v8697
    %v8914 = vpack.c.b16 %v8706, %v8702
    %v8915 = vpack.c.b16 %v8707, %v8703
    %v8916 = vpack.c.b16 %v8708, %v8704
    %v8917 = vpack.c.b16 %v8709, %v8705
    %v8918 = vpack.c.b16 %v8714, %v8710
    %v8919 = vpack.c.b16 %v8715, %v8711
    %v8920 = vpack.c.b16 %v8716, %v8712
    %v8921 = vpack.c.b16 %v8717, %v8713
    %v8922 = vpack.c.b16 %v8722, %v8718
    %v8923 = vpack.c.b16 %v8723, %v8719
    %v8924 = vpack.c.b16 %v8724, %v8720
    %v8925 = vpack.c.b16 %v8725, %v8721
    %v8926 = vpack.c.b16 %v8730, %v8726
    %v8927 = vpack.c.b16 %v8731, %v8727
    %v8928 = vpack.c.b16 %v8732, %v8728
    %v8929 = vpack.c.b16 %v8733, %v8729
    %v8930 = vpack.c.b16 %v8738, %v8734
    %v8931 = vpack.c.b16 %v8739, %v8735
    %v8932 = vpack.c.b16 %v8740, %v8736
    %v8933 = vpack.c.b16 %v8741, %v8737
    %v8934 = vpack.c.b16 %v8746, %v8742
    %v8935 = vpack.c.b16 %v8747, %v8743
    %v8936 = vpack.c.b16 %v8748, %v8744
    %v8937 = vpack.c.b16 %v8749, %v8745
    %v8938 = vpack.c.b16 %v8754, %v8750
    %v8939 = vpack.c.b16 %v8755, %v8751
    %v8940 = vpack.c.b16 %v8756, %v8752
    %v8941 = vpack.c.b16 %v8757, %v8753
    %v8942 = vpack.c.b16 %v8762, %v8758
    %v8943 = vpack.c.b16 %v8763, %v8759
    %v8944 = vpack.c.b16 %v8764, %v8760
    %v8945 = vpack.c.b16 %v8765, %v8761
    %v8946 = vpack.c.b16 %v8770, %v8766
    %v8947 = vpack.c.b16 %v8771, %v8767
    %v8948 = vpack.c.b16 %v8772, %v8768
    %v8949 = vpack.c.b16 %v8773, %v8769
    %v8950 = vpack.c.b16 %v8778, %v8774
    %v8951 = vpack.c.b16 %v8779, %v8775
    %v8952 = vpack.c.b16 %v8780, %v8776
    %v8953 = vpack.c.b16 %v8781, %v8777
    %v8954 = vpack.c.b16 %v8786, %v8782
    %v8955 = vpack.c.b16 %v8787, %v8783
    %v8956 = vpack.c.b16 %v8788, %v8784
    %v8957 = vpack.c.b16 %v8789, %v8785
    %v8958 = vpack.c.b16 %v8794, %v8790
    %v8959 = vpack.c.b16 %v8795, %v8791
    %v8960 = vpack.c.b16 %v8796, %v8792
    %v8961 = vpack.c.b16 %v8797, %v8793
    %v8962 = vpack.c.b16 %v8802, %v8798
    %v8963 = vpack.c.b16 %v8803, %v8799
    %v8964 = vpack.c.b16 %v8804, %v8800
    %v8965 = vpack.c.b16 %v8805, %v8801
    %v8966 = vpack.c.b16 %v8810, %v8806
    %v8967 = vpack.c.b16 %v8811, %v8807
    %v8968 = vpack.c.b16 %v8812, %v8808
    %v8969 = vpack.c.b16 %v8813, %v8809
    %v8970 = vpack.c.b16 %v8818, %v8814
    %v8971 = vpack.c.b16 %v8819, %v8815
    %v8972 = vpack.c.b16 %v8820, %v8816
    %v8973 = vpack.c.b16 %v8821, %v8817
    %v8974 = vpack.c.b16 %v8826, %v8822
    %v8975 = vpack.c.b16 %v8827, %v8823
    %v8976 = vpack.c.b16 %v8828, %v8824
    %v8977 = vpack.c.b16 %v8829, %v8825
    %v8978 = vpack.c.b16 %v8834, %v8830
    %v8979 = vpack.c.b16 %v8835, %v8831
    %v8980 = vpack.c.b16 %v8836, %v8832
    %v8981 = vpack.c.b16 %v8837, %v8833
    %v8982 = vpack.c.b16 %v8842, %v8838
    %v8983 = vpack.c.b16 %v8843, %v8839
    %v8984 = vpack.c.b16 %v8844, %v8840
    %v8985 = vpack.c.b16 %v8845, %v8841
    %v8986 = vpack.c.b16 %v8850, %v8846
    %v8987 = vpack.c.b16 %v8851, %v8847
    %v8988 = vpack.c.b16 %v8852, %v8848
    %v8989 = vpack.c.b16 %v8853, %v8849
    %v8990 = vpack.c.b16 %v8858, %v8854
    %v8991 = vpack.c.b16 %v8859, %v8855
    %v8992 = vpack.c.b16 %v8860, %v8856
    %v8993 = vpack.c.b16 %v8861, %v8857
    %v8994 = vpack.c.b16 %v8866, %v8862
    %v8995 = vpack.c.b16 %v8867, %v8863
    %v8996 = vpack.c.b16 %v8868, %v8864
    %v8997 = vpack.c.b16 %v8869, %v8865
    %9126 = vmatprep.subr.bf16.mxu0 %v8871
    %9127 = vmatpush1.bf16.msra.mxu0 %v8870
    %9128 = vmatprep.subr.bf16.mxu0 %v8875
    %9129 = vmatpush1.bf16.msra.mxu0 %v8874
    %9130 = vmatprep.subr.bf16.mxu0 %v8879
    %9131 = vmatpush1.bf16.msra.mxu0 %v8878
    %9132 = vmatprep.subr.bf16.mxu0 %v8883
    %9133 = vmatpush1.bf16.msra.mxu0 %v8882
    %9134 = vmatprep.subr.bf16.mxu0 %v8887
    %9135 = vmatpush1.bf16.msra.mxu0 %v8886
    %9136 = vmatprep.subr.bf16.mxu0 %v8891
    %9137 = vmatpush1.bf16.msra.mxu0 %v8890
    %9138 = vmatprep.subr.bf16.mxu0 %v8895
    %9139 = vmatpush1.bf16.msra.mxu0 %v8894
    %9140 = vmatprep.subr.bf16.mxu0 %v8899
    %9141 = vmatpush1.bf16.msra.mxu0 %v8898
    %9142 = vmatprep.subr.bf16.mxu0 %v8903
    %9143 = vmatpush1.bf16.msra.mxu0 %v8902
    %9144 = vmatprep.subr.bf16.mxu0 %v8907
    %9145 = vmatpush1.bf16.msra.mxu0 %v8906
    %9146 = vmatprep.subr.bf16.mxu0 %v8911
    %9147 = vmatpush1.bf16.msra.mxu0 %v8910
    %9148 = vmatprep.subr.bf16.mxu0 %v8915
    %9149 = vmatpush1.bf16.msra.mxu0 %v8914
    %9150 = vmatprep.subr.bf16.mxu0 %v8919
    %9151 = vmatpush1.bf16.msra.mxu0 %v8918
    %9152 = vmatprep.subr.bf16.mxu0 %v8923
    %9153 = vmatpush1.bf16.msra.mxu0 %v8922
    %9154 = vmatprep.subr.bf16.mxu0 %v8927
    %9155 = vmatpush1.bf16.msra.mxu0 %v8926
    %9156 = vmatprep.subr.bf16.mxu0 %v8931
    %9157 = vmatpush1.bf16.msra.mxu0 %v8930
    %9158 = vmatprep.mubr.bf16.mxu0 %v8331
    %9159 = vmatmul.mubr.bf16.gmra.mrb[0].mxu0 %v8330
    %v9160 = vpop.f32.mrb[0].mxu0
    %v9161 = vadd.f32 %v8469, %v9160
    %v9162 = vpop.f32.mrb[0].mxu0
    %v9163 = vadd.f32 %v8473, %v9162
    %v9164 = vpop.f32.mrb[0].mxu0
    %v9165 = vpop.f32.mrb[0].mxu0
    %9166 = vdwg.mxu0
    %9167 = vmatprep.subr.bf16.mxu0 %v8935
    %9168 = vmatpush1.bf16.msra.mxu0 %v8934
    %9169 = vmatprep.subr.bf16.mxu0 %v8939
    %9170 = vmatpush1.bf16.msra.mxu0 %v8938
    %9171 = vmatprep.subr.bf16.mxu0 %v8943
    %9172 = vmatpush1.bf16.msra.mxu0 %v8942
    %9173 = vmatprep.subr.bf16.mxu0 %v8947
    %9174 = vmatpush1.bf16.msra.mxu0 %v8946
    %9175 = vmatprep.subr.bf16.mxu0 %v8951
    %9176 = vmatpush1.bf16.msra.mxu0 %v8950
    %9177 = vmatprep.subr.bf16.mxu0 %v8955
    %9178 = vmatpush1.bf16.msra.mxu0 %v8954
    %9179 = vmatprep.subr.bf16.mxu0 %v8959
    %9180 = vmatpush1.bf16.msra.mxu0 %v8958
    %9181 = vmatprep.subr.bf16.mxu0 %v8963
    %9182 = vmatpush1.bf16.msra.mxu0 %v8962
    %9183 = vmatprep.subr.bf16.mxu0 %v8967
    %9184 = vmatpush1.bf16.msra.mxu0 %v8966
    %9185 = vmatprep.subr.bf16.mxu0 %v8971
    %9186 = vmatpush1.bf16.msra.mxu0 %v8970
    %9187 = vmatprep.subr.bf16.mxu0 %v8975
    %9188 = vmatpush1.bf16.msra.mxu0 %v8974
    %9189 = vmatprep.subr.bf16.mxu0 %v8979
    %9190 = vmatpush1.bf16.msra.mxu0 %v8978
    %9191 = vmatprep.subr.bf16.mxu0 %v8983
    %9192 = vmatpush1.bf16.msra.mxu0 %v8982
    %9193 = vmatprep.subr.bf16.mxu0 %v8987
    %9194 = vmatpush1.bf16.msra.mxu0 %v8986
    %9195 = vmatprep.subr.bf16.mxu0 %v8991
    %9196 = vmatpush1.bf16.msra.mxu0 %v8990
    %9197 = vmatprep.subr.bf16.mxu0 %v8995
    %9198 = vmatpush1.bf16.msra.mxu0 %v8994
    %9199 = vmatprep.mubr.bf16.mxu0 %v8333
    %9200 = vmatmul.mubr.bf16.gmra.mrb[0].mxu0 %v8332
    %v9201 = vpop.f32.mrb[0].mxu0
    %v9202 = vadd.f32 %v9161, %v9201
    %v9203 = vpop.f32.mrb[0].mxu0
    %v9204 = vadd.f32 %v9163, %v9203
    %v9205 = vpop.f32.mrb[0].mxu0
    %v9206 = vpop.f32.mrb[0].mxu0
    %9207 = vdwg.mxu0
    %9208 = vmatprep.subr.bf16.mxu0 %v8873
    %9209 = vmatpush1.bf16.msra.mxu0 %v8872
    %9210 = vmatprep.subr.bf16.mxu0 %v8877
    %9211 = vmatpush1.bf16.msra.mxu0 %v8876
    %9212 = vmatprep.subr.bf16.mxu0 %v8881
    %9213 = vmatpush1.bf16.msra.mxu0 %v8880
    %9214 = vmatprep.subr.bf16.mxu0 %v8885
    %9215 = vmatpush1.bf16.msra.mxu0 %v8884
    %9216 = vmatprep.subr.bf16.mxu0 %v8889
    %9217 = vmatpush1.bf16.msra.mxu0 %v8888
    %9218 = vmatprep.subr.bf16.mxu0 %v8893
    %9219 = vmatpush1.bf16.msra.mxu0 %v8892
    %9220 = vmatprep.subr.bf16.mxu0 %v8897
    %9221 = vmatpush1.bf16.msra.mxu0 %v8896
    %9222 = vmatprep.subr.bf16.mxu0 %v8901
    %9223 = vmatpush1.bf16.msra.mxu0 %v8900
    %9224 = vmatprep.subr.bf16.mxu0 %v8905
    %9225 = vmatpush1.bf16.msra.mxu0 %v8904
    %9226 = vmatprep.subr.bf16.mxu0 %v8909
    %9227 = vmatpush1.bf16.msra.mxu0 %v8908
    %9228 = vmatprep.subr.bf16.mxu0 %v8913
    %9229 = vmatpush1.bf16.msra.mxu0 %v8912
    %9230 = vmatprep.subr.bf16.mxu0 %v8917
    %9231 = vmatpush1.bf16.msra.mxu0 %v8916
    %9232 = vmatprep.subr.bf16.mxu0 %v8921
    %9233 = vmatpush1.bf16.msra.mxu0 %v8920
    %9234 = vmatprep.subr.bf16.mxu0 %v8925
    %9235 = vmatpush1.bf16.msra.mxu0 %v8924
    %9236 = vmatprep.subr.bf16.mxu0 %v8929
    %9237 = vmatpush1.bf16.msra.mxu0 %v8928
    %9238 = vmatprep.subr.bf16.mxu0 %v8933
    %9239 = vmatpush1.bf16.msra.mxu0 %v8932
    %9240 = vmatprep.mubr.bf16.mxu0 %v8331
    %9241 = vmatmul.mubr.bf16.gmra.mrb[0].mxu0 %v8330
    %v9242 = vpop.f32.mrb[0].mxu0
    %v9243 = vadd.f32 %v8477, %v9242
    %v9244 = vpop.f32.mrb[0].mxu0
    %v9245 = vadd.f32 %v8481, %v9244
    %v9246 = vpop.f32.mrb[0].mxu0
    %v9247 = vpop.f32.mrb[0].mxu0
    %9248 = vdwg.mxu0
    %9249 = vmatprep.subr.bf16.mxu0 %v8937
    %9250 = vmatpush1.bf16.msra.mxu0 %v8936
    %9251 = vmatprep.subr.bf16.mxu0 %v8941
    %9252 = vmatpush1.bf16.msra.mxu0 %v8940
    %9253 = vmatprep.subr.bf16.mxu0 %v8945
    %9254 = vmatpush1.bf16.msra.mxu0 %v8944
    %9255 = vmatprep.subr.bf16.mxu0 %v8949
    %9256 = vmatpush1.bf16.msra.mxu0 %v8948
    %9257 = vmatprep.subr.bf16.mxu0 %v8953
    %9258 = vmatpush1.bf16.msra.mxu0 %v8952
    %9259 = vmatprep.subr.bf16.mxu0 %v8957
    %9260 = vmatpush1.bf16.msra.mxu0 %v8956
    %9261 = vmatprep.subr.bf16.mxu0 %v8961
    %9262 = vmatpush1.bf16.msra.mxu0 %v8960
    %9263 = vmatprep.subr.bf16.mxu0 %v8965
    %9264 = vmatpush1.bf16.msra.mxu0 %v8964
    %9265 = vmatprep.subr.bf16.mxu0 %v8969
    %9266 = vmatpush1.bf16.msra.mxu0 %v8968
    %9267 = vmatprep.subr.bf16.mxu0 %v8973
    %9268 = vmatpush1.bf16.msra.mxu0 %v8972
    %9269 = vmatprep.subr.bf16.mxu0 %v8977
    %9270 = vmatpush1.bf16.msra.mxu0 %v8976
    %9271 = vmatprep.subr.bf16.mxu0 %v8981
    %9272 = vmatpush1.bf16.msra.mxu0 %v8980
    %9273 = vmatprep.subr.bf16.mxu0 %v8985
    %9274 = vmatpush1.bf16.msra.mxu0 %v8984
    %9275 = vmatprep.subr.bf16.mxu0 %v8989
    %9276 = vmatpush1.bf16.msra.mxu0 %v8988
    %9277 = vmatprep.subr.bf16.mxu0 %v8993
    %9278 = vmatpush1.bf16.msra.mxu0 %v8992
    %9279 = vmatprep.subr.bf16.mxu0 %v8997
    %9280 = vmatpush1.bf16.msra.mxu0 %v8996
    %9281 = vmatprep.mubr.bf16.mxu0 %v8333
    %9282 = vmatmul.mubr.bf16.gmra.mrb[0].mxu0 %v8332
    %v9283 = vpop.f32.mrb[0].mxu0
    %v9284 = vadd.f32 %v9243, %v9283
    %v9285 = vpop.f32.mrb[0].mxu0
    %v9286 = vadd.f32 %v9245, %v9285
    %v9287 = vpop.f32.mrb[0].mxu0
    %v9288 = vpop.f32.mrb[0].mxu0
    %9289 = vdwg.mxu0
    %v9290 = vmax.f32 %v9202, 0.0
    %v9291 = vmax.f32 %v9204, 0.0
    %v9292 = vmax.f32 %v9284, 0.0
    %v9293 = vmax.f32 %v9286, 0.0
    %v9294 = vpack.c.bf16 %v9290, %v9290
    %v9295 = vpack.c.bf16 %v9291, %v9291
    %v9296 = vpack.c.bf16 %v9292, %v9292
    %v9297 = vpack.c.bf16 %v9293, %v9293
    %s9298 = scalar_lea.vmem %s7, 256
    %v9299 = vld [vmem:[%s9298] sm:$0xf]
    %v9300 = vld [vmem:[%s9298 + $0x4] sm:$0xf]
    %v9301 = vld [vmem:[%s9298 + $0x8] sm:$0xf]
    %v9302 = vld [vmem:[%s9298 + $0xc] sm:$0xf]
    %v9303 = vld [vmem:[%s9298 + $0x10] sm:$0xf]
    %v9304 = vld [vmem:[%s9298 + $0x14] sm:$0xf]
    %v9305 = vld [vmem:[%s9298 + $0x18] sm:$0xf]
    %v9306 = vld [vmem:[%s9298 + $0x1c] sm:$0xf]
    %v9307 = vld [vmem:[%s9298 + $0x20] sm:$0xf]
    %v9308 = vld [vmem:[%s9298 + $0x24] sm:$0xf]
    %v9309 = vld [vmem:[%s9298 + $0x28] sm:$0xf]
    %v9310 = vld [vmem:[%s9298 + $0x2c] sm:$0xf]
    %v9311 = vld [vmem:[%s9298 + $0x30] sm:$0xf]
    %v9312 = vld [vmem:[%s9298 + $0x34] sm:$0xf]
    %v9313 = vld [vmem:[%s9298 + $0x38] sm:$0xf]
    %v9314 = vld [vmem:[%s9298 + $0x3c] sm:$0xf]
    %v9315 = vld [vmem:[%s9298 + $0x40] sm:$0xf]
    %v9316 = vld [vmem:[%s9298 + $0x44] sm:$0xf]
    %v9317 = vld [vmem:[%s9298 + $0x48] sm:$0xf]
    %v9318 = vld [vmem:[%s9298 + $0x4c] sm:$0xf]
    %v9319 = vld [vmem:[%s9298 + $0x50] sm:$0xf]
    %v9320 = vld [vmem:[%s9298 + $0x54] sm:$0xf]
    %v9321 = vld [vmem:[%s9298 + $0x58] sm:$0xf]
    %v9322 = vld [vmem:[%s9298 + $0x5c] sm:$0xf]
    %v9323 = vld [vmem:[%s9298 + $0x60] sm:$0xf]
    %v9324 = vld [vmem:[%s9298 + $0x64] sm:$0xf]
    %v9325 = vld [vmem:[%s9298 + $0x68] sm:$0xf]
    %v9326 = vld [vmem:[%s9298 + $0x6c] sm:$0xf]
    %v9327 = vld [vmem:[%s9298 + $0x70] sm:$0xf]
    %v9328 = vld [vmem:[%s9298 + $0x74] sm:$0xf]
    %v9329 = vld [vmem:[%s9298 + $0x78] sm:$0xf]
    %v9330 = vld [vmem:[%s9298 + $0x7c] sm:$0xf]
    %v9331 = vld [vmem:[%s9298 + $0x80] sm:$0xf]
    %v9332 = vld [vmem:[%s9298 + $0x84] sm:$0xf]
    %v9333 = vld [vmem:[%s9298 + $0x88] sm:$0xf]
    %v9334 = vld [vmem:[%s9298 + $0x8c] sm:$0xf]
    %v9335 = vld [vmem:[%s9298 + $0x90] sm:$0xf]
    %v9336 = vld [vmem:[%s9298 + $0x94] sm:$0xf]
    %v9337 = vld [vmem:[%s9298 + $0x98] sm:$0xf]
    %v9338 = vld [vmem:[%s9298 + $0x9c] sm:$0xf]
    %v9339 = vld [vmem:[%s9298 + $0xa0] sm:$0xf]
    %v9340 = vld [vmem:[%s9298 + $0xa4] sm:$0xf]
    %v9341 = vld [vmem:[%s9298 + $0xa8] sm:$0xf]
    %v9342 = vld [vmem:[%s9298 + $0xac] sm:$0xf]
    %v9343 = vld [vmem:[%s9298 + $0xb0] sm:$0xf]
    %v9344 = vld [vmem:[%s9298 + $0xb4] sm:$0xf]
    %v9345 = vld [vmem:[%s9298 + $0xb8] sm:$0xf]
    %v9346 = vld [vmem:[%s9298 + $0xbc] sm:$0xf]
    %v9347 = vld [vmem:[%s9298 + $0xc0] sm:$0xf]
    %v9348 = vld [vmem:[%s9298 + $0xc4] sm:$0xf]
    %v9349 = vld [vmem:[%s9298 + $0xc8] sm:$0xf]
    %v9350 = vld [vmem:[%s9298 + $0xcc] sm:$0xf]
    %v9351 = vld [vmem:[%s9298 + $0xd0] sm:$0xf]
    %v9352 = vld [vmem:[%s9298 + $0xd4] sm:$0xf]
    %v9353 = vld [vmem:[%s9298 + $0xd8] sm:$0xf]
    %v9354 = vld [vmem:[%s9298 + $0xdc] sm:$0xf]
    %v9355 = vld [vmem:[%s9298 + $0xe0] sm:$0xf]
    %v9356 = vld [vmem:[%s9298 + $0xe4] sm:$0xf]
    %v9357 = vld [vmem:[%s9298 + $0xe8] sm:$0xf]
    %v9358 = vld [vmem:[%s9298 + $0xec] sm:$0xf]
    %v9359 = vld [vmem:[%s9298 + $0xf0] sm:$0xf]
    %v9360 = vld [vmem:[%s9298 + $0xf4] sm:$0xf]
    %v9361 = vld [vmem:[%s9298 + $0xf8] sm:$0xf]
    %v9362 = vld [vmem:[%s9298 + $0xfc] sm:$0xf]
    %s9363 = scalar_lea.vmem [#allocation13], 1
    %v9364 = vld [vmem:[%s9363] sm:$0x1]
    %v9366 = vlaneseq
    %v9367 = vshrl.u32 %v9366, 7
    %v9368 = vsub.s32 0, %v9367
    %v9369 = vrot.slane %v9364, %v9368
    %v9435 = vunpack.c.l.b16 %v9299
    %v9436 = vunpack.c.l.b16 %v9300
    %v9437 = vunpack.c.l.b16 %v9301
    %v9438 = vunpack.c.l.b16 %v9302
    %v9439 = vunpack.c.l.b16 %v9303
    %v9440 = vunpack.c.l.b16 %v9304
    %v9441 = vunpack.c.l.b16 %v9305
    %v9442 = vunpack.c.l.b16 %v9306
    %v9443 = vunpack.c.l.b16 %v9307
    %v9444 = vunpack.c.l.b16 %v9308
    %v9445 = vunpack.c.l.b16 %v9309
    %v9446 = vunpack.c.l.b16 %v9310
    %v9447 = vunpack.c.l.b16 %v9311
    %v9448 = vunpack.c.l.b16 %v9312
    %v9449 = vunpack.c.l.b16 %v9313
    %v9450 = vunpack.c.l.b16 %v9314
    %v9451 = vunpack.c.l.b16 %v9315
    %v9452 = vunpack.c.l.b16 %v9316
    %v9453 = vunpack.c.l.b16 %v9317
    %v9454 = vunpack.c.l.b16 %v9318
    %v9455 = vunpack.c.l.b16 %v9319
    %v9456 = vunpack.c.l.b16 %v9320
    %v9457 = vunpack.c.l.b16 %v9321
    %v9458 = vunpack.c.l.b16 %v9322
    %v9459 = vunpack.c.l.b16 %v9323
    %v9460 = vunpack.c.l.b16 %v9324
    %v9461 = vunpack.c.l.b16 %v9325
    %v9462 = vunpack.c.l.b16 %v9326
    %v9463 = vunpack.c.l.b16 %v9327
    %v9464 = vunpack.c.l.b16 %v9328
    %v9465 = vunpack.c.l.b16 %v9329
    %v9466 = vunpack.c.l.b16 %v9330
    %v9467 = vunpack.c.l.b16 %v9331
    %v9468 = vunpack.c.l.b16 %v9332
    %v9469 = vunpack.c.l.b16 %v9333
    %v9470 = vunpack.c.l.b16 %v9334
    %v9471 = vunpack.c.l.b16 %v9335
    %v9472 = vunpack.c.l.b16 %v9336
    %v9473 = vunpack.c.l.b16 %v9337
    %v9474 = vunpack.c.l.b16 %v9338
    %v9475 = vunpack.c.l.b16 %v9339
    %v9476 = vunpack.c.l.b16 %v9340
    %v9477 = vunpack.c.l.b16 %v9341
    %v9478 = vunpack.c.l.b16 %v9342
    %v9479 = vunpack.c.l.b16 %v9343
    %v9480 = vunpack.c.l.b16 %v9344
    %v9481 = vunpack.c.l.b16 %v9345
    %v9482 = vunpack.c.l.b16 %v9346
    %v9483 = vunpack.c.l.b16 %v9347
    %v9484 = vunpack.c.l.b16 %v9348
    %v9485 = vunpack.c.l.b16 %v9349
    %v9486 = vunpack.c.l.b16 %v9350
    %v9487 = vunpack.c.l.b16 %v9351
    %v9488 = vunpack.c.l.b16 %v9352
    %v9489 = vunpack.c.l.b16 %v9353
    %v9490 = vunpack.c.l.b16 %v9354
    %v9491 = vunpack.c.l.b16 %v9355
    %v9492 = vunpack.c.l.b16 %v9356
    %v9493 = vunpack.c.l.b16 %v9357
    %v9494 = vunpack.c.l.b16 %v9358
    %v9495 = vunpack.c.l.b16 %v9359
    %v9496 = vunpack.c.l.b16 %v9360
    %v9497 = vunpack.c.l.b16 %v9361
    %v9498 = vunpack.c.l.b16 %v9362
    %v9499 = vpack.c.b16 %v9436, %v9435
    %v9500 = vpack.c.b16 %v9438, %v9437
    %v9501 = vpack.c.b16 %v9440, %v9439
    %v9502 = vpack.c.b16 %v9442, %v9441
    %v9503 = vpack.c.b16 %v9444, %v9443
    %v9504 = vpack.c.b16 %v9446, %v9445
    %v9505 = vpack.c.b16 %v9448, %v9447
    %v9506 = vpack.c.b16 %v9450, %v9449
    %v9507 = vpack.c.b16 %v9452, %v9451
    %v9508 = vpack.c.b16 %v9454, %v9453
    %v9509 = vpack.c.b16 %v9456, %v9455
    %v9510 = vpack.c.b16 %v9458, %v9457
    %v9511 = vpack.c.b16 %v9460, %v9459
    %v9512 = vpack.c.b16 %v9462, %v9461
    %v9513 = vpack.c.b16 %v9464, %v9463
    %v9514 = vpack.c.b16 %v9466, %v9465
    %v9515 = vpack.c.b16 %v9468, %v9467
    %v9516 = vpack.c.b16 %v9470, %v9469
    %v9517 = vpack.c.b16 %v9472, %v9471
    %v9518 = vpack.c.b16 %v9474, %v9473
    %v9519 = vpack.c.b16 %v9476, %v9475
    %v9520 = vpack.c.b16 %v9478, %v9477
    %v9521 = vpack.c.b16 %v9480, %v9479
    %v9522 = vpack.c.b16 %v9482, %v9481
    %v9523 = vpack.c.b16 %v9484, %v9483
    %v9524 = vpack.c.b16 %v9486, %v9485
    %v9525 = vpack.c.b16 %v9488, %v9487
    %v9526 = vpack.c.b16 %v9490, %v9489
    %v9527 = vpack.c.b16 %v9492, %v9491
    %v9528 = vpack.c.b16 %v9494, %v9493
    %v9529 = vpack.c.b16 %v9496, %v9495
    %v9530 = vpack.c.b16 %v9498, %v9497
    %9563 = vmatprep.subr.bf16.mxu0 0
    %9564 = vmatpush1.bf16.msra.mxu0 %v9499
    %9565 = vmatprep.subr.bf16.mxu0 0
    %9566 = vmatpush1.bf16.msra.mxu0 %v9500
    %9567 = vmatprep.subr.bf16.mxu0 0
    %9568 = vmatpush1.bf16.msra.mxu0 %v9501
    %9569 = vmatprep.subr.bf16.mxu0 0
    %9570 = vmatpush1.bf16.msra.mxu0 %v9502
    %9571 = vmatprep.subr.bf16.mxu0 0
    %9572 = vmatpush1.bf16.msra.mxu0 %v9503
    %9573 = vmatprep.subr.bf16.mxu0 0
    %9574 = vmatpush1.bf16.msra.mxu0 %v9504
    %9575 = vmatprep.subr.bf16.mxu0 0
    %9576 = vmatpush1.bf16.msra.mxu0 %v9505
    %9577 = vmatprep.subr.bf16.mxu0 0
    %9578 = vmatpush1.bf16.msra.mxu0 %v9506
    %9579 = vmatprep.subr.bf16.mxu0 0
    %9580 = vmatpush1.bf16.msra.mxu0 %v9507
    %9581 = vmatprep.subr.bf16.mxu0 0
    %9582 = vmatpush1.bf16.msra.mxu0 %v9508
    %9583 = vmatprep.subr.bf16.mxu0 0
    %9584 = vmatpush1.bf16.msra.mxu0 %v9509
    %9585 = vmatprep.subr.bf16.mxu0 0
    %9586 = vmatpush1.bf16.msra.mxu0 %v9510
    %9587 = vmatprep.subr.bf16.mxu0 0
    %9588 = vmatpush1.bf16.msra.mxu0 %v9511
    %9589 = vmatprep.subr.bf16.mxu0 0
    %9590 = vmatpush1.bf16.msra.mxu0 %v9512
    %9591 = vmatprep.subr.bf16.mxu0 0
    %9592 = vmatpush1.bf16.msra.mxu0 %v9513
    %9593 = vmatprep.subr.bf16.mxu0 0
    %9594 = vmatpush1.bf16.msra.mxu0 %v9514
    %9595 = vmatprep.mubr.bf16.mxu0 %v9295
    %9596 = vmatmul.mubr.bf16.gmra.mrb[0].mxu0 %v9294
    %v9597 = vpop.f32.mrb[0].mxu0
    %v9598 = vadd.f32 %v9369, %v9597
    %v9599 = vpop.f32.mrb[0].mxu0
    %v9600 = vpop.f32.mrb[0].mxu0
    %v9601 = vpop.f32.mrb[0].mxu0
    %9602 = vdwg.mxu0
    %9603 = vmatprep.subr.bf16.mxu0 0
    %9604 = vmatpush1.bf16.msra.mxu0 %v9515
    %9605 = vmatprep.subr.bf16.mxu0 0
    %9606 = vmatpush1.bf16.msra.mxu0 %v9516
    %9607 = vmatprep.subr.bf16.mxu0 0
    %9608 = vmatpush1.bf16.msra.mxu0 %v9517
    %9609 = vmatprep.subr.bf16.mxu0 0
    %9610 = vmatpush1.bf16.msra.mxu0 %v9518
    %9611 = vmatprep.subr.bf16.mxu0 0
    %9612 = vmatpush1.bf16.msra.mxu0 %v9519
    %9613 = vmatprep.subr.bf16.mxu0 0
    %9614 = vmatpush1.bf16.msra.mxu0 %v9520
    %9615 = vmatprep.subr.bf16.mxu0 0
    %9616 = vmatpush1.bf16.msra.mxu0 %v9521
    %9617 = vmatprep.subr.bf16.mxu0 0
    %9618 = vmatpush1.bf16.msra.mxu0 %v9522
    %9619 = vmatprep.subr.bf16.mxu0 0
    %9620 = vmatpush1.bf16.msra.mxu0 %v9523
    %9621 = vmatprep.subr.bf16.mxu0 0
    %9622 = vmatpush1.bf16.msra.mxu0 %v9524
    %9623 = vmatprep.subr.bf16.mxu0 0
    %9624 = vmatpush1.bf16.msra.mxu0 %v9525
    %9625 = vmatprep.subr.bf16.mxu0 0
    %9626 = vmatpush1.bf16.msra.mxu0 %v9526
    %9627 = vmatprep.subr.bf16.mxu0 0
    %9628 = vmatpush1.bf16.msra.mxu0 %v9527
    %9629 = vmatprep.subr.bf16.mxu0 0
    %9630 = vmatpush1.bf16.msra.mxu0 %v9528
    %9631 = vmatprep.subr.bf16.mxu0 0
    %9632 = vmatpush1.bf16.msra.mxu0 %v9529
    %9633 = vmatprep.subr.bf16.mxu0 0
    %9634 = vmatpush1.bf16.msra.mxu0 %v9530
    %9635 = vmatprep.mubr.bf16.mxu0 %v9297
    %9636 = vmatmul.mubr.bf16.gmra.mrb[0].mxu0 %v9296
    %v9637 = vpop.f32.mrb[0].mxu0
    %v9638 = vadd.f32 %v9598, %v9637
    %v9639 = vpop.f32.mrb[0].mxu0
    %v9640 = vpop.f32.mrb[0].mxu0
    %v9641 = vpop.f32.mrb[0].mxu0
    %9642 = vdwg.mxu0
    %9644 = vrot.lane.b32.xlu0 %v9638, 64
    %v9645 = vpop.permute.xlu0 %9644
    %vm9647 = vcmask 523264
    %v9648 = vsel %vm9647, %v6401, %v9645
    %v9649 = vld [vmem:[%s9] sm:$0xff]
    %v9650 = vmul.f32 %v9648, %v9649
    %9651 = vst [vmem:[%s10] sm:$0xff] %v9650
    // Predicated region
    $region74: #{noise2style_pallas.1} parent=1 // pred_check
      _
    $region75: #{noise2style_pallas.1} parent=1 // pred_check_branch
      %9653 = sbr.rel (0) target = $region77
    $region76: #{noise2style_pallas.1} parent=1 // pred_region
      _
    $region77: #{noise2style_pallas.1} parent=1 // pred_fallthru
      _
    // Predicated region
    $region78: #{noise2style_pallas.1} parent=1 // pred_check
      _
    $region79: #{noise2style_pallas.1} parent=1 // pred_check_branch
      %9655 = sbr.rel (0) target = $region81
    $region80: #{noise2style_pallas.1} parent=1 // pred_region
      _
    $region81: #{noise2style_pallas.1} parent=1 // pred_fallthru
      _
    %9656 = vsyncpa [#allocation3], 1
    %9657 = vsyncpa [#allocation5], 1
    %9658 = vsyncpa [#allocation8], 1
    %9659 = vsyncpa [#allocation11], 1
    %9660 = vsyncpa [#allocation14], 1

</llo_original>
